<compile_context>
chip_gen: v6e
topology: v6e:2x2x1
jax: 0.10.0
libtpu: 0.0.40
codegen_flags: <defaults>
</compile_context>

<pallas_src>
import functools

import jax
import jax.numpy as jnp
from jax.experimental import pallas as pl
from jax.experimental.pallas import tpu as pltpu

LEAKY_SLOPE = 0.01          # F.leaky_relu default negative_slope
HIDDEN = 1024               # fixed hidden width of MyFCNet2
DEFAULT_TM = 256            # batch tile (>= v6e/v7x MXU tile height)


def _round_up(v, m):
    return (v + m - 1) // m * m


# ----------------------------- Pallas kernel ------------------------------
def _fused_mlp_kernel(x_ref, w1_ref, b1_ref, w2_ref, b2_ref,
                      w3_ref, b3_ref, w4_ref, b4_ref, o_ref):
    """Entire 4-layer MLP on one VMEM-resident activation tile."""

    def layer(h, w_ref, b_ref, leaky):
        # Cast activations to the (possibly bf16) weight dtype so the MXU's
        # native low-precision path is used; accumulate in f32.
        y = jnp.dot(h.astype(w_ref.dtype), w_ref[...],
                    preferred_element_type=jnp.float32)
        y = y + b_ref[...]                       # (M, N) + (1, N) broadcast
        if leaky:
            y = jnp.maximum(y, LEAKY_SLOPE * y)  # leaky_relu, mul+max only
        return y

    h = x_ref[...]
    h = layer(h, w1_ref, b1_ref, True)
    h = layer(h, w2_ref, b2_ref, True)
    h = layer(h, w3_ref, b3_ref, True)
    h = layer(h, w4_ref, b4_ref, False)
    o_ref[...] = h.astype(o_ref.dtype)


def _vmem_limit_bytes(padded_params, tm, io_itemsize):
    """Shape-derived VMEM cap: 2x-buffered weights + io tiles + act slabs."""
    w_bytes = sum(w.size * w.dtype.itemsize + b.size * b.dtype.itemsize
                  for w, b in padded_params)
    kp = padded_params[0][0].shape[0]
    np_ = padded_params[-1][0].shape[1]
    io_bytes = tm * kp * io_itemsize + tm * np_ * io_itemsize
    act_bytes = 2 * tm * HIDDEN * 4               # two live f32 activation slabs
    total = 2 * (w_bytes + io_bytes) + act_bytes + (8 << 20)
    # Keep below v7x's 64 MiB physical VMEM; harmless slack on v5e/v6e (128 MiB).
    return int(min(max(total, 32 << 20), 56 << 20))


def fused_mlp_pallas(x_padded, padded_params, *, tm=DEFAULT_TM):
    """y = fc4(leaky(fc3(leaky(fc2(leaky(fc1(x))))))) in one pallas_call.

    `x_padded` must already be tile-aligned: batch a multiple of 8 (and of `tm`
    if batch > tm), feature dim equal to the padded K of the first weight.
    """
    (w1, b1), (w2, b2), (w3, b3), (w4, b4) = padded_params
    Mp, Kp = x_padded.shape
    assert Kp == w1.shape[0], "x feature dim must match padded fc1 input dim"
    Np = w4.shape[1]
    operands = (x_padded, w1, b1, w2, b2, w3, b3, w4, b4)
    limit = _vmem_limit_bytes(padded_params, min(Mp, tm), x_padded.dtype.itemsize)
    out_shape = jax.ShapeDtypeStruct((Mp, Np), x_padded.dtype)

    if Mp <= tm:
        # Small batch: single shot, everything VMEM resident, no grid machinery.
        vmem = pl.BlockSpec(memory_space=pltpu.MemorySpace.VMEM)
        return pl.pallas_call(
            _fused_mlp_kernel,
            out_shape=out_shape,
            in_specs=[vmem] * 9,
            out_specs=vmem,
            compiler_params=pltpu.CompilerParams(vmem_limit_bytes=limit),
        )(*operands)

    # Large batch: 1-D grid over batch tiles.  Weight/bias BlockSpecs use a
    # constant index_map so they are DMA'd once and stay resident; x/out tiles
    # pipeline behind compute; "parallel" lets v7x split tiles across its 2 TCs.
    assert Mp % tm == 0, "batch must be padded to a multiple of the batch tile"

    def const_spec(arr):
        return pl.BlockSpec(arr.shape, lambda i: (0, 0))

    return pl.pallas_call(
        _fused_mlp_kernel,
        out_shape=out_shape,
        grid=(Mp // tm,),
        in_specs=[pl.BlockSpec((tm, Kp), lambda i: (i, 0)),
                  const_spec(w1), const_spec(b1),
                  const_spec(w2), const_spec(b2),
                  const_spec(w3), const_spec(b3),
                  const_spec(w4), const_spec(b4)],
        out_specs=pl.BlockSpec((tm, Np), lambda i: (i, 0)),
        compiler_params=pltpu.CompilerParams(
            dimension_semantics=("parallel",),
            vmem_limit_bytes=limit),
    )(*operands)


# ---------------------------- Model definition -----------------------------
def init_params(key, num_inp, num_out):
    """Deterministic init mimicking nn.Linear's uniform(-1/sqrt(fan_in), ...)."""
    dims = [(num_inp, HIDDEN), (HIDDEN, HIDDEN), (HIDDEN, HIDDEN), (HIDDEN, num_out)]
    params = []
    for d_in, d_out in dims:
        key, kw, kb = jax.random.split(key, 3)
        bound = 1.0 / jnp.sqrt(float(d_in))
        # stored as (in_features, out_features) == torch weight.T
        w = jax.random.uniform(kw, (d_in, d_out), jnp.float32, -bound, bound)
        b = jax.random.uniform(kb, (d_out,), jnp.float32, -bound, bound)
        params.append((w, b))
    return params


def pad_params(params, weight_dtype=jnp.bfloat16):
    """One-time pad + cast: K/N to multiples of 128, weights -> weight_dtype,
    biases stay f32 as (1, N).

    Zero padding is numerically benign: padded input columns are zero, padded
    bias columns are zero, and leaky_relu(0) == 0, so padded lanes stay zero
    through every layer.
    """
    padded = []
    for w, b in params:
        k, n = w.shape
        kp, np_ = _round_up(k, 128), _round_up(n, 128)
        wp = jnp.pad(w, ((0, kp - k), (0, np_ - n))).astype(weight_dtype)
        bp = jnp.pad(b, (0, np_ - n)).reshape(1, np_).astype(jnp.float32)
        padded.append((wp, bp))
    return padded


def _aligned_batch(m, tm=DEFAULT_TM):
    return _round_up(m, 8) if m <= tm else _round_up(m, tm)


@functools.partial(jax.jit, static_argnames=("batch", "num_out"))
def _forward_padded(padded_params, x_padded, batch, num_out):
    out = fused_mlp_pallas(x_padded, padded_params)
    return out[:batch, :num_out]


def my_fc_net2_forward(padded_params, x, num_out):
    """Non-jitted wrapper: pads x once (outside the Pallas hot path) then calls
    the jitted fused kernel.  Callers with pre-aligned inputs can skip the pad
    entirely by calling _forward_padded directly."""
    kp = padded_params[0][0].shape[0]
    m, k = x.shape
    mp = _aligned_batch(m)
    if (m, k) != (mp, kp):
        x = jnp.pad(x, ((0, mp - m), (0, kp - k)))
    return _forward_padded(padded_params, x, m, num_out)


# Pure-JAX fp32 reference for a sanity check (uses the unpadded params).
def reference_forward(params, x):
    def leaky(v):
        return jnp.maximum(v, LEAKY_SLOPE * v)

    (w1, b1), (w2, b2), (w3, b3), (w4, b4) = params
    x = leaky(x @ w1 + b1)
    x = leaky(x @ w2 + b2)
    x = leaky(x @ w3 + b3)
    return x @ w4 + b4


if __name__ == "__main__":
    key = jax.random.PRNGKey(0)
    num_inp, num_out, batch = 32, 16, 8

    kparam, kx = jax.random.split(key)
    params = init_params(kparam, num_inp, num_out)
    # bf16 weight streaming (halves the weight DMA that bounds this kernel).
    padded_params = pad_params(params, weight_dtype=jnp.bfloat16)
    x = jax.random.normal(kx, (batch, num_inp), jnp.float32)

    out = my_fc_net2_forward(padded_params, x, num_out)
    out = jax.block_until_ready(out)

    ref = reference_forward(params, x)
    assert out.shape == (batch, num_out)
    # bf16 weights => relaxed tolerance vs the f32 reference (typical |err| ~1e-2).
    err = float(jnp.max(jnp.abs(out - ref)))
    assert jnp.allclose(out, ref, atol=5e-2, rtol=5e-2), f"max abs err {err}"

    print("KERNEL_OK")
</pallas_src>

<mosaic_0001>
module attributes {stable_mosaic.version = 11 : i64} {
  func.func @_fused_mlp_kernel(%arg0: memref<8x128xf32, #tpu.memory_space<vmem>>, %arg1: memref<128x1024xbf16, #tpu.memory_space<vmem>>, %arg2: memref<1x1024xf32, #tpu.memory_space<vmem>>, %arg3: memref<1024x1024xbf16, #tpu.memory_space<vmem>>, %arg4: memref<1x1024xf32, #tpu.memory_space<vmem>>, %arg5: memref<1024x1024xbf16, #tpu.memory_space<vmem>>, %arg6: memref<1x1024xf32, #tpu.memory_space<vmem>>, %arg7: memref<1024x128xbf16, #tpu.memory_space<vmem>>, %arg8: memref<1x128xf32, #tpu.memory_space<vmem>>, %arg9: memref<8x128xf32, #tpu.memory_space<vmem>>) attributes {dimension_semantics = [], scalar_prefetch = 0 : i64, scratch_operands = 0 : i64, tpu.core_type = #tpu.core_type<tc>} {
    %c0 = arith.constant 0 : index
    %c0_0 = arith.constant 0 : index
    %0 = vector.load %arg0[%c0, %c0_0] : memref<8x128xf32, #tpu.memory_space<vmem>>, vector<8x128xf32>
    %1 = arith.truncf %0 : vector<8x128xf32> to vector<8x128xbf16>
    %c0_1 = arith.constant 0 : index
    %c0_2 = arith.constant 0 : index
    %2 = vector.load %arg1[%c0_1, %c0_2] : memref<128x1024xbf16, #tpu.memory_space<vmem>>, vector<128x1024xbf16>
    %cst = arith.constant dense<0.000000e+00> : vector<8x1024xf32>
    %3 = tpu.matmul %1, %2, %cst {dimension_numbers = #tpu.dot_dimension_numbers<[1], [0], [0], [1], [0, 0, 1, 1], [], []>} : vector<8x128xbf16>, vector<128x1024xbf16>, vector<8x1024xf32> -> vector<8x1024xf32>
    %c0_3 = arith.constant 0 : index
    %c0_4 = arith.constant 0 : index
    %4 = vector.load %arg2[%c0_3, %c0_4] : memref<1x1024xf32, #tpu.memory_space<vmem>>, vector<1x1024xf32>
    %5 = vector.broadcast %4 : vector<1x1024xf32> to vector<8x1024xf32>
    %6 = arith.addf %3, %5 : vector<8x1024xf32>
    %cst_5 = arith.constant 0.00999999977 : f32
    %7 = vector.broadcast %cst_5 : f32 to vector<8x1024xf32>
    %8 = arith.mulf %7, %6 : vector<8x1024xf32>
    %9 = arith.maximumf %6, %8 : vector<8x1024xf32>
    %10 = arith.truncf %9 : vector<8x1024xf32> to vector<8x1024xbf16>
    %c0_6 = arith.constant 0 : index
    %c0_7 = arith.constant 0 : index
    %11 = vector.load %arg3[%c0_6, %c0_7] : memref<1024x1024xbf16, #tpu.memory_space<vmem>>, vector<1024x1024xbf16>
    %cst_8 = arith.constant dense<0.000000e+00> : vector<8x1024xf32>
    %12 = tpu.matmul %10, %11, %cst_8 {dimension_numbers = #tpu.dot_dimension_numbers<[1], [0], [0], [1], [0, 0, 1, 1], [], []>} : vector<8x1024xbf16>, vector<1024x1024xbf16>, vector<8x1024xf32> -> vector<8x1024xf32>
    %c0_9 = arith.constant 0 : index
    %c0_10 = arith.constant 0 : index
    %13 = vector.load %arg4[%c0_9, %c0_10] : memref<1x1024xf32, #tpu.memory_space<vmem>>, vector<1x1024xf32>
    %14 = vector.broadcast %13 : vector<1x1024xf32> to vector<8x1024xf32>
    %15 = arith.addf %12, %14 : vector<8x1024xf32>
    %cst_11 = arith.constant 0.00999999977 : f32
    %16 = vector.broadcast %cst_11 : f32 to vector<8x1024xf32>
    %17 = arith.mulf %16, %15 : vector<8x1024xf32>
    %18 = arith.maximumf %15, %17 : vector<8x1024xf32>
    %19 = arith.truncf %18 : vector<8x1024xf32> to vector<8x1024xbf16>
    %c0_12 = arith.constant 0 : index
    %c0_13 = arith.constant 0 : index
    %20 = vector.load %arg5[%c0_12, %c0_13] : memref<1024x1024xbf16, #tpu.memory_space<vmem>>, vector<1024x1024xbf16>
    %cst_14 = arith.constant dense<0.000000e+00> : vector<8x1024xf32>
    %21 = tpu.matmul %19, %20, %cst_14 {dimension_numbers = #tpu.dot_dimension_numbers<[1], [0], [0], [1], [0, 0, 1, 1], [], []>} : vector<8x1024xbf16>, vector<1024x1024xbf16>, vector<8x1024xf32> -> vector<8x1024xf32>
    %c0_15 = arith.constant 0 : index
    %c0_16 = arith.constant 0 : index
    %22 = vector.load %arg6[%c0_15, %c0_16] : memref<1x1024xf32, #tpu.memory_space<vmem>>, vector<1x1024xf32>
    %23 = vector.broadcast %22 : vector<1x1024xf32> to vector<8x1024xf32>
    %24 = arith.addf %21, %23 : vector<8x1024xf32>
    %cst_17 = arith.constant 0.00999999977 : f32
    %25 = vector.broadcast %cst_17 : f32 to vector<8x1024xf32>
    %26 = arith.mulf %25, %24 : vector<8x1024xf32>
    %27 = arith.maximumf %24, %26 : vector<8x1024xf32>
    %28 = arith.truncf %27 : vector<8x1024xf32> to vector<8x1024xbf16>
    %c0_18 = arith.constant 0 : index
    %c0_19 = arith.constant 0 : index
    %29 = vector.load %arg7[%c0_18, %c0_19] : memref<1024x128xbf16, #tpu.memory_space<vmem>>, vector<1024x128xbf16>
    %cst_20 = arith.constant dense<0.000000e+00> : vector<8x128xf32>
    %30 = tpu.matmul %28, %29, %cst_20 {dimension_numbers = #tpu.dot_dimension_numbers<[1], [0], [0], [1], [0, 0, 1, 1], [], []>} : vector<8x1024xbf16>, vector<1024x128xbf16>, vector<8x128xf32> -> vector<8x128xf32>
    %c0_21 = arith.constant 0 : index
    %c0_22 = arith.constant 0 : index
    %31 = vector.load %arg8[%c0_21, %c0_22] : memref<1x128xf32, #tpu.memory_space<vmem>>, vector<1x128xf32>
    %32 = vector.broadcast %31 : vector<1x128xf32> to vector<8x128xf32>
    %33 = arith.addf %30, %32 : vector<8x128xf32>
    %c0_23 = arith.constant 0 : index
    %c0_24 = arith.constant 0 : index
    %34 = vector.load %arg9[%c0_23, %c0_24] : memref<8x128xf32, #tpu.memory_space<vmem>>, vector<8x128xf32>
    tpu.vector_store %arg9[%c0_23, %c0_24], %33 {strides = array<i32>} : memref<8x128xf32, #tpu.memory_space<vmem>>, vector<8x128xf32>,
    return
  }
}

</mosaic_0001>

<llo_original>
// kernel: _forward_padded.1
$region0: #{_forward_padded.1}
  #allocation0 [shape = 'u32[]', space=smem, size = 0x4, offset = 0x4, fixed_abs, tag = 'smem constant byte address 0x4 - core index']
  #allocation1 [shape = 'u32[144,128]{1,0:T(1,128)}', space=vmem, size = 0x12000, scoped, tag = 'internal scratch']
  %s0 = inlined_call_operand.hbm [shape: f32[8,128], index: 0, kind: input, shape index: {}]
  %s1 = inlined_call_operand.hbm [shape: bf16[128,1024], index: 1, kind: input, shape index: {}]
  %s2 = inlined_call_operand.hbm [shape: f32[1,1024], index: 2, kind: input, shape index: {}]
  %s3 = inlined_call_operand.hbm [shape: bf16[1024,1024], index: 3, kind: input, shape index: {}]
  %s4 = inlined_call_operand.hbm [shape: f32[1,1024], index: 4, kind: input, shape index: {}]
  %s5 = inlined_call_operand.hbm [shape: bf16[1024,1024], index: 5, kind: input, shape index: {}]
  %s6 = inlined_call_operand.hbm [shape: f32[1,1024], index: 6, kind: input, shape index: {}]
  %s7 = inlined_call_operand.hbm [shape: bf16[1024,128], index: 7, kind: input, shape index: {}]
  %s8 = inlined_call_operand.hbm [shape: f32[1,128], index: 8, kind: input, shape index: {}]
  %s9 = inlined_call_operand.hbm [shape: f32[8,128], index: 9, kind: output, shape index: {}]
  %s10 = sld [smem:[#allocation0]]
  $region82: #{_forward_padded.1} parent=0
    _
  %s12 = ssub.s32 1, %s10
  %s13 = scalar_select 0, %s12, %s10
  $region1: #{_forward_padded.1} parent=0
    #allocation2 [shape = 'u8[4096]{0}', space=vmem, size = 0x1000, scoped, tag = 'input window, operand 0, single buffered']
    #allocation3 [shape = 's32[1]{0}', space=sflag, size = 0x4, scoped, tag = 'scoped memory for _forward_padded.1']
    #allocation4 [shape = 's32[1]{0}', space=sflag, size = 0x4, scoped, tag = 'scoped memory for _forward_padded.1']
    #allocation5 [shape = 'u8[262144]{0}', space=vmem, size = 0x40000, scoped, tag = 'input window, operand 1, single buffered']
    #allocation6 [shape = 's32[1]{0}', space=sflag, size = 0x4, scoped, tag = 'scoped memory for _forward_padded.1']
    #allocation7 [shape = 'u8[4096]{0}', space=vmem, size = 0x1000, scoped, tag = 'input window, operand 2, single buffered']
    #allocation8 [shape = 'u8[2097152]{0}', space=vmem, size = 0x200000, scoped, tag = 'input window, operand 3, single buffered']
    #allocation9 [shape = 's32[1]{0}', space=sflag, size = 0x4, scoped, tag = 'scoped memory for _forward_padded.1']
    #allocation10 [shape = 'u8[4096]{0}', space=vmem, size = 0x1000, scoped, tag = 'input window, operand 4, single buffered']
    #allocation11 [shape = 'u8[2097152]{0}', space=vmem, size = 0x200000, scoped, tag = 'input window, operand 5, single buffered']
    #allocation12 [shape = 's32[1]{0}', space=sflag, size = 0x4, scoped, tag = 'scoped memory for _forward_padded.1']
    #allocation13 [shape = 'u8[4096]{0}', space=vmem, size = 0x1000, scoped, tag = 'input window, operand 6, single buffered']
    #allocation14 [shape = 'u8[262144]{0}', space=vmem, size = 0x40000, scoped, tag = 'input window, operand 7, single buffered']
    #allocation15 [shape = 's32[1]{0}', space=sflag, size = 0x4, scoped, tag = 'scoped memory for _forward_padded.1']
    #allocation16 [shape = 'u8[512]{0}', space=vmem, size = 0x400, scoped, tag = 'input window, operand 8, single buffered']
    #allocation17 [shape = 'u8[4096]{0}', space=vmem, size = 0x1000, scoped, tag = 'output window, operand 0, single buffered']
    %14 = vsyncpa [#allocation3], 0
    %15 = vsyncpa [#allocation6], 0
    %16 = vsyncpa [#allocation9], 0
    %17 = vsyncpa [#allocation12], 0
    %18 = vsyncpa [#allocation15], 0
    %19 = vsyncpa [#allocation4], 0
    // Predicated region
    $region2: #{_forward_padded.1} parent=1 // pred_check
      _
    $region3: #{_forward_padded.1} parent=1 // pred_check_branch
      %21 = sbr.rel (0) target = $region5
    $region4: #{_forward_padded.1} parent=1 // pred_region
      %s23 = ssub.s32 128, 128
      %24 = vsyncadd [#allocation3], %s23
      %s26 = sshll.u32 [#allocation2], 4
      %s27 = int_to_ptr.vmem [resolvable:$true] %s26
      %29 = dma.hbm_to_vmem [thread:$0]  %s0, 128, %s27, [#allocation3]
    $region5: #{_forward_padded.1} parent=1 // pred_fallthru
      _
    // Predicated region
    $region6: #{_forward_padded.1} parent=1 // pred_check
      _
    $region7: #{_forward_padded.1} parent=1 // pred_check_branch
      %31 = sbr.rel (0) target = $region9
    $region8: #{_forward_padded.1} parent=1 // pred_region
      %s33 = ssub.s32 8192, 8192
      %34 = vsyncadd [#allocation6], %s33
      %s35 = sshll.u32 [#allocation5], 4
      %s36 = int_to_ptr.vmem [resolvable:$true] %s35
      %41 = dma.hbm_to_vmem [thread:$0]  %s1, 8192, %s36, [#allocation6], 512, 512, 32
    $region9: #{_forward_padded.1} parent=1 // pred_fallthru
      _
    // Predicated region
    $region10: #{_forward_padded.1} parent=1 // pred_check
      _
    $region11: #{_forward_padded.1} parent=1 // pred_check_branch
      %43 = sbr.rel (0) target = $region13
    $region12: #{_forward_padded.1} parent=1 // pred_region
      %s45 = ssub.s32 128, 128
      %46 = vsyncadd [#allocation6], %s45
      %s48 = sshll.u32 [#allocation7], 4
      %s49 = int_to_ptr.vmem [resolvable:$true] %s48
      %51 = dma.hbm_to_vmem [thread:$0]  %s2, 128, %s49, [#allocation6]
    $region13: #{_forward_padded.1} parent=1 // pred_fallthru
      _
    // Predicated region
    $region14: #{_forward_padded.1} parent=1 // pred_check
      _
    $region15: #{_forward_padded.1} parent=1 // pred_check_branch
      %53 = sbr.rel (0) target = $region17
    $region16: #{_forward_padded.1} parent=1 // pred_region
      %s55 = ssub.s32 65536, 65536
      %56 = vsyncadd [#allocation9], %s55
      %s57 = sshll.u32 [#allocation8], 4
      %s58 = int_to_ptr.vmem [resolvable:$true] %s57
      %63 = dma.hbm_to_vmem [thread:$0]  %s3, 65536, %s58, [#allocation9], 512, 512, 32
    $region17: #{_forward_padded.1} parent=1 // pred_fallthru
      _
    // Predicated region
    $region18: #{_forward_padded.1} parent=1 // pred_check
      _
    $region19: #{_forward_padded.1} parent=1 // pred_check_branch
      %65 = sbr.rel (0) target = $region21
    $region20: #{_forward_padded.1} parent=1 // pred_region
      %s67 = ssub.s32 128, 128
      %68 = vsyncadd [#allocation9], %s67
      %s70 = sshll.u32 [#allocation10], 4
      %s71 = int_to_ptr.vmem [resolvable:$true] %s70
      %73 = dma.hbm_to_vmem [thread:$0]  %s4, 128, %s71, [#allocation9]
    $region21: #{_forward_padded.1} parent=1 // pred_fallthru
      _
    // Predicated region
    $region22: #{_forward_padded.1} parent=1 // pred_check
      _
    $region23: #{_forward_padded.1} parent=1 // pred_check_branch
      %75 = sbr.rel (0) target = $region25
    $region24: #{_forward_padded.1} parent=1 // pred_region
      %s77 = ssub.s32 65536, 65536
      %78 = vsyncadd [#allocation12], %s77
      %s79 = sshll.u32 [#allocation11], 4
      %s80 = int_to_ptr.vmem [resolvable:$true] %s79
      %85 = dma.hbm_to_vmem [thread:$0]  %s5, 65536, %s80, [#allocation12], 512, 512, 32
    $region25: #{_forward_padded.1} parent=1 // pred_fallthru
      _
    // Predicated region
    $region26: #{_forward_padded.1} parent=1 // pred_check
      _
    $region27: #{_forward_padded.1} parent=1 // pred_check_branch
      %87 = sbr.rel (0) target = $region29
    $region28: #{_forward_padded.1} parent=1 // pred_region
      %s89 = ssub.s32 128, 128
      %90 = vsyncadd [#allocation12], %s89
      %s92 = sshll.u32 [#allocation13], 4
      %s93 = int_to_ptr.vmem [resolvable:$true] %s92
      %95 = dma.hbm_to_vmem [thread:$0]  %s6, 128, %s93, [#allocation12]
    $region29: #{_forward_padded.1} parent=1 // pred_fallthru
      _
    // Predicated region
    $region30: #{_forward_padded.1} parent=1 // pred_check
      _
    $region31: #{_forward_padded.1} parent=1 // pred_check_branch
      %97 = sbr.rel (0) target = $region33
    $region32: #{_forward_padded.1} parent=1 // pred_region
      %s99 = ssub.s32 8192, 8192
      %100 = vsyncadd [#allocation15], %s99
      %s101 = sshll.u32 [#allocation14], 4
      %s102 = int_to_ptr.vmem [resolvable:$true] %s101
      %107 = dma.hbm_to_vmem [thread:$0]  %s7, 8192, %s102, [#allocation15], 64, 64, 4
    $region33: #{_forward_padded.1} parent=1 // pred_fallthru
      _
    // Predicated region
    $region34: #{_forward_padded.1} parent=1 // pred_check
      _
    $region35: #{_forward_padded.1} parent=1 // pred_check_branch
      %109 = sbr.rel (0) target = $region37
    $region36: #{_forward_padded.1} parent=1 // pred_region
      %s111 = ssub.s32 16, 16
      %112 = vsyncadd [#allocation15], %s111
      %s114 = sshll.u32 [#allocation16], 4
      %s115 = int_to_ptr.vmem [resolvable:$true] %s114
      %117 = dma.hbm_to_vmem [thread:$0]  %s8, 16, %s115, [#allocation15]
    $region37: #{_forward_padded.1} parent=1 // pred_fallthru
      _
    // Predicated region
    $region38: #{_forward_padded.1} parent=1 // pred_check
      _
    $region39: #{_forward_padded.1} parent=1 // pred_check_branch
      %119 = sbr.rel (0) target = $region41
    $region40: #{_forward_padded.1} parent=1 // pred_region
      %120 = dma.done [#allocation3], 128
    $region41: #{_forward_padded.1} parent=1 // pred_fallthru
      _
    // Predicated region
    $region42: #{_forward_padded.1} parent=1 // pred_check
      _
    $region43: #{_forward_padded.1} parent=1 // pred_check_branch
      %122 = sbr.rel (0) target = $region45
    $region44: #{_forward_padded.1} parent=1 // pred_region
      %123 = dma.done [#allocation6], 8192
    $region45: #{_forward_padded.1} parent=1 // pred_fallthru
      _
    // Predicated region
    $region46: #{_forward_padded.1} parent=1 // pred_check
      _
    $region47: #{_forward_padded.1} parent=1 // pred_check_branch
      %125 = sbr.rel (0) target = $region49
    $region48: #{_forward_padded.1} parent=1 // pred_region
      %126 = dma.done [#allocation6], 128
    $region49: #{_forward_padded.1} parent=1 // pred_fallthru
      _
    // Predicated region
    $region50: #{_forward_padded.1} parent=1 // pred_check
      _
    $region51: #{_forward_padded.1} parent=1 // pred_check_branch
      %128 = sbr.rel (0) target = $region53
    $region52: #{_forward_padded.1} parent=1 // pred_region
      %129 = dma.done [#allocation9], 65536
    $region53: #{_forward_padded.1} parent=1 // pred_fallthru
      _
    // Predicated region
    $region54: #{_forward_padded.1} parent=1 // pred_check
      _
    $region55: #{_forward_padded.1} parent=1 // pred_check_branch
      %131 = sbr.rel (0) target = $region57
    $region56: #{_forward_padded.1} parent=1 // pred_region
      %132 = dma.done [#allocation9], 128
    $region57: #{_forward_padded.1} parent=1 // pred_fallthru
      _
    // Predicated region
    $region58: #{_forward_padded.1} parent=1 // pred_check
      _
    $region59: #{_forward_padded.1} parent=1 // pred_check_branch
      %134 = sbr.rel (0) target = $region61
    $region60: #{_forward_padded.1} parent=1 // pred_region
      %135 = dma.done [#allocation12], 65536
    $region61: #{_forward_padded.1} parent=1 // pred_fallthru
      _
    // Predicated region
    $region62: #{_forward_padded.1} parent=1 // pred_check
      _
    $region63: #{_forward_padded.1} parent=1 // pred_check_branch
      %137 = sbr.rel (0) target = $region65
    $region64: #{_forward_padded.1} parent=1 // pred_region
      %138 = dma.done [#allocation12], 128
    $region65: #{_forward_padded.1} parent=1 // pred_fallthru
      _
    // Predicated region
    $region66: #{_forward_padded.1} parent=1 // pred_check
      _
    $region67: #{_forward_padded.1} parent=1 // pred_check_branch
      %140 = sbr.rel (0) target = $region69
    $region68: #{_forward_padded.1} parent=1 // pred_region
      %141 = dma.done [#allocation15], 8192
    $region69: #{_forward_padded.1} parent=1 // pred_fallthru
      _
    // Predicated region
    $region70: #{_forward_padded.1} parent=1 // pred_check
      _
    $region71: #{_forward_padded.1} parent=1 // pred_check_branch
      %143 = sbr.rel (0) target = $region73
    $region72: #{_forward_padded.1} parent=1 // pred_region
      %144 = dma.done [#allocation15], 16
    $region73: #{_forward_padded.1} parent=1 // pred_fallthru
      _
    %v146 = vld [vmem:[#allocation2] sm:$0xff]
    %v147 = vpack.c.bf16 %v146, %v146
    %v148 = vld [vmem:[#allocation5] sm:$0xff]
    %v149 = vld [vmem:[#allocation5 + $0x8] sm:$0xff]
    %v150 = vld [vmem:[#allocation5 + $0x10] sm:$0xff]
    %v151 = vld [vmem:[#allocation5 + $0x18] sm:$0xff]
    %v152 = vld [vmem:[#allocation5 + $0x20] sm:$0xff]
    %v153 = vld [vmem:[#allocation5 + $0x28] sm:$0xff]
    %v154 = vld [vmem:[#allocation5 + $0x30] sm:$0xff]
    %v155 = vld [vmem:[#allocation5 + $0x38] sm:$0xff]
    %v156 = vld [vmem:[#allocation5 + $0x40] sm:$0xff]
    %v157 = vld [vmem:[#allocation5 + $0x48] sm:$0xff]
    %v158 = vld [vmem:[#allocation5 + $0x50] sm:$0xff]
    %v159 = vld [vmem:[#allocation5 + $0x58] sm:$0xff]
    %v160 = vld [vmem:[#allocation5 + $0x60] sm:$0xff]
    %v161 = vld [vmem:[#allocation5 + $0x68] sm:$0xff]
    %v162 = vld [vmem:[#allocation5 + $0x70] sm:$0xff]
    %v163 = vld [vmem:[#allocation5 + $0x78] sm:$0xff]
    %v164 = vld [vmem:[#allocation5 + $0x80] sm:$0xff]
    %v165 = vld [vmem:[#allocation5 + $0x88] sm:$0xff]
    %v166 = vld [vmem:[#allocation5 + $0x90] sm:$0xff]
    %v167 = vld [vmem:[#allocation5 + $0x98] sm:$0xff]
    %v168 = vld [vmem:[#allocation5 + $0xa0] sm:$0xff]
    %v169 = vld [vmem:[#allocation5 + $0xa8] sm:$0xff]
    %v170 = vld [vmem:[#allocation5 + $0xb0] sm:$0xff]
    %v171 = vld [vmem:[#allocation5 + $0xb8] sm:$0xff]
    %v172 = vld [vmem:[#allocation5 + $0xc0] sm:$0xff]
    %v173 = vld [vmem:[#allocation5 + $0xc8] sm:$0xff]
    %v174 = vld [vmem:[#allocation5 + $0xd0] sm:$0xff]
    %v175 = vld [vmem:[#allocation5 + $0xd8] sm:$0xff]
    %v176 = vld [vmem:[#allocation5 + $0xe0] sm:$0xff]
    %v177 = vld [vmem:[#allocation5 + $0xe8] sm:$0xff]
    %v178 = vld [vmem:[#allocation5 + $0xf0] sm:$0xff]
    %v179 = vld [vmem:[#allocation5 + $0xf8] sm:$0xff]
    %v180 = vld [vmem:[#allocation5 + $0x100] sm:$0xff]
    %v181 = vld [vmem:[#allocation5 + $0x108] sm:$0xff]
    %v182 = vld [vmem:[#allocation5 + $0x110] sm:$0xff]
    %v183 = vld [vmem:[#allocation5 + $0x118] sm:$0xff]
    %v184 = vld [vmem:[#allocation5 + $0x120] sm:$0xff]
    %v185 = vld [vmem:[#allocation5 + $0x128] sm:$0xff]
    %v186 = vld [vmem:[#allocation5 + $0x130] sm:$0xff]
    %v187 = vld [vmem:[#allocation5 + $0x138] sm:$0xff]
    %v188 = vld [vmem:[#allocation5 + $0x140] sm:$0xff]
    %v189 = vld [vmem:[#allocation5 + $0x148] sm:$0xff]
    %v190 = vld [vmem:[#allocation5 + $0x150] sm:$0xff]
    %v191 = vld [vmem:[#allocation5 + $0x158] sm:$0xff]
    %v192 = vld [vmem:[#allocation5 + $0x160] sm:$0xff]
    %v193 = vld [vmem:[#allocation5 + $0x168] sm:$0xff]
    %v194 = vld [vmem:[#allocation5 + $0x170] sm:$0xff]
    %v195 = vld [vmem:[#allocation5 + $0x178] sm:$0xff]
    %v196 = vld [vmem:[#allocation5 + $0x180] sm:$0xff]
    %v197 = vld [vmem:[#allocation5 + $0x188] sm:$0xff]
    %v198 = vld [vmem:[#allocation5 + $0x190] sm:$0xff]
    %v199 = vld [vmem:[#allocation5 + $0x198] sm:$0xff]
    %v200 = vld [vmem:[#allocation5 + $0x1a0] sm:$0xff]
    %v201 = vld [vmem:[#allocation5 + $0x1a8] sm:$0xff]
    %v202 = vld [vmem:[#allocation5 + $0x1b0] sm:$0xff]
    %v203 = vld [vmem:[#allocation5 + $0x1b8] sm:$0xff]
    %v204 = vld [vmem:[#allocation5 + $0x1c0] sm:$0xff]
    %v205 = vld [vmem:[#allocation5 + $0x1c8] sm:$0xff]
    %v206 = vld [vmem:[#allocation5 + $0x1d0] sm:$0xff]
    %v207 = vld [vmem:[#allocation5 + $0x1d8] sm:$0xff]
    %v208 = vld [vmem:[#allocation5 + $0x1e0] sm:$0xff]
    %v209 = vld [vmem:[#allocation5 + $0x1e8] sm:$0xff]
    %v210 = vld [vmem:[#allocation5 + $0x1f0] sm:$0xff]
    %v211 = vld [vmem:[#allocation5 + $0x1f8] sm:$0xff]
    %v212 = vld [vmem:[#allocation7] sm:$0xff]
    %v214 = vlaneseq
    %v215 = vshrl.u32 %v214, 7
    %v216 = vsub.s32 0, %v215
    %v217 = vrot.slane %v212, %v216
    %v218 = vlaneseq
    %v219 = vshrl.u32 %v218, 7
    %v220 = vsub.s32 1, %v219
    %v221 = vrot.slane %v212, %v220
    %v222 = vlaneseq
    %v223 = vshrl.u32 %v222, 7
    %v224 = vsub.s32 2, %v223
    %v225 = vrot.slane %v212, %v224
    %v226 = vlaneseq
    %v227 = vshrl.u32 %v226, 7
    %v228 = vsub.s32 3, %v227
    %v229 = vrot.slane %v212, %v228
    %v230 = vlaneseq
    %v231 = vshrl.u32 %v230, 7
    %v232 = vsub.s32 4, %v231
    %v233 = vrot.slane %v212, %v232
    %v234 = vlaneseq
    %v235 = vshrl.u32 %v234, 7
    %v236 = vsub.s32 5, %v235
    %v237 = vrot.slane %v212, %v236
    %v238 = vlaneseq
    %v239 = vshrl.u32 %v238, 7
    %v240 = vsub.s32 6, %v239
    %v241 = vrot.slane %v212, %v240
    %v242 = vlaneseq
    %v243 = vshrl.u32 %v242, 7
    %v244 = vsub.s32 7, %v243
    %v245 = vrot.slane %v212, %v244
    %v318 = vunpack.c.l.b16 %v148
    %v319 = vunpack.c.h.b16 %v148
    %v320 = vunpack.c.l.b16 %v149
    %v321 = vunpack.c.h.b16 %v149
    %v322 = vunpack.c.l.b16 %v150
    %v323 = vunpack.c.h.b16 %v150
    %v324 = vunpack.c.l.b16 %v151
    %v325 = vunpack.c.h.b16 %v151
    %v326 = vunpack.c.l.b16 %v152
    %v327 = vunpack.c.h.b16 %v152
    %v328 = vunpack.c.l.b16 %v153
    %v329 = vunpack.c.h.b16 %v153
    %v330 = vunpack.c.l.b16 %v154
    %v331 = vunpack.c.h.b16 %v154
    %v332 = vunpack.c.l.b16 %v155
    %v333 = vunpack.c.h.b16 %v155
    %v334 = vunpack.c.l.b16 %v156
    %v335 = vunpack.c.h.b16 %v156
    %v336 = vunpack.c.l.b16 %v157
    %v337 = vunpack.c.h.b16 %v157
    %v338 = vunpack.c.l.b16 %v158
    %v339 = vunpack.c.h.b16 %v158
    %v340 = vunpack.c.l.b16 %v159
    %v341 = vunpack.c.h.b16 %v159
    %v342 = vunpack.c.l.b16 %v160
    %v343 = vunpack.c.h.b16 %v160
    %v344 = vunpack.c.l.b16 %v161
    %v345 = vunpack.c.h.b16 %v161
    %v346 = vunpack.c.l.b16 %v162
    %v347 = vunpack.c.h.b16 %v162
    %v348 = vunpack.c.l.b16 %v163
    %v349 = vunpack.c.h.b16 %v163
    %v350 = vunpack.c.l.b16 %v164
    %v351 = vunpack.c.h.b16 %v164
    %v352 = vunpack.c.l.b16 %v165
    %v353 = vunpack.c.h.b16 %v165
    %v354 = vunpack.c.l.b16 %v166
    %v355 = vunpack.c.h.b16 %v166
    %v356 = vunpack.c.l.b16 %v167
    %v357 = vunpack.c.h.b16 %v167
    %v358 = vunpack.c.l.b16 %v168
    %v359 = vunpack.c.h.b16 %v168
    %v360 = vunpack.c.l.b16 %v169
    %v361 = vunpack.c.h.b16 %v169
    %v362 = vunpack.c.l.b16 %v170
    %v363 = vunpack.c.h.b16 %v170
    %v364 = vunpack.c.l.b16 %v171
    %v365 = vunpack.c.h.b16 %v171
    %v366 = vunpack.c.l.b16 %v172
    %v367 = vunpack.c.h.b16 %v172
    %v368 = vunpack.c.l.b16 %v173
    %v369 = vunpack.c.h.b16 %v173
    %v370 = vunpack.c.l.b16 %v174
    %v371 = vunpack.c.h.b16 %v174
    %v372 = vunpack.c.l.b16 %v175
    %v373 = vunpack.c.h.b16 %v175
    %v374 = vunpack.c.l.b16 %v176
    %v375 = vunpack.c.h.b16 %v176
    %v376 = vunpack.c.l.b16 %v177
    %v377 = vunpack.c.h.b16 %v177
    %v378 = vunpack.c.l.b16 %v178
    %v379 = vunpack.c.h.b16 %v178
    %v380 = vunpack.c.l.b16 %v179
    %v381 = vunpack.c.h.b16 %v179
    %v382 = vunpack.c.l.b16 %v180
    %v383 = vunpack.c.h.b16 %v180
    %v384 = vunpack.c.l.b16 %v181
    %v385 = vunpack.c.h.b16 %v181
    %v386 = vunpack.c.l.b16 %v182
    %v387 = vunpack.c.h.b16 %v182
    %v388 = vunpack.c.l.b16 %v183
    %v389 = vunpack.c.h.b16 %v183
    %v390 = vunpack.c.l.b16 %v184
    %v391 = vunpack.c.h.b16 %v184
    %v392 = vunpack.c.l.b16 %v185
    %v393 = vunpack.c.h.b16 %v185
    %v394 = vunpack.c.l.b16 %v186
    %v395 = vunpack.c.h.b16 %v186
    %v396 = vunpack.c.l.b16 %v187
    %v397 = vunpack.c.h.b16 %v187
    %v398 = vunpack.c.l.b16 %v188
    %v399 = vunpack.c.h.b16 %v188
    %v400 = vunpack.c.l.b16 %v189
    %v401 = vunpack.c.h.b16 %v189
    %v402 = vunpack.c.l.b16 %v190
    %v403 = vunpack.c.h.b16 %v190
    %v404 = vunpack.c.l.b16 %v191
    %v405 = vunpack.c.h.b16 %v191
    %v406 = vunpack.c.l.b16 %v192
    %v407 = vunpack.c.h.b16 %v192
    %v408 = vunpack.c.l.b16 %v193
    %v409 = vunpack.c.h.b16 %v193
    %v410 = vunpack.c.l.b16 %v194
    %v411 = vunpack.c.h.b16 %v194
    %v412 = vunpack.c.l.b16 %v195
    %v413 = vunpack.c.h.b16 %v195
    %v414 = vunpack.c.l.b16 %v196
    %v415 = vunpack.c.h.b16 %v196
    %v416 = vunpack.c.l.b16 %v197
    %v417 = vunpack.c.h.b16 %v197
    %v418 = vunpack.c.l.b16 %v198
    %v419 = vunpack.c.h.b16 %v198
    %v420 = vunpack.c.l.b16 %v199
    %v421 = vunpack.c.h.b16 %v199
    %v422 = vunpack.c.l.b16 %v200
    %v423 = vunpack.c.h.b16 %v200
    %v424 = vunpack.c.l.b16 %v201
    %v425 = vunpack.c.h.b16 %v201
    %v426 = vunpack.c.l.b16 %v202
    %v427 = vunpack.c.h.b16 %v202
    %v428 = vunpack.c.l.b16 %v203
    %v429 = vunpack.c.h.b16 %v203
    %v430 = vunpack.c.l.b16 %v204
    %v431 = vunpack.c.h.b16 %v204
    %v432 = vunpack.c.l.b16 %v205
    %v433 = vunpack.c.h.b16 %v205
    %v434 = vunpack.c.l.b16 %v206
    %v435 = vunpack.c.h.b16 %v206
    %v436 = vunpack.c.l.b16 %v207
    %v437 = vunpack.c.h.b16 %v207
    %v438 = vunpack.c.l.b16 %v208
    %v439 = vunpack.c.h.b16 %v208
    %v440 = vunpack.c.l.b16 %v209
    %v441 = vunpack.c.h.b16 %v209
    %v442 = vunpack.c.l.b16 %v210
    %v443 = vunpack.c.h.b16 %v210
    %v444 = vunpack.c.l.b16 %v211
    %v445 = vunpack.c.h.b16 %v211
    %v446 = vpack.c.b16 %v326, %v318
    %v447 = vpack.c.b16 %v327, %v319
    %v448 = vpack.c.b16 %v328, %v320
    %v449 = vpack.c.b16 %v329, %v321
    %v450 = vpack.c.b16 %v330, %v322
    %v451 = vpack.c.b16 %v331, %v323
    %v452 = vpack.c.b16 %v332, %v324
    %v453 = vpack.c.b16 %v333, %v325
    %v454 = vpack.c.b16 %v342, %v334
    %v455 = vpack.c.b16 %v343, %v335
    %v456 = vpack.c.b16 %v344, %v336
    %v457 = vpack.c.b16 %v345, %v337
    %v458 = vpack.c.b16 %v346, %v338
    %v459 = vpack.c.b16 %v347, %v339
    %v460 = vpack.c.b16 %v348, %v340
    %v461 = vpack.c.b16 %v349, %v341
    %v462 = vpack.c.b16 %v358, %v350
    %v463 = vpack.c.b16 %v359, %v351
    %v464 = vpack.c.b16 %v360, %v352
    %v465 = vpack.c.b16 %v361, %v353
    %v466 = vpack.c.b16 %v362, %v354
    %v467 = vpack.c.b16 %v363, %v355
    %v468 = vpack.c.b16 %v364, %v356
    %v469 = vpack.c.b16 %v365, %v357
    %v470 = vpack.c.b16 %v374, %v366
    %v471 = vpack.c.b16 %v375, %v367
    %v472 = vpack.c.b16 %v376, %v368
    %v473 = vpack.c.b16 %v377, %v369
    %v474 = vpack.c.b16 %v378, %v370
    %v475 = vpack.c.b16 %v379, %v371
    %v476 = vpack.c.b16 %v380, %v372
    %v477 = vpack.c.b16 %v381, %v373
    %v478 = vpack.c.b16 %v390, %v382
    %v479 = vpack.c.b16 %v391, %v383
    %v480 = vpack.c.b16 %v392, %v384
    %v481 = vpack.c.b16 %v393, %v385
    %v482 = vpack.c.b16 %v394, %v386
    %v483 = vpack.c.b16 %v395, %v387
    %v484 = vpack.c.b16 %v396, %v388
    %v485 = vpack.c.b16 %v397, %v389
    %v486 = vpack.c.b16 %v406, %v398
    %v487 = vpack.c.b16 %v407, %v399
    %v488 = vpack.c.b16 %v408, %v400
    %v489 = vpack.c.b16 %v409, %v401
    %v490 = vpack.c.b16 %v410, %v402
    %v491 = vpack.c.b16 %v411, %v403
    %v492 = vpack.c.b16 %v412, %v404
    %v493 = vpack.c.b16 %v413, %v405
    %v494 = vpack.c.b16 %v422, %v414
    %v495 = vpack.c.b16 %v423, %v415
    %v496 = vpack.c.b16 %v424, %v416
    %v497 = vpack.c.b16 %v425, %v417
    %v498 = vpack.c.b16 %v426, %v418
    %v499 = vpack.c.b16 %v427, %v419
    %v500 = vpack.c.b16 %v428, %v420
    %v501 = vpack.c.b16 %v429, %v421
    %v502 = vpack.c.b16 %v438, %v430
    %v503 = vpack.c.b16 %v439, %v431
    %v504 = vpack.c.b16 %v440, %v432
    %v505 = vpack.c.b16 %v441, %v433
    %v506 = vpack.c.b16 %v442, %v434
    %v507 = vpack.c.b16 %v443, %v435
    %v508 = vpack.c.b16 %v444, %v436
    %v509 = vpack.c.b16 %v445, %v437
    %574 = vmatprep.subr.bf16.mxu0 %v503
    %575 = vmatpush1.bf16.msra.mxu0 %v502
    %576 = vmatprep.subr.bf16.mxu0 %v495
    %577 = vmatpush1.bf16.msra.mxu0 %v494
    %578 = vmatprep.subr.bf16.mxu0 %v487
    %579 = vmatpush1.bf16.msra.mxu0 %v486
    %580 = vmatprep.subr.bf16.mxu0 %v479
    %581 = vmatpush1.bf16.msra.mxu0 %v478
    %582 = vmatprep.subr.bf16.mxu0 %v471
    %583 = vmatpush1.bf16.msra.mxu0 %v470
    %584 = vmatprep.subr.bf16.mxu0 %v463
    %585 = vmatpush1.bf16.msra.mxu0 %v462
    %586 = vmatprep.subr.bf16.mxu0 %v455
    %587 = vmatpush1.bf16.msra.mxu0 %v454
    %588 = vmatprep.subr.bf16.mxu0 %v447
    %589 = vmatpush1.bf16.msra.mxu0 %v446
    %590 = vmatprep.subr.bf16.mxu0 0
    %591 = vmatpush2.bf16.msra.mxu0 0
    %592 = vmatprep.subr.bf16.mxu0 0
    %593 = vmatpush2.bf16.msra.mxu0 0
    %594 = vmatprep.subr.bf16.mxu0 0
    %595 = vmatpush2.bf16.msra.mxu0 0
    %596 = vmatprep.subr.bf16.mxu0 0
    %597 = vmatpush2.bf16.msra.mxu0 0
    %598 = vmatprep.subr.bf16.mxu0 0
    %599 = vmatpush2.bf16.msra.mxu0 0
    %600 = vmatprep.subr.bf16.mxu0 0
    %601 = vmatpush2.bf16.msra.mxu0 0
    %602 = vmatprep.subr.bf16.mxu0 0
    %603 = vmatpush2.bf16.msra.mxu0 0
    %604 = vmatprep.subr.bf16.mxu0 0
    %605 = vmatpush2.bf16.msra.mxu0 0
    %606 = vmatprep.mubr.bf16.mxu0 0
    %607 = vmatmul.mubr.bf16.gmra.mxu0 %v147
    %v608 = vpop.f32.mrf.mxu0
    %v609 = vadd.f32 %v217, %v608
    %v610 = vpop.f32.mrf.mxu0
    %v611 = vadd.f32 %v221, %v610
    %v612 = vpop.f32.mrf.mxu0
    %v613 = vpop.f32.mrf.mxu0
    %614 = vdwg.mxu0
    %615 = vmatprep.subr.bf16.mxu0 %v505
    %616 = vmatpush1.bf16.msra.mxu0 %v504
    %617 = vmatprep.subr.bf16.mxu0 %v497
    %618 = vmatpush1.bf16.msra.mxu0 %v496
    %619 = vmatprep.subr.bf16.mxu0 %v489
    %620 = vmatpush1.bf16.msra.mxu0 %v488
    %621 = vmatprep.subr.bf16.mxu0 %v481
    %622 = vmatpush1.bf16.msra.mxu0 %v480
    %623 = vmatprep.subr.bf16.mxu0 %v473
    %624 = vmatpush1.bf16.msra.mxu0 %v472
    %625 = vmatprep.subr.bf16.mxu0 %v465
    %626 = vmatpush1.bf16.msra.mxu0 %v464
    %627 = vmatprep.subr.bf16.mxu0 %v457
    %628 = vmatpush1.bf16.msra.mxu0 %v456
    %629 = vmatprep.subr.bf16.mxu0 %v449
    %630 = vmatpush1.bf16.msra.mxu0 %v448
    %631 = vmatprep.subr.bf16.mxu0 0
    %632 = vmatpush2.bf16.msra.mxu0 0
    %633 = vmatprep.subr.bf16.mxu0 0
    %634 = vmatpush2.bf16.msra.mxu0 0
    %635 = vmatprep.subr.bf16.mxu0 0
    %636 = vmatpush2.bf16.msra.mxu0 0
    %637 = vmatprep.subr.bf16.mxu0 0
    %638 = vmatpush2.bf16.msra.mxu0 0
    %639 = vmatprep.subr.bf16.mxu0 0
    %640 = vmatpush2.bf16.msra.mxu0 0
    %641 = vmatprep.subr.bf16.mxu0 0
    %642 = vmatpush2.bf16.msra.mxu0 0
    %643 = vmatprep.subr.bf16.mxu0 0
    %644 = vmatpush2.bf16.msra.mxu0 0
    %645 = vmatprep.subr.bf16.mxu0 0
    %646 = vmatpush2.bf16.msra.mxu0 0
    %647 = vmatprep.mubr.bf16.mxu0 0
    %648 = vmatmul.mubr.bf16.gmra.mxu0 %v147
    %v649 = vpop.f32.mrf.mxu0
    %v650 = vadd.f32 %v225, %v649
    %v651 = vpop.f32.mrf.mxu0
    %v652 = vadd.f32 %v229, %v651
    %v653 = vpop.f32.mrf.mxu0
    %v654 = vpop.f32.mrf.mxu0
    %655 = vdwg.mxu0
    %656 = vmatprep.subr.bf16.mxu0 %v507
    %657 = vmatpush1.bf16.msra.mxu0 %v506
    %658 = vmatprep.subr.bf16.mxu0 %v499
    %659 = vmatpush1.bf16.msra.mxu0 %v498
    %660 = vmatprep.subr.bf16.mxu0 %v491
    %661 = vmatpush1.bf16.msra.mxu0 %v490
    %662 = vmatprep.subr.bf16.mxu0 %v483
    %663 = vmatpush1.bf16.msra.mxu0 %v482
    %664 = vmatprep.subr.bf16.mxu0 %v475
    %665 = vmatpush1.bf16.msra.mxu0 %v474
    %666 = vmatprep.subr.bf16.mxu0 %v467
    %667 = vmatpush1.bf16.msra.mxu0 %v466
    %668 = vmatprep.subr.bf16.mxu0 %v459
    %669 = vmatpush1.bf16.msra.mxu0 %v458
    %670 = vmatprep.subr.bf16.mxu0 %v451
    %671 = vmatpush1.bf16.msra.mxu0 %v450
    %672 = vmatprep.subr.bf16.mxu0 0
    %673 = vmatpush2.bf16.msra.mxu0 0
    %674 = vmatprep.subr.bf16.mxu0 0
    %675 = vmatpush2.bf16.msra.mxu0 0
    %676 = vmatprep.subr.bf16.mxu0 0
    %677 = vmatpush2.bf16.msra.mxu0 0
    %678 = vmatprep.subr.bf16.mxu0 0
    %679 = vmatpush2.bf16.msra.mxu0 0
    %680 = vmatprep.subr.bf16.mxu0 0
    %681 = vmatpush2.bf16.msra.mxu0 0
    %682 = vmatprep.subr.bf16.mxu0 0
    %683 = vmatpush2.bf16.msra.mxu0 0
    %684 = vmatprep.subr.bf16.mxu0 0
    %685 = vmatpush2.bf16.msra.mxu0 0
    %686 = vmatprep.subr.bf16.mxu0 0
    %687 = vmatpush2.bf16.msra.mxu0 0
    %688 = vmatprep.mubr.bf16.mxu0 0
    %689 = vmatmul.mubr.bf16.gmra.mxu0 %v147
    %v690 = vpop.f32.mrf.mxu0
    %v691 = vadd.f32 %v233, %v690
    %v692 = vpop.f32.mrf.mxu0
    %v693 = vadd.f32 %v237, %v692
    %v694 = vpop.f32.mrf.mxu0
    %v695 = vpop.f32.mrf.mxu0
    %696 = vdwg.mxu0
    %697 = vmatprep.subr.bf16.mxu0 %v509
    %698 = vmatpush1.bf16.msra.mxu0 %v508
    %699 = vmatprep.subr.bf16.mxu0 %v501
    %700 = vmatpush1.bf16.msra.mxu0 %v500
    %701 = vmatprep.subr.bf16.mxu0 %v493
    %702 = vmatpush1.bf16.msra.mxu0 %v492
    %703 = vmatprep.subr.bf16.mxu0 %v485
    %704 = vmatpush1.bf16.msra.mxu0 %v484
    %705 = vmatprep.subr.bf16.mxu0 %v477
    %706 = vmatpush1.bf16.msra.mxu0 %v476
    %707 = vmatprep.subr.bf16.mxu0 %v469
    %708 = vmatpush1.bf16.msra.mxu0 %v468
    %709 = vmatprep.subr.bf16.mxu0 %v461
    %710 = vmatpush1.bf16.msra.mxu0 %v460
    %711 = vmatprep.subr.bf16.mxu0 %v453
    %712 = vmatpush1.bf16.msra.mxu0 %v452
    %713 = vmatprep.subr.bf16.mxu0 0
    %714 = vmatpush2.bf16.msra.mxu0 0
    %715 = vmatprep.subr.bf16.mxu0 0
    %716 = vmatpush2.bf16.msra.mxu0 0
    %717 = vmatprep.subr.bf16.mxu0 0
    %718 = vmatpush2.bf16.msra.mxu0 0
    %719 = vmatprep.subr.bf16.mxu0 0
    %720 = vmatpush2.bf16.msra.mxu0 0
    %721 = vmatprep.subr.bf16.mxu0 0
    %722 = vmatpush2.bf16.msra.mxu0 0
    %723 = vmatprep.subr.bf16.mxu0 0
    %724 = vmatpush2.bf16.msra.mxu0 0
    %725 = vmatprep.subr.bf16.mxu0 0
    %726 = vmatpush2.bf16.msra.mxu0 0
    %727 = vmatprep.subr.bf16.mxu0 0
    %728 = vmatpush2.bf16.msra.mxu0 0
    %729 = vmatprep.mubr.bf16.mxu0 0
    %730 = vmatmul.mubr.bf16.gmra.mxu0 %v147
    %v731 = vpop.f32.mrf.mxu0
    %v732 = vadd.f32 %v241, %v731
    %v733 = vpop.f32.mrf.mxu0
    %v734 = vadd.f32 %v245, %v733
    %v735 = vpop.f32.mrf.mxu0
    %v736 = vpop.f32.mrf.mxu0
    %737 = vdwg.mxu0
    %v738 = vmul.f32 %v609, 0.01
    %v739 = vmul.f32 %v611, 0.01
    %v740 = vmul.f32 %v650, 0.01
    %v741 = vmul.f32 %v652, 0.01
    %v742 = vmul.f32 %v691, 0.01
    %v743 = vmul.f32 %v693, 0.01
    %v744 = vmul.f32 %v732, 0.01
    %v745 = vmul.f32 %v734, 0.01
    %v746 = vmax.f32 %v609, %v738
    %v747 = vmax.f32 %v611, %v739
    %v748 = vmax.f32 %v650, %v740
    %v749 = vmax.f32 %v652, %v741
    %v750 = vmax.f32 %v691, %v742
    %v751 = vmax.f32 %v693, %v743
    %v752 = vmax.f32 %v732, %v744
    %v753 = vmax.f32 %v734, %v745
    %v754 = vpack.c.bf16 %v746, %v746
    %v755 = vpack.c.bf16 %v747, %v747
    %v756 = vpack.c.bf16 %v748, %v748
    %v757 = vpack.c.bf16 %v749, %v749
    %v758 = vpack.c.bf16 %v750, %v750
    %v759 = vpack.c.bf16 %v751, %v751
    %v760 = vpack.c.bf16 %v752, %v752
    %v761 = vpack.c.bf16 %v753, %v753
    %v762 = vld [vmem:[#allocation8] sm:$0xff]
    %v763 = vld [vmem:[#allocation8 + $0x8] sm:$0xff]
    %v764 = vld [vmem:[#allocation8 + $0x10] sm:$0xff]
    %v765 = vld [vmem:[#allocation8 + $0x18] sm:$0xff]
    %v766 = vld [vmem:[#allocation8 + $0x20] sm:$0xff]
    %v767 = vld [vmem:[#allocation8 + $0x28] sm:$0xff]
    %v768 = vld [vmem:[#allocation8 + $0x30] sm:$0xff]
    %v769 = vld [vmem:[#allocation8 + $0x38] sm:$0xff]
    %v770 = vld [vmem:[#allocation8 + $0x40] sm:$0xff]
    %v771 = vld [vmem:[#allocation8 + $0x48] sm:$0xff]
    %v772 = vld [vmem:[#allocation8 + $0x50] sm:$0xff]
    %v773 = vld [vmem:[#allocation8 + $0x58] sm:$0xff]
    %v774 = vld [vmem:[#allocation8 + $0x60] sm:$0xff]
    %v775 = vld [vmem:[#allocation8 + $0x68] sm:$0xff]
    %v776 = vld [vmem:[#allocation8 + $0x70] sm:$0xff]
    %v777 = vld [vmem:[#allocation8 + $0x78] sm:$0xff]
    %v778 = vld [vmem:[#allocation8 + $0x80] sm:$0xff]
    %v779 = vld [vmem:[#allocation8 + $0x88] sm:$0xff]
    %v780 = vld [vmem:[#allocation8 + $0x90] sm:$0xff]
    %v781 = vld [vmem:[#allocation8 + $0x98] sm:$0xff]
    %v782 = vld [vmem:[#allocation8 + $0xa0] sm:$0xff]
    %v783 = vld [vmem:[#allocation8 + $0xa8] sm:$0xff]
    %v784 = vld [vmem:[#allocation8 + $0xb0] sm:$0xff]
    %v785 = vld [vmem:[#allocation8 + $0xb8] sm:$0xff]
    %v786 = vld [vmem:[#allocation8 + $0xc0] sm:$0xff]
    %v787 = vld [vmem:[#allocation8 + $0xc8] sm:$0xff]
    %v788 = vld [vmem:[#allocation8 + $0xd0] sm:$0xff]
    %v789 = vld [vmem:[#allocation8 + $0xd8] sm:$0xff]
    %v790 = vld [vmem:[#allocation8 + $0xe0] sm:$0xff]
    %v791 = vld [vmem:[#allocation8 + $0xe8] sm:$0xff]
    %v792 = vld [vmem:[#allocation8 + $0xf0] sm:$0xff]
    %v793 = vld [vmem:[#allocation8 + $0xf8] sm:$0xff]
    %v794 = vld [vmem:[#allocation8 + $0x100] sm:$0xff]
    %v795 = vld [vmem:[#allocation8 + $0x108] sm:$0xff]
    %v796 = vld [vmem:[#allocation8 + $0x110] sm:$0xff]
    %v797 = vld [vmem:[#allocation8 + $0x118] sm:$0xff]
    %v798 = vld [vmem:[#allocation8 + $0x120] sm:$0xff]
    %v799 = vld [vmem:[#allocation8 + $0x128] sm:$0xff]
    %v800 = vld [vmem:[#allocation8 + $0x130] sm:$0xff]
    %v801 = vld [vmem:[#allocation8 + $0x138] sm:$0xff]
    %v802 = vld [vmem:[#allocation8 + $0x140] sm:$0xff]
    %v803 = vld [vmem:[#allocation8 + $0x148] sm:$0xff]
    %v804 = vld [vmem:[#allocation8 + $0x150] sm:$0xff]
    %v805 = vld [vmem:[#allocation8 + $0x158] sm:$0xff]
    %v806 = vld [vmem:[#allocation8 + $0x160] sm:$0xff]
    %v807 = vld [vmem:[#allocation8 + $0x168] sm:$0xff]
    %v808 = vld [vmem:[#allocation8 + $0x170] sm:$0xff]
    %v809 = vld [vmem:[#allocation8 + $0x178] sm:$0xff]
    %v810 = vld [vmem:[#allocation8 + $0x180] sm:$0xff]
    %v811 = vld [vmem:[#allocation8 + $0x188] sm:$0xff]
    %v812 = vld [vmem:[#allocation8 + $0x190] sm:$0xff]
    %v813 = vld [vmem:[#allocation8 + $0x198] sm:$0xff]
    %v814 = vld [vmem:[#allocation8 + $0x1a0] sm:$0xff]
    %v815 = vld [vmem:[#allocation8 + $0x1a8] sm:$0xff]
    %v816 = vld [vmem:[#allocation8 + $0x1b0] sm:$0xff]
    %v817 = vld [vmem:[#allocation8 + $0x1b8] sm:$0xff]
    %v818 = vld [vmem:[#allocation8 + $0x1c0] sm:$0xff]
    %v819 = vld [vmem:[#allocation8 + $0x1c8] sm:$0xff]
    %v820 = vld [vmem:[#allocation8 + $0x1d0] sm:$0xff]
    %v821 = vld [vmem:[#allocation8 + $0x1d8] sm:$0xff]
    %v822 = vld [vmem:[#allocation8 + $0x1e0] sm:$0xff]
    %v823 = vld [vmem:[#allocation8 + $0x1e8] sm:$0xff]
    %v824 = vld [vmem:[#allocation8 + $0x1f0] sm:$0xff]
    %v825 = vld [vmem:[#allocation8 + $0x1f8] sm:$0xff]
    %v826 = vld [vmem:[#allocation8 + $0x200] sm:$0xff]
    %v827 = vld [vmem:[#allocation8 + $0x208] sm:$0xff]
    %v828 = vld [vmem:[#allocation8 + $0x210] sm:$0xff]
    %v829 = vld [vmem:[#allocation8 + $0x218] sm:$0xff]
    %v830 = vld [vmem:[#allocation8 + $0x220] sm:$0xff]
    %v831 = vld [vmem:[#allocation8 + $0x228] sm:$0xff]
    %v832 = vld [vmem:[#allocation8 + $0x230] sm:$0xff]
    %v833 = vld [vmem:[#allocation8 + $0x238] sm:$0xff]
    %v834 = vld [vmem:[#allocation8 + $0x240] sm:$0xff]
    %v835 = vld [vmem:[#allocation8 + $0x248] sm:$0xff]
    %v836 = vld [vmem:[#allocation8 + $0x250] sm:$0xff]
    %v837 = vld [vmem:[#allocation8 + $0x258] sm:$0xff]
    %v838 = vld [vmem:[#allocation8 + $0x260] sm:$0xff]
    %v839 = vld [vmem:[#allocation8 + $0x268] sm:$0xff]
    %v840 = vld [vmem:[#allocation8 + $0x270] sm:$0xff]
    %v841 = vld [vmem:[#allocation8 + $0x278] sm:$0xff]
    %v842 = vld [vmem:[#allocation8 + $0x280] sm:$0xff]
    %v843 = vld [vmem:[#allocation8 + $0x288] sm:$0xff]
    %v844 = vld [vmem:[#allocation8 + $0x290] sm:$0xff]
    %v845 = vld [vmem:[#allocation8 + $0x298] sm:$0xff]
    %v846 = vld [vmem:[#allocation8 + $0x2a0] sm:$0xff]
    %v847 = vld [vmem:[#allocation8 + $0x2a8] sm:$0xff]
    %v848 = vld [vmem:[#allocation8 + $0x2b0] sm:$0xff]
    %v849 = vld [vmem:[#allocation8 + $0x2b8] sm:$0xff]
    %v850 = vld [vmem:[#allocation8 + $0x2c0] sm:$0xff]
    %v851 = vld [vmem:[#allocation8 + $0x2c8] sm:$0xff]
    %v852 = vld [vmem:[#allocation8 + $0x2d0] sm:$0xff]
    %v853 = vld [vmem:[#allocation8 + $0x2d8] sm:$0xff]
    %v854 = vld [vmem:[#allocation8 + $0x2e0] sm:$0xff]
    %v855 = vld [vmem:[#allocation8 + $0x2e8] sm:$0xff]
    %v856 = vld [vmem:[#allocation8 + $0x2f0] sm:$0xff]
    %v857 = vld [vmem:[#allocation8 + $0x2f8] sm:$0xff]
    %v858 = vld [vmem:[#allocation8 + $0x300] sm:$0xff]
    %v859 = vld [vmem:[#allocation8 + $0x308] sm:$0xff]
    %v860 = vld [vmem:[#allocation8 + $0x310] sm:$0xff]
    %v861 = vld [vmem:[#allocation8 + $0x318] sm:$0xff]
    %v862 = vld [vmem:[#allocation8 + $0x320] sm:$0xff]
    %v863 = vld [vmem:[#allocation8 + $0x328] sm:$0xff]
    %v864 = vld [vmem:[#allocation8 + $0x330] sm:$0xff]
    %v865 = vld [vmem:[#allocation8 + $0x338] sm:$0xff]
    %v866 = vld [vmem:[#allocation8 + $0x340] sm:$0xff]
    %v867 = vld [vmem:[#allocation8 + $0x348] sm:$0xff]
    %v868 = vld [vmem:[#allocation8 + $0x350] sm:$0xff]
    %v869 = vld [vmem:[#allocation8 + $0x358] sm:$0xff]
    %v870 = vld [vmem:[#allocation8 + $0x360] sm:$0xff]
    %v871 = vld [vmem:[#allocation8 + $0x368] sm:$0xff]
    %v872 = vld [vmem:[#allocation8 + $0x370] sm:$0xff]
    %v873 = vld [vmem:[#allocation8 + $0x378] sm:$0xff]
    %v874 = vld [vmem:[#allocation8 + $0x380] sm:$0xff]
    %v875 = vld [vmem:[#allocation8 + $0x388] sm:$0xff]
    %v876 = vld [vmem:[#allocation8 + $0x390] sm:$0xff]
    %v877 = vld [vmem:[#allocation8 + $0x398] sm:$0xff]
    %v878 = vld [vmem:[#allocation8 + $0x3a0] sm:$0xff]
    %v879 = vld [vmem:[#allocation8 + $0x3a8] sm:$0xff]
    %v880 = vld [vmem:[#allocation8 + $0x3b0] sm:$0xff]
    %v881 = vld [vmem:[#allocation8 + $0x3b8] sm:$0xff]
    %v882 = vld [vmem:[#allocation8 + $0x3c0] sm:$0xff]
    %v883 = vld [vmem:[#allocation8 + $0x3c8] sm:$0xff]
    %v884 = vld [vmem:[#allocation8 + $0x3d0] sm:$0xff]
    %v885 = vld [vmem:[#allocation8 + $0x3d8] sm:$0xff]
    %v886 = vld [vmem:[#allocation8 + $0x3e0] sm:$0xff]
    %v887 = vld [vmem:[#allocation8 + $0x3e8] sm:$0xff]
    %v888 = vld [vmem:[#allocation8 + $0x3f0] sm:$0xff]
    %v889 = vld [vmem:[#allocation8 + $0x3f8] sm:$0xff]
    %v890 = vld [vmem:[#allocation8 + $0x400] sm:$0xff]
    %v891 = vld [vmem:[#allocation8 + $0x408] sm:$0xff]
    %v892 = vld [vmem:[#allocation8 + $0x410] sm:$0xff]
    %v893 = vld [vmem:[#allocation8 + $0x418] sm:$0xff]
    %v894 = vld [vmem:[#allocation8 + $0x420] sm:$0xff]
    %v895 = vld [vmem:[#allocation8 + $0x428] sm:$0xff]
    %v896 = vld [vmem:[#allocation8 + $0x430] sm:$0xff]
    %v897 = vld [vmem:[#allocation8 + $0x438] sm:$0xff]
    %v898 = vld [vmem:[#allocation8 + $0x440] sm:$0xff]
    %v899 = vld [vmem:[#allocation8 + $0x448] sm:$0xff]
    %v900 = vld [vmem:[#allocation8 + $0x450] sm:$0xff]
    %v901 = vld [vmem:[#allocation8 + $0x458] sm:$0xff]
    %v902 = vld [vmem:[#allocation8 + $0x460] sm:$0xff]
    %v903 = vld [vmem:[#allocation8 + $0x468] sm:$0xff]
    %v904 = vld [vmem:[#allocation8 + $0x470] sm:$0xff]
    %v905 = vld [vmem:[#allocation8 + $0x478] sm:$0xff]
    %v906 = vld [vmem:[#allocation8 + $0x480] sm:$0xff]
    %v907 = vld [vmem:[#allocation8 + $0x488] sm:$0xff]
    %v908 = vld [vmem:[#allocation8 + $0x490] sm:$0xff]
    %v909 = vld [vmem:[#allocation8 + $0x498] sm:$0xff]
    %v910 = vld [vmem:[#allocation8 + $0x4a0] sm:$0xff]
    %v911 = vld [vmem:[#allocation8 + $0x4a8] sm:$0xff]
    %v912 = vld [vmem:[#allocation8 + $0x4b0] sm:$0xff]
    %v913 = vld [vmem:[#allocation8 + $0x4b8] sm:$0xff]
    %v914 = vld [vmem:[#allocation8 + $0x4c0] sm:$0xff]
    %v915 = vld [vmem:[#allocation8 + $0x4c8] sm:$0xff]
    %v916 = vld [vmem:[#allocation8 + $0x4d0] sm:$0xff]
    %v917 = vld [vmem:[#allocation8 + $0x4d8] sm:$0xff]
    %v918 = vld [vmem:[#allocation8 + $0x4e0] sm:$0xff]
    %v919 = vld [vmem:[#allocation8 + $0x4e8] sm:$0xff]
    %v920 = vld [vmem:[#allocation8 + $0x4f0] sm:$0xff]
    %v921 = vld [vmem:[#allocation8 + $0x4f8] sm:$0xff]
    %v922 = vld [vmem:[#allocation8 + $0x500] sm:$0xff]
    %v923 = vld [vmem:[#allocation8 + $0x508] sm:$0xff]
    %v924 = vld [vmem:[#allocation8 + $0x510] sm:$0xff]
    %v925 = vld [vmem:[#allocation8 + $0x518] sm:$0xff]
    %v926 = vld [vmem:[#allocation8 + $0x520] sm:$0xff]
    %v927 = vld [vmem:[#allocation8 + $0x528] sm:$0xff]
    %v928 = vld [vmem:[#allocation8 + $0x530] sm:$0xff]
    %v929 = vld [vmem:[#allocation8 + $0x538] sm:$0xff]
    %v930 = vld [vmem:[#allocation8 + $0x540] sm:$0xff]
    %v931 = vld [vmem:[#allocation8 + $0x548] sm:$0xff]
    %v932 = vld [vmem:[#allocation8 + $0x550] sm:$0xff]
    %v933 = vld [vmem:[#allocation8 + $0x558] sm:$0xff]
    %v934 = vld [vmem:[#allocation8 + $0x560] sm:$0xff]
    %v935 = vld [vmem:[#allocation8 + $0x568] sm:$0xff]
    %v936 = vld [vmem:[#allocation8 + $0x570] sm:$0xff]
    %v937 = vld [vmem:[#allocation8 + $0x578] sm:$0xff]
    %v938 = vld [vmem:[#allocation8 + $0x580] sm:$0xff]
    %v939 = vld [vmem:[#allocation8 + $0x588] sm:$0xff]
    %v940 = vld [vmem:[#allocation8 + $0x590] sm:$0xff]
    %v941 = vld [vmem:[#allocation8 + $0x598] sm:$0xff]
    %v942 = vld [vmem:[#allocation8 + $0x5a0] sm:$0xff]
    %v943 = vld [vmem:[#allocation8 + $0x5a8] sm:$0xff]
    %v944 = vld [vmem:[#allocation8 + $0x5b0] sm:$0xff]
    %v945 = vld [vmem:[#allocation8 + $0x5b8] sm:$0xff]
    %v946 = vld [vmem:[#allocation8 + $0x5c0] sm:$0xff]
    %v947 = vld [vmem:[#allocation8 + $0x5c8] sm:$0xff]
    %v948 = vld [vmem:[#allocation8 + $0x5d0] sm:$0xff]
    %v949 = vld [vmem:[#allocation8 + $0x5d8] sm:$0xff]
    %v950 = vld [vmem:[#allocation8 + $0x5e0] sm:$0xff]
    %v951 = vld [vmem:[#allocation8 + $0x5e8] sm:$0xff]
    %v952 = vld [vmem:[#allocation8 + $0x5f0] sm:$0xff]
    %v953 = vld [vmem:[#allocation8 + $0x5f8] sm:$0xff]
    %v954 = vld [vmem:[#allocation8 + $0x600] sm:$0xff]
    %v955 = vld [vmem:[#allocation8 + $0x608] sm:$0xff]
    %v956 = vld [vmem:[#allocation8 + $0x610] sm:$0xff]
    %v957 = vld [vmem:[#allocation8 + $0x618] sm:$0xff]
    %v958 = vld [vmem:[#allocation8 + $0x620] sm:$0xff]
    %v959 = vld [vmem:[#allocation8 + $0x628] sm:$0xff]
    %v960 = vld [vmem:[#allocation8 + $0x630] sm:$0xff]
    %v961 = vld [vmem:[#allocation8 + $0x638] sm:$0xff]
    %v962 = vld [vmem:[#allocation8 + $0x640] sm:$0xff]
    %v963 = vld [vmem:[#allocation8 + $0x648] sm:$0xff]
    %v964 = vld [vmem:[#allocation8 + $0x650] sm:$0xff]
    %v965 = vld [vmem:[#allocation8 + $0x658] sm:$0xff]
    %v966 = vld [vmem:[#allocation8 + $0x660] sm:$0xff]
    %v967 = vld [vmem:[#allocation8 + $0x668] sm:$0xff]
    %v968 = vld [vmem:[#allocation8 + $0x670] sm:$0xff]
    %v969 = vld [vmem:[#allocation8 + $0x678] sm:$0xff]
    %v970 = vld [vmem:[#allocation8 + $0x680] sm:$0xff]
    %v971 = vld [vmem:[#allocation8 + $0x688] sm:$0xff]
    %v972 = vld [vmem:[#allocation8 + $0x690] sm:$0xff]
    %v973 = vld [vmem:[#allocation8 + $0x698] sm:$0xff]
    %v974 = vld [vmem:[#allocation8 + $0x6a0] sm:$0xff]
    %v975 = vld [vmem:[#allocation8 + $0x6a8] sm:$0xff]
    %v976 = vld [vmem:[#allocation8 + $0x6b0] sm:$0xff]
    %v977 = vld [vmem:[#allocation8 + $0x6b8] sm:$0xff]
    %v978 = vld [vmem:[#allocation8 + $0x6c0] sm:$0xff]
    %v979 = vld [vmem:[#allocation8 + $0x6c8] sm:$0xff]
    %v980 = vld [vmem:[#allocation8 + $0x6d0] sm:$0xff]
    %v981 = vld [vmem:[#allocation8 + $0x6d8] sm:$0xff]
    %v982 = vld [vmem:[#allocation8 + $0x6e0] sm:$0xff]
    %v983 = vld [vmem:[#allocation8 + $0x6e8] sm:$0xff]
    %v984 = vld [vmem:[#allocation8 + $0x6f0] sm:$0xff]
    %v985 = vld [vmem:[#allocation8 + $0x6f8] sm:$0xff]
    %v986 = vld [vmem:[#allocation8 + $0x700] sm:$0xff]
    %v987 = vld [vmem:[#allocation8 + $0x708] sm:$0xff]
    %v988 = vld [vmem:[#allocation8 + $0x710] sm:$0xff]
    %v989 = vld [vmem:[#allocation8 + $0x718] sm:$0xff]
    %v990 = vld [vmem:[#allocation8 + $0x720] sm:$0xff]
    %v991 = vld [vmem:[#allocation8 + $0x728] sm:$0xff]
    %v992 = vld [vmem:[#allocation8 + $0x730] sm:$0xff]
    %v993 = vld [vmem:[#allocation8 + $0x738] sm:$0xff]
    %v994 = vld [vmem:[#allocation8 + $0x740] sm:$0xff]
    %v995 = vld [vmem:[#allocation8 + $0x748] sm:$0xff]
    %v996 = vld [vmem:[#allocation8 + $0x750] sm:$0xff]
    %v997 = vld [vmem:[#allocation8 + $0x758] sm:$0xff]
    %v998 = vld [vmem:[#allocation8 + $0x760] sm:$0xff]
    %v999 = vld [vmem:[#allocation8 + $0x768] sm:$0xff]
    %v1000 = vld [vmem:[#allocation8 + $0x770] sm:$0xff]
    %v1001 = vld [vmem:[#allocation8 + $0x778] sm:$0xff]
    %v1002 = vld [vmem:[#allocation8 + $0x780] sm:$0xff]
    %v1003 = vld [vmem:[#allocation8 + $0x788] sm:$0xff]
    %v1004 = vld [vmem:[#allocation8 + $0x790] sm:$0xff]
    %v1005 = vld [vmem:[#allocation8 + $0x798] sm:$0xff]
    %v1006 = vld [vmem:[#allocation8 + $0x7a0] sm:$0xff]
    %v1007 = vld [vmem:[#allocation8 + $0x7a8] sm:$0xff]
    %v1008 = vld [vmem:[#allocation8 + $0x7b0] sm:$0xff]
    %v1009 = vld [vmem:[#allocation8 + $0x7b8] sm:$0xff]
    %v1010 = vld [vmem:[#allocation8 + $0x7c0] sm:$0xff]
    %v1011 = vld [vmem:[#allocation8 + $0x7c8] sm:$0xff]
    %v1012 = vld [vmem:[#allocation8 + $0x7d0] sm:$0xff]
    %v1013 = vld [vmem:[#allocation8 + $0x7d8] sm:$0xff]
    %v1014 = vld [vmem:[#allocation8 + $0x7e0] sm:$0xff]
    %v1015 = vld [vmem:[#allocation8 + $0x7e8] sm:$0xff]
    %v1016 = vld [vmem:[#allocation8 + $0x7f0] sm:$0xff]
    %v1017 = vld [vmem:[#allocation8 + $0x7f8] sm:$0xff]
    %v1018 = vld [vmem:[#allocation8 + $0x800] sm:$0xff]
    %v1019 = vld [vmem:[#allocation8 + $0x808] sm:$0xff]
    %v1020 = vld [vmem:[#allocation8 + $0x810] sm:$0xff]
    %v1021 = vld [vmem:[#allocation8 + $0x818] sm:$0xff]
    %v1022 = vld [vmem:[#allocation8 + $0x820] sm:$0xff]
    %v1023 = vld [vmem:[#allocation8 + $0x828] sm:$0xff]
    %v1024 = vld [vmem:[#allocation8 + $0x830] sm:$0xff]
    %v1025 = vld [vmem:[#allocation8 + $0x838] sm:$0xff]
    %v1026 = vld [vmem:[#allocation8 + $0x840] sm:$0xff]
    %v1027 = vld [vmem:[#allocation8 + $0x848] sm:$0xff]
    %v1028 = vld [vmem:[#allocation8 + $0x850] sm:$0xff]
    %v1029 = vld [vmem:[#allocation8 + $0x858] sm:$0xff]
    %v1030 = vld [vmem:[#allocation8 + $0x860] sm:$0xff]
    %v1031 = vld [vmem:[#allocation8 + $0x868] sm:$0xff]
    %v1032 = vld [vmem:[#allocation8 + $0x870] sm:$0xff]
    %v1033 = vld [vmem:[#allocation8 + $0x878] sm:$0xff]
    %v1034 = vld [vmem:[#allocation8 + $0x880] sm:$0xff]
    %v1035 = vld [vmem:[#allocation8 + $0x888] sm:$0xff]
    %v1036 = vld [vmem:[#allocation8 + $0x890] sm:$0xff]
    %v1037 = vld [vmem:[#allocation8 + $0x898] sm:$0xff]
    %v1038 = vld [vmem:[#allocation8 + $0x8a0] sm:$0xff]
    %v1039 = vld [vmem:[#allocation8 + $0x8a8] sm:$0xff]
    %v1040 = vld [vmem:[#allocation8 + $0x8b0] sm:$0xff]
    %v1041 = vld [vmem:[#allocation8 + $0x8b8] sm:$0xff]
    %v1042 = vld [vmem:[#allocation8 + $0x8c0] sm:$0xff]
    %v1043 = vld [vmem:[#allocation8 + $0x8c8] sm:$0xff]
    %v1044 = vld [vmem:[#allocation8 + $0x8d0] sm:$0xff]
    %v1045 = vld [vmem:[#allocation8 + $0x8d8] sm:$0xff]
    %v1046 = vld [vmem:[#allocation8 + $0x8e0] sm:$0xff]
    %v1047 = vld [vmem:[#allocation8 + $0x8e8] sm:$0xff]
    %v1048 = vld [vmem:[#allocation8 + $0x8f0] sm:$0xff]
    %v1049 = vld [vmem:[#allocation8 + $0x8f8] sm:$0xff]
    %v1050 = vld [vmem:[#allocation8 + $0x900] sm:$0xff]
    %v1051 = vld [vmem:[#allocation8 + $0x908] sm:$0xff]
    %v1052 = vld [vmem:[#allocation8 + $0x910] sm:$0xff]
    %v1053 = vld [vmem:[#allocation8 + $0x918] sm:$0xff]
    %v1054 = vld [vmem:[#allocation8 + $0x920] sm:$0xff]
    %v1055 = vld [vmem:[#allocation8 + $0x928] sm:$0xff]
    %v1056 = vld [vmem:[#allocation8 + $0x930] sm:$0xff]
    %v1057 = vld [vmem:[#allocation8 + $0x938] sm:$0xff]
    %v1058 = vld [vmem:[#allocation8 + $0x940] sm:$0xff]
    %v1059 = vld [vmem:[#allocation8 + $0x948] sm:$0xff]
    %v1060 = vld [vmem:[#allocation8 + $0x950] sm:$0xff]
    %v1061 = vld [vmem:[#allocation8 + $0x958] sm:$0xff]
    %v1062 = vld [vmem:[#allocation8 + $0x960] sm:$0xff]
    %v1063 = vld [vmem:[#allocation8 + $0x968] sm:$0xff]
    %v1064 = vld [vmem:[#allocation8 + $0x970] sm:$0xff]
    %v1065 = vld [vmem:[#allocation8 + $0x978] sm:$0xff]
    %v1066 = vld [vmem:[#allocation8 + $0x980] sm:$0xff]
    %v1067 = vld [vmem:[#allocation8 + $0x988] sm:$0xff]
    %v1068 = vld [vmem:[#allocation8 + $0x990] sm:$0xff]
    %v1069 = vld [vmem:[#allocation8 + $0x998] sm:$0xff]
    %v1070 = vld [vmem:[#allocation8 + $0x9a0] sm:$0xff]
    %v1071 = vld [vmem:[#allocation8 + $0x9a8] sm:$0xff]
    %v1072 = vld [vmem:[#allocation8 + $0x9b0] sm:$0xff]
    %v1073 = vld [vmem:[#allocation8 + $0x9b8] sm:$0xff]
    %v1074 = vld [vmem:[#allocation8 + $0x9c0] sm:$0xff]
    %v1075 = vld [vmem:[#allocation8 + $0x9c8] sm:$0xff]
    %v1076 = vld [vmem:[#allocation8 + $0x9d0] sm:$0xff]
    %v1077 = vld [vmem:[#allocation8 + $0x9d8] sm:$0xff]
    %v1078 = vld [vmem:[#allocation8 + $0x9e0] sm:$0xff]
    %v1079 = vld [vmem:[#allocation8 + $0x9e8] sm:$0xff]
    %v1080 = vld [vmem:[#allocation8 + $0x9f0] sm:$0xff]
    %v1081 = vld [vmem:[#allocation8 + $0x9f8] sm:$0xff]
    %v1082 = vld [vmem:[#allocation8 + $0xa00] sm:$0xff]
    %v1083 = vld [vmem:[#allocation8 + $0xa08] sm:$0xff]
    %v1084 = vld [vmem:[#allocation8 + $0xa10] sm:$0xff]
    %v1085 = vld [vmem:[#allocation8 + $0xa18] sm:$0xff]
    %v1086 = vld [vmem:[#allocation8 + $0xa20] sm:$0xff]
    %v1087 = vld [vmem:[#allocation8 + $0xa28] sm:$0xff]
    %v1088 = vld [vmem:[#allocation8 + $0xa30] sm:$0xff]
    %v1089 = vld [vmem:[#allocation8 + $0xa38] sm:$0xff]
    %v1090 = vld [vmem:[#allocation8 + $0xa40] sm:$0xff]
    %v1091 = vld [vmem:[#allocation8 + $0xa48] sm:$0xff]
    %v1092 = vld [vmem:[#allocation8 + $0xa50] sm:$0xff]
    %v1093 = vld [vmem:[#allocation8 + $0xa58] sm:$0xff]
    %v1094 = vld [vmem:[#allocation8 + $0xa60] sm:$0xff]
    %v1095 = vld [vmem:[#allocation8 + $0xa68] sm:$0xff]
    %v1096 = vld [vmem:[#allocation8 + $0xa70] sm:$0xff]
    %v1097 = vld [vmem:[#allocation8 + $0xa78] sm:$0xff]
    %v1098 = vld [vmem:[#allocation8 + $0xa80] sm:$0xff]
    %v1099 = vld [vmem:[#allocation8 + $0xa88] sm:$0xff]
    %v1100 = vld [vmem:[#allocation8 + $0xa90] sm:$0xff]
    %v1101 = vld [vmem:[#allocation8 + $0xa98] sm:$0xff]
    %v1102 = vld [vmem:[#allocation8 + $0xaa0] sm:$0xff]
    %v1103 = vld [vmem:[#allocation8 + $0xaa8] sm:$0xff]
    %v1104 = vld [vmem:[#allocation8 + $0xab0] sm:$0xff]
    %v1105 = vld [vmem:[#allocation8 + $0xab8] sm:$0xff]
    %v1106 = vld [vmem:[#allocation8 + $0xac0] sm:$0xff]
    %v1107 = vld [vmem:[#allocation8 + $0xac8] sm:$0xff]
    %v1108 = vld [vmem:[#allocation8 + $0xad0] sm:$0xff]
    %v1109 = vld [vmem:[#allocation8 + $0xad8] sm:$0xff]
    %v1110 = vld [vmem:[#allocation8 + $0xae0] sm:$0xff]
    %v1111 = vld [vmem:[#allocation8 + $0xae8] sm:$0xff]
    %v1112 = vld [vmem:[#allocation8 + $0xaf0] sm:$0xff]
    %v1113 = vld [vmem:[#allocation8 + $0xaf8] sm:$0xff]
    %v1114 = vld [vmem:[#allocation8 + $0xb00] sm:$0xff]
    %v1115 = vld [vmem:[#allocation8 + $0xb08] sm:$0xff]
    %v1116 = vld [vmem:[#allocation8 + $0xb10] sm:$0xff]
    %v1117 = vld [vmem:[#allocation8 + $0xb18] sm:$0xff]
    %v1118 = vld [vmem:[#allocation8 + $0xb20] sm:$0xff]
    %v1119 = vld [vmem:[#allocation8 + $0xb28] sm:$0xff]
    %v1120 = vld [vmem:[#allocation8 + $0xb30] sm:$0xff]
    %v1121 = vld [vmem:[#allocation8 + $0xb38] sm:$0xff]
    %v1122 = vld [vmem:[#allocation8 + $0xb40] sm:$0xff]
    %v1123 = vld [vmem:[#allocation8 + $0xb48] sm:$0xff]
    %v1124 = vld [vmem:[#allocation8 + $0xb50] sm:$0xff]
    %v1125 = vld [vmem:[#allocation8 + $0xb58] sm:$0xff]
    %v1126 = vld [vmem:[#allocation8 + $0xb60] sm:$0xff]
    %v1127 = vld [vmem:[#allocation8 + $0xb68] sm:$0xff]
    %v1128 = vld [vmem:[#allocation8 + $0xb70] sm:$0xff]
    %v1129 = vld [vmem:[#allocation8 + $0xb78] sm:$0xff]
    %v1130 = vld [vmem:[#allocation8 + $0xb80] sm:$0xff]
    %v1131 = vld [vmem:[#allocation8 + $0xb88] sm:$0xff]
    %v1132 = vld [vmem:[#allocation8 + $0xb90] sm:$0xff]
    %v1133 = vld [vmem:[#allocation8 + $0xb98] sm:$0xff]
    %v1134 = vld [vmem:[#allocation8 + $0xba0] sm:$0xff]
    %v1135 = vld [vmem:[#allocation8 + $0xba8] sm:$0xff]
    %v1136 = vld [vmem:[#allocation8 + $0xbb0] sm:$0xff]
    %v1137 = vld [vmem:[#allocation8 + $0xbb8] sm:$0xff]
    %v1138 = vld [vmem:[#allocation8 + $0xbc0] sm:$0xff]
    %v1139 = vld [vmem:[#allocation8 + $0xbc8] sm:$0xff]
    %v1140 = vld [vmem:[#allocation8 + $0xbd0] sm:$0xff]
    %v1141 = vld [vmem:[#allocation8 + $0xbd8] sm:$0xff]
    %v1142 = vld [vmem:[#allocation8 + $0xbe0] sm:$0xff]
    %v1143 = vld [vmem:[#allocation8 + $0xbe8] sm:$0xff]
    %v1144 = vld [vmem:[#allocation8 + $0xbf0] sm:$0xff]
    %v1145 = vld [vmem:[#allocation8 + $0xbf8] sm:$0xff]
    %v1146 = vld [vmem:[#allocation8 + $0xc00] sm:$0xff]
    %v1147 = vld [vmem:[#allocation8 + $0xc08] sm:$0xff]
    %v1148 = vld [vmem:[#allocation8 + $0xc10] sm:$0xff]
    %v1149 = vld [vmem:[#allocation8 + $0xc18] sm:$0xff]
    %v1150 = vld [vmem:[#allocation8 + $0xc20] sm:$0xff]
    %v1151 = vld [vmem:[#allocation8 + $0xc28] sm:$0xff]
    %v1152 = vld [vmem:[#allocation8 + $0xc30] sm:$0xff]
    %v1153 = vld [vmem:[#allocation8 + $0xc38] sm:$0xff]
    %v1154 = vld [vmem:[#allocation8 + $0xc40] sm:$0xff]
    %v1155 = vld [vmem:[#allocation8 + $0xc48] sm:$0xff]
    %v1156 = vld [vmem:[#allocation8 + $0xc50] sm:$0xff]
    %v1157 = vld [vmem:[#allocation8 + $0xc58] sm:$0xff]
    %v1158 = vld [vmem:[#allocation8 + $0xc60] sm:$0xff]
    %v1159 = vld [vmem:[#allocation8 + $0xc68] sm:$0xff]
    %v1160 = vld [vmem:[#allocation8 + $0xc70] sm:$0xff]
    %v1161 = vld [vmem:[#allocation8 + $0xc78] sm:$0xff]
    %v1162 = vld [vmem:[#allocation8 + $0xc80] sm:$0xff]
    %v1163 = vld [vmem:[#allocation8 + $0xc88] sm:$0xff]
    %v1164 = vld [vmem:[#allocation8 + $0xc90] sm:$0xff]
    %v1165 = vld [vmem:[#allocation8 + $0xc98] sm:$0xff]
    %v1166 = vld [vmem:[#allocation8 + $0xca0] sm:$0xff]
    %v1167 = vld [vmem:[#allocation8 + $0xca8] sm:$0xff]
    %v1168 = vld [vmem:[#allocation8 + $0xcb0] sm:$0xff]
    %v1169 = vld [vmem:[#allocation8 + $0xcb8] sm:$0xff]
    %v1170 = vld [vmem:[#allocation8 + $0xcc0] sm:$0xff]
    %v1171 = vld [vmem:[#allocation8 + $0xcc8] sm:$0xff]
    %v1172 = vld [vmem:[#allocation8 + $0xcd0] sm:$0xff]
    %v1173 = vld [vmem:[#allocation8 + $0xcd8] sm:$0xff]
    %v1174 = vld [vmem:[#allocation8 + $0xce0] sm:$0xff]
    %v1175 = vld [vmem:[#allocation8 + $0xce8] sm:$0xff]
    %v1176 = vld [vmem:[#allocation8 + $0xcf0] sm:$0xff]
    %v1177 = vld [vmem:[#allocation8 + $0xcf8] sm:$0xff]
    %v1178 = vld [vmem:[#allocation8 + $0xd00] sm:$0xff]
    %v1179 = vld [vmem:[#allocation8 + $0xd08] sm:$0xff]
    %v1180 = vld [vmem:[#allocation8 + $0xd10] sm:$0xff]
    %v1181 = vld [vmem:[#allocation8 + $0xd18] sm:$0xff]
    %v1182 = vld [vmem:[#allocation8 + $0xd20] sm:$0xff]
    %v1183 = vld [vmem:[#allocation8 + $0xd28] sm:$0xff]
    %v1184 = vld [vmem:[#allocation8 + $0xd30] sm:$0xff]
    %v1185 = vld [vmem:[#allocation8 + $0xd38] sm:$0xff]
    %v1186 = vld [vmem:[#allocation8 + $0xd40] sm:$0xff]
    %v1187 = vld [vmem:[#allocation8 + $0xd48] sm:$0xff]
    %v1188 = vld [vmem:[#allocation8 + $0xd50] sm:$0xff]
    %v1189 = vld [vmem:[#allocation8 + $0xd58] sm:$0xff]
    %v1190 = vld [vmem:[#allocation8 + $0xd60] sm:$0xff]
    %v1191 = vld [vmem:[#allocation8 + $0xd68] sm:$0xff]
    %v1192 = vld [vmem:[#allocation8 + $0xd70] sm:$0xff]
    %v1193 = vld [vmem:[#allocation8 + $0xd78] sm:$0xff]
    %v1194 = vld [vmem:[#allocation8 + $0xd80] sm:$0xff]
    %v1195 = vld [vmem:[#allocation8 + $0xd88] sm:$0xff]
    %v1196 = vld [vmem:[#allocation8 + $0xd90] sm:$0xff]
    %v1197 = vld [vmem:[#allocation8 + $0xd98] sm:$0xff]
    %v1198 = vld [vmem:[#allocation8 + $0xda0] sm:$0xff]
    %v1199 = vld [vmem:[#allocation8 + $0xda8] sm:$0xff]
    %v1200 = vld [vmem:[#allocation8 + $0xdb0] sm:$0xff]
    %v1201 = vld [vmem:[#allocation8 + $0xdb8] sm:$0xff]
    %v1202 = vld [vmem:[#allocation8 + $0xdc0] sm:$0xff]
    %v1203 = vld [vmem:[#allocation8 + $0xdc8] sm:$0xff]
    %v1204 = vld [vmem:[#allocation8 + $0xdd0] sm:$0xff]
    %v1205 = vld [vmem:[#allocation8 + $0xdd8] sm:$0xff]
    %v1206 = vld [vmem:[#allocation8 + $0xde0] sm:$0xff]
    %v1207 = vld [vmem:[#allocation8 + $0xde8] sm:$0xff]
    %v1208 = vld [vmem:[#allocation8 + $0xdf0] sm:$0xff]
    %v1209 = vld [vmem:[#allocation8 + $0xdf8] sm:$0xff]
    %v1210 = vld [vmem:[#allocation8 + $0xe00] sm:$0xff]
    %v1211 = vld [vmem:[#allocation8 + $0xe08] sm:$0xff]
    %v1212 = vld [vmem:[#allocation8 + $0xe10] sm:$0xff]
    %v1213 = vld [vmem:[#allocation8 + $0xe18] sm:$0xff]
    %v1214 = vld [vmem:[#allocation8 + $0xe20] sm:$0xff]
    %v1215 = vld [vmem:[#allocation8 + $0xe28] sm:$0xff]
    %v1216 = vld [vmem:[#allocation8 + $0xe30] sm:$0xff]
    %v1217 = vld [vmem:[#allocation8 + $0xe38] sm:$0xff]
    %v1218 = vld [vmem:[#allocation8 + $0xe40] sm:$0xff]
    %v1219 = vld [vmem:[#allocation8 + $0xe48] sm:$0xff]
    %v1220 = vld [vmem:[#allocation8 + $0xe50] sm:$0xff]
    %v1221 = vld [vmem:[#allocation8 + $0xe58] sm:$0xff]
    %v1222 = vld [vmem:[#allocation8 + $0xe60] sm:$0xff]
    %v1223 = vld [vmem:[#allocation8 + $0xe68] sm:$0xff]
    %v1224 = vld [vmem:[#allocation8 + $0xe70] sm:$0xff]
    %v1225 = vld [vmem:[#allocation8 + $0xe78] sm:$0xff]
    %v1226 = vld [vmem:[#allocation8 + $0xe80] sm:$0xff]
    %v1227 = vld [vmem:[#allocation8 + $0xe88] sm:$0xff]
    %v1228 = vld [vmem:[#allocation8 + $0xe90] sm:$0xff]
    %v1229 = vld [vmem:[#allocation8 + $0xe98] sm:$0xff]
    %v1230 = vld [vmem:[#allocation8 + $0xea0] sm:$0xff]
    %v1231 = vld [vmem:[#allocation8 + $0xea8] sm:$0xff]
    %v1232 = vld [vmem:[#allocation8 + $0xeb0] sm:$0xff]
    %v1233 = vld [vmem:[#allocation8 + $0xeb8] sm:$0xff]
    %v1234 = vld [vmem:[#allocation8 + $0xec0] sm:$0xff]
    %v1235 = vld [vmem:[#allocation8 + $0xec8] sm:$0xff]
    %v1236 = vld [vmem:[#allocation8 + $0xed0] sm:$0xff]
    %v1237 = vld [vmem:[#allocation8 + $0xed8] sm:$0xff]
    %v1238 = vld [vmem:[#allocation8 + $0xee0] sm:$0xff]
    %v1239 = vld [vmem:[#allocation8 + $0xee8] sm:$0xff]
    %v1240 = vld [vmem:[#allocation8 + $0xef0] sm:$0xff]
    %v1241 = vld [vmem:[#allocation8 + $0xef8] sm:$0xff]
    %v1242 = vld [vmem:[#allocation8 + $0xf00] sm:$0xff]
    %v1243 = vld [vmem:[#allocation8 + $0xf08] sm:$0xff]
    %v1244 = vld [vmem:[#allocation8 + $0xf10] sm:$0xff]
    %v1245 = vld [vmem:[#allocation8 + $0xf18] sm:$0xff]
    %v1246 = vld [vmem:[#allocation8 + $0xf20] sm:$0xff]
    %v1247 = vld [vmem:[#allocation8 + $0xf28] sm:$0xff]
    %v1248 = vld [vmem:[#allocation8 + $0xf30] sm:$0xff]
    %v1249 = vld [vmem:[#allocation8 + $0xf38] sm:$0xff]
    %v1250 = vld [vmem:[#allocation8 + $0xf40] sm:$0xff]
    %v1251 = vld [vmem:[#allocation8 + $0xf48] sm:$0xff]
    %v1252 = vld [vmem:[#allocation8 + $0xf50] sm:$0xff]
    %v1253 = vld [vmem:[#allocation8 + $0xf58] sm:$0xff]
    %v1254 = vld [vmem:[#allocation8 + $0xf60] sm:$0xff]
    %v1255 = vld [vmem:[#allocation8 + $0xf68] sm:$0xff]
    %v1256 = vld [vmem:[#allocation8 + $0xf70] sm:$0xff]
    %v1257 = vld [vmem:[#allocation8 + $0xf78] sm:$0xff]
    %v1258 = vld [vmem:[#allocation8 + $0xf80] sm:$0xff]
    %v1259 = vld [vmem:[#allocation8 + $0xf88] sm:$0xff]
    %v1260 = vld [vmem:[#allocation8 + $0xf90] sm:$0xff]
    %v1261 = vld [vmem:[#allocation8 + $0xf98] sm:$0xff]
    %v1262 = vld [vmem:[#allocation8 + $0xfa0] sm:$0xff]
    %v1263 = vld [vmem:[#allocation8 + $0xfa8] sm:$0xff]
    %v1264 = vld [vmem:[#allocation8 + $0xfb0] sm:$0xff]
    %v1265 = vld [vmem:[#allocation8 + $0xfb8] sm:$0xff]
    %v1266 = vld [vmem:[#allocation8 + $0xfc0] sm:$0xff]
    %v1267 = vld [vmem:[#allocation8 + $0xfc8] sm:$0xff]
    %v1268 = vld [vmem:[#allocation8 + $0xfd0] sm:$0xff]
    %v1269 = vld [vmem:[#allocation8 + $0xfd8] sm:$0xff]
    %v1270 = vld [vmem:[#allocation8 + $0xfe0] sm:$0xff]
    %v1271 = vld [vmem:[#allocation8 + $0xfe8] sm:$0xff]
    %v1272 = vld [vmem:[#allocation8 + $0xff0] sm:$0xff]
    %v1273 = vld [vmem:[#allocation8 + $0xff8] sm:$0xff]
    %v1274 = vld [vmem:[#allocation10] sm:$0xff]
    %v1276 = vlaneseq
    %v1277 = vshrl.u32 %v1276, 7
    %v1278 = vsub.s32 0, %v1277
    %v1279 = vrot.slane %v1274, %v1278
    %v1280 = vlaneseq
    %v1281 = vshrl.u32 %v1280, 7
    %v1282 = vsub.s32 1, %v1281
    %v1283 = vrot.slane %v1274, %v1282
    %v1284 = vlaneseq
    %v1285 = vshrl.u32 %v1284, 7
    %v1286 = vsub.s32 2, %v1285
    %v1287 = vrot.slane %v1274, %v1286
    %v1288 = vlaneseq
    %v1289 = vshrl.u32 %v1288, 7
    %v1290 = vsub.s32 3, %v1289
    %v1291 = vrot.slane %v1274, %v1290
    %v1292 = vlaneseq
    %v1293 = vshrl.u32 %v1292, 7
    %v1294 = vsub.s32 4, %v1293
    %v1295 = vrot.slane %v1274, %v1294
    %v1296 = vlaneseq
    %v1297 = vshrl.u32 %v1296, 7
    %v1298 = vsub.s32 5, %v1297
    %v1299 = vrot.slane %v1274, %v1298
    %v1300 = vlaneseq
    %v1301 = vshrl.u32 %v1300, 7
    %v1302 = vsub.s32 6, %v1301
    %v1303 = vrot.slane %v1274, %v1302
    %v1304 = vlaneseq
    %v1305 = vshrl.u32 %v1304, 7
    %v1306 = vsub.s32 7, %v1305
    %v1307 = vrot.slane %v1274, %v1306
    %v1828 = vunpack.c.l.b16 %v762
    %v1829 = vunpack.c.h.b16 %v762
    %v1830 = vunpack.c.l.b16 %v763
    %v1831 = vunpack.c.h.b16 %v763
    %v1832 = vunpack.c.l.b16 %v764
    %v1833 = vunpack.c.h.b16 %v764
    %v1834 = vunpack.c.l.b16 %v765
    %v1835 = vunpack.c.h.b16 %v765
    %v1836 = vunpack.c.l.b16 %v766
    %v1837 = vunpack.c.h.b16 %v766
    %v1838 = vunpack.c.l.b16 %v767
    %v1839 = vunpack.c.h.b16 %v767
    %v1840 = vunpack.c.l.b16 %v768
    %v1841 = vunpack.c.h.b16 %v768
    %v1842 = vunpack.c.l.b16 %v769
    %v1843 = vunpack.c.h.b16 %v769
    %v1844 = vunpack.c.l.b16 %v770
    %v1845 = vunpack.c.h.b16 %v770
    %v1846 = vunpack.c.l.b16 %v771
    %v1847 = vunpack.c.h.b16 %v771
    %v1848 = vunpack.c.l.b16 %v772
    %v1849 = vunpack.c.h.b16 %v772
    %v1850 = vunpack.c.l.b16 %v773
    %v1851 = vunpack.c.h.b16 %v773
    %v1852 = vunpack.c.l.b16 %v774
    %v1853 = vunpack.c.h.b16 %v774
    %v1854 = vunpack.c.l.b16 %v775
    %v1855 = vunpack.c.h.b16 %v775
    %v1856 = vunpack.c.l.b16 %v776
    %v1857 = vunpack.c.h.b16 %v776
    %v1858 = vunpack.c.l.b16 %v777
    %v1859 = vunpack.c.h.b16 %v777
    %v1860 = vunpack.c.l.b16 %v778
    %v1861 = vunpack.c.h.b16 %v778
    %v1862 = vunpack.c.l.b16 %v779
    %v1863 = vunpack.c.h.b16 %v779
    %v1864 = vunpack.c.l.b16 %v780
    %v1865 = vunpack.c.h.b16 %v780
    %v1866 = vunpack.c.l.b16 %v781
    %v1867 = vunpack.c.h.b16 %v781
    %v1868 = vunpack.c.l.b16 %v782
    %v1869 = vunpack.c.h.b16 %v782
    %v1870 = vunpack.c.l.b16 %v783
    %v1871 = vunpack.c.h.b16 %v783
    %v1872 = vunpack.c.l.b16 %v784
    %v1873 = vunpack.c.h.b16 %v784
    %v1874 = vunpack.c.l.b16 %v785
    %v1875 = vunpack.c.h.b16 %v785
    %v1876 = vunpack.c.l.b16 %v786
    %v1877 = vunpack.c.h.b16 %v786
    %v1878 = vunpack.c.l.b16 %v787
    %v1879 = vunpack.c.h.b16 %v787
    %v1880 = vunpack.c.l.b16 %v788
    %v1881 = vunpack.c.h.b16 %v788
    %v1882 = vunpack.c.l.b16 %v789
    %v1883 = vunpack.c.h.b16 %v789
    %v1884 = vunpack.c.l.b16 %v790
    %v1885 = vunpack.c.h.b16 %v790
    %v1886 = vunpack.c.l.b16 %v791
    %v1887 = vunpack.c.h.b16 %v791
    %v1888 = vunpack.c.l.b16 %v792
    %v1889 = vunpack.c.h.b16 %v792
    %v1890 = vunpack.c.l.b16 %v793
    %v1891 = vunpack.c.h.b16 %v793
    %v1892 = vunpack.c.l.b16 %v794
    %v1893 = vunpack.c.h.b16 %v794
    %v1894 = vunpack.c.l.b16 %v795
    %v1895 = vunpack.c.h.b16 %v795
    %v1896 = vunpack.c.l.b16 %v796
    %v1897 = vunpack.c.h.b16 %v796
    %v1898 = vunpack.c.l.b16 %v797
    %v1899 = vunpack.c.h.b16 %v797
    %v1900 = vunpack.c.l.b16 %v798
    %v1901 = vunpack.c.h.b16 %v798
    %v1902 = vunpack.c.l.b16 %v799
    %v1903 = vunpack.c.h.b16 %v799
    %v1904 = vunpack.c.l.b16 %v800
    %v1905 = vunpack.c.h.b16 %v800
    %v1906 = vunpack.c.l.b16 %v801
    %v1907 = vunpack.c.h.b16 %v801
    %v1908 = vunpack.c.l.b16 %v802
    %v1909 = vunpack.c.h.b16 %v802
    %v1910 = vunpack.c.l.b16 %v803
    %v1911 = vunpack.c.h.b16 %v803
    %v1912 = vunpack.c.l.b16 %v804
    %v1913 = vunpack.c.h.b16 %v804
    %v1914 = vunpack.c.l.b16 %v805
    %v1915 = vunpack.c.h.b16 %v805
    %v1916 = vunpack.c.l.b16 %v806
    %v1917 = vunpack.c.h.b16 %v806
    %v1918 = vunpack.c.l.b16 %v807
    %v1919 = vunpack.c.h.b16 %v807
    %v1920 = vunpack.c.l.b16 %v808
    %v1921 = vunpack.c.h.b16 %v808
    %v1922 = vunpack.c.l.b16 %v809
    %v1923 = vunpack.c.h.b16 %v809
    %v1924 = vunpack.c.l.b16 %v810
    %v1925 = vunpack.c.h.b16 %v810
    %v1926 = vunpack.c.l.b16 %v811
    %v1927 = vunpack.c.h.b16 %v811
    %v1928 = vunpack.c.l.b16 %v812
    %v1929 = vunpack.c.h.b16 %v812
    %v1930 = vunpack.c.l.b16 %v813
    %v1931 = vunpack.c.h.b16 %v813
    %v1932 = vunpack.c.l.b16 %v814
    %v1933 = vunpack.c.h.b16 %v814
    %v1934 = vunpack.c.l.b16 %v815
    %v1935 = vunpack.c.h.b16 %v815
    %v1936 = vunpack.c.l.b16 %v816
    %v1937 = vunpack.c.h.b16 %v816
    %v1938 = vunpack.c.l.b16 %v817
    %v1939 = vunpack.c.h.b16 %v817
    %v1940 = vunpack.c.l.b16 %v818
    %v1941 = vunpack.c.h.b16 %v818
    %v1942 = vunpack.c.l.b16 %v819
    %v1943 = vunpack.c.h.b16 %v819
    %v1944 = vunpack.c.l.b16 %v820
    %v1945 = vunpack.c.h.b16 %v820
    %v1946 = vunpack.c.l.b16 %v821
    %v1947 = vunpack.c.h.b16 %v821
    %v1948 = vunpack.c.l.b16 %v822
    %v1949 = vunpack.c.h.b16 %v822
    %v1950 = vunpack.c.l.b16 %v823
    %v1951 = vunpack.c.h.b16 %v823
    %v1952 = vunpack.c.l.b16 %v824
    %v1953 = vunpack.c.h.b16 %v824
    %v1954 = vunpack.c.l.b16 %v825
    %v1955 = vunpack.c.h.b16 %v825
    %v1956 = vunpack.c.l.b16 %v826
    %v1957 = vunpack.c.h.b16 %v826
    %v1958 = vunpack.c.l.b16 %v827
    %v1959 = vunpack.c.h.b16 %v827
    %v1960 = vunpack.c.l.b16 %v828
    %v1961 = vunpack.c.h.b16 %v828
    %v1962 = vunpack.c.l.b16 %v829
    %v1963 = vunpack.c.h.b16 %v829
    %v1964 = vunpack.c.l.b16 %v830
    %v1965 = vunpack.c.h.b16 %v830
    %v1966 = vunpack.c.l.b16 %v831
    %v1967 = vunpack.c.h.b16 %v831
    %v1968 = vunpack.c.l.b16 %v832
    %v1969 = vunpack.c.h.b16 %v832
    %v1970 = vunpack.c.l.b16 %v833
    %v1971 = vunpack.c.h.b16 %v833
    %v1972 = vunpack.c.l.b16 %v834
    %v1973 = vunpack.c.h.b16 %v834
    %v1974 = vunpack.c.l.b16 %v835
    %v1975 = vunpack.c.h.b16 %v835
    %v1976 = vunpack.c.l.b16 %v836
    %v1977 = vunpack.c.h.b16 %v836
    %v1978 = vunpack.c.l.b16 %v837
    %v1979 = vunpack.c.h.b16 %v837
    %v1980 = vunpack.c.l.b16 %v838
    %v1981 = vunpack.c.h.b16 %v838
    %v1982 = vunpack.c.l.b16 %v839
    %v1983 = vunpack.c.h.b16 %v839
    %v1984 = vunpack.c.l.b16 %v840
    %v1985 = vunpack.c.h.b16 %v840
    %v1986 = vunpack.c.l.b16 %v841
    %v1987 = vunpack.c.h.b16 %v841
    %v1988 = vunpack.c.l.b16 %v842
    %v1989 = vunpack.c.h.b16 %v842
    %v1990 = vunpack.c.l.b16 %v843
    %v1991 = vunpack.c.h.b16 %v843
    %v1992 = vunpack.c.l.b16 %v844
    %v1993 = vunpack.c.h.b16 %v844
    %v1994 = vunpack.c.l.b16 %v845
    %v1995 = vunpack.c.h.b16 %v845
    %v1996 = vunpack.c.l.b16 %v846
    %v1997 = vunpack.c.h.b16 %v846
    %v1998 = vunpack.c.l.b16 %v847
    %v1999 = vunpack.c.h.b16 %v847
    %v2000 = vunpack.c.l.b16 %v848
    %v2001 = vunpack.c.h.b16 %v848
    %v2002 = vunpack.c.l.b16 %v849
    %v2003 = vunpack.c.h.b16 %v849
    %v2004 = vunpack.c.l.b16 %v850
    %v2005 = vunpack.c.h.b16 %v850
    %v2006 = vunpack.c.l.b16 %v851
    %v2007 = vunpack.c.h.b16 %v851
    %v2008 = vunpack.c.l.b16 %v852
    %v2009 = vunpack.c.h.b16 %v852
    %v2010 = vunpack.c.l.b16 %v853
    %v2011 = vunpack.c.h.b16 %v853
    %v2012 = vunpack.c.l.b16 %v854
    %v2013 = vunpack.c.h.b16 %v854
    %v2014 = vunpack.c.l.b16 %v855
    %v2015 = vunpack.c.h.b16 %v855
    %v2016 = vunpack.c.l.b16 %v856
    %v2017 = vunpack.c.h.b16 %v856
    %v2018 = vunpack.c.l.b16 %v857
    %v2019 = vunpack.c.h.b16 %v857
    %v2020 = vunpack.c.l.b16 %v858
    %v2021 = vunpack.c.h.b16 %v858
    %v2022 = vunpack.c.l.b16 %v859
    %v2023 = vunpack.c.h.b16 %v859
    %v2024 = vunpack.c.l.b16 %v860
    %v2025 = vunpack.c.h.b16 %v860
    %v2026 = vunpack.c.l.b16 %v861
    %v2027 = vunpack.c.h.b16 %v861
    %v2028 = vunpack.c.l.b16 %v862
    %v2029 = vunpack.c.h.b16 %v862
    %v2030 = vunpack.c.l.b16 %v863
    %v2031 = vunpack.c.h.b16 %v863
    %v2032 = vunpack.c.l.b16 %v864
    %v2033 = vunpack.c.h.b16 %v864
    %v2034 = vunpack.c.l.b16 %v865
    %v2035 = vunpack.c.h.b16 %v865
    %v2036 = vunpack.c.l.b16 %v866
    %v2037 = vunpack.c.h.b16 %v866
    %v2038 = vunpack.c.l.b16 %v867
    %v2039 = vunpack.c.h.b16 %v867
    %v2040 = vunpack.c.l.b16 %v868
    %v2041 = vunpack.c.h.b16 %v868
    %v2042 = vunpack.c.l.b16 %v869
    %v2043 = vunpack.c.h.b16 %v869
    %v2044 = vunpack.c.l.b16 %v870
    %v2045 = vunpack.c.h.b16 %v870
    %v2046 = vunpack.c.l.b16 %v871
    %v2047 = vunpack.c.h.b16 %v871
    %v2048 = vunpack.c.l.b16 %v872
    %v2049 = vunpack.c.h.b16 %v872
    %v2050 = vunpack.c.l.b16 %v873
    %v2051 = vunpack.c.h.b16 %v873
    %v2052 = vunpack.c.l.b16 %v874
    %v2053 = vunpack.c.h.b16 %v874
    %v2054 = vunpack.c.l.b16 %v875
    %v2055 = vunpack.c.h.b16 %v875
    %v2056 = vunpack.c.l.b16 %v876
    %v2057 = vunpack.c.h.b16 %v876
    %v2058 = vunpack.c.l.b16 %v877
    %v2059 = vunpack.c.h.b16 %v877
    %v2060 = vunpack.c.l.b16 %v878
    %v2061 = vunpack.c.h.b16 %v878
    %v2062 = vunpack.c.l.b16 %v879
    %v2063 = vunpack.c.h.b16 %v879
    %v2064 = vunpack.c.l.b16 %v880
    %v2065 = vunpack.c.h.b16 %v880
    %v2066 = vunpack.c.l.b16 %v881
    %v2067 = vunpack.c.h.b16 %v881
    %v2068 = vunpack.c.l.b16 %v882
    %v2069 = vunpack.c.h.b16 %v882
    %v2070 = vunpack.c.l.b16 %v883
    %v2071 = vunpack.c.h.b16 %v883
    %v2072 = vunpack.c.l.b16 %v884
    %v2073 = vunpack.c.h.b16 %v884
    %v2074 = vunpack.c.l.b16 %v885
    %v2075 = vunpack.c.h.b16 %v885
    %v2076 = vunpack.c.l.b16 %v886
    %v2077 = vunpack.c.h.b16 %v886
    %v2078 = vunpack.c.l.b16 %v887
    %v2079 = vunpack.c.h.b16 %v887
    %v2080 = vunpack.c.l.b16 %v888
    %v2081 = vunpack.c.h.b16 %v888
    %v2082 = vunpack.c.l.b16 %v889
    %v2083 = vunpack.c.h.b16 %v889
    %v2084 = vunpack.c.l.b16 %v890
    %v2085 = vunpack.c.h.b16 %v890
    %v2086 = vunpack.c.l.b16 %v891
    %v2087 = vunpack.c.h.b16 %v891
    %v2088 = vunpack.c.l.b16 %v892
    %v2089 = vunpack.c.h.b16 %v892
    %v2090 = vunpack.c.l.b16 %v893
    %v2091 = vunpack.c.h.b16 %v893
    %v2092 = vunpack.c.l.b16 %v894
    %v2093 = vunpack.c.h.b16 %v894
    %v2094 = vunpack.c.l.b16 %v895
    %v2095 = vunpack.c.h.b16 %v895
    %v2096 = vunpack.c.l.b16 %v896
    %v2097 = vunpack.c.h.b16 %v896
    %v2098 = vunpack.c.l.b16 %v897
    %v2099 = vunpack.c.h.b16 %v897
    %v2100 = vunpack.c.l.b16 %v898
    %v2101 = vunpack.c.h.b16 %v898
    %v2102 = vunpack.c.l.b16 %v899
    %v2103 = vunpack.c.h.b16 %v899
    %v2104 = vunpack.c.l.b16 %v900
    %v2105 = vunpack.c.h.b16 %v900
    %v2106 = vunpack.c.l.b16 %v901
    %v2107 = vunpack.c.h.b16 %v901
    %v2108 = vunpack.c.l.b16 %v902
    %v2109 = vunpack.c.h.b16 %v902
    %v2110 = vunpack.c.l.b16 %v903
    %v2111 = vunpack.c.h.b16 %v903
    %v2112 = vunpack.c.l.b16 %v904
    %v2113 = vunpack.c.h.b16 %v904
    %v2114 = vunpack.c.l.b16 %v905
    %v2115 = vunpack.c.h.b16 %v905
    %v2116 = vunpack.c.l.b16 %v906
    %v2117 = vunpack.c.h.b16 %v906
    %v2118 = vunpack.c.l.b16 %v907
    %v2119 = vunpack.c.h.b16 %v907
    %v2120 = vunpack.c.l.b16 %v908
    %v2121 = vunpack.c.h.b16 %v908
    %v2122 = vunpack.c.l.b16 %v909
    %v2123 = vunpack.c.h.b16 %v909
    %v2124 = vunpack.c.l.b16 %v910
    %v2125 = vunpack.c.h.b16 %v910
    %v2126 = vunpack.c.l.b16 %v911
    %v2127 = vunpack.c.h.b16 %v911
    %v2128 = vunpack.c.l.b16 %v912
    %v2129 = vunpack.c.h.b16 %v912
    %v2130 = vunpack.c.l.b16 %v913
    %v2131 = vunpack.c.h.b16 %v913
    %v2132 = vunpack.c.l.b16 %v914
    %v2133 = vunpack.c.h.b16 %v914
    %v2134 = vunpack.c.l.b16 %v915
    %v2135 = vunpack.c.h.b16 %v915
    %v2136 = vunpack.c.l.b16 %v916
    %v2137 = vunpack.c.h.b16 %v916
    %v2138 = vunpack.c.l.b16 %v917
    %v2139 = vunpack.c.h.b16 %v917
    %v2140 = vunpack.c.l.b16 %v918
    %v2141 = vunpack.c.h.b16 %v918
    %v2142 = vunpack.c.l.b16 %v919
    %v2143 = vunpack.c.h.b16 %v919
    %v2144 = vunpack.c.l.b16 %v920
    %v2145 = vunpack.c.h.b16 %v920
    %v2146 = vunpack.c.l.b16 %v921
    %v2147 = vunpack.c.h.b16 %v921
    %v2148 = vunpack.c.l.b16 %v922
    %v2149 = vunpack.c.h.b16 %v922
    %v2150 = vunpack.c.l.b16 %v923
    %v2151 = vunpack.c.h.b16 %v923
    %v2152 = vunpack.c.l.b16 %v924
    %v2153 = vunpack.c.h.b16 %v924
    %v2154 = vunpack.c.l.b16 %v925
    %v2155 = vunpack.c.h.b16 %v925
    %v2156 = vunpack.c.l.b16 %v926
    %v2157 = vunpack.c.h.b16 %v926
    %v2158 = vunpack.c.l.b16 %v927
    %v2159 = vunpack.c.h.b16 %v927
    %v2160 = vunpack.c.l.b16 %v928
    %v2161 = vunpack.c.h.b16 %v928
    %v2162 = vunpack.c.l.b16 %v929
    %v2163 = vunpack.c.h.b16 %v929
    %v2164 = vunpack.c.l.b16 %v930
    %v2165 = vunpack.c.h.b16 %v930
    %v2166 = vunpack.c.l.b16 %v931
    %v2167 = vunpack.c.h.b16 %v931
    %v2168 = vunpack.c.l.b16 %v932
    %v2169 = vunpack.c.h.b16 %v932
    %v2170 = vunpack.c.l.b16 %v933
    %v2171 = vunpack.c.h.b16 %v933
    %v2172 = vunpack.c.l.b16 %v934
    %v2173 = vunpack.c.h.b16 %v934
    %v2174 = vunpack.c.l.b16 %v935
    %v2175 = vunpack.c.h.b16 %v935
    %v2176 = vunpack.c.l.b16 %v936
    %v2177 = vunpack.c.h.b16 %v936
    %v2178 = vunpack.c.l.b16 %v937
    %v2179 = vunpack.c.h.b16 %v937
    %v2180 = vunpack.c.l.b16 %v938
    %v2181 = vunpack.c.h.b16 %v938
    %v2182 = vunpack.c.l.b16 %v939
    %v2183 = vunpack.c.h.b16 %v939
    %v2184 = vunpack.c.l.b16 %v940
    %v2185 = vunpack.c.h.b16 %v940
    %v2186 = vunpack.c.l.b16 %v941
    %v2187 = vunpack.c.h.b16 %v941
    %v2188 = vunpack.c.l.b16 %v942
    %v2189 = vunpack.c.h.b16 %v942
    %v2190 = vunpack.c.l.b16 %v943
    %v2191 = vunpack.c.h.b16 %v943
    %v2192 = vunpack.c.l.b16 %v944
    %v2193 = vunpack.c.h.b16 %v944
    %v2194 = vunpack.c.l.b16 %v945
    %v2195 = vunpack.c.h.b16 %v945
    %v2196 = vunpack.c.l.b16 %v946
    %v2197 = vunpack.c.h.b16 %v946
    %v2198 = vunpack.c.l.b16 %v947
    %v2199 = vunpack.c.h.b16 %v947
    %v2200 = vunpack.c.l.b16 %v948
    %v2201 = vunpack.c.h.b16 %v948
    %v2202 = vunpack.c.l.b16 %v949
    %v2203 = vunpack.c.h.b16 %v949
    %v2204 = vunpack.c.l.b16 %v950
    %v2205 = vunpack.c.h.b16 %v950
    %v2206 = vunpack.c.l.b16 %v951
    %v2207 = vunpack.c.h.b16 %v951
    %v2208 = vunpack.c.l.b16 %v952
    %v2209 = vunpack.c.h.b16 %v952
    %v2210 = vunpack.c.l.b16 %v953
    %v2211 = vunpack.c.h.b16 %v953
    %v2212 = vunpack.c.l.b16 %v954
    %v2213 = vunpack.c.h.b16 %v954
    %v2214 = vunpack.c.l.b16 %v955
    %v2215 = vunpack.c.h.b16 %v955
    %v2216 = vunpack.c.l.b16 %v956
    %v2217 = vunpack.c.h.b16 %v956
    %v2218 = vunpack.c.l.b16 %v957
    %v2219 = vunpack.c.h.b16 %v957
    %v2220 = vunpack.c.l.b16 %v958
    %v2221 = vunpack.c.h.b16 %v958
    %v2222 = vunpack.c.l.b16 %v959
    %v2223 = vunpack.c.h.b16 %v959
    %v2224 = vunpack.c.l.b16 %v960
    %v2225 = vunpack.c.h.b16 %v960
    %v2226 = vunpack.c.l.b16 %v961
    %v2227 = vunpack.c.h.b16 %v961
    %v2228 = vunpack.c.l.b16 %v962
    %v2229 = vunpack.c.h.b16 %v962
    %v2230 = vunpack.c.l.b16 %v963
    %v2231 = vunpack.c.h.b16 %v963
    %v2232 = vunpack.c.l.b16 %v964
    %v2233 = vunpack.c.h.b16 %v964
    %v2234 = vunpack.c.l.b16 %v965
    %v2235 = vunpack.c.h.b16 %v965
    %v2236 = vunpack.c.l.b16 %v966
    %v2237 = vunpack.c.h.b16 %v966
    %v2238 = vunpack.c.l.b16 %v967
    %v2239 = vunpack.c.h.b16 %v967
    %v2240 = vunpack.c.l.b16 %v968
    %v2241 = vunpack.c.h.b16 %v968
    %v2242 = vunpack.c.l.b16 %v969
    %v2243 = vunpack.c.h.b16 %v969
    %v2244 = vunpack.c.l.b16 %v970
    %v2245 = vunpack.c.h.b16 %v970
    %v2246 = vunpack.c.l.b16 %v971
    %v2247 = vunpack.c.h.b16 %v971
    %v2248 = vunpack.c.l.b16 %v972
    %v2249 = vunpack.c.h.b16 %v972
    %v2250 = vunpack.c.l.b16 %v973
    %v2251 = vunpack.c.h.b16 %v973
    %v2252 = vunpack.c.l.b16 %v974
    %v2253 = vunpack.c.h.b16 %v974
    %v2254 = vunpack.c.l.b16 %v975
    %v2255 = vunpack.c.h.b16 %v975
    %v2256 = vunpack.c.l.b16 %v976
    %v2257 = vunpack.c.h.b16 %v976
    %v2258 = vunpack.c.l.b16 %v977
    %v2259 = vunpack.c.h.b16 %v977
    %v2260 = vunpack.c.l.b16 %v978
    %v2261 = vunpack.c.h.b16 %v978
    %v2262 = vunpack.c.l.b16 %v979
    %v2263 = vunpack.c.h.b16 %v979
    %v2264 = vunpack.c.l.b16 %v980
    %v2265 = vunpack.c.h.b16 %v980
    %v2266 = vunpack.c.l.b16 %v981
    %v2267 = vunpack.c.h.b16 %v981
    %v2268 = vunpack.c.l.b16 %v982
    %v2269 = vunpack.c.h.b16 %v982
    %v2270 = vunpack.c.l.b16 %v983
    %v2271 = vunpack.c.h.b16 %v983
    %v2272 = vunpack.c.l.b16 %v984
    %v2273 = vunpack.c.h.b16 %v984
    %v2274 = vunpack.c.l.b16 %v985
    %v2275 = vunpack.c.h.b16 %v985
    %v2276 = vunpack.c.l.b16 %v986
    %v2277 = vunpack.c.h.b16 %v986
    %v2278 = vunpack.c.l.b16 %v987
    %v2279 = vunpack.c.h.b16 %v987
    %v2280 = vunpack.c.l.b16 %v988
    %v2281 = vunpack.c.h.b16 %v988
    %v2282 = vunpack.c.l.b16 %v989
    %v2283 = vunpack.c.h.b16 %v989
    %v2284 = vunpack.c.l.b16 %v990
    %v2285 = vunpack.c.h.b16 %v990
    %v2286 = vunpack.c.l.b16 %v991
    %v2287 = vunpack.c.h.b16 %v991
    %v2288 = vunpack.c.l.b16 %v992
    %v2289 = vunpack.c.h.b16 %v992
    %v2290 = vunpack.c.l.b16 %v993
    %v2291 = vunpack.c.h.b16 %v993
    %v2292 = vunpack.c.l.b16 %v994
    %v2293 = vunpack.c.h.b16 %v994
    %v2294 = vunpack.c.l.b16 %v995
    %v2295 = vunpack.c.h.b16 %v995
    %v2296 = vunpack.c.l.b16 %v996
    %v2297 = vunpack.c.h.b16 %v996
    %v2298 = vunpack.c.l.b16 %v997
    %v2299 = vunpack.c.h.b16 %v997
    %v2300 = vunpack.c.l.b16 %v998
    %v2301 = vunpack.c.h.b16 %v998
    %v2302 = vunpack.c.l.b16 %v999
    %v2303 = vunpack.c.h.b16 %v999
    %v2304 = vunpack.c.l.b16 %v1000
    %v2305 = vunpack.c.h.b16 %v1000
    %v2306 = vunpack.c.l.b16 %v1001
    %v2307 = vunpack.c.h.b16 %v1001
    %v2308 = vunpack.c.l.b16 %v1002
    %v2309 = vunpack.c.h.b16 %v1002
    %v2310 = vunpack.c.l.b16 %v1003
    %v2311 = vunpack.c.h.b16 %v1003
    %v2312 = vunpack.c.l.b16 %v1004
    %v2313 = vunpack.c.h.b16 %v1004
    %v2314 = vunpack.c.l.b16 %v1005
    %v2315 = vunpack.c.h.b16 %v1005
    %v2316 = vunpack.c.l.b16 %v1006
    %v2317 = vunpack.c.h.b16 %v1006
    %v2318 = vunpack.c.l.b16 %v1007
    %v2319 = vunpack.c.h.b16 %v1007
    %v2320 = vunpack.c.l.b16 %v1008
    %v2321 = vunpack.c.h.b16 %v1008
    %v2322 = vunpack.c.l.b16 %v1009
    %v2323 = vunpack.c.h.b16 %v1009
    %v2324 = vunpack.c.l.b16 %v1010
    %v2325 = vunpack.c.h.b16 %v1010
    %v2326 = vunpack.c.l.b16 %v1011
    %v2327 = vunpack.c.h.b16 %v1011
    %v2328 = vunpack.c.l.b16 %v1012
    %v2329 = vunpack.c.h.b16 %v1012
    %v2330 = vunpack.c.l.b16 %v1013
    %v2331 = vunpack.c.h.b16 %v1013
    %v2332 = vunpack.c.l.b16 %v1014
    %v2333 = vunpack.c.h.b16 %v1014
    %v2334 = vunpack.c.l.b16 %v1015
    %v2335 = vunpack.c.h.b16 %v1015
    %v2336 = vunpack.c.l.b16 %v1016
    %v2337 = vunpack.c.h.b16 %v1016
    %v2338 = vunpack.c.l.b16 %v1017
    %v2339 = vunpack.c.h.b16 %v1017
    %v2340 = vunpack.c.l.b16 %v1018
    %v2341 = vunpack.c.h.b16 %v1018
    %v2342 = vunpack.c.l.b16 %v1019
    %v2343 = vunpack.c.h.b16 %v1019
    %v2344 = vunpack.c.l.b16 %v1020
    %v2345 = vunpack.c.h.b16 %v1020
    %v2346 = vunpack.c.l.b16 %v1021
    %v2347 = vunpack.c.h.b16 %v1021
    %v2348 = vunpack.c.l.b16 %v1022
    %v2349 = vunpack.c.h.b16 %v1022
    %v2350 = vunpack.c.l.b16 %v1023
    %v2351 = vunpack.c.h.b16 %v1023
    %v2352 = vunpack.c.l.b16 %v1024
    %v2353 = vunpack.c.h.b16 %v1024
    %v2354 = vunpack.c.l.b16 %v1025
    %v2355 = vunpack.c.h.b16 %v1025
    %v2356 = vunpack.c.l.b16 %v1026
    %v2357 = vunpack.c.h.b16 %v1026
    %v2358 = vunpack.c.l.b16 %v1027
    %v2359 = vunpack.c.h.b16 %v1027
    %v2360 = vunpack.c.l.b16 %v1028
    %v2361 = vunpack.c.h.b16 %v1028
    %v2362 = vunpack.c.l.b16 %v1029
    %v2363 = vunpack.c.h.b16 %v1029
    %v2364 = vunpack.c.l.b16 %v1030
    %v2365 = vunpack.c.h.b16 %v1030
    %v2366 = vunpack.c.l.b16 %v1031
    %v2367 = vunpack.c.h.b16 %v1031
    %v2368 = vunpack.c.l.b16 %v1032
    %v2369 = vunpack.c.h.b16 %v1032
    %v2370 = vunpack.c.l.b16 %v1033
    %v2371 = vunpack.c.h.b16 %v1033
    %v2372 = vunpack.c.l.b16 %v1034
    %v2373 = vunpack.c.h.b16 %v1034
    %v2374 = vunpack.c.l.b16 %v1035
    %v2375 = vunpack.c.h.b16 %v1035
    %v2376 = vunpack.c.l.b16 %v1036
    %v2377 = vunpack.c.h.b16 %v1036
    %v2378 = vunpack.c.l.b16 %v1037
    %v2379 = vunpack.c.h.b16 %v1037
    %v2380 = vunpack.c.l.b16 %v1038
    %v2381 = vunpack.c.h.b16 %v1038
    %v2382 = vunpack.c.l.b16 %v1039
    %v2383 = vunpack.c.h.b16 %v1039
    %v2384 = vunpack.c.l.b16 %v1040
    %v2385 = vunpack.c.h.b16 %v1040
    %v2386 = vunpack.c.l.b16 %v1041
    %v2387 = vunpack.c.h.b16 %v1041
    %v2388 = vunpack.c.l.b16 %v1042
    %v2389 = vunpack.c.h.b16 %v1042
    %v2390 = vunpack.c.l.b16 %v1043
    %v2391 = vunpack.c.h.b16 %v1043
    %v2392 = vunpack.c.l.b16 %v1044
    %v2393 = vunpack.c.h.b16 %v1044
    %v2394 = vunpack.c.l.b16 %v1045
    %v2395 = vunpack.c.h.b16 %v1045
    %v2396 = vunpack.c.l.b16 %v1046
    %v2397 = vunpack.c.h.b16 %v1046
    %v2398 = vunpack.c.l.b16 %v1047
    %v2399 = vunpack.c.h.b16 %v1047
    %v2400 = vunpack.c.l.b16 %v1048
    %v2401 = vunpack.c.h.b16 %v1048
    %v2402 = vunpack.c.l.b16 %v1049
    %v2403 = vunpack.c.h.b16 %v1049
    %v2404 = vunpack.c.l.b16 %v1050
    %v2405 = vunpack.c.h.b16 %v1050
    %v2406 = vunpack.c.l.b16 %v1051
    %v2407 = vunpack.c.h.b16 %v1051
    %v2408 = vunpack.c.l.b16 %v1052
    %v2409 = vunpack.c.h.b16 %v1052
    %v2410 = vunpack.c.l.b16 %v1053
    %v2411 = vunpack.c.h.b16 %v1053
    %v2412 = vunpack.c.l.b16 %v1054
    %v2413 = vunpack.c.h.b16 %v1054
    %v2414 = vunpack.c.l.b16 %v1055
    %v2415 = vunpack.c.h.b16 %v1055
    %v2416 = vunpack.c.l.b16 %v1056
    %v2417 = vunpack.c.h.b16 %v1056
    %v2418 = vunpack.c.l.b16 %v1057
    %v2419 = vunpack.c.h.b16 %v1057
    %v2420 = vunpack.c.l.b16 %v1058
    %v2421 = vunpack.c.h.b16 %v1058
    %v2422 = vunpack.c.l.b16 %v1059
    %v2423 = vunpack.c.h.b16 %v1059
    %v2424 = vunpack.c.l.b16 %v1060
    %v2425 = vunpack.c.h.b16 %v1060
    %v2426 = vunpack.c.l.b16 %v1061
    %v2427 = vunpack.c.h.b16 %v1061
    %v2428 = vunpack.c.l.b16 %v1062
    %v2429 = vunpack.c.h.b16 %v1062
    %v2430 = vunpack.c.l.b16 %v1063
    %v2431 = vunpack.c.h.b16 %v1063
    %v2432 = vunpack.c.l.b16 %v1064
    %v2433 = vunpack.c.h.b16 %v1064
    %v2434 = vunpack.c.l.b16 %v1065
    %v2435 = vunpack.c.h.b16 %v1065
    %v2436 = vunpack.c.l.b16 %v1066
    %v2437 = vunpack.c.h.b16 %v1066
    %v2438 = vunpack.c.l.b16 %v1067
    %v2439 = vunpack.c.h.b16 %v1067
    %v2440 = vunpack.c.l.b16 %v1068
    %v2441 = vunpack.c.h.b16 %v1068
    %v2442 = vunpack.c.l.b16 %v1069
    %v2443 = vunpack.c.h.b16 %v1069
    %v2444 = vunpack.c.l.b16 %v1070
    %v2445 = vunpack.c.h.b16 %v1070
    %v2446 = vunpack.c.l.b16 %v1071
    %v2447 = vunpack.c.h.b16 %v1071
    %v2448 = vunpack.c.l.b16 %v1072
    %v2449 = vunpack.c.h.b16 %v1072
    %v2450 = vunpack.c.l.b16 %v1073
    %v2451 = vunpack.c.h.b16 %v1073
    %v2452 = vunpack.c.l.b16 %v1074
    %v2453 = vunpack.c.h.b16 %v1074
    %v2454 = vunpack.c.l.b16 %v1075
    %v2455 = vunpack.c.h.b16 %v1075
    %v2456 = vunpack.c.l.b16 %v1076
    %v2457 = vunpack.c.h.b16 %v1076
    %v2458 = vunpack.c.l.b16 %v1077
    %v2459 = vunpack.c.h.b16 %v1077
    %v2460 = vunpack.c.l.b16 %v1078
    %v2461 = vunpack.c.h.b16 %v1078
    %v2462 = vunpack.c.l.b16 %v1079
    %v2463 = vunpack.c.h.b16 %v1079
    %v2464 = vunpack.c.l.b16 %v1080
    %v2465 = vunpack.c.h.b16 %v1080
    %v2466 = vunpack.c.l.b16 %v1081
    %v2467 = vunpack.c.h.b16 %v1081
    %v2468 = vunpack.c.l.b16 %v1082
    %v2469 = vunpack.c.h.b16 %v1082
    %v2470 = vunpack.c.l.b16 %v1083
    %v2471 = vunpack.c.h.b16 %v1083
    %v2472 = vunpack.c.l.b16 %v1084
    %v2473 = vunpack.c.h.b16 %v1084
    %v2474 = vunpack.c.l.b16 %v1085
    %v2475 = vunpack.c.h.b16 %v1085
    %v2476 = vunpack.c.l.b16 %v1086
    %v2477 = vunpack.c.h.b16 %v1086
    %v2478 = vunpack.c.l.b16 %v1087
    %v2479 = vunpack.c.h.b16 %v1087
    %v2480 = vunpack.c.l.b16 %v1088
    %v2481 = vunpack.c.h.b16 %v1088
    %v2482 = vunpack.c.l.b16 %v1089
    %v2483 = vunpack.c.h.b16 %v1089
    %v2484 = vunpack.c.l.b16 %v1090
    %v2485 = vunpack.c.h.b16 %v1090
    %v2486 = vunpack.c.l.b16 %v1091
    %v2487 = vunpack.c.h.b16 %v1091
    %v2488 = vunpack.c.l.b16 %v1092
    %v2489 = vunpack.c.h.b16 %v1092
    %v2490 = vunpack.c.l.b16 %v1093
    %v2491 = vunpack.c.h.b16 %v1093
    %v2492 = vunpack.c.l.b16 %v1094
    %v2493 = vunpack.c.h.b16 %v1094
    %v2494 = vunpack.c.l.b16 %v1095
    %v2495 = vunpack.c.h.b16 %v1095
    %v2496 = vunpack.c.l.b16 %v1096
    %v2497 = vunpack.c.h.b16 %v1096
    %v2498 = vunpack.c.l.b16 %v1097
    %v2499 = vunpack.c.h.b16 %v1097
    %v2500 = vunpack.c.l.b16 %v1098
    %v2501 = vunpack.c.h.b16 %v1098
    %v2502 = vunpack.c.l.b16 %v1099
    %v2503 = vunpack.c.h.b16 %v1099
    %v2504 = vunpack.c.l.b16 %v1100
    %v2505 = vunpack.c.h.b16 %v1100
    %v2506 = vunpack.c.l.b16 %v1101
    %v2507 = vunpack.c.h.b16 %v1101
    %v2508 = vunpack.c.l.b16 %v1102
    %v2509 = vunpack.c.h.b16 %v1102
    %v2510 = vunpack.c.l.b16 %v1103
    %v2511 = vunpack.c.h.b16 %v1103
    %v2512 = vunpack.c.l.b16 %v1104
    %v2513 = vunpack.c.h.b16 %v1104
    %v2514 = vunpack.c.l.b16 %v1105
    %v2515 = vunpack.c.h.b16 %v1105
    %v2516 = vunpack.c.l.b16 %v1106
    %v2517 = vunpack.c.h.b16 %v1106
    %v2518 = vunpack.c.l.b16 %v1107
    %v2519 = vunpack.c.h.b16 %v1107
    %v2520 = vunpack.c.l.b16 %v1108
    %v2521 = vunpack.c.h.b16 %v1108
    %v2522 = vunpack.c.l.b16 %v1109
    %v2523 = vunpack.c.h.b16 %v1109
    %v2524 = vunpack.c.l.b16 %v1110
    %v2525 = vunpack.c.h.b16 %v1110
    %v2526 = vunpack.c.l.b16 %v1111
    %v2527 = vunpack.c.h.b16 %v1111
    %v2528 = vunpack.c.l.b16 %v1112
    %v2529 = vunpack.c.h.b16 %v1112
    %v2530 = vunpack.c.l.b16 %v1113
    %v2531 = vunpack.c.h.b16 %v1113
    %v2532 = vunpack.c.l.b16 %v1114
    %v2533 = vunpack.c.h.b16 %v1114
    %v2534 = vunpack.c.l.b16 %v1115
    %v2535 = vunpack.c.h.b16 %v1115
    %v2536 = vunpack.c.l.b16 %v1116
    %v2537 = vunpack.c.h.b16 %v1116
    %v2538 = vunpack.c.l.b16 %v1117
    %v2539 = vunpack.c.h.b16 %v1117
    %v2540 = vunpack.c.l.b16 %v1118
    %v2541 = vunpack.c.h.b16 %v1118
    %v2542 = vunpack.c.l.b16 %v1119
    %v2543 = vunpack.c.h.b16 %v1119
    %v2544 = vunpack.c.l.b16 %v1120
    %v2545 = vunpack.c.h.b16 %v1120
    %v2546 = vunpack.c.l.b16 %v1121
    %v2547 = vunpack.c.h.b16 %v1121
    %v2548 = vunpack.c.l.b16 %v1122
    %v2549 = vunpack.c.h.b16 %v1122
    %v2550 = vunpack.c.l.b16 %v1123
    %v2551 = vunpack.c.h.b16 %v1123
    %v2552 = vunpack.c.l.b16 %v1124
    %v2553 = vunpack.c.h.b16 %v1124
    %v2554 = vunpack.c.l.b16 %v1125
    %v2555 = vunpack.c.h.b16 %v1125
    %v2556 = vunpack.c.l.b16 %v1126
    %v2557 = vunpack.c.h.b16 %v1126
    %v2558 = vunpack.c.l.b16 %v1127
    %v2559 = vunpack.c.h.b16 %v1127
    %v2560 = vunpack.c.l.b16 %v1128
    %v2561 = vunpack.c.h.b16 %v1128
    %v2562 = vunpack.c.l.b16 %v1129
    %v2563 = vunpack.c.h.b16 %v1129
    %v2564 = vunpack.c.l.b16 %v1130
    %v2565 = vunpack.c.h.b16 %v1130
    %v2566 = vunpack.c.l.b16 %v1131
    %v2567 = vunpack.c.h.b16 %v1131
    %v2568 = vunpack.c.l.b16 %v1132
    %v2569 = vunpack.c.h.b16 %v1132
    %v2570 = vunpack.c.l.b16 %v1133
    %v2571 = vunpack.c.h.b16 %v1133
    %v2572 = vunpack.c.l.b16 %v1134
    %v2573 = vunpack.c.h.b16 %v1134
    %v2574 = vunpack.c.l.b16 %v1135
    %v2575 = vunpack.c.h.b16 %v1135
    %v2576 = vunpack.c.l.b16 %v1136
    %v2577 = vunpack.c.h.b16 %v1136
    %v2578 = vunpack.c.l.b16 %v1137
    %v2579 = vunpack.c.h.b16 %v1137
    %v2580 = vunpack.c.l.b16 %v1138
    %v2581 = vunpack.c.h.b16 %v1138
    %v2582 = vunpack.c.l.b16 %v1139
    %v2583 = vunpack.c.h.b16 %v1139
    %v2584 = vunpack.c.l.b16 %v1140
    %v2585 = vunpack.c.h.b16 %v1140
    %v2586 = vunpack.c.l.b16 %v1141
    %v2587 = vunpack.c.h.b16 %v1141
    %v2588 = vunpack.c.l.b16 %v1142
    %v2589 = vunpack.c.h.b16 %v1142
    %v2590 = vunpack.c.l.b16 %v1143
    %v2591 = vunpack.c.h.b16 %v1143
    %v2592 = vunpack.c.l.b16 %v1144
    %v2593 = vunpack.c.h.b16 %v1144
    %v2594 = vunpack.c.l.b16 %v1145
    %v2595 = vunpack.c.h.b16 %v1145
    %v2596 = vunpack.c.l.b16 %v1146
    %v2597 = vunpack.c.h.b16 %v1146
    %v2598 = vunpack.c.l.b16 %v1147
    %v2599 = vunpack.c.h.b16 %v1147
    %v2600 = vunpack.c.l.b16 %v1148
    %v2601 = vunpack.c.h.b16 %v1148
    %v2602 = vunpack.c.l.b16 %v1149
    %v2603 = vunpack.c.h.b16 %v1149
    %v2604 = vunpack.c.l.b16 %v1150
    %v2605 = vunpack.c.h.b16 %v1150
    %v2606 = vunpack.c.l.b16 %v1151
    %v2607 = vunpack.c.h.b16 %v1151
    %v2608 = vunpack.c.l.b16 %v1152
    %v2609 = vunpack.c.h.b16 %v1152
    %v2610 = vunpack.c.l.b16 %v1153
    %v2611 = vunpack.c.h.b16 %v1153
    %v2612 = vunpack.c.l.b16 %v1154
    %v2613 = vunpack.c.h.b16 %v1154
    %v2614 = vunpack.c.l.b16 %v1155
    %v2615 = vunpack.c.h.b16 %v1155
    %v2616 = vunpack.c.l.b16 %v1156
    %v2617 = vunpack.c.h.b16 %v1156
    %v2618 = vunpack.c.l.b16 %v1157
    %v2619 = vunpack.c.h.b16 %v1157
    %v2620 = vunpack.c.l.b16 %v1158
    %v2621 = vunpack.c.h.b16 %v1158
    %v2622 = vunpack.c.l.b16 %v1159
    %v2623 = vunpack.c.h.b16 %v1159
    %v2624 = vunpack.c.l.b16 %v1160
    %v2625 = vunpack.c.h.b16 %v1160
    %v2626 = vunpack.c.l.b16 %v1161
    %v2627 = vunpack.c.h.b16 %v1161
    %v2628 = vunpack.c.l.b16 %v1162
    %v2629 = vunpack.c.h.b16 %v1162
    %v2630 = vunpack.c.l.b16 %v1163
    %v2631 = vunpack.c.h.b16 %v1163
    %v2632 = vunpack.c.l.b16 %v1164
    %v2633 = vunpack.c.h.b16 %v1164
    %v2634 = vunpack.c.l.b16 %v1165
    %v2635 = vunpack.c.h.b16 %v1165
    %v2636 = vunpack.c.l.b16 %v1166
    %v2637 = vunpack.c.h.b16 %v1166
    %v2638 = vunpack.c.l.b16 %v1167
    %v2639 = vunpack.c.h.b16 %v1167
    %v2640 = vunpack.c.l.b16 %v1168
    %v2641 = vunpack.c.h.b16 %v1168
    %v2642 = vunpack.c.l.b16 %v1169
    %v2643 = vunpack.c.h.b16 %v1169
    %v2644 = vunpack.c.l.b16 %v1170
    %v2645 = vunpack.c.h.b16 %v1170
    %v2646 = vunpack.c.l.b16 %v1171
    %v2647 = vunpack.c.h.b16 %v1171
    %v2648 = vunpack.c.l.b16 %v1172
    %v2649 = vunpack.c.h.b16 %v1172
    %v2650 = vunpack.c.l.b16 %v1173
    %v2651 = vunpack.c.h.b16 %v1173
    %v2652 = vunpack.c.l.b16 %v1174
    %v2653 = vunpack.c.h.b16 %v1174
    %v2654 = vunpack.c.l.b16 %v1175
    %v2655 = vunpack.c.h.b16 %v1175
    %v2656 = vunpack.c.l.b16 %v1176
    %v2657 = vunpack.c.h.b16 %v1176
    %v2658 = vunpack.c.l.b16 %v1177
    %v2659 = vunpack.c.h.b16 %v1177
    %v2660 = vunpack.c.l.b16 %v1178
    %v2661 = vunpack.c.h.b16 %v1178
    %v2662 = vunpack.c.l.b16 %v1179
    %v2663 = vunpack.c.h.b16 %v1179
    %v2664 = vunpack.c.l.b16 %v1180
    %v2665 = vunpack.c.h.b16 %v1180
    %v2666 = vunpack.c.l.b16 %v1181
    %v2667 = vunpack.c.h.b16 %v1181
    %v2668 = vunpack.c.l.b16 %v1182
    %v2669 = vunpack.c.h.b16 %v1182
    %v2670 = vunpack.c.l.b16 %v1183
    %v2671 = vunpack.c.h.b16 %v1183
    %v2672 = vunpack.c.l.b16 %v1184
    %v2673 = vunpack.c.h.b16 %v1184
    %v2674 = vunpack.c.l.b16 %v1185
    %v2675 = vunpack.c.h.b16 %v1185
    %v2676 = vunpack.c.l.b16 %v1186
    %v2677 = vunpack.c.h.b16 %v1186
    %v2678 = vunpack.c.l.b16 %v1187
    %v2679 = vunpack.c.h.b16 %v1187
    %v2680 = vunpack.c.l.b16 %v1188
    %v2681 = vunpack.c.h.b16 %v1188
    %v2682 = vunpack.c.l.b16 %v1189
    %v2683 = vunpack.c.h.b16 %v1189
    %v2684 = vunpack.c.l.b16 %v1190
    %v2685 = vunpack.c.h.b16 %v1190
    %v2686 = vunpack.c.l.b16 %v1191
    %v2687 = vunpack.c.h.b16 %v1191
    %v2688 = vunpack.c.l.b16 %v1192
    %v2689 = vunpack.c.h.b16 %v1192
    %v2690 = vunpack.c.l.b16 %v1193
    %v2691 = vunpack.c.h.b16 %v1193
    %v2692 = vunpack.c.l.b16 %v1194
    %v2693 = vunpack.c.h.b16 %v1194
    %v2694 = vunpack.c.l.b16 %v1195
    %v2695 = vunpack.c.h.b16 %v1195
    %v2696 = vunpack.c.l.b16 %v1196
    %v2697 = vunpack.c.h.b16 %v1196
    %v2698 = vunpack.c.l.b16 %v1197
    %v2699 = vunpack.c.h.b16 %v1197
    %v2700 = vunpack.c.l.b16 %v1198
    %v2701 = vunpack.c.h.b16 %v1198
    %v2702 = vunpack.c.l.b16 %v1199
    %v2703 = vunpack.c.h.b16 %v1199
    %v2704 = vunpack.c.l.b16 %v1200
    %v2705 = vunpack.c.h.b16 %v1200
    %v2706 = vunpack.c.l.b16 %v1201
    %v2707 = vunpack.c.h.b16 %v1201
    %v2708 = vunpack.c.l.b16 %v1202
    %v2709 = vunpack.c.h.b16 %v1202
    %v2710 = vunpack.c.l.b16 %v1203
    %v2711 = vunpack.c.h.b16 %v1203
    %v2712 = vunpack.c.l.b16 %v1204
    %v2713 = vunpack.c.h.b16 %v1204
    %v2714 = vunpack.c.l.b16 %v1205
    %v2715 = vunpack.c.h.b16 %v1205
    %v2716 = vunpack.c.l.b16 %v1206
    %v2717 = vunpack.c.h.b16 %v1206
    %v2718 = vunpack.c.l.b16 %v1207
    %v2719 = vunpack.c.h.b16 %v1207
    %v2720 = vunpack.c.l.b16 %v1208
    %v2721 = vunpack.c.h.b16 %v1208
    %v2722 = vunpack.c.l.b16 %v1209
    %v2723 = vunpack.c.h.b16 %v1209
    %v2724 = vunpack.c.l.b16 %v1210
    %v2725 = vunpack.c.h.b16 %v1210
    %v2726 = vunpack.c.l.b16 %v1211
    %v2727 = vunpack.c.h.b16 %v1211
    %v2728 = vunpack.c.l.b16 %v1212
    %v2729 = vunpack.c.h.b16 %v1212
    %v2730 = vunpack.c.l.b16 %v1213
    %v2731 = vunpack.c.h.b16 %v1213
    %v2732 = vunpack.c.l.b16 %v1214
    %v2733 = vunpack.c.h.b16 %v1214
    %v2734 = vunpack.c.l.b16 %v1215
    %v2735 = vunpack.c.h.b16 %v1215
    %v2736 = vunpack.c.l.b16 %v1216
    %v2737 = vunpack.c.h.b16 %v1216
    %v2738 = vunpack.c.l.b16 %v1217
    %v2739 = vunpack.c.h.b16 %v1217
    %v2740 = vunpack.c.l.b16 %v1218
    %v2741 = vunpack.c.h.b16 %v1218
    %v2742 = vunpack.c.l.b16 %v1219
    %v2743 = vunpack.c.h.b16 %v1219
    %v2744 = vunpack.c.l.b16 %v1220
    %v2745 = vunpack.c.h.b16 %v1220
    %v2746 = vunpack.c.l.b16 %v1221
    %v2747 = vunpack.c.h.b16 %v1221
    %v2748 = vunpack.c.l.b16 %v1222
    %v2749 = vunpack.c.h.b16 %v1222
    %v2750 = vunpack.c.l.b16 %v1223
    %v2751 = vunpack.c.h.b16 %v1223
    %v2752 = vunpack.c.l.b16 %v1224
    %v2753 = vunpack.c.h.b16 %v1224
    %v2754 = vunpack.c.l.b16 %v1225
    %v2755 = vunpack.c.h.b16 %v1225
    %v2756 = vunpack.c.l.b16 %v1226
    %v2757 = vunpack.c.h.b16 %v1226
    %v2758 = vunpack.c.l.b16 %v1227
    %v2759 = vunpack.c.h.b16 %v1227
    %v2760 = vunpack.c.l.b16 %v1228
    %v2761 = vunpack.c.h.b16 %v1228
    %v2762 = vunpack.c.l.b16 %v1229
    %v2763 = vunpack.c.h.b16 %v1229
    %v2764 = vunpack.c.l.b16 %v1230
    %v2765 = vunpack.c.h.b16 %v1230
    %v2766 = vunpack.c.l.b16 %v1231
    %v2767 = vunpack.c.h.b16 %v1231
    %v2768 = vunpack.c.l.b16 %v1232
    %v2769 = vunpack.c.h.b16 %v1232
    %v2770 = vunpack.c.l.b16 %v1233
    %v2771 = vunpack.c.h.b16 %v1233
    %v2772 = vunpack.c.l.b16 %v1234
    %v2773 = vunpack.c.h.b16 %v1234
    %v2774 = vunpack.c.l.b16 %v1235
    %v2775 = vunpack.c.h.b16 %v1235
    %v2776 = vunpack.c.l.b16 %v1236
    %v2777 = vunpack.c.h.b16 %v1236
    %v2778 = vunpack.c.l.b16 %v1237
    %v2779 = vunpack.c.h.b16 %v1237
    %v2780 = vunpack.c.l.b16 %v1238
    %v2781 = vunpack.c.h.b16 %v1238
    %v2782 = vunpack.c.l.b16 %v1239
    %v2783 = vunpack.c.h.b16 %v1239
    %v2784 = vunpack.c.l.b16 %v1240
    %v2785 = vunpack.c.h.b16 %v1240
    %v2786 = vunpack.c.l.b16 %v1241
    %v2787 = vunpack.c.h.b16 %v1241
    %v2788 = vunpack.c.l.b16 %v1242
    %v2789 = vunpack.c.h.b16 %v1242
    %v2790 = vunpack.c.l.b16 %v1243
    %v2791 = vunpack.c.h.b16 %v1243
    %v2792 = vunpack.c.l.b16 %v1244
    %v2793 = vunpack.c.h.b16 %v1244
    %v2794 = vunpack.c.l.b16 %v1245
    %v2795 = vunpack.c.h.b16 %v1245
    %v2796 = vunpack.c.l.b16 %v1246
    %v2797 = vunpack.c.h.b16 %v1246
    %v2798 = vunpack.c.l.b16 %v1247
    %v2799 = vunpack.c.h.b16 %v1247
    %v2800 = vunpack.c.l.b16 %v1248
    %v2801 = vunpack.c.h.b16 %v1248
    %v2802 = vunpack.c.l.b16 %v1249
    %v2803 = vunpack.c.h.b16 %v1249
    %v2804 = vunpack.c.l.b16 %v1250
    %v2805 = vunpack.c.h.b16 %v1250
    %v2806 = vunpack.c.l.b16 %v1251
    %v2807 = vunpack.c.h.b16 %v1251
    %v2808 = vunpack.c.l.b16 %v1252
    %v2809 = vunpack.c.h.b16 %v1252
    %v2810 = vunpack.c.l.b16 %v1253
    %v2811 = vunpack.c.h.b16 %v1253
    %v2812 = vunpack.c.l.b16 %v1254
    %v2813 = vunpack.c.h.b16 %v1254
    %v2814 = vunpack.c.l.b16 %v1255
    %v2815 = vunpack.c.h.b16 %v1255
    %v2816 = vunpack.c.l.b16 %v1256
    %v2817 = vunpack.c.h.b16 %v1256
    %v2818 = vunpack.c.l.b16 %v1257
    %v2819 = vunpack.c.h.b16 %v1257
    %v2820 = vunpack.c.l.b16 %v1258
    %v2821 = vunpack.c.h.b16 %v1258
    %v2822 = vunpack.c.l.b16 %v1259
    %v2823 = vunpack.c.h.b16 %v1259
    %v2824 = vunpack.c.l.b16 %v1260
    %v2825 = vunpack.c.h.b16 %v1260
    %v2826 = vunpack.c.l.b16 %v1261
    %v2827 = vunpack.c.h.b16 %v1261
    %v2828 = vunpack.c.l.b16 %v1262
    %v2829 = vunpack.c.h.b16 %v1262
    %v2830 = vunpack.c.l.b16 %v1263
    %v2831 = vunpack.c.h.b16 %v1263
    %v2832 = vunpack.c.l.b16 %v1264
    %v2833 = vunpack.c.h.b16 %v1264
    %v2834 = vunpack.c.l.b16 %v1265
    %v2835 = vunpack.c.h.b16 %v1265
    %v2836 = vunpack.c.l.b16 %v1266
    %v2837 = vunpack.c.h.b16 %v1266
    %v2838 = vunpack.c.l.b16 %v1267
    %v2839 = vunpack.c.h.b16 %v1267
    %v2840 = vunpack.c.l.b16 %v1268
    %v2841 = vunpack.c.h.b16 %v1268
    %v2842 = vunpack.c.l.b16 %v1269
    %v2843 = vunpack.c.h.b16 %v1269
    %v2844 = vunpack.c.l.b16 %v1270
    %v2845 = vunpack.c.h.b16 %v1270
    %v2846 = vunpack.c.l.b16 %v1271
    %v2847 = vunpack.c.h.b16 %v1271
    %v2848 = vunpack.c.l.b16 %v1272
    %v2849 = vunpack.c.h.b16 %v1272
    %v2850 = vunpack.c.l.b16 %v1273
    %v2851 = vunpack.c.h.b16 %v1273
    %v2852 = vpack.c.b16 %v1836, %v1828
    %v2853 = vpack.c.b16 %v1837, %v1829
    %v2854 = vpack.c.b16 %v1838, %v1830
    %v2855 = vpack.c.b16 %v1839, %v1831
    %v2856 = vpack.c.b16 %v1840, %v1832
    %v2857 = vpack.c.b16 %v1841, %v1833
    %v2858 = vpack.c.b16 %v1842, %v1834
    %v2859 = vpack.c.b16 %v1843, %v1835
    %v2860 = vpack.c.b16 %v1852, %v1844
    %v2861 = vpack.c.b16 %v1853, %v1845
    %v2862 = vpack.c.b16 %v1854, %v1846
    %v2863 = vpack.c.b16 %v1855, %v1847
    %v2864 = vpack.c.b16 %v1856, %v1848
    %v2865 = vpack.c.b16 %v1857, %v1849
    %v2866 = vpack.c.b16 %v1858, %v1850
    %v2867 = vpack.c.b16 %v1859, %v1851
    %v2868 = vpack.c.b16 %v1868, %v1860
    %v2869 = vpack.c.b16 %v1869, %v1861
    %v2870 = vpack.c.b16 %v1870, %v1862
    %v2871 = vpack.c.b16 %v1871, %v1863
    %v2872 = vpack.c.b16 %v1872, %v1864
    %v2873 = vpack.c.b16 %v1873, %v1865
    %v2874 = vpack.c.b16 %v1874, %v1866
    %v2875 = vpack.c.b16 %v1875, %v1867
    %v2876 = vpack.c.b16 %v1884, %v1876
    %v2877 = vpack.c.b16 %v1885, %v1877
    %v2878 = vpack.c.b16 %v1886, %v1878
    %v2879 = vpack.c.b16 %v1887, %v1879
    %v2880 = vpack.c.b16 %v1888, %v1880
    %v2881 = vpack.c.b16 %v1889, %v1881
    %v2882 = vpack.c.b16 %v1890, %v1882
    %v2883 = vpack.c.b16 %v1891, %v1883
    %v2884 = vpack.c.b16 %v1900, %v1892
    %v2885 = vpack.c.b16 %v1901, %v1893
    %v2886 = vpack.c.b16 %v1902, %v1894
    %v2887 = vpack.c.b16 %v1903, %v1895
    %v2888 = vpack.c.b16 %v1904, %v1896
    %v2889 = vpack.c.b16 %v1905, %v1897
    %v2890 = vpack.c.b16 %v1906, %v1898
    %v2891 = vpack.c.b16 %v1907, %v1899
    %v2892 = vpack.c.b16 %v1916, %v1908
    %v2893 = vpack.c.b16 %v1917, %v1909
    %v2894 = vpack.c.b16 %v1918, %v1910
    %v2895 = vpack.c.b16 %v1919, %v1911
    %v2896 = vpack.c.b16 %v1920, %v1912
    %v2897 = vpack.c.b16 %v1921, %v1913
    %v2898 = vpack.c.b16 %v1922, %v1914
    %v2899 = vpack.c.b16 %v1923, %v1915
    %v2900 = vpack.c.b16 %v1932, %v1924
    %v2901 = vpack.c.b16 %v1933, %v1925
    %v2902 = vpack.c.b16 %v1934, %v1926
    %v2903 = vpack.c.b16 %v1935, %v1927
    %v2904 = vpack.c.b16 %v1936, %v1928
    %v2905 = vpack.c.b16 %v1937, %v1929
    %v2906 = vpack.c.b16 %v1938, %v1930
    %v2907 = vpack.c.b16 %v1939, %v1931
    %v2908 = vpack.c.b16 %v1948, %v1940
    %v2909 = vpack.c.b16 %v1949, %v1941
    %v2910 = vpack.c.b16 %v1950, %v1942
    %v2911 = vpack.c.b16 %v1951, %v1943
    %v2912 = vpack.c.b16 %v1952, %v1944
    %v2913 = vpack.c.b16 %v1953, %v1945
    %v2914 = vpack.c.b16 %v1954, %v1946
    %v2915 = vpack.c.b16 %v1955, %v1947
    %v2916 = vpack.c.b16 %v1964, %v1956
    %v2917 = vpack.c.b16 %v1965, %v1957
    %v2918 = vpack.c.b16 %v1966, %v1958
    %v2919 = vpack.c.b16 %v1967, %v1959
    %v2920 = vpack.c.b16 %v1968, %v1960
    %v2921 = vpack.c.b16 %v1969, %v1961
    %v2922 = vpack.c.b16 %v1970, %v1962
    %v2923 = vpack.c.b16 %v1971, %v1963
    %v2924 = vpack.c.b16 %v1980, %v1972
    %v2925 = vpack.c.b16 %v1981, %v1973
    %v2926 = vpack.c.b16 %v1982, %v1974
    %v2927 = vpack.c.b16 %v1983, %v1975
    %v2928 = vpack.c.b16 %v1984, %v1976
    %v2929 = vpack.c.b16 %v1985, %v1977
    %v2930 = vpack.c.b16 %v1986, %v1978
    %v2931 = vpack.c.b16 %v1987, %v1979
    %v2932 = vpack.c.b16 %v1996, %v1988
    %v2933 = vpack.c.b16 %v1997, %v1989
    %v2934 = vpack.c.b16 %v1998, %v1990
    %v2935 = vpack.c.b16 %v1999, %v1991
    %v2936 = vpack.c.b16 %v2000, %v1992
    %v2937 = vpack.c.b16 %v2001, %v1993
    %v2938 = vpack.c.b16 %v2002, %v1994
    %v2939 = vpack.c.b16 %v2003, %v1995
    %v2940 = vpack.c.b16 %v2012, %v2004
    %v2941 = vpack.c.b16 %v2013, %v2005
    %v2942 = vpack.c.b16 %v2014, %v2006
    %v2943 = vpack.c.b16 %v2015, %v2007
    %v2944 = vpack.c.b16 %v2016, %v2008
    %v2945 = vpack.c.b16 %v2017, %v2009
    %v2946 = vpack.c.b16 %v2018, %v2010
    %v2947 = vpack.c.b16 %v2019, %v2011
    %v2948 = vpack.c.b16 %v2028, %v2020
    %v2949 = vpack.c.b16 %v2029, %v2021
    %v2950 = vpack.c.b16 %v2030, %v2022
    %v2951 = vpack.c.b16 %v2031, %v2023
    %v2952 = vpack.c.b16 %v2032, %v2024
    %v2953 = vpack.c.b16 %v2033, %v2025
    %v2954 = vpack.c.b16 %v2034, %v2026
    %v2955 = vpack.c.b16 %v2035, %v2027
    %v2956 = vpack.c.b16 %v2044, %v2036
    %v2957 = vpack.c.b16 %v2045, %v2037
    %v2958 = vpack.c.b16 %v2046, %v2038
    %v2959 = vpack.c.b16 %v2047, %v2039
    %v2960 = vpack.c.b16 %v2048, %v2040
    %v2961 = vpack.c.b16 %v2049, %v2041
    %v2962 = vpack.c.b16 %v2050, %v2042
    %v2963 = vpack.c.b16 %v2051, %v2043
    %v2964 = vpack.c.b16 %v2060, %v2052
    %v2965 = vpack.c.b16 %v2061, %v2053
    %v2966 = vpack.c.b16 %v2062, %v2054
    %v2967 = vpack.c.b16 %v2063, %v2055
    %v2968 = vpack.c.b16 %v2064, %v2056
    %v2969 = vpack.c.b16 %v2065, %v2057
    %v2970 = vpack.c.b16 %v2066, %v2058
    %v2971 = vpack.c.b16 %v2067, %v2059
    %v2972 = vpack.c.b16 %v2076, %v2068
    %v2973 = vpack.c.b16 %v2077, %v2069
    %v2974 = vpack.c.b16 %v2078, %v2070
    %v2975 = vpack.c.b16 %v2079, %v2071
    %v2976 = vpack.c.b16 %v2080, %v2072
    %v2977 = vpack.c.b16 %v2081, %v2073
    %v2978 = vpack.c.b16 %v2082, %v2074
    %v2979 = vpack.c.b16 %v2083, %v2075
    %v2980 = vpack.c.b16 %v2092, %v2084
    %v2981 = vpack.c.b16 %v2093, %v2085
    %v2982 = vpack.c.b16 %v2094, %v2086
    %v2983 = vpack.c.b16 %v2095, %v2087
    %v2984 = vpack.c.b16 %v2096, %v2088
    %v2985 = vpack.c.b16 %v2097, %v2089
    %v2986 = vpack.c.b16 %v2098, %v2090
    %v2987 = vpack.c.b16 %v2099, %v2091
    %v2988 = vpack.c.b16 %v2108, %v2100
    %v2989 = vpack.c.b16 %v2109, %v2101
    %v2990 = vpack.c.b16 %v2110, %v2102
    %v2991 = vpack.c.b16 %v2111, %v2103
    %v2992 = vpack.c.b16 %v2112, %v2104
    %v2993 = vpack.c.b16 %v2113, %v2105
    %v2994 = vpack.c.b16 %v2114, %v2106
    %v2995 = vpack.c.b16 %v2115, %v2107
    %v2996 = vpack.c.b16 %v2124, %v2116
    %v2997 = vpack.c.b16 %v2125, %v2117
    %v2998 = vpack.c.b16 %v2126, %v2118
    %v2999 = vpack.c.b16 %v2127, %v2119
    %v3000 = vpack.c.b16 %v2128, %v2120
    %v3001 = vpack.c.b16 %v2129, %v2121
    %v3002 = vpack.c.b16 %v2130, %v2122
    %v3003 = vpack.c.b16 %v2131, %v2123
    %v3004 = vpack.c.b16 %v2140, %v2132
    %v3005 = vpack.c.b16 %v2141, %v2133
    %v3006 = vpack.c.b16 %v2142, %v2134
    %v3007 = vpack.c.b16 %v2143, %v2135
    %v3008 = vpack.c.b16 %v2144, %v2136
    %v3009 = vpack.c.b16 %v2145, %v2137
    %v3010 = vpack.c.b16 %v2146, %v2138
    %v3011 = vpack.c.b16 %v2147, %v2139
    %v3012 = vpack.c.b16 %v2156, %v2148
    %v3013 = vpack.c.b16 %v2157, %v2149
    %v3014 = vpack.c.b16 %v2158, %v2150
    %v3015 = vpack.c.b16 %v2159, %v2151
    %v3016 = vpack.c.b16 %v2160, %v2152
    %v3017 = vpack.c.b16 %v2161, %v2153
    %v3018 = vpack.c.b16 %v2162, %v2154
    %v3019 = vpack.c.b16 %v2163, %v2155
    %v3020 = vpack.c.b16 %v2172, %v2164
    %v3021 = vpack.c.b16 %v2173, %v2165
    %v3022 = vpack.c.b16 %v2174, %v2166
    %v3023 = vpack.c.b16 %v2175, %v2167
    %v3024 = vpack.c.b16 %v2176, %v2168
    %v3025 = vpack.c.b16 %v2177, %v2169
    %v3026 = vpack.c.b16 %v2178, %v2170
    %v3027 = vpack.c.b16 %v2179, %v2171
    %v3028 = vpack.c.b16 %v2188, %v2180
    %v3029 = vpack.c.b16 %v2189, %v2181
    %v3030 = vpack.c.b16 %v2190, %v2182
    %v3031 = vpack.c.b16 %v2191, %v2183
    %v3032 = vpack.c.b16 %v2192, %v2184
    %v3033 = vpack.c.b16 %v2193, %v2185
    %v3034 = vpack.c.b16 %v2194, %v2186
    %v3035 = vpack.c.b16 %v2195, %v2187
    %v3036 = vpack.c.b16 %v2204, %v2196
    %v3037 = vpack.c.b16 %v2205, %v2197
    %v3038 = vpack.c.b16 %v2206, %v2198
    %v3039 = vpack.c.b16 %v2207, %v2199
    %v3040 = vpack.c.b16 %v2208, %v2200
    %v3041 = vpack.c.b16 %v2209, %v2201
    %v3042 = vpack.c.b16 %v2210, %v2202
    %v3043 = vpack.c.b16 %v2211, %v2203
    %v3044 = vpack.c.b16 %v2220, %v2212
    %v3045 = vpack.c.b16 %v2221, %v2213
    %v3046 = vpack.c.b16 %v2222, %v2214
    %v3047 = vpack.c.b16 %v2223, %v2215
    %v3048 = vpack.c.b16 %v2224, %v2216
    %v3049 = vpack.c.b16 %v2225, %v2217
    %v3050 = vpack.c.b16 %v2226, %v2218
    %v3051 = vpack.c.b16 %v2227, %v2219
    %v3052 = vpack.c.b16 %v2236, %v2228
    %v3053 = vpack.c.b16 %v2237, %v2229
    %v3054 = vpack.c.b16 %v2238, %v2230
    %v3055 = vpack.c.b16 %v2239, %v2231
    %v3056 = vpack.c.b16 %v2240, %v2232
    %v3057 = vpack.c.b16 %v2241, %v2233
    %v3058 = vpack.c.b16 %v2242, %v2234
    %v3059 = vpack.c.b16 %v2243, %v2235
    %v3060 = vpack.c.b16 %v2252, %v2244
    %v3061 = vpack.c.b16 %v2253, %v2245
    %v3062 = vpack.c.b16 %v2254, %v2246
    %v3063 = vpack.c.b16 %v2255, %v2247
    %v3064 = vpack.c.b16 %v2256, %v2248
    %v3065 = vpack.c.b16 %v2257, %v2249
    %v3066 = vpack.c.b16 %v2258, %v2250
    %v3067 = vpack.c.b16 %v2259, %v2251
    %v3068 = vpack.c.b16 %v2268, %v2260
    %v3069 = vpack.c.b16 %v2269, %v2261
    %v3070 = vpack.c.b16 %v2270, %v2262
    %v3071 = vpack.c.b16 %v2271, %v2263
    %v3072 = vpack.c.b16 %v2272, %v2264
    %v3073 = vpack.c.b16 %v2273, %v2265
    %v3074 = vpack.c.b16 %v2274, %v2266
    %v3075 = vpack.c.b16 %v2275, %v2267
    %v3076 = vpack.c.b16 %v2284, %v2276
    %v3077 = vpack.c.b16 %v2285, %v2277
    %v3078 = vpack.c.b16 %v2286, %v2278
    %v3079 = vpack.c.b16 %v2287, %v2279
    %v3080 = vpack.c.b16 %v2288, %v2280
    %v3081 = vpack.c.b16 %v2289, %v2281
    %v3082 = vpack.c.b16 %v2290, %v2282
    %v3083 = vpack.c.b16 %v2291, %v2283
    %v3084 = vpack.c.b16 %v2300, %v2292
    %v3085 = vpack.c.b16 %v2301, %v2293
    %v3086 = vpack.c.b16 %v2302, %v2294
    %v3087 = vpack.c.b16 %v2303, %v2295
    %v3088 = vpack.c.b16 %v2304, %v2296
    %v3089 = vpack.c.b16 %v2305, %v2297
    %v3090 = vpack.c.b16 %v2306, %v2298
    %v3091 = vpack.c.b16 %v2307, %v2299
    %v3092 = vpack.c.b16 %v2316, %v2308
    %v3093 = vpack.c.b16 %v2317, %v2309
    %v3094 = vpack.c.b16 %v2318, %v2310
    %v3095 = vpack.c.b16 %v2319, %v2311
    %v3096 = vpack.c.b16 %v2320, %v2312
    %v3097 = vpack.c.b16 %v2321, %v2313
    %v3098 = vpack.c.b16 %v2322, %v2314
    %v3099 = vpack.c.b16 %v2323, %v2315
    %v3100 = vpack.c.b16 %v2332, %v2324
    %v3101 = vpack.c.b16 %v2333, %v2325
    %v3102 = vpack.c.b16 %v2334, %v2326
    %v3103 = vpack.c.b16 %v2335, %v2327
    %v3104 = vpack.c.b16 %v2336, %v2328
    %v3105 = vpack.c.b16 %v2337, %v2329
    %v3106 = vpack.c.b16 %v2338, %v2330
    %v3107 = vpack.c.b16 %v2339, %v2331
    %v3108 = vpack.c.b16 %v2348, %v2340
    %v3109 = vpack.c.b16 %v2349, %v2341
    %v3110 = vpack.c.b16 %v2350, %v2342
    %v3111 = vpack.c.b16 %v2351, %v2343
    %v3112 = vpack.c.b16 %v2352, %v2344
    %v3113 = vpack.c.b16 %v2353, %v2345
    %v3114 = vpack.c.b16 %v2354, %v2346
    %v3115 = vpack.c.b16 %v2355, %v2347
    %v3116 = vpack.c.b16 %v2364, %v2356
    %v3117 = vpack.c.b16 %v2365, %v2357
    %v3118 = vpack.c.b16 %v2366, %v2358
    %v3119 = vpack.c.b16 %v2367, %v2359
    %v3120 = vpack.c.b16 %v2368, %v2360
    %v3121 = vpack.c.b16 %v2369, %v2361
    %v3122 = vpack.c.b16 %v2370, %v2362
    %v3123 = vpack.c.b16 %v2371, %v2363
    %v3124 = vpack.c.b16 %v2380, %v2372
    %v3125 = vpack.c.b16 %v2381, %v2373
    %v3126 = vpack.c.b16 %v2382, %v2374
    %v3127 = vpack.c.b16 %v2383, %v2375
    %v3128 = vpack.c.b16 %v2384, %v2376
    %v3129 = vpack.c.b16 %v2385, %v2377
    %v3130 = vpack.c.b16 %v2386, %v2378
    %v3131 = vpack.c.b16 %v2387, %v2379
    %v3132 = vpack.c.b16 %v2396, %v2388
    %v3133 = vpack.c.b16 %v2397, %v2389
    %v3134 = vpack.c.b16 %v2398, %v2390
    %v3135 = vpack.c.b16 %v2399, %v2391
    %v3136 = vpack.c.b16 %v2400, %v2392
    %v3137 = vpack.c.b16 %v2401, %v2393
    %v3138 = vpack.c.b16 %v2402, %v2394
    %v3139 = vpack.c.b16 %v2403, %v2395
    %v3140 = vpack.c.b16 %v2412, %v2404
    %v3141 = vpack.c.b16 %v2413, %v2405
    %v3142 = vpack.c.b16 %v2414, %v2406
    %v3143 = vpack.c.b16 %v2415, %v2407
    %v3144 = vpack.c.b16 %v2416, %v2408
    %v3145 = vpack.c.b16 %v2417, %v2409
    %v3146 = vpack.c.b16 %v2418, %v2410
    %v3147 = vpack.c.b16 %v2419, %v2411
    %v3148 = vpack.c.b16 %v2428, %v2420
    %v3149 = vpack.c.b16 %v2429, %v2421
    %v3150 = vpack.c.b16 %v2430, %v2422
    %v3151 = vpack.c.b16 %v2431, %v2423
    %v3152 = vpack.c.b16 %v2432, %v2424
    %v3153 = vpack.c.b16 %v2433, %v2425
    %v3154 = vpack.c.b16 %v2434, %v2426
    %v3155 = vpack.c.b16 %v2435, %v2427
    %v3156 = vpack.c.b16 %v2444, %v2436
    %v3157 = vpack.c.b16 %v2445, %v2437
    %v3158 = vpack.c.b16 %v2446, %v2438
    %v3159 = vpack.c.b16 %v2447, %v2439
    %v3160 = vpack.c.b16 %v2448, %v2440
    %v3161 = vpack.c.b16 %v2449, %v2441
    %v3162 = vpack.c.b16 %v2450, %v2442
    %v3163 = vpack.c.b16 %v2451, %v2443
    %v3164 = vpack.c.b16 %v2460, %v2452
    %v3165 = vpack.c.b16 %v2461, %v2453
    %v3166 = vpack.c.b16 %v2462, %v2454
    %v3167 = vpack.c.b16 %v2463, %v2455
    %v3168 = vpack.c.b16 %v2464, %v2456
    %v3169 = vpack.c.b16 %v2465, %v2457
    %v3170 = vpack.c.b16 %v2466, %v2458
    %v3171 = vpack.c.b16 %v2467, %v2459
    %v3172 = vpack.c.b16 %v2476, %v2468
    %v3173 = vpack.c.b16 %v2477, %v2469
    %v3174 = vpack.c.b16 %v2478, %v2470
    %v3175 = vpack.c.b16 %v2479, %v2471
    %v3176 = vpack.c.b16 %v2480, %v2472
    %v3177 = vpack.c.b16 %v2481, %v2473
    %v3178 = vpack.c.b16 %v2482, %v2474
    %v3179 = vpack.c.b16 %v2483, %v2475
    %v3180 = vpack.c.b16 %v2492, %v2484
    %v3181 = vpack.c.b16 %v2493, %v2485
    %v3182 = vpack.c.b16 %v2494, %v2486
    %v3183 = vpack.c.b16 %v2495, %v2487
    %v3184 = vpack.c.b16 %v2496, %v2488
    %v3185 = vpack.c.b16 %v2497, %v2489
    %v3186 = vpack.c.b16 %v2498, %v2490
    %v3187 = vpack.c.b16 %v2499, %v2491
    %v3188 = vpack.c.b16 %v2508, %v2500
    %v3189 = vpack.c.b16 %v2509, %v2501
    %v3190 = vpack.c.b16 %v2510, %v2502
    %v3191 = vpack.c.b16 %v2511, %v2503
    %v3192 = vpack.c.b16 %v2512, %v2504
    %v3193 = vpack.c.b16 %v2513, %v2505
    %v3194 = vpack.c.b16 %v2514, %v2506
    %v3195 = vpack.c.b16 %v2515, %v2507
    %v3196 = vpack.c.b16 %v2524, %v2516
    %v3197 = vpack.c.b16 %v2525, %v2517
    %v3198 = vpack.c.b16 %v2526, %v2518
    %v3199 = vpack.c.b16 %v2527, %v2519
    %v3200 = vpack.c.b16 %v2528, %v2520
    %v3201 = vpack.c.b16 %v2529, %v2521
    %v3202 = vpack.c.b16 %v2530, %v2522
    %v3203 = vpack.c.b16 %v2531, %v2523
    %v3204 = vpack.c.b16 %v2540, %v2532
    %v3205 = vpack.c.b16 %v2541, %v2533
    %v3206 = vpack.c.b16 %v2542, %v2534
    %v3207 = vpack.c.b16 %v2543, %v2535
    %v3208 = vpack.c.b16 %v2544, %v2536
    %v3209 = vpack.c.b16 %v2545, %v2537
    %v3210 = vpack.c.b16 %v2546, %v2538
    %v3211 = vpack.c.b16 %v2547, %v2539
    %v3212 = vpack.c.b16 %v2556, %v2548
    %v3213 = vpack.c.b16 %v2557, %v2549
    %v3214 = vpack.c.b16 %v2558, %v2550
    %v3215 = vpack.c.b16 %v2559, %v2551
    %v3216 = vpack.c.b16 %v2560, %v2552
    %v3217 = vpack.c.b16 %v2561, %v2553
    %v3218 = vpack.c.b16 %v2562, %v2554
    %v3219 = vpack.c.b16 %v2563, %v2555
    %v3220 = vpack.c.b16 %v2572, %v2564
    %v3221 = vpack.c.b16 %v2573, %v2565
    %v3222 = vpack.c.b16 %v2574, %v2566
    %v3223 = vpack.c.b16 %v2575, %v2567
    %v3224 = vpack.c.b16 %v2576, %v2568
    %v3225 = vpack.c.b16 %v2577, %v2569
    %v3226 = vpack.c.b16 %v2578, %v2570
    %v3227 = vpack.c.b16 %v2579, %v2571
    %v3228 = vpack.c.b16 %v2588, %v2580
    %v3229 = vpack.c.b16 %v2589, %v2581
    %v3230 = vpack.c.b16 %v2590, %v2582
    %v3231 = vpack.c.b16 %v2591, %v2583
    %v3232 = vpack.c.b16 %v2592, %v2584
    %v3233 = vpack.c.b16 %v2593, %v2585
    %v3234 = vpack.c.b16 %v2594, %v2586
    %v3235 = vpack.c.b16 %v2595, %v2587
    %v3236 = vpack.c.b16 %v2604, %v2596
    %v3237 = vpack.c.b16 %v2605, %v2597
    %v3238 = vpack.c.b16 %v2606, %v2598
    %v3239 = vpack.c.b16 %v2607, %v2599
    %v3240 = vpack.c.b16 %v2608, %v2600
    %v3241 = vpack.c.b16 %v2609, %v2601
    %v3242 = vpack.c.b16 %v2610, %v2602
    %v3243 = vpack.c.b16 %v2611, %v2603
    %v3244 = vpack.c.b16 %v2620, %v2612
    %v3245 = vpack.c.b16 %v2621, %v2613
    %v3246 = vpack.c.b16 %v2622, %v2614
    %v3247 = vpack.c.b16 %v2623, %v2615
    %v3248 = vpack.c.b16 %v2624, %v2616
    %v3249 = vpack.c.b16 %v2625, %v2617
    %v3250 = vpack.c.b16 %v2626, %v2618
    %v3251 = vpack.c.b16 %v2627, %v2619
    %v3252 = vpack.c.b16 %v2636, %v2628
    %v3253 = vpack.c.b16 %v2637, %v2629
    %v3254 = vpack.c.b16 %v2638, %v2630
    %v3255 = vpack.c.b16 %v2639, %v2631
    %v3256 = vpack.c.b16 %v2640, %v2632
    %v3257 = vpack.c.b16 %v2641, %v2633
    %v3258 = vpack.c.b16 %v2642, %v2634
    %v3259 = vpack.c.b16 %v2643, %v2635
    %v3260 = vpack.c.b16 %v2652, %v2644
    %v3261 = vpack.c.b16 %v2653, %v2645
    %v3262 = vpack.c.b16 %v2654, %v2646
    %v3263 = vpack.c.b16 %v2655, %v2647
    %v3264 = vpack.c.b16 %v2656, %v2648
    %v3265 = vpack.c.b16 %v2657, %v2649
    %v3266 = vpack.c.b16 %v2658, %v2650
    %v3267 = vpack.c.b16 %v2659, %v2651
    %v3268 = vpack.c.b16 %v2668, %v2660
    %v3269 = vpack.c.b16 %v2669, %v2661
    %v3270 = vpack.c.b16 %v2670, %v2662
    %v3271 = vpack.c.b16 %v2671, %v2663
    %v3272 = vpack.c.b16 %v2672, %v2664
    %v3273 = vpack.c.b16 %v2673, %v2665
    %v3274 = vpack.c.b16 %v2674, %v2666
    %v3275 = vpack.c.b16 %v2675, %v2667
    %v3276 = vpack.c.b16 %v2684, %v2676
    %v3277 = vpack.c.b16 %v2685, %v2677
    %v3278 = vpack.c.b16 %v2686, %v2678
    %v3279 = vpack.c.b16 %v2687, %v2679
    %v3280 = vpack.c.b16 %v2688, %v2680
    %v3281 = vpack.c.b16 %v2689, %v2681
    %v3282 = vpack.c.b16 %v2690, %v2682
    %v3283 = vpack.c.b16 %v2691, %v2683
    %v3284 = vpack.c.b16 %v2700, %v2692
    %v3285 = vpack.c.b16 %v2701, %v2693
    %v3286 = vpack.c.b16 %v2702, %v2694
    %v3287 = vpack.c.b16 %v2703, %v2695
    %v3288 = vpack.c.b16 %v2704, %v2696
    %v3289 = vpack.c.b16 %v2705, %v2697
    %v3290 = vpack.c.b16 %v2706, %v2698
    %v3291 = vpack.c.b16 %v2707, %v2699
    %v3292 = vpack.c.b16 %v2716, %v2708
    %v3293 = vpack.c.b16 %v2717, %v2709
    %v3294 = vpack.c.b16 %v2718, %v2710
    %v3295 = vpack.c.b16 %v2719, %v2711
    %v3296 = vpack.c.b16 %v2720, %v2712
    %v3297 = vpack.c.b16 %v2721, %v2713
    %v3298 = vpack.c.b16 %v2722, %v2714
    %v3299 = vpack.c.b16 %v2723, %v2715
    %v3300 = vpack.c.b16 %v2732, %v2724
    %v3301 = vpack.c.b16 %v2733, %v2725
    %v3302 = vpack.c.b16 %v2734, %v2726
    %v3303 = vpack.c.b16 %v2735, %v2727
    %v3304 = vpack.c.b16 %v2736, %v2728
    %v3305 = vpack.c.b16 %v2737, %v2729
    %v3306 = vpack.c.b16 %v2738, %v2730
    %v3307 = vpack.c.b16 %v2739, %v2731
    %v3308 = vpack.c.b16 %v2748, %v2740
    %v3309 = vpack.c.b16 %v2749, %v2741
    %v3310 = vpack.c.b16 %v2750, %v2742
    %v3311 = vpack.c.b16 %v2751, %v2743
    %v3312 = vpack.c.b16 %v2752, %v2744
    %v3313 = vpack.c.b16 %v2753, %v2745
    %v3314 = vpack.c.b16 %v2754, %v2746
    %v3315 = vpack.c.b16 %v2755, %v2747
    %v3316 = vpack.c.b16 %v2764, %v2756
    %v3317 = vpack.c.b16 %v2765, %v2757
    %v3318 = vpack.c.b16 %v2766, %v2758
    %v3319 = vpack.c.b16 %v2767, %v2759
    %v3320 = vpack.c.b16 %v2768, %v2760
    %v3321 = vpack.c.b16 %v2769, %v2761
    %v3322 = vpack.c.b16 %v2770, %v2762
    %v3323 = vpack.c.b16 %v2771, %v2763
    %v3324 = vpack.c.b16 %v2780, %v2772
    %v3325 = vpack.c.b16 %v2781, %v2773
    %v3326 = vpack.c.b16 %v2782, %v2774
    %v3327 = vpack.c.b16 %v2783, %v2775
    %v3328 = vpack.c.b16 %v2784, %v2776
    %v3329 = vpack.c.b16 %v2785, %v2777
    %v3330 = vpack.c.b16 %v2786, %v2778
    %v3331 = vpack.c.b16 %v2787, %v2779
    %v3332 = vpack.c.b16 %v2796, %v2788
    %v3333 = vpack.c.b16 %v2797, %v2789
    %v3334 = vpack.c.b16 %v2798, %v2790
    %v3335 = vpack.c.b16 %v2799, %v2791
    %v3336 = vpack.c.b16 %v2800, %v2792
    %v3337 = vpack.c.b16 %v2801, %v2793
    %v3338 = vpack.c.b16 %v2802, %v2794
    %v3339 = vpack.c.b16 %v2803, %v2795
    %v3340 = vpack.c.b16 %v2812, %v2804
    %v3341 = vpack.c.b16 %v2813, %v2805
    %v3342 = vpack.c.b16 %v2814, %v2806
    %v3343 = vpack.c.b16 %v2815, %v2807
    %v3344 = vpack.c.b16 %v2816, %v2808
    %v3345 = vpack.c.b16 %v2817, %v2809
    %v3346 = vpack.c.b16 %v2818, %v2810
    %v3347 = vpack.c.b16 %v2819, %v2811
    %v3348 = vpack.c.b16 %v2828, %v2820
    %v3349 = vpack.c.b16 %v2829, %v2821
    %v3350 = vpack.c.b16 %v2830, %v2822
    %v3351 = vpack.c.b16 %v2831, %v2823
    %v3352 = vpack.c.b16 %v2832, %v2824
    %v3353 = vpack.c.b16 %v2833, %v2825
    %v3354 = vpack.c.b16 %v2834, %v2826
    %v3355 = vpack.c.b16 %v2835, %v2827
    %v3356 = vpack.c.b16 %v2844, %v2836
    %v3357 = vpack.c.b16 %v2845, %v2837
    %v3358 = vpack.c.b16 %v2846, %v2838
    %v3359 = vpack.c.b16 %v2847, %v2839
    %v3360 = vpack.c.b16 %v2848, %v2840
    %v3361 = vpack.c.b16 %v2849, %v2841
    %v3362 = vpack.c.b16 %v2850, %v2842
    %v3363 = vpack.c.b16 %v2851, %v2843
    %3876 = vmatprep.subr.bf16.mxu0 %v2909
    %3877 = vmatpush1.bf16.msra.mxu0 %v2908
    %3878 = vmatprep.subr.bf16.mxu0 %v2901
    %3879 = vmatpush1.bf16.msra.mxu0 %v2900
    %3880 = vmatprep.subr.bf16.mxu0 %v2893
    %3881 = vmatpush1.bf16.msra.mxu0 %v2892
    %3882 = vmatprep.subr.bf16.mxu0 %v2885
    %3883 = vmatpush1.bf16.msra.mxu0 %v2884
    %3884 = vmatprep.subr.bf16.mxu0 %v2877
    %3885 = vmatpush1.bf16.msra.mxu0 %v2876
    %3886 = vmatprep.subr.bf16.mxu0 %v2869
    %3887 = vmatpush1.bf16.msra.mxu0 %v2868
    %3888 = vmatprep.subr.bf16.mxu0 %v2861
    %3889 = vmatpush1.bf16.msra.mxu0 %v2860
    %3890 = vmatprep.subr.bf16.mxu0 %v2853
    %3891 = vmatpush1.bf16.msra.mxu0 %v2852
    %3892 = vmatprep.subr.bf16.mxu0 %v2973
    %3893 = vmatpush2.bf16.msra.mxu0 %v2972
    %3894 = vmatprep.subr.bf16.mxu0 %v2965
    %3895 = vmatpush2.bf16.msra.mxu0 %v2964
    %3896 = vmatprep.subr.bf16.mxu0 %v2957
    %3897 = vmatpush2.bf16.msra.mxu0 %v2956
    %3898 = vmatprep.subr.bf16.mxu0 %v2949
    %3899 = vmatpush2.bf16.msra.mxu0 %v2948
    %3900 = vmatprep.subr.bf16.mxu0 %v2941
    %3901 = vmatpush2.bf16.msra.mxu0 %v2940
    %3902 = vmatprep.subr.bf16.mxu0 %v2933
    %3903 = vmatpush2.bf16.msra.mxu0 %v2932
    %3904 = vmatprep.subr.bf16.mxu0 %v2925
    %3905 = vmatpush2.bf16.msra.mxu0 %v2924
    %3906 = vmatprep.subr.bf16.mxu0 %v2917
    %3907 = vmatpush2.bf16.msra.mxu0 %v2916
    %3908 = vmatprep.mubr.bf16.mxu0 %v755
    %3909 = vmatmul.mubr.bf16.gmra.mxu0 %v754
    %v3910 = vpop.f32.mrf.mxu0
    %v3911 = vadd.f32 %v1279, %v3910
    %v3912 = vpop.f32.mrf.mxu0
    %v3913 = vadd.f32 %v1283, %v3912
    %v3914 = vpop.f32.mrf.mxu0
    %v3915 = vpop.f32.mrf.mxu0
    %3916 = vdwg.mxu0
    %3917 = vmatprep.subr.bf16.mxu0 %v3037
    %3918 = vmatpush1.bf16.msra.mxu0 %v3036
    %3919 = vmatprep.subr.bf16.mxu0 %v3029
    %3920 = vmatpush1.bf16.msra.mxu0 %v3028
    %3921 = vmatprep.subr.bf16.mxu0 %v3021
    %3922 = vmatpush1.bf16.msra.mxu0 %v3020
    %3923 = vmatprep.subr.bf16.mxu0 %v3013
    %3924 = vmatpush1.bf16.msra.mxu0 %v3012
    %3925 = vmatprep.subr.bf16.mxu0 %v3005
    %3926 = vmatpush1.bf16.msra.mxu0 %v3004
    %3927 = vmatprep.subr.bf16.mxu0 %v2997
    %3928 = vmatpush1.bf16.msra.mxu0 %v2996
    %3929 = vmatprep.subr.bf16.mxu0 %v2989
    %3930 = vmatpush1.bf16.msra.mxu0 %v2988
    %3931 = vmatprep.subr.bf16.mxu0 %v2981
    %3932 = vmatpush1.bf16.msra.mxu0 %v2980
    %3933 = vmatprep.subr.bf16.mxu0 %v3101
    %3934 = vmatpush2.bf16.msra.mxu0 %v3100
    %3935 = vmatprep.subr.bf16.mxu0 %v3093
    %3936 = vmatpush2.bf16.msra.mxu0 %v3092
    %3937 = vmatprep.subr.bf16.mxu0 %v3085
    %3938 = vmatpush2.bf16.msra.mxu0 %v3084
    %3939 = vmatprep.subr.bf16.mxu0 %v3077
    %3940 = vmatpush2.bf16.msra.mxu0 %v3076
    %3941 = vmatprep.subr.bf16.mxu0 %v3069
    %3942 = vmatpush2.bf16.msra.mxu0 %v3068
    %3943 = vmatprep.subr.bf16.mxu0 %v3061
    %3944 = vmatpush2.bf16.msra.mxu0 %v3060
    %3945 = vmatprep.subr.bf16.mxu0 %v3053
    %3946 = vmatpush2.bf16.msra.mxu0 %v3052
    %3947 = vmatprep.subr.bf16.mxu0 %v3045
    %3948 = vmatpush2.bf16.msra.mxu0 %v3044
    %3949 = vmatprep.mubr.bf16.mxu0 %v757
    %3950 = vmatmul.mubr.bf16.gmra.mxu0 %v756
    %v3951 = vpop.f32.mrf.mxu0
    %v3952 = vadd.f32 %v3911, %v3951
    %v3953 = vpop.f32.mrf.mxu0
    %v3954 = vadd.f32 %v3913, %v3953
    %v3955 = vpop.f32.mrf.mxu0
    %v3956 = vpop.f32.mrf.mxu0
    %3957 = vdwg.mxu0
    %3958 = vmatprep.subr.bf16.mxu0 %v3165
    %3959 = vmatpush1.bf16.msra.mxu0 %v3164
    %3960 = vmatprep.subr.bf16.mxu0 %v3157
    %3961 = vmatpush1.bf16.msra.mxu0 %v3156
    %3962 = vmatprep.subr.bf16.mxu0 %v3149
    %3963 = vmatpush1.bf16.msra.mxu0 %v3148
    %3964 = vmatprep.subr.bf16.mxu0 %v3141
    %3965 = vmatpush1.bf16.msra.mxu0 %v3140
    %3966 = vmatprep.subr.bf16.mxu0 %v3133
    %3967 = vmatpush1.bf16.msra.mxu0 %v3132
    %3968 = vmatprep.subr.bf16.mxu0 %v3125
    %3969 = vmatpush1.bf16.msra.mxu0 %v3124
    %3970 = vmatprep.subr.bf16.mxu0 %v3117
    %3971 = vmatpush1.bf16.msra.mxu0 %v3116
    %3972 = vmatprep.subr.bf16.mxu0 %v3109
    %3973 = vmatpush1.bf16.msra.mxu0 %v3108
    %3974 = vmatprep.subr.bf16.mxu0 %v3229
    %3975 = vmatpush2.bf16.msra.mxu0 %v3228
    %3976 = vmatprep.subr.bf16.mxu0 %v3221
    %3977 = vmatpush2.bf16.msra.mxu0 %v3220
    %3978 = vmatprep.subr.bf16.mxu0 %v3213
    %3979 = vmatpush2.bf16.msra.mxu0 %v3212
    %3980 = vmatprep.subr.bf16.mxu0 %v3205
    %3981 = vmatpush2.bf16.msra.mxu0 %v3204
    %3982 = vmatprep.subr.bf16.mxu0 %v3197
    %3983 = vmatpush2.bf16.msra.mxu0 %v3196
    %3984 = vmatprep.subr.bf16.mxu0 %v3189
    %3985 = vmatpush2.bf16.msra.mxu0 %v3188
    %3986 = vmatprep.subr.bf16.mxu0 %v3181
    %3987 = vmatpush2.bf16.msra.mxu0 %v3180
    %3988 = vmatprep.subr.bf16.mxu0 %v3173
    %3989 = vmatpush2.bf16.msra.mxu0 %v3172
    %3990 = vmatprep.mubr.bf16.mxu0 %v759
    %3991 = vmatmul.mubr.bf16.gmra.mxu0 %v758
    %v3992 = vpop.f32.mrf.mxu0
    %v3993 = vadd.f32 %v3952, %v3992
    %v3994 = vpop.f32.mrf.mxu0
    %v3995 = vadd.f32 %v3954, %v3994
    %v3996 = vpop.f32.mrf.mxu0
    %v3997 = vpop.f32.mrf.mxu0
    %3998 = vdwg.mxu0
    %3999 = vmatprep.subr.bf16.mxu0 %v3293
    %4000 = vmatpush1.bf16.msra.mxu0 %v3292
    %4001 = vmatprep.subr.bf16.mxu0 %v3285
    %4002 = vmatpush1.bf16.msra.mxu0 %v3284
    %4003 = vmatprep.subr.bf16.mxu0 %v3277
    %4004 = vmatpush1.bf16.msra.mxu0 %v3276
    %4005 = vmatprep.subr.bf16.mxu0 %v3269
    %4006 = vmatpush1.bf16.msra.mxu0 %v3268
    %4007 = vmatprep.subr.bf16.mxu0 %v3261
    %4008 = vmatpush1.bf16.msra.mxu0 %v3260
    %4009 = vmatprep.subr.bf16.mxu0 %v3253
    %4010 = vmatpush1.bf16.msra.mxu0 %v3252
    %4011 = vmatprep.subr.bf16.mxu0 %v3245
    %4012 = vmatpush1.bf16.msra.mxu0 %v3244
    %4013 = vmatprep.subr.bf16.mxu0 %v3237
    %4014 = vmatpush1.bf16.msra.mxu0 %v3236
    %4015 = vmatprep.subr.bf16.mxu0 %v3357
    %4016 = vmatpush2.bf16.msra.mxu0 %v3356
    %4017 = vmatprep.subr.bf16.mxu0 %v3349
    %4018 = vmatpush2.bf16.msra.mxu0 %v3348
    %4019 = vmatprep.subr.bf16.mxu0 %v3341
    %4020 = vmatpush2.bf16.msra.mxu0 %v3340
    %4021 = vmatprep.subr.bf16.mxu0 %v3333
    %4022 = vmatpush2.bf16.msra.mxu0 %v3332
    %4023 = vmatprep.subr.bf16.mxu0 %v3325
    %4024 = vmatpush2.bf16.msra.mxu0 %v3324
    %4025 = vmatprep.subr.bf16.mxu0 %v3317
    %4026 = vmatpush2.bf16.msra.mxu0 %v3316
    %4027 = vmatprep.subr.bf16.mxu0 %v3309
    %4028 = vmatpush2.bf16.msra.mxu0 %v3308
    %4029 = vmatprep.subr.bf16.mxu0 %v3301
    %4030 = vmatpush2.bf16.msra.mxu0 %v3300
    %4031 = vmatprep.mubr.bf16.mxu0 %v761
    %4032 = vmatmul.mubr.bf16.gmra.mxu0 %v760
    %v4033 = vpop.f32.mrf.mxu0
    %v4034 = vadd.f32 %v3993, %v4033
    %v4035 = vpop.f32.mrf.mxu0
    %v4036 = vadd.f32 %v3995, %v4035
    %v4037 = vpop.f32.mrf.mxu0
    %v4038 = vpop.f32.mrf.mxu0
    %4039 = vdwg.mxu0
    %4040 = vmatprep.subr.bf16.mxu0 %v2911
    %4041 = vmatpush1.bf16.msra.mxu0 %v2910
    %4042 = vmatprep.subr.bf16.mxu0 %v2903
    %4043 = vmatpush1.bf16.msra.mxu0 %v2902
    %4044 = vmatprep.subr.bf16.mxu0 %v2895
    %4045 = vmatpush1.bf16.msra.mxu0 %v2894
    %4046 = vmatprep.subr.bf16.mxu0 %v2887
    %4047 = vmatpush1.bf16.msra.mxu0 %v2886
    %4048 = vmatprep.subr.bf16.mxu0 %v2879
    %4049 = vmatpush1.bf16.msra.mxu0 %v2878
    %4050 = vmatprep.subr.bf16.mxu0 %v2871
    %4051 = vmatpush1.bf16.msra.mxu0 %v2870
    %4052 = vmatprep.subr.bf16.mxu0 %v2863
    %4053 = vmatpush1.bf16.msra.mxu0 %v2862
    %4054 = vmatprep.subr.bf16.mxu0 %v2855
    %4055 = vmatpush1.bf16.msra.mxu0 %v2854
    %4056 = vmatprep.subr.bf16.mxu0 %v2975
    %4057 = vmatpush2.bf16.msra.mxu0 %v2974
    %4058 = vmatprep.subr.bf16.mxu0 %v2967
    %4059 = vmatpush2.bf16.msra.mxu0 %v2966
    %4060 = vmatprep.subr.bf16.mxu0 %v2959
    %4061 = vmatpush2.bf16.msra.mxu0 %v2958
    %4062 = vmatprep.subr.bf16.mxu0 %v2951
    %4063 = vmatpush2.bf16.msra.mxu0 %v2950
    %4064 = vmatprep.subr.bf16.mxu0 %v2943
    %4065 = vmatpush2.bf16.msra.mxu0 %v2942
    %4066 = vmatprep.subr.bf16.mxu0 %v2935
    %4067 = vmatpush2.bf16.msra.mxu0 %v2934
    %4068 = vmatprep.subr.bf16.mxu0 %v2927
    %4069 = vmatpush2.bf16.msra.mxu0 %v2926
    %4070 = vmatprep.subr.bf16.mxu0 %v2919
    %4071 = vmatpush2.bf16.msra.mxu0 %v2918
    %4072 = vmatprep.mubr.bf16.mxu0 %v755
    %4073 = vmatmul.mubr.bf16.gmra.mxu0 %v754
    %v4074 = vpop.f32.mrf.mxu0
    %v4075 = vadd.f32 %v1287, %v4074
    %v4076 = vpop.f32.mrf.mxu0
    %v4077 = vadd.f32 %v1291, %v4076
    %v4078 = vpop.f32.mrf.mxu0
    %v4079 = vpop.f32.mrf.mxu0
    %4080 = vdwg.mxu0
    %4081 = vmatprep.subr.bf16.mxu0 %v3039
    %4082 = vmatpush1.bf16.msra.mxu0 %v3038
    %4083 = vmatprep.subr.bf16.mxu0 %v3031
    %4084 = vmatpush1.bf16.msra.mxu0 %v3030
    %4085 = vmatprep.subr.bf16.mxu0 %v3023
    %4086 = vmatpush1.bf16.msra.mxu0 %v3022
    %4087 = vmatprep.subr.bf16.mxu0 %v3015
    %4088 = vmatpush1.bf16.msra.mxu0 %v3014
    %4089 = vmatprep.subr.bf16.mxu0 %v3007
    %4090 = vmatpush1.bf16.msra.mxu0 %v3006
    %4091 = vmatprep.subr.bf16.mxu0 %v2999
    %4092 = vmatpush1.bf16.msra.mxu0 %v2998
    %4093 = vmatprep.subr.bf16.mxu0 %v2991
    %4094 = vmatpush1.bf16.msra.mxu0 %v2990
    %4095 = vmatprep.subr.bf16.mxu0 %v2983
    %4096 = vmatpush1.bf16.msra.mxu0 %v2982
    %4097 = vmatprep.subr.bf16.mxu0 %v3103
    %4098 = vmatpush2.bf16.msra.mxu0 %v3102
    %4099 = vmatprep.subr.bf16.mxu0 %v3095
    %4100 = vmatpush2.bf16.msra.mxu0 %v3094
    %4101 = vmatprep.subr.bf16.mxu0 %v3087
    %4102 = vmatpush2.bf16.msra.mxu0 %v3086
    %4103 = vmatprep.subr.bf16.mxu0 %v3079
    %4104 = vmatpush2.bf16.msra.mxu0 %v3078
    %4105 = vmatprep.subr.bf16.mxu0 %v3071
    %4106 = vmatpush2.bf16.msra.mxu0 %v3070
    %4107 = vmatprep.subr.bf16.mxu0 %v3063
    %4108 = vmatpush2.bf16.msra.mxu0 %v3062
    %4109 = vmatprep.subr.bf16.mxu0 %v3055
    %4110 = vmatpush2.bf16.msra.mxu0 %v3054
    %4111 = vmatprep.subr.bf16.mxu0 %v3047
    %4112 = vmatpush2.bf16.msra.mxu0 %v3046
    %4113 = vmatprep.mubr.bf16.mxu0 %v757
    %4114 = vmatmul.mubr.bf16.gmra.mxu0 %v756
    %v4115 = vpop.f32.mrf.mxu0
    %v4116 = vadd.f32 %v4075, %v4115
    %v4117 = vpop.f32.mrf.mxu0
    %v4118 = vadd.f32 %v4077, %v4117
    %v4119 = vpop.f32.mrf.mxu0
    %v4120 = vpop.f32.mrf.mxu0
    %4121 = vdwg.mxu0
    %4122 = vmatprep.subr.bf16.mxu0 %v3167
    %4123 = vmatpush1.bf16.msra.mxu0 %v3166
    %4124 = vmatprep.subr.bf16.mxu0 %v3159
    %4125 = vmatpush1.bf16.msra.mxu0 %v3158
    %4126 = vmatprep.subr.bf16.mxu0 %v3151
    %4127 = vmatpush1.bf16.msra.mxu0 %v3150
    %4128 = vmatprep.subr.bf16.mxu0 %v3143
    %4129 = vmatpush1.bf16.msra.mxu0 %v3142
    %4130 = vmatprep.subr.bf16.mxu0 %v3135
    %4131 = vmatpush1.bf16.msra.mxu0 %v3134
    %4132 = vmatprep.subr.bf16.mxu0 %v3127
    %4133 = vmatpush1.bf16.msra.mxu0 %v3126
    %4134 = vmatprep.subr.bf16.mxu0 %v3119
    %4135 = vmatpush1.bf16.msra.mxu0 %v3118
    %4136 = vmatprep.subr.bf16.mxu0 %v3111
    %4137 = vmatpush1.bf16.msra.mxu0 %v3110
    %4138 = vmatprep.subr.bf16.mxu0 %v3231
    %4139 = vmatpush2.bf16.msra.mxu0 %v3230
    %4140 = vmatprep.subr.bf16.mxu0 %v3223
    %4141 = vmatpush2.bf16.msra.mxu0 %v3222
    %4142 = vmatprep.subr.bf16.mxu0 %v3215
    %4143 = vmatpush2.bf16.msra.mxu0 %v3214
    %4144 = vmatprep.subr.bf16.mxu0 %v3207
    %4145 = vmatpush2.bf16.msra.mxu0 %v3206
    %4146 = vmatprep.subr.bf16.mxu0 %v3199
    %4147 = vmatpush2.bf16.msra.mxu0 %v3198
    %4148 = vmatprep.subr.bf16.mxu0 %v3191
    %4149 = vmatpush2.bf16.msra.mxu0 %v3190
    %4150 = vmatprep.subr.bf16.mxu0 %v3183
    %4151 = vmatpush2.bf16.msra.mxu0 %v3182
    %4152 = vmatprep.subr.bf16.mxu0 %v3175
    %4153 = vmatpush2.bf16.msra.mxu0 %v3174
    %4154 = vmatprep.mubr.bf16.mxu0 %v759
    %4155 = vmatmul.mubr.bf16.gmra.mxu0 %v758
    %v4156 = vpop.f32.mrf.mxu0
    %v4157 = vadd.f32 %v4116, %v4156
    %v4158 = vpop.f32.mrf.mxu0
    %v4159 = vadd.f32 %v4118, %v4158
    %v4160 = vpop.f32.mrf.mxu0
    %v4161 = vpop.f32.mrf.mxu0
    %4162 = vdwg.mxu0
    %4163 = vmatprep.subr.bf16.mxu0 %v3295
    %4164 = vmatpush1.bf16.msra.mxu0 %v3294
    %4165 = vmatprep.subr.bf16.mxu0 %v3287
    %4166 = vmatpush1.bf16.msra.mxu0 %v3286
    %4167 = vmatprep.subr.bf16.mxu0 %v3279
    %4168 = vmatpush1.bf16.msra.mxu0 %v3278
    %4169 = vmatprep.subr.bf16.mxu0 %v3271
    %4170 = vmatpush1.bf16.msra.mxu0 %v3270
    %4171 = vmatprep.subr.bf16.mxu0 %v3263
    %4172 = vmatpush1.bf16.msra.mxu0 %v3262
    %4173 = vmatprep.subr.bf16.mxu0 %v3255
    %4174 = vmatpush1.bf16.msra.mxu0 %v3254
    %4175 = vmatprep.subr.bf16.mxu0 %v3247
    %4176 = vmatpush1.bf16.msra.mxu0 %v3246
    %4177 = vmatprep.subr.bf16.mxu0 %v3239
    %4178 = vmatpush1.bf16.msra.mxu0 %v3238
    %4179 = vmatprep.subr.bf16.mxu0 %v3359
    %4180 = vmatpush2.bf16.msra.mxu0 %v3358
    %4181 = vmatprep.subr.bf16.mxu0 %v3351
    %4182 = vmatpush2.bf16.msra.mxu0 %v3350
    %4183 = vmatprep.subr.bf16.mxu0 %v3343
    %4184 = vmatpush2.bf16.msra.mxu0 %v3342
    %4185 = vmatprep.subr.bf16.mxu0 %v3335
    %4186 = vmatpush2.bf16.msra.mxu0 %v3334
    %4187 = vmatprep.subr.bf16.mxu0 %v3327
    %4188 = vmatpush2.bf16.msra.mxu0 %v3326
    %4189 = vmatprep.subr.bf16.mxu0 %v3319
    %4190 = vmatpush2.bf16.msra.mxu0 %v3318
    %4191 = vmatprep.subr.bf16.mxu0 %v3311
    %4192 = vmatpush2.bf16.msra.mxu0 %v3310
    %4193 = vmatprep.subr.bf16.mxu0 %v3303
    %4194 = vmatpush2.bf16.msra.mxu0 %v3302
    %4195 = vmatprep.mubr.bf16.mxu0 %v761
    %4196 = vmatmul.mubr.bf16.gmra.mxu0 %v760
    %v4197 = vpop.f32.mrf.mxu0
    %v4198 = vadd.f32 %v4157, %v4197
    %v4199 = vpop.f32.mrf.mxu0
    %v4200 = vadd.f32 %v4159, %v4199
    %v4201 = vpop.f32.mrf.mxu0
    %v4202 = vpop.f32.mrf.mxu0
    %4203 = vdwg.mxu0
    %4204 = vmatprep.subr.bf16.mxu0 %v2913
    %4205 = vmatpush1.bf16.msra.mxu0 %v2912
    %4206 = vmatprep.subr.bf16.mxu0 %v2905
    %4207 = vmatpush1.bf16.msra.mxu0 %v2904
    %4208 = vmatprep.subr.bf16.mxu0 %v2897
    %4209 = vmatpush1.bf16.msra.mxu0 %v2896
    %4210 = vmatprep.subr.bf16.mxu0 %v2889
    %4211 = vmatpush1.bf16.msra.mxu0 %v2888
    %4212 = vmatprep.subr.bf16.mxu0 %v2881
    %4213 = vmatpush1.bf16.msra.mxu0 %v2880
    %4214 = vmatprep.subr.bf16.mxu0 %v2873
    %4215 = vmatpush1.bf16.msra.mxu0 %v2872
    %4216 = vmatprep.subr.bf16.mxu0 %v2865
    %4217 = vmatpush1.bf16.msra.mxu0 %v2864
    %4218 = vmatprep.subr.bf16.mxu0 %v2857
    %4219 = vmatpush1.bf16.msra.mxu0 %v2856
    %4220 = vmatprep.subr.bf16.mxu0 %v2977
    %4221 = vmatpush2.bf16.msra.mxu0 %v2976
    %4222 = vmatprep.subr.bf16.mxu0 %v2969
    %4223 = vmatpush2.bf16.msra.mxu0 %v2968
    %4224 = vmatprep.subr.bf16.mxu0 %v2961
    %4225 = vmatpush2.bf16.msra.mxu0 %v2960
    %4226 = vmatprep.subr.bf16.mxu0 %v2953
    %4227 = vmatpush2.bf16.msra.mxu0 %v2952
    %4228 = vmatprep.subr.bf16.mxu0 %v2945
    %4229 = vmatpush2.bf16.msra.mxu0 %v2944
    %4230 = vmatprep.subr.bf16.mxu0 %v2937
    %4231 = vmatpush2.bf16.msra.mxu0 %v2936
    %4232 = vmatprep.subr.bf16.mxu0 %v2929
    %4233 = vmatpush2.bf16.msra.mxu0 %v2928
    %4234 = vmatprep.subr.bf16.mxu0 %v2921
    %4235 = vmatpush2.bf16.msra.mxu0 %v2920
    %4236 = vmatprep.mubr.bf16.mxu0 %v755
    %4237 = vmatmul.mubr.bf16.gmra.mxu0 %v754
    %v4238 = vpop.f32.mrf.mxu0
    %v4239 = vadd.f32 %v1295, %v4238
    %v4240 = vpop.f32.mrf.mxu0
    %v4241 = vadd.f32 %v1299, %v4240
    %v4242 = vpop.f32.mrf.mxu0
    %v4243 = vpop.f32.mrf.mxu0
    %4244 = vdwg.mxu0
    %4245 = vmatprep.subr.bf16.mxu0 %v3041
    %4246 = vmatpush1.bf16.msra.mxu0 %v3040
    %4247 = vmatprep.subr.bf16.mxu0 %v3033
    %4248 = vmatpush1.bf16.msra.mxu0 %v3032
    %4249 = vmatprep.subr.bf16.mxu0 %v3025
    %4250 = vmatpush1.bf16.msra.mxu0 %v3024
    %4251 = vmatprep.subr.bf16.mxu0 %v3017
    %4252 = vmatpush1.bf16.msra.mxu0 %v3016
    %4253 = vmatprep.subr.bf16.mxu0 %v3009
    %4254 = vmatpush1.bf16.msra.mxu0 %v3008
    %4255 = vmatprep.subr.bf16.mxu0 %v3001
    %4256 = vmatpush1.bf16.msra.mxu0 %v3000
    %4257 = vmatprep.subr.bf16.mxu0 %v2993
    %4258 = vmatpush1.bf16.msra.mxu0 %v2992
    %4259 = vmatprep.subr.bf16.mxu0 %v2985
    %4260 = vmatpush1.bf16.msra.mxu0 %v2984
    %4261 = vmatprep.subr.bf16.mxu0 %v3105
    %4262 = vmatpush2.bf16.msra.mxu0 %v3104
    %4263 = vmatprep.subr.bf16.mxu0 %v3097
    %4264 = vmatpush2.bf16.msra.mxu0 %v3096
    %4265 = vmatprep.subr.bf16.mxu0 %v3089
    %4266 = vmatpush2.bf16.msra.mxu0 %v3088
    %4267 = vmatprep.subr.bf16.mxu0 %v3081
    %4268 = vmatpush2.bf16.msra.mxu0 %v3080
    %4269 = vmatprep.subr.bf16.mxu0 %v3073
    %4270 = vmatpush2.bf16.msra.mxu0 %v3072
    %4271 = vmatprep.subr.bf16.mxu0 %v3065
    %4272 = vmatpush2.bf16.msra.mxu0 %v3064
    %4273 = vmatprep.subr.bf16.mxu0 %v3057
    %4274 = vmatpush2.bf16.msra.mxu0 %v3056
    %4275 = vmatprep.subr.bf16.mxu0 %v3049
    %4276 = vmatpush2.bf16.msra.mxu0 %v3048
    %4277 = vmatprep.mubr.bf16.mxu0 %v757
    %4278 = vmatmul.mubr.bf16.gmra.mxu0 %v756
    %v4279 = vpop.f32.mrf.mxu0
    %v4280 = vadd.f32 %v4239, %v4279
    %v4281 = vpop.f32.mrf.mxu0
    %v4282 = vadd.f32 %v4241, %v4281
    %v4283 = vpop.f32.mrf.mxu0
    %v4284 = vpop.f32.mrf.mxu0
    %4285 = vdwg.mxu0
    %4286 = vmatprep.subr.bf16.mxu0 %v3169
    %4287 = vmatpush1.bf16.msra.mxu0 %v3168
    %4288 = vmatprep.subr.bf16.mxu0 %v3161
    %4289 = vmatpush1.bf16.msra.mxu0 %v3160
    %4290 = vmatprep.subr.bf16.mxu0 %v3153
    %4291 = vmatpush1.bf16.msra.mxu0 %v3152
    %4292 = vmatprep.subr.bf16.mxu0 %v3145
    %4293 = vmatpush1.bf16.msra.mxu0 %v3144
    %4294 = vmatprep.subr.bf16.mxu0 %v3137
    %4295 = vmatpush1.bf16.msra.mxu0 %v3136
    %4296 = vmatprep.subr.bf16.mxu0 %v3129
    %4297 = vmatpush1.bf16.msra.mxu0 %v3128
    %4298 = vmatprep.subr.bf16.mxu0 %v3121
    %4299 = vmatpush1.bf16.msra.mxu0 %v3120
    %4300 = vmatprep.subr.bf16.mxu0 %v3113
    %4301 = vmatpush1.bf16.msra.mxu0 %v3112
    %4302 = vmatprep.subr.bf16.mxu0 %v3233
    %4303 = vmatpush2.bf16.msra.mxu0 %v3232
    %4304 = vmatprep.subr.bf16.mxu0 %v3225
    %4305 = vmatpush2.bf16.msra.mxu0 %v3224
    %4306 = vmatprep.subr.bf16.mxu0 %v3217
    %4307 = vmatpush2.bf16.msra.mxu0 %v3216
    %4308 = vmatprep.subr.bf16.mxu0 %v3209
    %4309 = vmatpush2.bf16.msra.mxu0 %v3208
    %4310 = vmatprep.subr.bf16.mxu0 %v3201
    %4311 = vmatpush2.bf16.msra.mxu0 %v3200
    %4312 = vmatprep.subr.bf16.mxu0 %v3193
    %4313 = vmatpush2.bf16.msra.mxu0 %v3192
    %4314 = vmatprep.subr.bf16.mxu0 %v3185
    %4315 = vmatpush2.bf16.msra.mxu0 %v3184
    %4316 = vmatprep.subr.bf16.mxu0 %v3177
    %4317 = vmatpush2.bf16.msra.mxu0 %v3176
    %4318 = vmatprep.mubr.bf16.mxu0 %v759
    %4319 = vmatmul.mubr.bf16.gmra.mxu0 %v758
    %v4320 = vpop.f32.mrf.mxu0
    %v4321 = vadd.f32 %v4280, %v4320
    %v4322 = vpop.f32.mrf.mxu0
    %v4323 = vadd.f32 %v4282, %v4322
    %v4324 = vpop.f32.mrf.mxu0
    %v4325 = vpop.f32.mrf.mxu0
    %4326 = vdwg.mxu0
    %4327 = vmatprep.subr.bf16.mxu0 %v3297
    %4328 = vmatpush1.bf16.msra.mxu0 %v3296
    %4329 = vmatprep.subr.bf16.mxu0 %v3289
    %4330 = vmatpush1.bf16.msra.mxu0 %v3288
    %4331 = vmatprep.subr.bf16.mxu0 %v3281
    %4332 = vmatpush1.bf16.msra.mxu0 %v3280
    %4333 = vmatprep.subr.bf16.mxu0 %v3273
    %4334 = vmatpush1.bf16.msra.mxu0 %v3272
    %4335 = vmatprep.subr.bf16.mxu0 %v3265
    %4336 = vmatpush1.bf16.msra.mxu0 %v3264
    %4337 = vmatprep.subr.bf16.mxu0 %v3257
    %4338 = vmatpush1.bf16.msra.mxu0 %v3256
    %4339 = vmatprep.subr.bf16.mxu0 %v3249
    %4340 = vmatpush1.bf16.msra.mxu0 %v3248
    %4341 = vmatprep.subr.bf16.mxu0 %v3241
    %4342 = vmatpush1.bf16.msra.mxu0 %v3240
    %4343 = vmatprep.subr.bf16.mxu0 %v3361
    %4344 = vmatpush2.bf16.msra.mxu0 %v3360
    %4345 = vmatprep.subr.bf16.mxu0 %v3353
    %4346 = vmatpush2.bf16.msra.mxu0 %v3352
    %4347 = vmatprep.subr.bf16.mxu0 %v3345
    %4348 = vmatpush2.bf16.msra.mxu0 %v3344
    %4349 = vmatprep.subr.bf16.mxu0 %v3337
    %4350 = vmatpush2.bf16.msra.mxu0 %v3336
    %4351 = vmatprep.subr.bf16.mxu0 %v3329
    %4352 = vmatpush2.bf16.msra.mxu0 %v3328
    %4353 = vmatprep.subr.bf16.mxu0 %v3321
    %4354 = vmatpush2.bf16.msra.mxu0 %v3320
    %4355 = vmatprep.subr.bf16.mxu0 %v3313
    %4356 = vmatpush2.bf16.msra.mxu0 %v3312
    %4357 = vmatprep.subr.bf16.mxu0 %v3305
    %4358 = vmatpush2.bf16.msra.mxu0 %v3304
    %4359 = vmatprep.mubr.bf16.mxu0 %v761
    %4360 = vmatmul.mubr.bf16.gmra.mxu0 %v760
    %v4361 = vpop.f32.mrf.mxu0
    %v4362 = vadd.f32 %v4321, %v4361
    %v4363 = vpop.f32.mrf.mxu0
    %v4364 = vadd.f32 %v4323, %v4363
    %v4365 = vpop.f32.mrf.mxu0
    %v4366 = vpop.f32.mrf.mxu0
    %4367 = vdwg.mxu0
    %4368 = vmatprep.subr.bf16.mxu0 %v2915
    %4369 = vmatpush1.bf16.msra.mxu0 %v2914
    %4370 = vmatprep.subr.bf16.mxu0 %v2907
    %4371 = vmatpush1.bf16.msra.mxu0 %v2906
    %4372 = vmatprep.subr.bf16.mxu0 %v2899
    %4373 = vmatpush1.bf16.msra.mxu0 %v2898
    %4374 = vmatprep.subr.bf16.mxu0 %v2891
    %4375 = vmatpush1.bf16.msra.mxu0 %v2890
    %4376 = vmatprep.subr.bf16.mxu0 %v2883
    %4377 = vmatpush1.bf16.msra.mxu0 %v2882
    %4378 = vmatprep.subr.bf16.mxu0 %v2875
    %4379 = vmatpush1.bf16.msra.mxu0 %v2874
    %4380 = vmatprep.subr.bf16.mxu0 %v2867
    %4381 = vmatpush1.bf16.msra.mxu0 %v2866
    %4382 = vmatprep.subr.bf16.mxu0 %v2859
    %4383 = vmatpush1.bf16.msra.mxu0 %v2858
    %4384 = vmatprep.subr.bf16.mxu0 %v2979
    %4385 = vmatpush2.bf16.msra.mxu0 %v2978
    %4386 = vmatprep.subr.bf16.mxu0 %v2971
    %4387 = vmatpush2.bf16.msra.mxu0 %v2970
    %4388 = vmatprep.subr.bf16.mxu0 %v2963
    %4389 = vmatpush2.bf16.msra.mxu0 %v2962
    %4390 = vmatprep.subr.bf16.mxu0 %v2955
    %4391 = vmatpush2.bf16.msra.mxu0 %v2954
    %4392 = vmatprep.subr.bf16.mxu0 %v2947
    %4393 = vmatpush2.bf16.msra.mxu0 %v2946
    %4394 = vmatprep.subr.bf16.mxu0 %v2939
    %4395 = vmatpush2.bf16.msra.mxu0 %v2938
    %4396 = vmatprep.subr.bf16.mxu0 %v2931
    %4397 = vmatpush2.bf16.msra.mxu0 %v2930
    %4398 = vmatprep.subr.bf16.mxu0 %v2923
    %4399 = vmatpush2.bf16.msra.mxu0 %v2922
    %4400 = vmatprep.mubr.bf16.mxu0 %v755
    %4401 = vmatmul.mubr.bf16.gmra.mxu0 %v754
    %v4402 = vpop.f32.mrf.mxu0
    %v4403 = vadd.f32 %v1303, %v4402
    %v4404 = vpop.f32.mrf.mxu0
    %v4405 = vadd.f32 %v1307, %v4404
    %v4406 = vpop.f32.mrf.mxu0
    %v4407 = vpop.f32.mrf.mxu0
    %4408 = vdwg.mxu0
    %4409 = vmatprep.subr.bf16.mxu0 %v3043
    %4410 = vmatpush1.bf16.msra.mxu0 %v3042
    %4411 = vmatprep.subr.bf16.mxu0 %v3035
    %4412 = vmatpush1.bf16.msra.mxu0 %v3034
    %4413 = vmatprep.subr.bf16.mxu0 %v3027
    %4414 = vmatpush1.bf16.msra.mxu0 %v3026
    %4415 = vmatprep.subr.bf16.mxu0 %v3019
    %4416 = vmatpush1.bf16.msra.mxu0 %v3018
    %4417 = vmatprep.subr.bf16.mxu0 %v3011
    %4418 = vmatpush1.bf16.msra.mxu0 %v3010
    %4419 = vmatprep.subr.bf16.mxu0 %v3003
    %4420 = vmatpush1.bf16.msra.mxu0 %v3002
    %4421 = vmatprep.subr.bf16.mxu0 %v2995
    %4422 = vmatpush1.bf16.msra.mxu0 %v2994
    %4423 = vmatprep.subr.bf16.mxu0 %v2987
    %4424 = vmatpush1.bf16.msra.mxu0 %v2986
    %4425 = vmatprep.subr.bf16.mxu0 %v3107
    %4426 = vmatpush2.bf16.msra.mxu0 %v3106
    %4427 = vmatprep.subr.bf16.mxu0 %v3099
    %4428 = vmatpush2.bf16.msra.mxu0 %v3098
    %4429 = vmatprep.subr.bf16.mxu0 %v3091
    %4430 = vmatpush2.bf16.msra.mxu0 %v3090
    %4431 = vmatprep.subr.bf16.mxu0 %v3083
    %4432 = vmatpush2.bf16.msra.mxu0 %v3082
    %4433 = vmatprep.subr.bf16.mxu0 %v3075
    %4434 = vmatpush2.bf16.msra.mxu0 %v3074
    %4435 = vmatprep.subr.bf16.mxu0 %v3067
    %4436 = vmatpush2.bf16.msra.mxu0 %v3066
    %4437 = vmatprep.subr.bf16.mxu0 %v3059
    %4438 = vmatpush2.bf16.msra.mxu0 %v3058
    %4439 = vmatprep.subr.bf16.mxu0 %v3051
    %4440 = vmatpush2.bf16.msra.mxu0 %v3050
    %4441 = vmatprep.mubr.bf16.mxu0 %v757
    %4442 = vmatmul.mubr.bf16.gmra.mxu0 %v756
    %v4443 = vpop.f32.mrf.mxu0
    %v4444 = vadd.f32 %v4403, %v4443
    %v4445 = vpop.f32.mrf.mxu0
    %v4446 = vadd.f32 %v4405, %v4445
    %v4447 = vpop.f32.mrf.mxu0
    %v4448 = vpop.f32.mrf.mxu0
    %4449 = vdwg.mxu0
    %4450 = vmatprep.subr.bf16.mxu0 %v3171
    %4451 = vmatpush1.bf16.msra.mxu0 %v3170
    %4452 = vmatprep.subr.bf16.mxu0 %v3163
    %4453 = vmatpush1.bf16.msra.mxu0 %v3162
    %4454 = vmatprep.subr.bf16.mxu0 %v3155
    %4455 = vmatpush1.bf16.msra.mxu0 %v3154
    %4456 = vmatprep.subr.bf16.mxu0 %v3147
    %4457 = vmatpush1.bf16.msra.mxu0 %v3146
    %4458 = vmatprep.subr.bf16.mxu0 %v3139
    %4459 = vmatpush1.bf16.msra.mxu0 %v3138
    %4460 = vmatprep.subr.bf16.mxu0 %v3131
    %4461 = vmatpush1.bf16.msra.mxu0 %v3130
    %4462 = vmatprep.subr.bf16.mxu0 %v3123
    %4463 = vmatpush1.bf16.msra.mxu0 %v3122
    %4464 = vmatprep.subr.bf16.mxu0 %v3115
    %4465 = vmatpush1.bf16.msra.mxu0 %v3114
    %4466 = vmatprep.subr.bf16.mxu0 %v3235
    %4467 = vmatpush2.bf16.msra.mxu0 %v3234
    %4468 = vmatprep.subr.bf16.mxu0 %v3227
    %4469 = vmatpush2.bf16.msra.mxu0 %v3226
    %4470 = vmatprep.subr.bf16.mxu0 %v3219
    %4471 = vmatpush2.bf16.msra.mxu0 %v3218
    %4472 = vmatprep.subr.bf16.mxu0 %v3211
    %4473 = vmatpush2.bf16.msra.mxu0 %v3210
    %4474 = vmatprep.subr.bf16.mxu0 %v3203
    %4475 = vmatpush2.bf16.msra.mxu0 %v3202
    %4476 = vmatprep.subr.bf16.mxu0 %v3195
    %4477 = vmatpush2.bf16.msra.mxu0 %v3194
    %4478 = vmatprep.subr.bf16.mxu0 %v3187
    %4479 = vmatpush2.bf16.msra.mxu0 %v3186
    %4480 = vmatprep.subr.bf16.mxu0 %v3179
    %4481 = vmatpush2.bf16.msra.mxu0 %v3178
    %4482 = vmatprep.mubr.bf16.mxu0 %v759
    %4483 = vmatmul.mubr.bf16.gmra.mxu0 %v758
    %v4484 = vpop.f32.mrf.mxu0
    %v4485 = vadd.f32 %v4444, %v4484
    %v4486 = vpop.f32.mrf.mxu0
    %v4487 = vadd.f32 %v4446, %v4486
    %v4488 = vpop.f32.mrf.mxu0
    %v4489 = vpop.f32.mrf.mxu0
    %4490 = vdwg.mxu0
    %4491 = vmatprep.subr.bf16.mxu0 %v3299
    %4492 = vmatpush1.bf16.msra.mxu0 %v3298
    %4493 = vmatprep.subr.bf16.mxu0 %v3291
    %4494 = vmatpush1.bf16.msra.mxu0 %v3290
    %4495 = vmatprep.subr.bf16.mxu0 %v3283
    %4496 = vmatpush1.bf16.msra.mxu0 %v3282
    %4497 = vmatprep.subr.bf16.mxu0 %v3275
    %4498 = vmatpush1.bf16.msra.mxu0 %v3274
    %4499 = vmatprep.subr.bf16.mxu0 %v3267
    %4500 = vmatpush1.bf16.msra.mxu0 %v3266
    %4501 = vmatprep.subr.bf16.mxu0 %v3259
    %4502 = vmatpush1.bf16.msra.mxu0 %v3258
    %4503 = vmatprep.subr.bf16.mxu0 %v3251
    %4504 = vmatpush1.bf16.msra.mxu0 %v3250
    %4505 = vmatprep.subr.bf16.mxu0 %v3243
    %4506 = vmatpush1.bf16.msra.mxu0 %v3242
    %4507 = vmatprep.subr.bf16.mxu0 %v3363
    %4508 = vmatpush2.bf16.msra.mxu0 %v3362
    %4509 = vmatprep.subr.bf16.mxu0 %v3355
    %4510 = vmatpush2.bf16.msra.mxu0 %v3354
    %4511 = vmatprep.subr.bf16.mxu0 %v3347
    %4512 = vmatpush2.bf16.msra.mxu0 %v3346
    %4513 = vmatprep.subr.bf16.mxu0 %v3339
    %4514 = vmatpush2.bf16.msra.mxu0 %v3338
    %4515 = vmatprep.subr.bf16.mxu0 %v3331
    %4516 = vmatpush2.bf16.msra.mxu0 %v3330
    %4517 = vmatprep.subr.bf16.mxu0 %v3323
    %4518 = vmatpush2.bf16.msra.mxu0 %v3322
    %4519 = vmatprep.subr.bf16.mxu0 %v3315
    %4520 = vmatpush2.bf16.msra.mxu0 %v3314
    %4521 = vmatprep.subr.bf16.mxu0 %v3307
    %4522 = vmatpush2.bf16.msra.mxu0 %v3306
    %4523 = vmatprep.mubr.bf16.mxu0 %v761
    %4524 = vmatmul.mubr.bf16.gmra.mxu0 %v760
    %v4525 = vpop.f32.mrf.mxu0
    %v4526 = vadd.f32 %v4485, %v4525
    %v4527 = vpop.f32.mrf.mxu0
    %v4528 = vadd.f32 %v4487, %v4527
    %v4529 = vpop.f32.mrf.mxu0
    %v4530 = vpop.f32.mrf.mxu0
    %4531 = vdwg.mxu0
    %v4532 = vmul.f32 %v4034, 0.01
    %v4533 = vmul.f32 %v4036, 0.01
    %v4534 = vmul.f32 %v4198, 0.01
    %v4535 = vmul.f32 %v4200, 0.01
    %v4536 = vmul.f32 %v4362, 0.01
    %v4537 = vmul.f32 %v4364, 0.01
    %v4538 = vmul.f32 %v4526, 0.01
    %v4539 = vmul.f32 %v4528, 0.01
    %v4540 = vmax.f32 %v4034, %v4532
    %v4541 = vmax.f32 %v4036, %v4533
    %v4542 = vmax.f32 %v4198, %v4534
    %v4543 = vmax.f32 %v4200, %v4535
    %v4544 = vmax.f32 %v4362, %v4536
    %v4545 = vmax.f32 %v4364, %v4537
    %v4546 = vmax.f32 %v4526, %v4538
    %v4547 = vmax.f32 %v4528, %v4539
    %v4548 = vpack.c.bf16 %v4540, %v4540
    %v4549 = vpack.c.bf16 %v4541, %v4541
    %v4550 = vpack.c.bf16 %v4542, %v4542
    %v4551 = vpack.c.bf16 %v4543, %v4543
    %v4552 = vpack.c.bf16 %v4544, %v4544
    %v4553 = vpack.c.bf16 %v4545, %v4545
    %v4554 = vpack.c.bf16 %v4546, %v4546
    %v4555 = vpack.c.bf16 %v4547, %v4547
    %v4556 = vld [vmem:[#allocation11] sm:$0xff]
    %v4557 = vld [vmem:[#allocation11 + $0x8] sm:$0xff]
    %v4558 = vld [vmem:[#allocation11 + $0x10] sm:$0xff]
    %v4559 = vld [vmem:[#allocation11 + $0x18] sm:$0xff]
    %v4560 = vld [vmem:[#allocation11 + $0x20] sm:$0xff]
    %v4561 = vld [vmem:[#allocation11 + $0x28] sm:$0xff]
    %v4562 = vld [vmem:[#allocation11 + $0x30] sm:$0xff]
    %v4563 = vld [vmem:[#allocation11 + $0x38] sm:$0xff]
    %v4564 = vld [vmem:[#allocation11 + $0x40] sm:$0xff]
    %v4565 = vld [vmem:[#allocation11 + $0x48] sm:$0xff]
    %v4566 = vld [vmem:[#allocation11 + $0x50] sm:$0xff]
    %v4567 = vld [vmem:[#allocation11 + $0x58] sm:$0xff]
    %v4568 = vld [vmem:[#allocation11 + $0x60] sm:$0xff]
    %v4569 = vld [vmem:[#allocation11 + $0x68] sm:$0xff]
    %v4570 = vld [vmem:[#allocation11 + $0x70] sm:$0xff]
    %v4571 = vld [vmem:[#allocation11 + $0x78] sm:$0xff]
    %v4572 = vld [vmem:[#allocation11 + $0x80] sm:$0xff]
    %v4573 = vld [vmem:[#allocation11 + $0x88] sm:$0xff]
    %v4574 = vld [vmem:[#allocation11 + $0x90] sm:$0xff]
    %v4575 = vld [vmem:[#allocation11 + $0x98] sm:$0xff]
    %v4576 = vld [vmem:[#allocation11 + $0xa0] sm:$0xff]
    %v4577 = vld [vmem:[#allocation11 + $0xa8] sm:$0xff]
    %v4578 = vld [vmem:[#allocation11 + $0xb0] sm:$0xff]
    %v4579 = vld [vmem:[#allocation11 + $0xb8] sm:$0xff]
    %v4580 = vld [vmem:[#allocation11 + $0xc0] sm:$0xff]
    %v4581 = vld [vmem:[#allocation11 + $0xc8] sm:$0xff]
    %v4582 = vld [vmem:[#allocation11 + $0xd0] sm:$0xff]
    %v4583 = vld [vmem:[#allocation11 + $0xd8] sm:$0xff]
    %v4584 = vld [vmem:[#allocation11 + $0xe0] sm:$0xff]
    %v4585 = vld [vmem:[#allocation11 + $0xe8] sm:$0xff]
    %v4586 = vld [vmem:[#allocation11 + $0xf0] sm:$0xff]
    %v4587 = vld [vmem:[#allocation11 + $0xf8] sm:$0xff]
    %v4588 = vld [vmem:[#allocation11 + $0x100] sm:$0xff]
    %v4589 = vld [vmem:[#allocation11 + $0x108] sm:$0xff]
    %v4590 = vld [vmem:[#allocation11 + $0x110] sm:$0xff]
    %v4591 = vld [vmem:[#allocation11 + $0x118] sm:$0xff]
    %v4592 = vld [vmem:[#allocation11 + $0x120] sm:$0xff]
    %v4593 = vld [vmem:[#allocation11 + $0x128] sm:$0xff]
    %v4594 = vld [vmem:[#allocation11 + $0x130] sm:$0xff]
    %v4595 = vld [vmem:[#allocation11 + $0x138] sm:$0xff]
    %v4596 = vld [vmem:[#allocation11 + $0x140] sm:$0xff]
    %v4597 = vld [vmem:[#allocation11 + $0x148] sm:$0xff]
    %v4598 = vld [vmem:[#allocation11 + $0x150] sm:$0xff]
    %v4599 = vld [vmem:[#allocation11 + $0x158] sm:$0xff]
    %v4600 = vld [vmem:[#allocation11 + $0x160] sm:$0xff]
    %v4601 = vld [vmem:[#allocation11 + $0x168] sm:$0xff]
    %v4602 = vld [vmem:[#allocation11 + $0x170] sm:$0xff]
    %v4603 = vld [vmem:[#allocation11 + $0x178] sm:$0xff]
    %v4604 = vld [vmem:[#allocation11 + $0x180] sm:$0xff]
    %v4605 = vld [vmem:[#allocation11 + $0x188] sm:$0xff]
    %v4606 = vld [vmem:[#allocation11 + $0x190] sm:$0xff]
    %v4607 = vld [vmem:[#allocation11 + $0x198] sm:$0xff]
    %v4608 = vld [vmem:[#allocation11 + $0x1a0] sm:$0xff]
    %v4609 = vld [vmem:[#allocation11 + $0x1a8] sm:$0xff]
    %v4610 = vld [vmem:[#allocation11 + $0x1b0] sm:$0xff]
    %v4611 = vld [vmem:[#allocation11 + $0x1b8] sm:$0xff]
    %v4612 = vld [vmem:[#allocation11 + $0x1c0] sm:$0xff]
    %v4613 = vld [vmem:[#allocation11 + $0x1c8] sm:$0xff]
    %v4614 = vld [vmem:[#allocation11 + $0x1d0] sm:$0xff]
    %v4615 = vld [vmem:[#allocation11 + $0x1d8] sm:$0xff]
    %v4616 = vld [vmem:[#allocation11 + $0x1e0] sm:$0xff]
    %v4617 = vld [vmem:[#allocation11 + $0x1e8] sm:$0xff]
    %v4618 = vld [vmem:[#allocation11 + $0x1f0] sm:$0xff]
    %v4619 = vld [vmem:[#allocation11 + $0x1f8] sm:$0xff]
    %v4620 = vld [vmem:[#allocation11 + $0x200] sm:$0xff]
    %v4621 = vld [vmem:[#allocation11 + $0x208] sm:$0xff]
    %v4622 = vld [vmem:[#allocation11 + $0x210] sm:$0xff]
    %v4623 = vld [vmem:[#allocation11 + $0x218] sm:$0xff]
    %v4624 = vld [vmem:[#allocation11 + $0x220] sm:$0xff]
    %v4625 = vld [vmem:[#allocation11 + $0x228] sm:$0xff]
    %v4626 = vld [vmem:[#allocation11 + $0x230] sm:$0xff]
    %v4627 = vld [vmem:[#allocation11 + $0x238] sm:$0xff]
    %v4628 = vld [vmem:[#allocation11 + $0x240] sm:$0xff]
    %v4629 = vld [vmem:[#allocation11 + $0x248] sm:$0xff]
    %v4630 = vld [vmem:[#allocation11 + $0x250] sm:$0xff]
    %v4631 = vld [vmem:[#allocation11 + $0x258] sm:$0xff]
    %v4632 = vld [vmem:[#allocation11 + $0x260] sm:$0xff]
    %v4633 = vld [vmem:[#allocation11 + $0x268] sm:$0xff]
    %v4634 = vld [vmem:[#allocation11 + $0x270] sm:$0xff]
    %v4635 = vld [vmem:[#allocation11 + $0x278] sm:$0xff]
    %v4636 = vld [vmem:[#allocation11 + $0x280] sm:$0xff]
    %v4637 = vld [vmem:[#allocation11 + $0x288] sm:$0xff]
    %v4638 = vld [vmem:[#allocation11 + $0x290] sm:$0xff]
    %v4639 = vld [vmem:[#allocation11 + $0x298] sm:$0xff]
    %v4640 = vld [vmem:[#allocation11 + $0x2a0] sm:$0xff]
    %v4641 = vld [vmem:[#allocation11 + $0x2a8] sm:$0xff]
    %v4642 = vld [vmem:[#allocation11 + $0x2b0] sm:$0xff]
    %v4643 = vld [vmem:[#allocation11 + $0x2b8] sm:$0xff]
    %v4644 = vld [vmem:[#allocation11 + $0x2c0] sm:$0xff]
    %v4645 = vld [vmem:[#allocation11 + $0x2c8] sm:$0xff]
    %v4646 = vld [vmem:[#allocation11 + $0x2d0] sm:$0xff]
    %v4647 = vld [vmem:[#allocation11 + $0x2d8] sm:$0xff]
    %v4648 = vld [vmem:[#allocation11 + $0x2e0] sm:$0xff]
    %v4649 = vld [vmem:[#allocation11 + $0x2e8] sm:$0xff]
    %v4650 = vld [vmem:[#allocation11 + $0x2f0] sm:$0xff]
    %v4651 = vld [vmem:[#allocation11 + $0x2f8] sm:$0xff]
    %v4652 = vld [vmem:[#allocation11 + $0x300] sm:$0xff]
    %v4653 = vld [vmem:[#allocation11 + $0x308] sm:$0xff]
    %v4654 = vld [vmem:[#allocation11 + $0x310] sm:$0xff]
    %v4655 = vld [vmem:[#allocation11 + $0x318] sm:$0xff]
    %v4656 = vld [vmem:[#allocation11 + $0x320] sm:$0xff]
    %v4657 = vld [vmem:[#allocation11 + $0x328] sm:$0xff]
    %v4658 = vld [vmem:[#allocation11 + $0x330] sm:$0xff]
    %v4659 = vld [vmem:[#allocation11 + $0x338] sm:$0xff]
    %v4660 = vld [vmem:[#allocation11 + $0x340] sm:$0xff]
    %v4661 = vld [vmem:[#allocation11 + $0x348] sm:$0xff]
    %v4662 = vld [vmem:[#allocation11 + $0x350] sm:$0xff]
    %v4663 = vld [vmem:[#allocation11 + $0x358] sm:$0xff]
    %v4664 = vld [vmem:[#allocation11 + $0x360] sm:$0xff]
    %v4665 = vld [vmem:[#allocation11 + $0x368] sm:$0xff]
    %v4666 = vld [vmem:[#allocation11 + $0x370] sm:$0xff]
    %v4667 = vld [vmem:[#allocation11 + $0x378] sm:$0xff]
    %v4668 = vld [vmem:[#allocation11 + $0x380] sm:$0xff]
    %v4669 = vld [vmem:[#allocation11 + $0x388] sm:$0xff]
    %v4670 = vld [vmem:[#allocation11 + $0x390] sm:$0xff]
    %v4671 = vld [vmem:[#allocation11 + $0x398] sm:$0xff]
    %v4672 = vld [vmem:[#allocation11 + $0x3a0] sm:$0xff]
    %v4673 = vld [vmem:[#allocation11 + $0x3a8] sm:$0xff]
    %v4674 = vld [vmem:[#allocation11 + $0x3b0] sm:$0xff]
    %v4675 = vld [vmem:[#allocation11 + $0x3b8] sm:$0xff]
    %v4676 = vld [vmem:[#allocation11 + $0x3c0] sm:$0xff]
    %v4677 = vld [vmem:[#allocation11 + $0x3c8] sm:$0xff]
    %v4678 = vld [vmem:[#allocation11 + $0x3d0] sm:$0xff]
    %v4679 = vld [vmem:[#allocation11 + $0x3d8] sm:$0xff]
    %v4680 = vld [vmem:[#allocation11 + $0x3e0] sm:$0xff]
    %v4681 = vld [vmem:[#allocation11 + $0x3e8] sm:$0xff]
    %v4682 = vld [vmem:[#allocation11 + $0x3f0] sm:$0xff]
    %v4683 = vld [vmem:[#allocation11 + $0x3f8] sm:$0xff]
    %v4684 = vld [vmem:[#allocation11 + $0x400] sm:$0xff]
    %v4685 = vld [vmem:[#allocation11 + $0x408] sm:$0xff]
    %v4686 = vld [vmem:[#allocation11 + $0x410] sm:$0xff]
    %v4687 = vld [vmem:[#allocation11 + $0x418] sm:$0xff]
    %v4688 = vld [vmem:[#allocation11 + $0x420] sm:$0xff]
    %v4689 = vld [vmem:[#allocation11 + $0x428] sm:$0xff]
    %v4690 = vld [vmem:[#allocation11 + $0x430] sm:$0xff]
    %v4691 = vld [vmem:[#allocation11 + $0x438] sm:$0xff]
    %v4692 = vld [vmem:[#allocation11 + $0x440] sm:$0xff]
    %v4693 = vld [vmem:[#allocation11 + $0x448] sm:$0xff]
    %v4694 = vld [vmem:[#allocation11 + $0x450] sm:$0xff]
    %v4695 = vld [vmem:[#allocation11 + $0x458] sm:$0xff]
    %v4696 = vld [vmem:[#allocation11 + $0x460] sm:$0xff]
    %v4697 = vld [vmem:[#allocation11 + $0x468] sm:$0xff]
    %v4698 = vld [vmem:[#allocation11 + $0x470] sm:$0xff]
    %v4699 = vld [vmem:[#allocation11 + $0x478] sm:$0xff]
    %v4700 = vld [vmem:[#allocation11 + $0x480] sm:$0xff]
    %v4701 = vld [vmem:[#allocation11 + $0x488] sm:$0xff]
    %v4702 = vld [vmem:[#allocation11 + $0x490] sm:$0xff]
    %v4703 = vld [vmem:[#allocation11 + $0x498] sm:$0xff]
    %v4704 = vld [vmem:[#allocation11 + $0x4a0] sm:$0xff]
    %v4705 = vld [vmem:[#allocation11 + $0x4a8] sm:$0xff]
    %v4706 = vld [vmem:[#allocation11 + $0x4b0] sm:$0xff]
    %v4707 = vld [vmem:[#allocation11 + $0x4b8] sm:$0xff]
    %v4708 = vld [vmem:[#allocation11 + $0x4c0] sm:$0xff]
    %v4709 = vld [vmem:[#allocation11 + $0x4c8] sm:$0xff]
    %v4710 = vld [vmem:[#allocation11 + $0x4d0] sm:$0xff]
    %v4711 = vld [vmem:[#allocation11 + $0x4d8] sm:$0xff]
    %v4712 = vld [vmem:[#allocation11 + $0x4e0] sm:$0xff]
    %v4713 = vld [vmem:[#allocation11 + $0x4e8] sm:$0xff]
    %v4714 = vld [vmem:[#allocation11 + $0x4f0] sm:$0xff]
    %v4715 = vld [vmem:[#allocation11 + $0x4f8] sm:$0xff]
    %v4716 = vld [vmem:[#allocation11 + $0x500] sm:$0xff]
    %v4717 = vld [vmem:[#allocation11 + $0x508] sm:$0xff]
    %v4718 = vld [vmem:[#allocation11 + $0x510] sm:$0xff]
    %v4719 = vld [vmem:[#allocation11 + $0x518] sm:$0xff]
    %v4720 = vld [vmem:[#allocation11 + $0x520] sm:$0xff]
    %v4721 = vld [vmem:[#allocation11 + $0x528] sm:$0xff]
    %v4722 = vld [vmem:[#allocation11 + $0x530] sm:$0xff]
    %v4723 = vld [vmem:[#allocation11 + $0x538] sm:$0xff]
    %v4724 = vld [vmem:[#allocation11 + $0x540] sm:$0xff]
    %v4725 = vld [vmem:[#allocation11 + $0x548] sm:$0xff]
    %v4726 = vld [vmem:[#allocation11 + $0x550] sm:$0xff]
    %v4727 = vld [vmem:[#allocation11 + $0x558] sm:$0xff]
    %v4728 = vld [vmem:[#allocation11 + $0x560] sm:$0xff]
    %v4729 = vld [vmem:[#allocation11 + $0x568] sm:$0xff]
    %v4730 = vld [vmem:[#allocation11 + $0x570] sm:$0xff]
    %v4731 = vld [vmem:[#allocation11 + $0x578] sm:$0xff]
    %v4732 = vld [vmem:[#allocation11 + $0x580] sm:$0xff]
    %v4733 = vld [vmem:[#allocation11 + $0x588] sm:$0xff]
    %v4734 = vld [vmem:[#allocation11 + $0x590] sm:$0xff]
    %v4735 = vld [vmem:[#allocation11 + $0x598] sm:$0xff]
    %v4736 = vld [vmem:[#allocation11 + $0x5a0] sm:$0xff]
    %v4737 = vld [vmem:[#allocation11 + $0x5a8] sm:$0xff]
    %v4738 = vld [vmem:[#allocation11 + $0x5b0] sm:$0xff]
    %v4739 = vld [vmem:[#allocation11 + $0x5b8] sm:$0xff]
    %v4740 = vld [vmem:[#allocation11 + $0x5c0] sm:$0xff]
    %v4741 = vld [vmem:[#allocation11 + $0x5c8] sm:$0xff]
    %v4742 = vld [vmem:[#allocation11 + $0x5d0] sm:$0xff]
    %v4743 = vld [vmem:[#allocation11 + $0x5d8] sm:$0xff]
    %v4744 = vld [vmem:[#allocation11 + $0x5e0] sm:$0xff]
    %v4745 = vld [vmem:[#allocation11 + $0x5e8] sm:$0xff]
    %v4746 = vld [vmem:[#allocation11 + $0x5f0] sm:$0xff]
    %v4747 = vld [vmem:[#allocation11 + $0x5f8] sm:$0xff]
    %v4748 = vld [vmem:[#allocation11 + $0x600] sm:$0xff]
    %v4749 = vld [vmem:[#allocation11 + $0x608] sm:$0xff]
    %v4750 = vld [vmem:[#allocation11 + $0x610] sm:$0xff]
    %v4751 = vld [vmem:[#allocation11 + $0x618] sm:$0xff]
    %v4752 = vld [vmem:[#allocation11 + $0x620] sm:$0xff]
    %v4753 = vld [vmem:[#allocation11 + $0x628] sm:$0xff]
    %v4754 = vld [vmem:[#allocation11 + $0x630] sm:$0xff]
    %v4755 = vld [vmem:[#allocation11 + $0x638] sm:$0xff]
    %v4756 = vld [vmem:[#allocation11 + $0x640] sm:$0xff]
    %v4757 = vld [vmem:[#allocation11 + $0x648] sm:$0xff]
    %v4758 = vld [vmem:[#allocation11 + $0x650] sm:$0xff]
    %v4759 = vld [vmem:[#allocation11 + $0x658] sm:$0xff]
    %v4760 = vld [vmem:[#allocation11 + $0x660] sm:$0xff]
    %v4761 = vld [vmem:[#allocation11 + $0x668] sm:$0xff]
    %v4762 = vld [vmem:[#allocation11 + $0x670] sm:$0xff]
    %v4763 = vld [vmem:[#allocation11 + $0x678] sm:$0xff]
    %v4764 = vld [vmem:[#allocation11 + $0x680] sm:$0xff]
    %v4765 = vld [vmem:[#allocation11 + $0x688] sm:$0xff]
    %v4766 = vld [vmem:[#allocation11 + $0x690] sm:$0xff]
    %v4767 = vld [vmem:[#allocation11 + $0x698] sm:$0xff]
    %v4768 = vld [vmem:[#allocation11 + $0x6a0] sm:$0xff]
    %v4769 = vld [vmem:[#allocation11 + $0x6a8] sm:$0xff]
    %v4770 = vld [vmem:[#allocation11 + $0x6b0] sm:$0xff]
    %v4771 = vld [vmem:[#allocation11 + $0x6b8] sm:$0xff]
    %v4772 = vld [vmem:[#allocation11 + $0x6c0] sm:$0xff]
    %v4773 = vld [vmem:[#allocation11 + $0x6c8] sm:$0xff]
    %v4774 = vld [vmem:[#allocation11 + $0x6d0] sm:$0xff]
    %v4775 = vld [vmem:[#allocation11 + $0x6d8] sm:$0xff]
    %v4776 = vld [vmem:[#allocation11 + $0x6e0] sm:$0xff]
    %v4777 = vld [vmem:[#allocation11 + $0x6e8] sm:$0xff]
    %v4778 = vld [vmem:[#allocation11 + $0x6f0] sm:$0xff]
    %v4779 = vld [vmem:[#allocation11 + $0x6f8] sm:$0xff]
    %v4780 = vld [vmem:[#allocation11 + $0x700] sm:$0xff]
    %v4781 = vld [vmem:[#allocation11 + $0x708] sm:$0xff]
    %v4782 = vld [vmem:[#allocation11 + $0x710] sm:$0xff]
    %v4783 = vld [vmem:[#allocation11 + $0x718] sm:$0xff]
    %v4784 = vld [vmem:[#allocation11 + $0x720] sm:$0xff]
    %v4785 = vld [vmem:[#allocation11 + $0x728] sm:$0xff]
    %v4786 = vld [vmem:[#allocation11 + $0x730] sm:$0xff]
    %v4787 = vld [vmem:[#allocation11 + $0x738] sm:$0xff]
    %v4788 = vld [vmem:[#allocation11 + $0x740] sm:$0xff]
    %v4789 = vld [vmem:[#allocation11 + $0x748] sm:$0xff]
    %v4790 = vld [vmem:[#allocation11 + $0x750] sm:$0xff]
    %v4791 = vld [vmem:[#allocation11 + $0x758] sm:$0xff]
    %v4792 = vld [vmem:[#allocation11 + $0x760] sm:$0xff]
    %v4793 = vld [vmem:[#allocation11 + $0x768] sm:$0xff]
    %v4794 = vld [vmem:[#allocation11 + $0x770] sm:$0xff]
    %v4795 = vld [vmem:[#allocation11 + $0x778] sm:$0xff]
    %v4796 = vld [vmem:[#allocation11 + $0x780] sm:$0xff]
    %v4797 = vld [vmem:[#allocation11 + $0x788] sm:$0xff]
    %v4798 = vld [vmem:[#allocation11 + $0x790] sm:$0xff]
    %v4799 = vld [vmem:[#allocation11 + $0x798] sm:$0xff]
    %v4800 = vld [vmem:[#allocation11 + $0x7a0] sm:$0xff]
    %v4801 = vld [vmem:[#allocation11 + $0x7a8] sm:$0xff]
    %v4802 = vld [vmem:[#allocation11 + $0x7b0] sm:$0xff]
    %v4803 = vld [vmem:[#allocation11 + $0x7b8] sm:$0xff]
    %v4804 = vld [vmem:[#allocation11 + $0x7c0] sm:$0xff]
    %v4805 = vld [vmem:[#allocation11 + $0x7c8] sm:$0xff]
    %v4806 = vld [vmem:[#allocation11 + $0x7d0] sm:$0xff]
    %v4807 = vld [vmem:[#allocation11 + $0x7d8] sm:$0xff]
    %v4808 = vld [vmem:[#allocation11 + $0x7e0] sm:$0xff]
    %v4809 = vld [vmem:[#allocation11 + $0x7e8] sm:$0xff]
    %v4810 = vld [vmem:[#allocation11 + $0x7f0] sm:$0xff]
    %v4811 = vld [vmem:[#allocation11 + $0x7f8] sm:$0xff]
    %v4812 = vld [vmem:[#allocation11 + $0x800] sm:$0xff]
    %v4813 = vld [vmem:[#allocation11 + $0x808] sm:$0xff]
    %v4814 = vld [vmem:[#allocation11 + $0x810] sm:$0xff]
    %v4815 = vld [vmem:[#allocation11 + $0x818] sm:$0xff]
    %v4816 = vld [vmem:[#allocation11 + $0x820] sm:$0xff]
    %v4817 = vld [vmem:[#allocation11 + $0x828] sm:$0xff]
    %v4818 = vld [vmem:[#allocation11 + $0x830] sm:$0xff]
    %v4819 = vld [vmem:[#allocation11 + $0x838] sm:$0xff]
    %v4820 = vld [vmem:[#allocation11 + $0x840] sm:$0xff]
    %v4821 = vld [vmem:[#allocation11 + $0x848] sm:$0xff]
    %v4822 = vld [vmem:[#allocation11 + $0x850] sm:$0xff]
    %v4823 = vld [vmem:[#allocation11 + $0x858] sm:$0xff]
    %v4824 = vld [vmem:[#allocation11 + $0x860] sm:$0xff]
    %v4825 = vld [vmem:[#allocation11 + $0x868] sm:$0xff]
    %v4826 = vld [vmem:[#allocation11 + $0x870] sm:$0xff]
    %v4827 = vld [vmem:[#allocation11 + $0x878] sm:$0xff]
    %v4828 = vld [vmem:[#allocation11 + $0x880] sm:$0xff]
    %v4829 = vld [vmem:[#allocation11 + $0x888] sm:$0xff]
    %v4830 = vld [vmem:[#allocation11 + $0x890] sm:$0xff]
    %v4831 = vld [vmem:[#allocation11 + $0x898] sm:$0xff]
    %v4832 = vld [vmem:[#allocation11 + $0x8a0] sm:$0xff]
    %v4833 = vld [vmem:[#allocation11 + $0x8a8] sm:$0xff]
    %v4834 = vld [vmem:[#allocation11 + $0x8b0] sm:$0xff]
    %v4835 = vld [vmem:[#allocation11 + $0x8b8] sm:$0xff]
    %v4836 = vld [vmem:[#allocation11 + $0x8c0] sm:$0xff]
    %v4837 = vld [vmem:[#allocation11 + $0x8c8] sm:$0xff]
    %v4838 = vld [vmem:[#allocation11 + $0x8d0] sm:$0xff]
    %v4839 = vld [vmem:[#allocation11 + $0x8d8] sm:$0xff]
    %v4840 = vld [vmem:[#allocation11 + $0x8e0] sm:$0xff]
    %v4841 = vld [vmem:[#allocation11 + $0x8e8] sm:$0xff]
    %v4842 = vld [vmem:[#allocation11 + $0x8f0] sm:$0xff]
    %v4843 = vld [vmem:[#allocation11 + $0x8f8] sm:$0xff]
    %v4844 = vld [vmem:[#allocation11 + $0x900] sm:$0xff]
    %v4845 = vld [vmem:[#allocation11 + $0x908] sm:$0xff]
    %v4846 = vld [vmem:[#allocation11 + $0x910] sm:$0xff]
    %v4847 = vld [vmem:[#allocation11 + $0x918] sm:$0xff]
    %v4848 = vld [vmem:[#allocation11 + $0x920] sm:$0xff]
    %v4849 = vld [vmem:[#allocation11 + $0x928] sm:$0xff]
    %v4850 = vld [vmem:[#allocation11 + $0x930] sm:$0xff]
    %v4851 = vld [vmem:[#allocation11 + $0x938] sm:$0xff]
    %v4852 = vld [vmem:[#allocation11 + $0x940] sm:$0xff]
    %v4853 = vld [vmem:[#allocation11 + $0x948] sm:$0xff]
    %v4854 = vld [vmem:[#allocation11 + $0x950] sm:$0xff]
    %v4855 = vld [vmem:[#allocation11 + $0x958] sm:$0xff]
    %v4856 = vld [vmem:[#allocation11 + $0x960] sm:$0xff]
    %v4857 = vld [vmem:[#allocation11 + $0x968] sm:$0xff]
    %v4858 = vld [vmem:[#allocation11 + $0x970] sm:$0xff]
    %v4859 = vld [vmem:[#allocation11 + $0x978] sm:$0xff]
    %v4860 = vld [vmem:[#allocation11 + $0x980] sm:$0xff]
    %v4861 = vld [vmem:[#allocation11 + $0x988] sm:$0xff]
    %v4862 = vld [vmem:[#allocation11 + $0x990] sm:$0xff]
    %v4863 = vld [vmem:[#allocation11 + $0x998] sm:$0xff]
    %v4864 = vld [vmem:[#allocation11 + $0x9a0] sm:$0xff]
    %v4865 = vld [vmem:[#allocation11 + $0x9a8] sm:$0xff]
    %v4866 = vld [vmem:[#allocation11 + $0x9b0] sm:$0xff]
    %v4867 = vld [vmem:[#allocation11 + $0x9b8] sm:$0xff]
    %v4868 = vld [vmem:[#allocation11 + $0x9c0] sm:$0xff]
    %v4869 = vld [vmem:[#allocation11 + $0x9c8] sm:$0xff]
    %v4870 = vld [vmem:[#allocation11 + $0x9d0] sm:$0xff]
    %v4871 = vld [vmem:[#allocation11 + $0x9d8] sm:$0xff]
    %v4872 = vld [vmem:[#allocation11 + $0x9e0] sm:$0xff]
    %v4873 = vld [vmem:[#allocation11 + $0x9e8] sm:$0xff]
    %v4874 = vld [vmem:[#allocation11 + $0x9f0] sm:$0xff]
    %v4875 = vld [vmem:[#allocation11 + $0x9f8] sm:$0xff]
    %v4876 = vld [vmem:[#allocation11 + $0xa00] sm:$0xff]
    %v4877 = vld [vmem:[#allocation11 + $0xa08] sm:$0xff]
    %v4878 = vld [vmem:[#allocation11 + $0xa10] sm:$0xff]
    %v4879 = vld [vmem:[#allocation11 + $0xa18] sm:$0xff]
    %v4880 = vld [vmem:[#allocation11 + $0xa20] sm:$0xff]
    %v4881 = vld [vmem:[#allocation11 + $0xa28] sm:$0xff]
    %v4882 = vld [vmem:[#allocation11 + $0xa30] sm:$0xff]
    %v4883 = vld [vmem:[#allocation11 + $0xa38] sm:$0xff]
    %v4884 = vld [vmem:[#allocation11 + $0xa40] sm:$0xff]
    %v4885 = vld [vmem:[#allocation11 + $0xa48] sm:$0xff]
    %v4886 = vld [vmem:[#allocation11 + $0xa50] sm:$0xff]
    %v4887 = vld [vmem:[#allocation11 + $0xa58] sm:$0xff]
    %v4888 = vld [vmem:[#allocation11 + $0xa60] sm:$0xff]
    %v4889 = vld [vmem:[#allocation11 + $0xa68] sm:$0xff]
    %v4890 = vld [vmem:[#allocation11 + $0xa70] sm:$0xff]
    %v4891 = vld [vmem:[#allocation11 + $0xa78] sm:$0xff]
    %v4892 = vld [vmem:[#allocation11 + $0xa80] sm:$0xff]
    %v4893 = vld [vmem:[#allocation11 + $0xa88] sm:$0xff]
    %v4894 = vld [vmem:[#allocation11 + $0xa90] sm:$0xff]
    %v4895 = vld [vmem:[#allocation11 + $0xa98] sm:$0xff]
    %v4896 = vld [vmem:[#allocation11 + $0xaa0] sm:$0xff]
    %v4897 = vld [vmem:[#allocation11 + $0xaa8] sm:$0xff]
    %v4898 = vld [vmem:[#allocation11 + $0xab0] sm:$0xff]
    %v4899 = vld [vmem:[#allocation11 + $0xab8] sm:$0xff]
    %v4900 = vld [vmem:[#allocation11 + $0xac0] sm:$0xff]
    %v4901 = vld [vmem:[#allocation11 + $0xac8] sm:$0xff]
    %v4902 = vld [vmem:[#allocation11 + $0xad0] sm:$0xff]
    %v4903 = vld [vmem:[#allocation11 + $0xad8] sm:$0xff]
    %v4904 = vld [vmem:[#allocation11 + $0xae0] sm:$0xff]
    %v4905 = vld [vmem:[#allocation11 + $0xae8] sm:$0xff]
    %v4906 = vld [vmem:[#allocation11 + $0xaf0] sm:$0xff]
    %v4907 = vld [vmem:[#allocation11 + $0xaf8] sm:$0xff]
    %v4908 = vld [vmem:[#allocation11 + $0xb00] sm:$0xff]
    %v4909 = vld [vmem:[#allocation11 + $0xb08] sm:$0xff]
    %v4910 = vld [vmem:[#allocation11 + $0xb10] sm:$0xff]
    %v4911 = vld [vmem:[#allocation11 + $0xb18] sm:$0xff]
    %v4912 = vld [vmem:[#allocation11 + $0xb20] sm:$0xff]
    %v4913 = vld [vmem:[#allocation11 + $0xb28] sm:$0xff]
    %v4914 = vld [vmem:[#allocation11 + $0xb30] sm:$0xff]
    %v4915 = vld [vmem:[#allocation11 + $0xb38] sm:$0xff]
    %v4916 = vld [vmem:[#allocation11 + $0xb40] sm:$0xff]
    %v4917 = vld [vmem:[#allocation11 + $0xb48] sm:$0xff]
    %v4918 = vld [vmem:[#allocation11 + $0xb50] sm:$0xff]
    %v4919 = vld [vmem:[#allocation11 + $0xb58] sm:$0xff]
    %v4920 = vld [vmem:[#allocation11 + $0xb60] sm:$0xff]
    %v4921 = vld [vmem:[#allocation11 + $0xb68] sm:$0xff]
    %v4922 = vld [vmem:[#allocation11 + $0xb70] sm:$0xff]
    %v4923 = vld [vmem:[#allocation11 + $0xb78] sm:$0xff]
    %v4924 = vld [vmem:[#allocation11 + $0xb80] sm:$0xff]
    %v4925 = vld [vmem:[#allocation11 + $0xb88] sm:$0xff]
    %v4926 = vld [vmem:[#allocation11 + $0xb90] sm:$0xff]
    %v4927 = vld [vmem:[#allocation11 + $0xb98] sm:$0xff]
    %v4928 = vld [vmem:[#allocation11 + $0xba0] sm:$0xff]
    %v4929 = vld [vmem:[#allocation11 + $0xba8] sm:$0xff]
    %v4930 = vld [vmem:[#allocation11 + $0xbb0] sm:$0xff]
    %v4931 = vld [vmem:[#allocation11 + $0xbb8] sm:$0xff]
    %v4932 = vld [vmem:[#allocation11 + $0xbc0] sm:$0xff]
    %v4933 = vld [vmem:[#allocation11 + $0xbc8] sm:$0xff]
    %v4934 = vld [vmem:[#allocation11 + $0xbd0] sm:$0xff]
    %v4935 = vld [vmem:[#allocation11 + $0xbd8] sm:$0xff]
    %v4936 = vld [vmem:[#allocation11 + $0xbe0] sm:$0xff]
    %v4937 = vld [vmem:[#allocation11 + $0xbe8] sm:$0xff]
    %v4938 = vld [vmem:[#allocation11 + $0xbf0] sm:$0xff]
    %v4939 = vld [vmem:[#allocation11 + $0xbf8] sm:$0xff]
    %v4940 = vld [vmem:[#allocation11 + $0xc00] sm:$0xff]
    %v4941 = vld [vmem:[#allocation11 + $0xc08] sm:$0xff]
    %v4942 = vld [vmem:[#allocation11 + $0xc10] sm:$0xff]
    %v4943 = vld [vmem:[#allocation11 + $0xc18] sm:$0xff]
    %v4944 = vld [vmem:[#allocation11 + $0xc20] sm:$0xff]
    %v4945 = vld [vmem:[#allocation11 + $0xc28] sm:$0xff]
    %v4946 = vld [vmem:[#allocation11 + $0xc30] sm:$0xff]
    %v4947 = vld [vmem:[#allocation11 + $0xc38] sm:$0xff]
    %v4948 = vld [vmem:[#allocation11 + $0xc40] sm:$0xff]
    %v4949 = vld [vmem:[#allocation11 + $0xc48] sm:$0xff]
    %v4950 = vld [vmem:[#allocation11 + $0xc50] sm:$0xff]
    %v4951 = vld [vmem:[#allocation11 + $0xc58] sm:$0xff]
    %v4952 = vld [vmem:[#allocation11 + $0xc60] sm:$0xff]
    %v4953 = vld [vmem:[#allocation11 + $0xc68] sm:$0xff]
    %v4954 = vld [vmem:[#allocation11 + $0xc70] sm:$0xff]
    %v4955 = vld [vmem:[#allocation11 + $0xc78] sm:$0xff]
    %v4956 = vld [vmem:[#allocation11 + $0xc80] sm:$0xff]
    %v4957 = vld [vmem:[#allocation11 + $0xc88] sm:$0xff]
    %v4958 = vld [vmem:[#allocation11 + $0xc90] sm:$0xff]
    %v4959 = vld [vmem:[#allocation11 + $0xc98] sm:$0xff]
    %v4960 = vld [vmem:[#allocation11 + $0xca0] sm:$0xff]
    %v4961 = vld [vmem:[#allocation11 + $0xca8] sm:$0xff]
    %v4962 = vld [vmem:[#allocation11 + $0xcb0] sm:$0xff]
    %v4963 = vld [vmem:[#allocation11 + $0xcb8] sm:$0xff]
    %v4964 = vld [vmem:[#allocation11 + $0xcc0] sm:$0xff]
    %v4965 = vld [vmem:[#allocation11 + $0xcc8] sm:$0xff]
    %v4966 = vld [vmem:[#allocation11 + $0xcd0] sm:$0xff]
    %v4967 = vld [vmem:[#allocation11 + $0xcd8] sm:$0xff]
    %v4968 = vld [vmem:[#allocation11 + $0xce0] sm:$0xff]
    %v4969 = vld [vmem:[#allocation11 + $0xce8] sm:$0xff]
    %v4970 = vld [vmem:[#allocation11 + $0xcf0] sm:$0xff]
    %v4971 = vld [vmem:[#allocation11 + $0xcf8] sm:$0xff]
    %v4972 = vld [vmem:[#allocation11 + $0xd00] sm:$0xff]
    %v4973 = vld [vmem:[#allocation11 + $0xd08] sm:$0xff]
    %v4974 = vld [vmem:[#allocation11 + $0xd10] sm:$0xff]
    %v4975 = vld [vmem:[#allocation11 + $0xd18] sm:$0xff]
    %v4976 = vld [vmem:[#allocation11 + $0xd20] sm:$0xff]
    %v4977 = vld [vmem:[#allocation11 + $0xd28] sm:$0xff]
    %v4978 = vld [vmem:[#allocation11 + $0xd30] sm:$0xff]
    %v4979 = vld [vmem:[#allocation11 + $0xd38] sm:$0xff]
    %v4980 = vld [vmem:[#allocation11 + $0xd40] sm:$0xff]
    %v4981 = vld [vmem:[#allocation11 + $0xd48] sm:$0xff]
    %v4982 = vld [vmem:[#allocation11 + $0xd50] sm:$0xff]
    %v4983 = vld [vmem:[#allocation11 + $0xd58] sm:$0xff]
    %v4984 = vld [vmem:[#allocation11 + $0xd60] sm:$0xff]
    %v4985 = vld [vmem:[#allocation11 + $0xd68] sm:$0xff]
    %v4986 = vld [vmem:[#allocation11 + $0xd70] sm:$0xff]
    %v4987 = vld [vmem:[#allocation11 + $0xd78] sm:$0xff]
    %v4988 = vld [vmem:[#allocation11 + $0xd80] sm:$0xff]
    %v4989 = vld [vmem:[#allocation11 + $0xd88] sm:$0xff]
    %v4990 = vld [vmem:[#allocation11 + $0xd90] sm:$0xff]
    %v4991 = vld [vmem:[#allocation11 + $0xd98] sm:$0xff]
    %v4992 = vld [vmem:[#allocation11 + $0xda0] sm:$0xff]
    %v4993 = vld [vmem:[#allocation11 + $0xda8] sm:$0xff]
    %v4994 = vld [vmem:[#allocation11 + $0xdb0] sm:$0xff]
    %v4995 = vld [vmem:[#allocation11 + $0xdb8] sm:$0xff]
    %v4996 = vld [vmem:[#allocation11 + $0xdc0] sm:$0xff]
    %v4997 = vld [vmem:[#allocation11 + $0xdc8] sm:$0xff]
    %v4998 = vld [vmem:[#allocation11 + $0xdd0] sm:$0xff]
    %v4999 = vld [vmem:[#allocation11 + $0xdd8] sm:$0xff]
    %v5000 = vld [vmem:[#allocation11 + $0xde0] sm:$0xff]
    %v5001 = vld [vmem:[#allocation11 + $0xde8] sm:$0xff]
    %v5002 = vld [vmem:[#allocation11 + $0xdf0] sm:$0xff]
    %v5003 = vld [vmem:[#allocation11 + $0xdf8] sm:$0xff]
    %v5004 = vld [vmem:[#allocation11 + $0xe00] sm:$0xff]
    %v5005 = vld [vmem:[#allocation11 + $0xe08] sm:$0xff]
    %v5006 = vld [vmem:[#allocation11 + $0xe10] sm:$0xff]
    %v5007 = vld [vmem:[#allocation11 + $0xe18] sm:$0xff]
    %v5008 = vld [vmem:[#allocation11 + $0xe20] sm:$0xff]
    %v5009 = vld [vmem:[#allocation11 + $0xe28] sm:$0xff]
    %v5010 = vld [vmem:[#allocation11 + $0xe30] sm:$0xff]
    %v5011 = vld [vmem:[#allocation11 + $0xe38] sm:$0xff]
    %v5012 = vld [vmem:[#allocation11 + $0xe40] sm:$0xff]
    %v5013 = vld [vmem:[#allocation11 + $0xe48] sm:$0xff]
    %v5014 = vld [vmem:[#allocation11 + $0xe50] sm:$0xff]
    %v5015 = vld [vmem:[#allocation11 + $0xe58] sm:$0xff]
    %v5016 = vld [vmem:[#allocation11 + $0xe60] sm:$0xff]
    %v5017 = vld [vmem:[#allocation11 + $0xe68] sm:$0xff]
    %v5018 = vld [vmem:[#allocation11 + $0xe70] sm:$0xff]
    %v5019 = vld [vmem:[#allocation11 + $0xe78] sm:$0xff]
    %v5020 = vld [vmem:[#allocation11 + $0xe80] sm:$0xff]
    %v5021 = vld [vmem:[#allocation11 + $0xe88] sm:$0xff]
    %v5022 = vld [vmem:[#allocation11 + $0xe90] sm:$0xff]
    %v5023 = vld [vmem:[#allocation11 + $0xe98] sm:$0xff]
    %v5024 = vld [vmem:[#allocation11 + $0xea0] sm:$0xff]
    %v5025 = vld [vmem:[#allocation11 + $0xea8] sm:$0xff]
    %v5026 = vld [vmem:[#allocation11 + $0xeb0] sm:$0xff]
    %v5027 = vld [vmem:[#allocation11 + $0xeb8] sm:$0xff]
    %v5028 = vld [vmem:[#allocation11 + $0xec0] sm:$0xff]
    %v5029 = vld [vmem:[#allocation11 + $0xec8] sm:$0xff]
    %v5030 = vld [vmem:[#allocation11 + $0xed0] sm:$0xff]
    %v5031 = vld [vmem:[#allocation11 + $0xed8] sm:$0xff]
    %v5032 = vld [vmem:[#allocation11 + $0xee0] sm:$0xff]
    %v5033 = vld [vmem:[#allocation11 + $0xee8] sm:$0xff]
    %v5034 = vld [vmem:[#allocation11 + $0xef0] sm:$0xff]
    %v5035 = vld [vmem:[#allocation11 + $0xef8] sm:$0xff]
    %v5036 = vld [vmem:[#allocation11 + $0xf00] sm:$0xff]
    %v5037 = vld [vmem:[#allocation11 + $0xf08] sm:$0xff]
    %v5038 = vld [vmem:[#allocation11 + $0xf10] sm:$0xff]
    %v5039 = vld [vmem:[#allocation11 + $0xf18] sm:$0xff]
    %v5040 = vld [vmem:[#allocation11 + $0xf20] sm:$0xff]
    %v5041 = vld [vmem:[#allocation11 + $0xf28] sm:$0xff]
    %v5042 = vld [vmem:[#allocation11 + $0xf30] sm:$0xff]
    %v5043 = vld [vmem:[#allocation11 + $0xf38] sm:$0xff]
    %v5044 = vld [vmem:[#allocation11 + $0xf40] sm:$0xff]
    %v5045 = vld [vmem:[#allocation11 + $0xf48] sm:$0xff]
    %v5046 = vld [vmem:[#allocation11 + $0xf50] sm:$0xff]
    %v5047 = vld [vmem:[#allocation11 + $0xf58] sm:$0xff]
    %v5048 = vld [vmem:[#allocation11 + $0xf60] sm:$0xff]
    %v5049 = vld [vmem:[#allocation11 + $0xf68] sm:$0xff]
    %v5050 = vld [vmem:[#allocation11 + $0xf70] sm:$0xff]
    %v5051 = vld [vmem:[#allocation11 + $0xf78] sm:$0xff]
    %v5052 = vld [vmem:[#allocation11 + $0xf80] sm:$0xff]
    %v5053 = vld [vmem:[#allocation11 + $0xf88] sm:$0xff]
    %v5054 = vld [vmem:[#allocation11 + $0xf90] sm:$0xff]
    %v5055 = vld [vmem:[#allocation11 + $0xf98] sm:$0xff]
    %v5056 = vld [vmem:[#allocation11 + $0xfa0] sm:$0xff]
    %v5057 = vld [vmem:[#allocation11 + $0xfa8] sm:$0xff]
    %v5058 = vld [vmem:[#allocation11 + $0xfb0] sm:$0xff]
    %v5059 = vld [vmem:[#allocation11 + $0xfb8] sm:$0xff]
    %v5060 = vld [vmem:[#allocation11 + $0xfc0] sm:$0xff]
    %v5061 = vld [vmem:[#allocation11 + $0xfc8] sm:$0xff]
    %v5062 = vld [vmem:[#allocation11 + $0xfd0] sm:$0xff]
    %v5063 = vld [vmem:[#allocation11 + $0xfd8] sm:$0xff]
    %v5064 = vld [vmem:[#allocation11 + $0xfe0] sm:$0xff]
    %v5065 = vld [vmem:[#allocation11 + $0xfe8] sm:$0xff]
    %v5066 = vld [vmem:[#allocation11 + $0xff0] sm:$0xff]
    %v5067 = vld [vmem:[#allocation11 + $0xff8] sm:$0xff]
    %v5068 = vld [vmem:[#allocation13] sm:$0xff]
    %v5070 = vlaneseq
    %v5071 = vshrl.u32 %v5070, 7
    %v5072 = vsub.s32 0, %v5071
    %v5073 = vrot.slane %v5068, %v5072
    %v5074 = vlaneseq
    %v5075 = vshrl.u32 %v5074, 7
    %v5076 = vsub.s32 1, %v5075
    %v5077 = vrot.slane %v5068, %v5076
    %v5078 = vlaneseq
    %v5079 = vshrl.u32 %v5078, 7
    %v5080 = vsub.s32 2, %v5079
    %v5081 = vrot.slane %v5068, %v5080
    %v5082 = vlaneseq
    %v5083 = vshrl.u32 %v5082, 7
    %v5084 = vsub.s32 3, %v5083
    %v5085 = vrot.slane %v5068, %v5084
    %v5086 = vlaneseq
    %v5087 = vshrl.u32 %v5086, 7
    %v5088 = vsub.s32 4, %v5087
    %v5089 = vrot.slane %v5068, %v5088
    %v5090 = vlaneseq
    %v5091 = vshrl.u32 %v5090, 7
    %v5092 = vsub.s32 5, %v5091
    %v5093 = vrot.slane %v5068, %v5092
    %v5094 = vlaneseq
    %v5095 = vshrl.u32 %v5094, 7
    %v5096 = vsub.s32 6, %v5095
    %v5097 = vrot.slane %v5068, %v5096
    %v5098 = vlaneseq
    %v5099 = vshrl.u32 %v5098, 7
    %v5100 = vsub.s32 7, %v5099
    %v5101 = vrot.slane %v5068, %v5100
    %v5622 = vunpack.c.l.b16 %v4556
    %v5623 = vunpack.c.h.b16 %v4556
    %v5624 = vunpack.c.l.b16 %v4557
    %v5625 = vunpack.c.h.b16 %v4557
    %v5626 = vunpack.c.l.b16 %v4558
    %v5627 = vunpack.c.h.b16 %v4558
    %v5628 = vunpack.c.l.b16 %v4559
    %v5629 = vunpack.c.h.b16 %v4559
    %v5630 = vunpack.c.l.b16 %v4560
    %v5631 = vunpack.c.h.b16 %v4560
    %v5632 = vunpack.c.l.b16 %v4561
    %v5633 = vunpack.c.h.b16 %v4561
    %v5634 = vunpack.c.l.b16 %v4562
    %v5635 = vunpack.c.h.b16 %v4562
    %v5636 = vunpack.c.l.b16 %v4563
    %v5637 = vunpack.c.h.b16 %v4563
    %v5638 = vunpack.c.l.b16 %v4564
    %v5639 = vunpack.c.h.b16 %v4564
    %v5640 = vunpack.c.l.b16 %v4565
    %v5641 = vunpack.c.h.b16 %v4565
    %v5642 = vunpack.c.l.b16 %v4566
    %v5643 = vunpack.c.h.b16 %v4566
    %v5644 = vunpack.c.l.b16 %v4567
    %v5645 = vunpack.c.h.b16 %v4567
    %v5646 = vunpack.c.l.b16 %v4568
    %v5647 = vunpack.c.h.b16 %v4568
    %v5648 = vunpack.c.l.b16 %v4569
    %v5649 = vunpack.c.h.b16 %v4569
    %v5650 = vunpack.c.l.b16 %v4570
    %v5651 = vunpack.c.h.b16 %v4570
    %v5652 = vunpack.c.l.b16 %v4571
    %v5653 = vunpack.c.h.b16 %v4571
    %v5654 = vunpack.c.l.b16 %v4572
    %v5655 = vunpack.c.h.b16 %v4572
    %v5656 = vunpack.c.l.b16 %v4573
    %v5657 = vunpack.c.h.b16 %v4573
    %v5658 = vunpack.c.l.b16 %v4574
    %v5659 = vunpack.c.h.b16 %v4574
    %v5660 = vunpack.c.l.b16 %v4575
    %v5661 = vunpack.c.h.b16 %v4575
    %v5662 = vunpack.c.l.b16 %v4576
    %v5663 = vunpack.c.h.b16 %v4576
    %v5664 = vunpack.c.l.b16 %v4577
    %v5665 = vunpack.c.h.b16 %v4577
    %v5666 = vunpack.c.l.b16 %v4578
    %v5667 = vunpack.c.h.b16 %v4578
    %v5668 = vunpack.c.l.b16 %v4579
    %v5669 = vunpack.c.h.b16 %v4579
    %v5670 = vunpack.c.l.b16 %v4580
    %v5671 = vunpack.c.h.b16 %v4580
    %v5672 = vunpack.c.l.b16 %v4581
    %v5673 = vunpack.c.h.b16 %v4581
    %v5674 = vunpack.c.l.b16 %v4582
    %v5675 = vunpack.c.h.b16 %v4582
    %v5676 = vunpack.c.l.b16 %v4583
    %v5677 = vunpack.c.h.b16 %v4583
    %v5678 = vunpack.c.l.b16 %v4584
    %v5679 = vunpack.c.h.b16 %v4584
    %v5680 = vunpack.c.l.b16 %v4585
    %v5681 = vunpack.c.h.b16 %v4585
    %v5682 = vunpack.c.l.b16 %v4586
    %v5683 = vunpack.c.h.b16 %v4586
    %v5684 = vunpack.c.l.b16 %v4587
    %v5685 = vunpack.c.h.b16 %v4587
    %v5686 = vunpack.c.l.b16 %v4588
    %v5687 = vunpack.c.h.b16 %v4588
    %v5688 = vunpack.c.l.b16 %v4589
    %v5689 = vunpack.c.h.b16 %v4589
    %v5690 = vunpack.c.l.b16 %v4590
    %v5691 = vunpack.c.h.b16 %v4590
    %v5692 = vunpack.c.l.b16 %v4591
    %v5693 = vunpack.c.h.b16 %v4591
    %v5694 = vunpack.c.l.b16 %v4592
    %v5695 = vunpack.c.h.b16 %v4592
    %v5696 = vunpack.c.l.b16 %v4593
    %v5697 = vunpack.c.h.b16 %v4593
    %v5698 = vunpack.c.l.b16 %v4594
    %v5699 = vunpack.c.h.b16 %v4594
    %v5700 = vunpack.c.l.b16 %v4595
    %v5701 = vunpack.c.h.b16 %v4595
    %v5702 = vunpack.c.l.b16 %v4596
    %v5703 = vunpack.c.h.b16 %v4596
    %v5704 = vunpack.c.l.b16 %v4597
    %v5705 = vunpack.c.h.b16 %v4597
    %v5706 = vunpack.c.l.b16 %v4598
    %v5707 = vunpack.c.h.b16 %v4598
    %v5708 = vunpack.c.l.b16 %v4599
    %v5709 = vunpack.c.h.b16 %v4599
    %v5710 = vunpack.c.l.b16 %v4600
    %v5711 = vunpack.c.h.b16 %v4600
    %v5712 = vunpack.c.l.b16 %v4601
    %v5713 = vunpack.c.h.b16 %v4601
    %v5714 = vunpack.c.l.b16 %v4602
    %v5715 = vunpack.c.h.b16 %v4602
    %v5716 = vunpack.c.l.b16 %v4603
    %v5717 = vunpack.c.h.b16 %v4603
    %v5718 = vunpack.c.l.b16 %v4604
    %v5719 = vunpack.c.h.b16 %v4604
    %v5720 = vunpack.c.l.b16 %v4605
    %v5721 = vunpack.c.h.b16 %v4605
    %v5722 = vunpack.c.l.b16 %v4606
    %v5723 = vunpack.c.h.b16 %v4606
    %v5724 = vunpack.c.l.b16 %v4607
    %v5725 = vunpack.c.h.b16 %v4607
    %v5726 = vunpack.c.l.b16 %v4608
    %v5727 = vunpack.c.h.b16 %v4608
    %v5728 = vunpack.c.l.b16 %v4609
    %v5729 = vunpack.c.h.b16 %v4609
    %v5730 = vunpack.c.l.b16 %v4610
    %v5731 = vunpack.c.h.b16 %v4610
    %v5732 = vunpack.c.l.b16 %v4611
    %v5733 = vunpack.c.h.b16 %v4611
    %v5734 = vunpack.c.l.b16 %v4612
    %v5735 = vunpack.c.h.b16 %v4612
    %v5736 = vunpack.c.l.b16 %v4613
    %v5737 = vunpack.c.h.b16 %v4613
    %v5738 = vunpack.c.l.b16 %v4614
    %v5739 = vunpack.c.h.b16 %v4614
    %v5740 = vunpack.c.l.b16 %v4615
    %v5741 = vunpack.c.h.b16 %v4615
    %v5742 = vunpack.c.l.b16 %v4616
    %v5743 = vunpack.c.h.b16 %v4616
    %v5744 = vunpack.c.l.b16 %v4617
    %v5745 = vunpack.c.h.b16 %v4617
    %v5746 = vunpack.c.l.b16 %v4618
    %v5747 = vunpack.c.h.b16 %v4618
    %v5748 = vunpack.c.l.b16 %v4619
    %v5749 = vunpack.c.h.b16 %v4619
    %v5750 = vunpack.c.l.b16 %v4620
    %v5751 = vunpack.c.h.b16 %v4620
    %v5752 = vunpack.c.l.b16 %v4621
    %v5753 = vunpack.c.h.b16 %v4621
    %v5754 = vunpack.c.l.b16 %v4622
    %v5755 = vunpack.c.h.b16 %v4622
    %v5756 = vunpack.c.l.b16 %v4623
    %v5757 = vunpack.c.h.b16 %v4623
    %v5758 = vunpack.c.l.b16 %v4624
    %v5759 = vunpack.c.h.b16 %v4624
    %v5760 = vunpack.c.l.b16 %v4625
    %v5761 = vunpack.c.h.b16 %v4625
    %v5762 = vunpack.c.l.b16 %v4626
    %v5763 = vunpack.c.h.b16 %v4626
    %v5764 = vunpack.c.l.b16 %v4627
    %v5765 = vunpack.c.h.b16 %v4627
    %v5766 = vunpack.c.l.b16 %v4628
    %v5767 = vunpack.c.h.b16 %v4628
    %v5768 = vunpack.c.l.b16 %v4629
    %v5769 = vunpack.c.h.b16 %v4629
    %v5770 = vunpack.c.l.b16 %v4630
    %v5771 = vunpack.c.h.b16 %v4630
    %v5772 = vunpack.c.l.b16 %v4631
    %v5773 = vunpack.c.h.b16 %v4631
    %v5774 = vunpack.c.l.b16 %v4632
    %v5775 = vunpack.c.h.b16 %v4632
    %v5776 = vunpack.c.l.b16 %v4633
    %v5777 = vunpack.c.h.b16 %v4633
    %v5778 = vunpack.c.l.b16 %v4634
    %v5779 = vunpack.c.h.b16 %v4634
    %v5780 = vunpack.c.l.b16 %v4635
    %v5781 = vunpack.c.h.b16 %v4635
    %v5782 = vunpack.c.l.b16 %v4636
    %v5783 = vunpack.c.h.b16 %v4636
    %v5784 = vunpack.c.l.b16 %v4637
    %v5785 = vunpack.c.h.b16 %v4637
    %v5786 = vunpack.c.l.b16 %v4638
    %v5787 = vunpack.c.h.b16 %v4638
    %v5788 = vunpack.c.l.b16 %v4639
    %v5789 = vunpack.c.h.b16 %v4639
    %v5790 = vunpack.c.l.b16 %v4640
    %v5791 = vunpack.c.h.b16 %v4640
    %v5792 = vunpack.c.l.b16 %v4641
    %v5793 = vunpack.c.h.b16 %v4641
    %v5794 = vunpack.c.l.b16 %v4642
    %v5795 = vunpack.c.h.b16 %v4642
    %v5796 = vunpack.c.l.b16 %v4643
    %v5797 = vunpack.c.h.b16 %v4643
    %v5798 = vunpack.c.l.b16 %v4644
    %v5799 = vunpack.c.h.b16 %v4644
    %v5800 = vunpack.c.l.b16 %v4645
    %v5801 = vunpack.c.h.b16 %v4645
    %v5802 = vunpack.c.l.b16 %v4646
    %v5803 = vunpack.c.h.b16 %v4646
    %v5804 = vunpack.c.l.b16 %v4647
    %v5805 = vunpack.c.h.b16 %v4647
    %v5806 = vunpack.c.l.b16 %v4648
    %v5807 = vunpack.c.h.b16 %v4648
    %v5808 = vunpack.c.l.b16 %v4649
    %v5809 = vunpack.c.h.b16 %v4649
    %v5810 = vunpack.c.l.b16 %v4650
    %v5811 = vunpack.c.h.b16 %v4650
    %v5812 = vunpack.c.l.b16 %v4651
    %v5813 = vunpack.c.h.b16 %v4651
    %v5814 = vunpack.c.l.b16 %v4652
    %v5815 = vunpack.c.h.b16 %v4652
    %v5816 = vunpack.c.l.b16 %v4653
    %v5817 = vunpack.c.h.b16 %v4653
    %v5818 = vunpack.c.l.b16 %v4654
    %v5819 = vunpack.c.h.b16 %v4654
    %v5820 = vunpack.c.l.b16 %v4655
    %v5821 = vunpack.c.h.b16 %v4655
    %v5822 = vunpack.c.l.b16 %v4656
    %v5823 = vunpack.c.h.b16 %v4656
    %v5824 = vunpack.c.l.b16 %v4657
    %v5825 = vunpack.c.h.b16 %v4657
    %v5826 = vunpack.c.l.b16 %v4658
    %v5827 = vunpack.c.h.b16 %v4658
    %v5828 = vunpack.c.l.b16 %v4659
    %v5829 = vunpack.c.h.b16 %v4659
    %v5830 = vunpack.c.l.b16 %v4660
    %v5831 = vunpack.c.h.b16 %v4660
    %v5832 = vunpack.c.l.b16 %v4661
    %v5833 = vunpack.c.h.b16 %v4661
    %v5834 = vunpack.c.l.b16 %v4662
    %v5835 = vunpack.c.h.b16 %v4662
    %v5836 = vunpack.c.l.b16 %v4663
    %v5837 = vunpack.c.h.b16 %v4663
    %v5838 = vunpack.c.l.b16 %v4664
    %v5839 = vunpack.c.h.b16 %v4664
    %v5840 = vunpack.c.l.b16 %v4665
    %v5841 = vunpack.c.h.b16 %v4665
    %v5842 = vunpack.c.l.b16 %v4666
    %v5843 = vunpack.c.h.b16 %v4666
    %v5844 = vunpack.c.l.b16 %v4667
    %v5845 = vunpack.c.h.b16 %v4667
    %v5846 = vunpack.c.l.b16 %v4668
    %v5847 = vunpack.c.h.b16 %v4668
    %v5848 = vunpack.c.l.b16 %v4669
    %v5849 = vunpack.c.h.b16 %v4669
    %v5850 = vunpack.c.l.b16 %v4670
    %v5851 = vunpack.c.h.b16 %v4670
    %v5852 = vunpack.c.l.b16 %v4671
    %v5853 = vunpack.c.h.b16 %v4671
    %v5854 = vunpack.c.l.b16 %v4672
    %v5855 = vunpack.c.h.b16 %v4672
    %v5856 = vunpack.c.l.b16 %v4673
    %v5857 = vunpack.c.h.b16 %v4673
    %v5858 = vunpack.c.l.b16 %v4674
    %v5859 = vunpack.c.h.b16 %v4674
    %v5860 = vunpack.c.l.b16 %v4675
    %v5861 = vunpack.c.h.b16 %v4675
    %v5862 = vunpack.c.l.b16 %v4676
    %v5863 = vunpack.c.h.b16 %v4676
    %v5864 = vunpack.c.l.b16 %v4677
    %v5865 = vunpack.c.h.b16 %v4677
    %v5866 = vunpack.c.l.b16 %v4678
    %v5867 = vunpack.c.h.b16 %v4678
    %v5868 = vunpack.c.l.b16 %v4679
    %v5869 = vunpack.c.h.b16 %v4679
    %v5870 = vunpack.c.l.b16 %v4680
    %v5871 = vunpack.c.h.b16 %v4680
    %v5872 = vunpack.c.l.b16 %v4681
    %v5873 = vunpack.c.h.b16 %v4681
    %v5874 = vunpack.c.l.b16 %v4682
    %v5875 = vunpack.c.h.b16 %v4682
    %v5876 = vunpack.c.l.b16 %v4683
    %v5877 = vunpack.c.h.b16 %v4683
    %v5878 = vunpack.c.l.b16 %v4684
    %v5879 = vunpack.c.h.b16 %v4684
    %v5880 = vunpack.c.l.b16 %v4685
    %v5881 = vunpack.c.h.b16 %v4685
    %v5882 = vunpack.c.l.b16 %v4686
    %v5883 = vunpack.c.h.b16 %v4686
    %v5884 = vunpack.c.l.b16 %v4687
    %v5885 = vunpack.c.h.b16 %v4687
    %v5886 = vunpack.c.l.b16 %v4688
    %v5887 = vunpack.c.h.b16 %v4688
    %v5888 = vunpack.c.l.b16 %v4689
    %v5889 = vunpack.c.h.b16 %v4689
    %v5890 = vunpack.c.l.b16 %v4690
    %v5891 = vunpack.c.h.b16 %v4690
    %v5892 = vunpack.c.l.b16 %v4691
    %v5893 = vunpack.c.h.b16 %v4691
    %v5894 = vunpack.c.l.b16 %v4692
    %v5895 = vunpack.c.h.b16 %v4692
    %v5896 = vunpack.c.l.b16 %v4693
    %v5897 = vunpack.c.h.b16 %v4693
    %v5898 = vunpack.c.l.b16 %v4694
    %v5899 = vunpack.c.h.b16 %v4694
    %v5900 = vunpack.c.l.b16 %v4695
    %v5901 = vunpack.c.h.b16 %v4695
    %v5902 = vunpack.c.l.b16 %v4696
    %v5903 = vunpack.c.h.b16 %v4696
    %v5904 = vunpack.c.l.b16 %v4697
    %v5905 = vunpack.c.h.b16 %v4697
    %v5906 = vunpack.c.l.b16 %v4698
    %v5907 = vunpack.c.h.b16 %v4698
    %v5908 = vunpack.c.l.b16 %v4699
    %v5909 = vunpack.c.h.b16 %v4699
    %v5910 = vunpack.c.l.b16 %v4700
    %v5911 = vunpack.c.h.b16 %v4700
    %v5912 = vunpack.c.l.b16 %v4701
    %v5913 = vunpack.c.h.b16 %v4701
    %v5914 = vunpack.c.l.b16 %v4702
    %v5915 = vunpack.c.h.b16 %v4702
    %v5916 = vunpack.c.l.b16 %v4703
    %v5917 = vunpack.c.h.b16 %v4703
    %v5918 = vunpack.c.l.b16 %v4704
    %v5919 = vunpack.c.h.b16 %v4704
    %v5920 = vunpack.c.l.b16 %v4705
    %v5921 = vunpack.c.h.b16 %v4705
    %v5922 = vunpack.c.l.b16 %v4706
    %v5923 = vunpack.c.h.b16 %v4706
    %v5924 = vunpack.c.l.b16 %v4707
    %v5925 = vunpack.c.h.b16 %v4707
    %v5926 = vunpack.c.l.b16 %v4708
    %v5927 = vunpack.c.h.b16 %v4708
    %v5928 = vunpack.c.l.b16 %v4709
    %v5929 = vunpack.c.h.b16 %v4709
    %v5930 = vunpack.c.l.b16 %v4710
    %v5931 = vunpack.c.h.b16 %v4710
    %v5932 = vunpack.c.l.b16 %v4711
    %v5933 = vunpack.c.h.b16 %v4711
    %v5934 = vunpack.c.l.b16 %v4712
    %v5935 = vunpack.c.h.b16 %v4712
    %v5936 = vunpack.c.l.b16 %v4713
    %v5937 = vunpack.c.h.b16 %v4713
    %v5938 = vunpack.c.l.b16 %v4714
    %v5939 = vunpack.c.h.b16 %v4714
    %v5940 = vunpack.c.l.b16 %v4715
    %v5941 = vunpack.c.h.b16 %v4715
    %v5942 = vunpack.c.l.b16 %v4716
    %v5943 = vunpack.c.h.b16 %v4716
    %v5944 = vunpack.c.l.b16 %v4717
    %v5945 = vunpack.c.h.b16 %v4717
    %v5946 = vunpack.c.l.b16 %v4718
    %v5947 = vunpack.c.h.b16 %v4718
    %v5948 = vunpack.c.l.b16 %v4719
    %v5949 = vunpack.c.h.b16 %v4719
    %v5950 = vunpack.c.l.b16 %v4720
    %v5951 = vunpack.c.h.b16 %v4720
    %v5952 = vunpack.c.l.b16 %v4721
    %v5953 = vunpack.c.h.b16 %v4721
    %v5954 = vunpack.c.l.b16 %v4722
    %v5955 = vunpack.c.h.b16 %v4722
    %v5956 = vunpack.c.l.b16 %v4723
    %v5957 = vunpack.c.h.b16 %v4723
    %v5958 = vunpack.c.l.b16 %v4724
    %v5959 = vunpack.c.h.b16 %v4724
    %v5960 = vunpack.c.l.b16 %v4725
    %v5961 = vunpack.c.h.b16 %v4725
    %v5962 = vunpack.c.l.b16 %v4726
    %v5963 = vunpack.c.h.b16 %v4726
    %v5964 = vunpack.c.l.b16 %v4727
    %v5965 = vunpack.c.h.b16 %v4727
    %v5966 = vunpack.c.l.b16 %v4728
    %v5967 = vunpack.c.h.b16 %v4728
    %v5968 = vunpack.c.l.b16 %v4729
    %v5969 = vunpack.c.h.b16 %v4729
    %v5970 = vunpack.c.l.b16 %v4730
    %v5971 = vunpack.c.h.b16 %v4730
    %v5972 = vunpack.c.l.b16 %v4731
    %v5973 = vunpack.c.h.b16 %v4731
    %v5974 = vunpack.c.l.b16 %v4732
    %v5975 = vunpack.c.h.b16 %v4732
    %v5976 = vunpack.c.l.b16 %v4733
    %v5977 = vunpack.c.h.b16 %v4733
    %v5978 = vunpack.c.l.b16 %v4734
    %v5979 = vunpack.c.h.b16 %v4734
    %v5980 = vunpack.c.l.b16 %v4735
    %v5981 = vunpack.c.h.b16 %v4735
    %v5982 = vunpack.c.l.b16 %v4736
    %v5983 = vunpack.c.h.b16 %v4736
    %v5984 = vunpack.c.l.b16 %v4737
    %v5985 = vunpack.c.h.b16 %v4737
    %v5986 = vunpack.c.l.b16 %v4738
    %v5987 = vunpack.c.h.b16 %v4738
    %v5988 = vunpack.c.l.b16 %v4739
    %v5989 = vunpack.c.h.b16 %v4739
    %v5990 = vunpack.c.l.b16 %v4740
    %v5991 = vunpack.c.h.b16 %v4740
    %v5992 = vunpack.c.l.b16 %v4741
    %v5993 = vunpack.c.h.b16 %v4741
    %v5994 = vunpack.c.l.b16 %v4742
    %v5995 = vunpack.c.h.b16 %v4742
    %v5996 = vunpack.c.l.b16 %v4743
    %v5997 = vunpack.c.h.b16 %v4743
    %v5998 = vunpack.c.l.b16 %v4744
    %v5999 = vunpack.c.h.b16 %v4744
    %v6000 = vunpack.c.l.b16 %v4745
    %v6001 = vunpack.c.h.b16 %v4745
    %v6002 = vunpack.c.l.b16 %v4746
    %v6003 = vunpack.c.h.b16 %v4746
    %v6004 = vunpack.c.l.b16 %v4747
    %v6005 = vunpack.c.h.b16 %v4747
    %v6006 = vunpack.c.l.b16 %v4748
    %v6007 = vunpack.c.h.b16 %v4748
    %v6008 = vunpack.c.l.b16 %v4749
    %v6009 = vunpack.c.h.b16 %v4749
    %v6010 = vunpack.c.l.b16 %v4750
    %v6011 = vunpack.c.h.b16 %v4750
    %v6012 = vunpack.c.l.b16 %v4751
    %v6013 = vunpack.c.h.b16 %v4751
    %v6014 = vunpack.c.l.b16 %v4752
    %v6015 = vunpack.c.h.b16 %v4752
    %v6016 = vunpack.c.l.b16 %v4753
    %v6017 = vunpack.c.h.b16 %v4753
    %v6018 = vunpack.c.l.b16 %v4754
    %v6019 = vunpack.c.h.b16 %v4754
    %v6020 = vunpack.c.l.b16 %v4755
    %v6021 = vunpack.c.h.b16 %v4755
    %v6022 = vunpack.c.l.b16 %v4756
    %v6023 = vunpack.c.h.b16 %v4756
    %v6024 = vunpack.c.l.b16 %v4757
    %v6025 = vunpack.c.h.b16 %v4757
    %v6026 = vunpack.c.l.b16 %v4758
    %v6027 = vunpack.c.h.b16 %v4758
    %v6028 = vunpack.c.l.b16 %v4759
    %v6029 = vunpack.c.h.b16 %v4759
    %v6030 = vunpack.c.l.b16 %v4760
    %v6031 = vunpack.c.h.b16 %v4760
    %v6032 = vunpack.c.l.b16 %v4761
    %v6033 = vunpack.c.h.b16 %v4761
    %v6034 = vunpack.c.l.b16 %v4762
    %v6035 = vunpack.c.h.b16 %v4762
    %v6036 = vunpack.c.l.b16 %v4763
    %v6037 = vunpack.c.h.b16 %v4763
    %v6038 = vunpack.c.l.b16 %v4764
    %v6039 = vunpack.c.h.b16 %v4764
    %v6040 = vunpack.c.l.b16 %v4765
    %v6041 = vunpack.c.h.b16 %v4765
    %v6042 = vunpack.c.l.b16 %v4766
    %v6043 = vunpack.c.h.b16 %v4766
    %v6044 = vunpack.c.l.b16 %v4767
    %v6045 = vunpack.c.h.b16 %v4767
    %v6046 = vunpack.c.l.b16 %v4768
    %v6047 = vunpack.c.h.b16 %v4768
    %v6048 = vunpack.c.l.b16 %v4769
    %v6049 = vunpack.c.h.b16 %v4769
    %v6050 = vunpack.c.l.b16 %v4770
    %v6051 = vunpack.c.h.b16 %v4770
    %v6052 = vunpack.c.l.b16 %v4771
    %v6053 = vunpack.c.h.b16 %v4771
    %v6054 = vunpack.c.l.b16 %v4772
    %v6055 = vunpack.c.h.b16 %v4772
    %v6056 = vunpack.c.l.b16 %v4773
    %v6057 = vunpack.c.h.b16 %v4773
    %v6058 = vunpack.c.l.b16 %v4774
    %v6059 = vunpack.c.h.b16 %v4774
    %v6060 = vunpack.c.l.b16 %v4775
    %v6061 = vunpack.c.h.b16 %v4775
    %v6062 = vunpack.c.l.b16 %v4776
    %v6063 = vunpack.c.h.b16 %v4776
    %v6064 = vunpack.c.l.b16 %v4777
    %v6065 = vunpack.c.h.b16 %v4777
    %v6066 = vunpack.c.l.b16 %v4778
    %v6067 = vunpack.c.h.b16 %v4778
    %v6068 = vunpack.c.l.b16 %v4779
    %v6069 = vunpack.c.h.b16 %v4779
    %v6070 = vunpack.c.l.b16 %v4780
    %v6071 = vunpack.c.h.b16 %v4780
    %v6072 = vunpack.c.l.b16 %v4781
    %v6073 = vunpack.c.h.b16 %v4781
    %v6074 = vunpack.c.l.b16 %v4782
    %v6075 = vunpack.c.h.b16 %v4782
    %v6076 = vunpack.c.l.b16 %v4783
    %v6077 = vunpack.c.h.b16 %v4783
    %v6078 = vunpack.c.l.b16 %v4784
    %v6079 = vunpack.c.h.b16 %v4784
    %v6080 = vunpack.c.l.b16 %v4785
    %v6081 = vunpack.c.h.b16 %v4785
    %v6082 = vunpack.c.l.b16 %v4786
    %v6083 = vunpack.c.h.b16 %v4786
    %v6084 = vunpack.c.l.b16 %v4787
    %v6085 = vunpack.c.h.b16 %v4787
    %v6086 = vunpack.c.l.b16 %v4788
    %v6087 = vunpack.c.h.b16 %v4788
    %v6088 = vunpack.c.l.b16 %v4789
    %v6089 = vunpack.c.h.b16 %v4789
    %v6090 = vunpack.c.l.b16 %v4790
    %v6091 = vunpack.c.h.b16 %v4790
    %v6092 = vunpack.c.l.b16 %v4791
    %v6093 = vunpack.c.h.b16 %v4791
    %v6094 = vunpack.c.l.b16 %v4792
    %v6095 = vunpack.c.h.b16 %v4792
    %v6096 = vunpack.c.l.b16 %v4793
    %v6097 = vunpack.c.h.b16 %v4793
    %v6098 = vunpack.c.l.b16 %v4794
    %v6099 = vunpack.c.h.b16 %v4794
    %v6100 = vunpack.c.l.b16 %v4795
    %v6101 = vunpack.c.h.b16 %v4795
    %v6102 = vunpack.c.l.b16 %v4796
    %v6103 = vunpack.c.h.b16 %v4796
    %v6104 = vunpack.c.l.b16 %v4797
    %v6105 = vunpack.c.h.b16 %v4797
    %v6106 = vunpack.c.l.b16 %v4798
    %v6107 = vunpack.c.h.b16 %v4798
    %v6108 = vunpack.c.l.b16 %v4799
    %v6109 = vunpack.c.h.b16 %v4799
    %v6110 = vunpack.c.l.b16 %v4800
    %v6111 = vunpack.c.h.b16 %v4800
    %v6112 = vunpack.c.l.b16 %v4801
    %v6113 = vunpack.c.h.b16 %v4801
    %v6114 = vunpack.c.l.b16 %v4802
    %v6115 = vunpack.c.h.b16 %v4802
    %v6116 = vunpack.c.l.b16 %v4803
    %v6117 = vunpack.c.h.b16 %v4803
    %v6118 = vunpack.c.l.b16 %v4804
    %v6119 = vunpack.c.h.b16 %v4804
    %v6120 = vunpack.c.l.b16 %v4805
    %v6121 = vunpack.c.h.b16 %v4805
    %v6122 = vunpack.c.l.b16 %v4806
    %v6123 = vunpack.c.h.b16 %v4806
    %v6124 = vunpack.c.l.b16 %v4807
    %v6125 = vunpack.c.h.b16 %v4807
    %v6126 = vunpack.c.l.b16 %v4808
    %v6127 = vunpack.c.h.b16 %v4808
    %v6128 = vunpack.c.l.b16 %v4809
    %v6129 = vunpack.c.h.b16 %v4809
    %v6130 = vunpack.c.l.b16 %v4810
    %v6131 = vunpack.c.h.b16 %v4810
    %v6132 = vunpack.c.l.b16 %v4811
    %v6133 = vunpack.c.h.b16 %v4811
    %v6134 = vunpack.c.l.b16 %v4812
    %v6135 = vunpack.c.h.b16 %v4812
    %v6136 = vunpack.c.l.b16 %v4813
    %v6137 = vunpack.c.h.b16 %v4813
    %v6138 = vunpack.c.l.b16 %v4814
    %v6139 = vunpack.c.h.b16 %v4814
    %v6140 = vunpack.c.l.b16 %v4815
    %v6141 = vunpack.c.h.b16 %v4815
    %v6142 = vunpack.c.l.b16 %v4816
    %v6143 = vunpack.c.h.b16 %v4816
    %v6144 = vunpack.c.l.b16 %v4817
    %v6145 = vunpack.c.h.b16 %v4817
    %v6146 = vunpack.c.l.b16 %v4818
    %v6147 = vunpack.c.h.b16 %v4818
    %v6148 = vunpack.c.l.b16 %v4819
    %v6149 = vunpack.c.h.b16 %v4819
    %v6150 = vunpack.c.l.b16 %v4820
    %v6151 = vunpack.c.h.b16 %v4820
    %v6152 = vunpack.c.l.b16 %v4821
    %v6153 = vunpack.c.h.b16 %v4821
    %v6154 = vunpack.c.l.b16 %v4822
    %v6155 = vunpack.c.h.b16 %v4822
    %v6156 = vunpack.c.l.b16 %v4823
    %v6157 = vunpack.c.h.b16 %v4823
    %v6158 = vunpack.c.l.b16 %v4824
    %v6159 = vunpack.c.h.b16 %v4824
    %v6160 = vunpack.c.l.b16 %v4825
    %v6161 = vunpack.c.h.b16 %v4825
    %v6162 = vunpack.c.l.b16 %v4826
    %v6163 = vunpack.c.h.b16 %v4826
    %v6164 = vunpack.c.l.b16 %v4827
    %v6165 = vunpack.c.h.b16 %v4827
    %v6166 = vunpack.c.l.b16 %v4828
    %v6167 = vunpack.c.h.b16 %v4828
    %v6168 = vunpack.c.l.b16 %v4829
    %v6169 = vunpack.c.h.b16 %v4829
    %v6170 = vunpack.c.l.b16 %v4830
    %v6171 = vunpack.c.h.b16 %v4830
    %v6172 = vunpack.c.l.b16 %v4831
    %v6173 = vunpack.c.h.b16 %v4831
    %v6174 = vunpack.c.l.b16 %v4832
    %v6175 = vunpack.c.h.b16 %v4832
    %v6176 = vunpack.c.l.b16 %v4833
    %v6177 = vunpack.c.h.b16 %v4833
    %v6178 = vunpack.c.l.b16 %v4834
    %v6179 = vunpack.c.h.b16 %v4834
    %v6180 = vunpack.c.l.b16 %v4835
    %v6181 = vunpack.c.h.b16 %v4835
    %v6182 = vunpack.c.l.b16 %v4836
    %v6183 = vunpack.c.h.b16 %v4836
    %v6184 = vunpack.c.l.b16 %v4837
    %v6185 = vunpack.c.h.b16 %v4837
    %v6186 = vunpack.c.l.b16 %v4838
    %v6187 = vunpack.c.h.b16 %v4838
    %v6188 = vunpack.c.l.b16 %v4839
    %v6189 = vunpack.c.h.b16 %v4839
    %v6190 = vunpack.c.l.b16 %v4840
    %v6191 = vunpack.c.h.b16 %v4840
    %v6192 = vunpack.c.l.b16 %v4841
    %v6193 = vunpack.c.h.b16 %v4841
    %v6194 = vunpack.c.l.b16 %v4842
    %v6195 = vunpack.c.h.b16 %v4842
    %v6196 = vunpack.c.l.b16 %v4843
    %v6197 = vunpack.c.h.b16 %v4843
    %v6198 = vunpack.c.l.b16 %v4844
    %v6199 = vunpack.c.h.b16 %v4844
    %v6200 = vunpack.c.l.b16 %v4845
    %v6201 = vunpack.c.h.b16 %v4845
    %v6202 = vunpack.c.l.b16 %v4846
    %v6203 = vunpack.c.h.b16 %v4846
    %v6204 = vunpack.c.l.b16 %v4847
    %v6205 = vunpack.c.h.b16 %v4847
    %v6206 = vunpack.c.l.b16 %v4848
    %v6207 = vunpack.c.h.b16 %v4848
    %v6208 = vunpack.c.l.b16 %v4849
    %v6209 = vunpack.c.h.b16 %v4849
    %v6210 = vunpack.c.l.b16 %v4850
    %v6211 = vunpack.c.h.b16 %v4850
    %v6212 = vunpack.c.l.b16 %v4851
    %v6213 = vunpack.c.h.b16 %v4851
    %v6214 = vunpack.c.l.b16 %v4852
    %v6215 = vunpack.c.h.b16 %v4852
    %v6216 = vunpack.c.l.b16 %v4853
    %v6217 = vunpack.c.h.b16 %v4853
    %v6218 = vunpack.c.l.b16 %v4854
    %v6219 = vunpack.c.h.b16 %v4854
    %v6220 = vunpack.c.l.b16 %v4855
    %v6221 = vunpack.c.h.b16 %v4855
    %v6222 = vunpack.c.l.b16 %v4856
    %v6223 = vunpack.c.h.b16 %v4856
    %v6224 = vunpack.c.l.b16 %v4857
    %v6225 = vunpack.c.h.b16 %v4857
    %v6226 = vunpack.c.l.b16 %v4858
    %v6227 = vunpack.c.h.b16 %v4858
    %v6228 = vunpack.c.l.b16 %v4859
    %v6229 = vunpack.c.h.b16 %v4859
    %v6230 = vunpack.c.l.b16 %v4860
    %v6231 = vunpack.c.h.b16 %v4860
    %v6232 = vunpack.c.l.b16 %v4861
    %v6233 = vunpack.c.h.b16 %v4861
    %v6234 = vunpack.c.l.b16 %v4862
    %v6235 = vunpack.c.h.b16 %v4862
    %v6236 = vunpack.c.l.b16 %v4863
    %v6237 = vunpack.c.h.b16 %v4863
    %v6238 = vunpack.c.l.b16 %v4864
    %v6239 = vunpack.c.h.b16 %v4864
    %v6240 = vunpack.c.l.b16 %v4865
    %v6241 = vunpack.c.h.b16 %v4865
    %v6242 = vunpack.c.l.b16 %v4866
    %v6243 = vunpack.c.h.b16 %v4866
    %v6244 = vunpack.c.l.b16 %v4867
    %v6245 = vunpack.c.h.b16 %v4867
    %v6246 = vunpack.c.l.b16 %v4868
    %v6247 = vunpack.c.h.b16 %v4868
    %v6248 = vunpack.c.l.b16 %v4869
    %v6249 = vunpack.c.h.b16 %v4869
    %v6250 = vunpack.c.l.b16 %v4870
    %v6251 = vunpack.c.h.b16 %v4870
    %v6252 = vunpack.c.l.b16 %v4871
    %v6253 = vunpack.c.h.b16 %v4871
    %v6254 = vunpack.c.l.b16 %v4872
    %v6255 = vunpack.c.h.b16 %v4872
    %v6256 = vunpack.c.l.b16 %v4873
    %v6257 = vunpack.c.h.b16 %v4873
    %v6258 = vunpack.c.l.b16 %v4874
    %v6259 = vunpack.c.h.b16 %v4874
    %v6260 = vunpack.c.l.b16 %v4875
    %v6261 = vunpack.c.h.b16 %v4875
    %v6262 = vunpack.c.l.b16 %v4876
    %v6263 = vunpack.c.h.b16 %v4876
    %v6264 = vunpack.c.l.b16 %v4877
    %v6265 = vunpack.c.h.b16 %v4877
    %v6266 = vunpack.c.l.b16 %v4878
    %v6267 = vunpack.c.h.b16 %v4878
    %v6268 = vunpack.c.l.b16 %v4879
    %v6269 = vunpack.c.h.b16 %v4879
    %v6270 = vunpack.c.l.b16 %v4880
    %v6271 = vunpack.c.h.b16 %v4880
    %v6272 = vunpack.c.l.b16 %v4881
    %v6273 = vunpack.c.h.b16 %v4881
    %v6274 = vunpack.c.l.b16 %v4882
    %v6275 = vunpack.c.h.b16 %v4882
    %v6276 = vunpack.c.l.b16 %v4883
    %v6277 = vunpack.c.h.b16 %v4883
    %v6278 = vunpack.c.l.b16 %v4884
    %v6279 = vunpack.c.h.b16 %v4884
    %v6280 = vunpack.c.l.b16 %v4885
    %v6281 = vunpack.c.h.b16 %v4885
    %v6282 = vunpack.c.l.b16 %v4886
    %v6283 = vunpack.c.h.b16 %v4886
    %v6284 = vunpack.c.l.b16 %v4887
    %v6285 = vunpack.c.h.b16 %v4887
    %v6286 = vunpack.c.l.b16 %v4888
    %v6287 = vunpack.c.h.b16 %v4888
    %v6288 = vunpack.c.l.b16 %v4889
    %v6289 = vunpack.c.h.b16 %v4889
    %v6290 = vunpack.c.l.b16 %v4890
    %v6291 = vunpack.c.h.b16 %v4890
    %v6292 = vunpack.c.l.b16 %v4891
    %v6293 = vunpack.c.h.b16 %v4891
    %v6294 = vunpack.c.l.b16 %v4892
    %v6295 = vunpack.c.h.b16 %v4892
    %v6296 = vunpack.c.l.b16 %v4893
    %v6297 = vunpack.c.h.b16 %v4893
    %v6298 = vunpack.c.l.b16 %v4894
    %v6299 = vunpack.c.h.b16 %v4894
    %v6300 = vunpack.c.l.b16 %v4895
    %v6301 = vunpack.c.h.b16 %v4895
    %v6302 = vunpack.c.l.b16 %v4896
    %v6303 = vunpack.c.h.b16 %v4896
    %v6304 = vunpack.c.l.b16 %v4897
    %v6305 = vunpack.c.h.b16 %v4897
    %v6306 = vunpack.c.l.b16 %v4898
    %v6307 = vunpack.c.h.b16 %v4898
    %v6308 = vunpack.c.l.b16 %v4899
    %v6309 = vunpack.c.h.b16 %v4899
    %v6310 = vunpack.c.l.b16 %v4900
    %v6311 = vunpack.c.h.b16 %v4900
    %v6312 = vunpack.c.l.b16 %v4901
    %v6313 = vunpack.c.h.b16 %v4901
    %v6314 = vunpack.c.l.b16 %v4902
    %v6315 = vunpack.c.h.b16 %v4902
    %v6316 = vunpack.c.l.b16 %v4903
    %v6317 = vunpack.c.h.b16 %v4903
    %v6318 = vunpack.c.l.b16 %v4904
    %v6319 = vunpack.c.h.b16 %v4904
    %v6320 = vunpack.c.l.b16 %v4905
    %v6321 = vunpack.c.h.b16 %v4905
    %v6322 = vunpack.c.l.b16 %v4906
    %v6323 = vunpack.c.h.b16 %v4906
    %v6324 = vunpack.c.l.b16 %v4907
    %v6325 = vunpack.c.h.b16 %v4907
    %v6326 = vunpack.c.l.b16 %v4908
    %v6327 = vunpack.c.h.b16 %v4908
    %v6328 = vunpack.c.l.b16 %v4909
    %v6329 = vunpack.c.h.b16 %v4909
    %v6330 = vunpack.c.l.b16 %v4910
    %v6331 = vunpack.c.h.b16 %v4910
    %v6332 = vunpack.c.l.b16 %v4911
    %v6333 = vunpack.c.h.b16 %v4911
    %v6334 = vunpack.c.l.b16 %v4912
    %v6335 = vunpack.c.h.b16 %v4912
    %v6336 = vunpack.c.l.b16 %v4913
    %v6337 = vunpack.c.h.b16 %v4913
    %v6338 = vunpack.c.l.b16 %v4914
    %v6339 = vunpack.c.h.b16 %v4914
    %v6340 = vunpack.c.l.b16 %v4915
    %v6341 = vunpack.c.h.b16 %v4915
    %v6342 = vunpack.c.l.b16 %v4916
    %v6343 = vunpack.c.h.b16 %v4916
    %v6344 = vunpack.c.l.b16 %v4917
    %v6345 = vunpack.c.h.b16 %v4917
    %v6346 = vunpack.c.l.b16 %v4918
    %v6347 = vunpack.c.h.b16 %v4918
    %v6348 = vunpack.c.l.b16 %v4919
    %v6349 = vunpack.c.h.b16 %v4919
    %v6350 = vunpack.c.l.b16 %v4920
    %v6351 = vunpack.c.h.b16 %v4920
    %v6352 = vunpack.c.l.b16 %v4921
    %v6353 = vunpack.c.h.b16 %v4921
    %v6354 = vunpack.c.l.b16 %v4922
    %v6355 = vunpack.c.h.b16 %v4922
    %v6356 = vunpack.c.l.b16 %v4923
    %v6357 = vunpack.c.h.b16 %v4923
    %v6358 = vunpack.c.l.b16 %v4924
    %v6359 = vunpack.c.h.b16 %v4924
    %v6360 = vunpack.c.l.b16 %v4925
    %v6361 = vunpack.c.h.b16 %v4925
    %v6362 = vunpack.c.l.b16 %v4926
    %v6363 = vunpack.c.h.b16 %v4926
    %v6364 = vunpack.c.l.b16 %v4927
    %v6365 = vunpack.c.h.b16 %v4927
    %v6366 = vunpack.c.l.b16 %v4928
    %v6367 = vunpack.c.h.b16 %v4928
    %v6368 = vunpack.c.l.b16 %v4929
    %v6369 = vunpack.c.h.b16 %v4929
    %v6370 = vunpack.c.l.b16 %v4930
    %v6371 = vunpack.c.h.b16 %v4930
    %v6372 = vunpack.c.l.b16 %v4931
    %v6373 = vunpack.c.h.b16 %v4931
    %v6374 = vunpack.c.l.b16 %v4932
    %v6375 = vunpack.c.h.b16 %v4932
    %v6376 = vunpack.c.l.b16 %v4933
    %v6377 = vunpack.c.h.b16 %v4933
    %v6378 = vunpack.c.l.b16 %v4934
    %v6379 = vunpack.c.h.b16 %v4934
    %v6380 = vunpack.c.l.b16 %v4935
    %v6381 = vunpack.c.h.b16 %v4935
    %v6382 = vunpack.c.l.b16 %v4936
    %v6383 = vunpack.c.h.b16 %v4936
    %v6384 = vunpack.c.l.b16 %v4937
    %v6385 = vunpack.c.h.b16 %v4937
    %v6386 = vunpack.c.l.b16 %v4938
    %v6387 = vunpack.c.h.b16 %v4938
    %v6388 = vunpack.c.l.b16 %v4939
    %v6389 = vunpack.c.h.b16 %v4939
    %v6390 = vunpack.c.l.b16 %v4940
    %v6391 = vunpack.c.h.b16 %v4940
    %v6392 = vunpack.c.l.b16 %v4941
    %v6393 = vunpack.c.h.b16 %v4941
    %v6394 = vunpack.c.l.b16 %v4942
    %v6395 = vunpack.c.h.b16 %v4942
    %v6396 = vunpack.c.l.b16 %v4943
    %v6397 = vunpack.c.h.b16 %v4943
    %v6398 = vunpack.c.l.b16 %v4944
    %v6399 = vunpack.c.h.b16 %v4944
    %v6400 = vunpack.c.l.b16 %v4945
    %v6401 = vunpack.c.h.b16 %v4945
    %v6402 = vunpack.c.l.b16 %v4946
    %v6403 = vunpack.c.h.b16 %v4946
    %v6404 = vunpack.c.l.b16 %v4947
    %v6405 = vunpack.c.h.b16 %v4947
    %v6406 = vunpack.c.l.b16 %v4948
    %v6407 = vunpack.c.h.b16 %v4948
    %v6408 = vunpack.c.l.b16 %v4949
    %v6409 = vunpack.c.h.b16 %v4949
    %v6410 = vunpack.c.l.b16 %v4950
    %v6411 = vunpack.c.h.b16 %v4950
    %v6412 = vunpack.c.l.b16 %v4951
    %v6413 = vunpack.c.h.b16 %v4951
    %v6414 = vunpack.c.l.b16 %v4952
    %v6415 = vunpack.c.h.b16 %v4952
    %v6416 = vunpack.c.l.b16 %v4953
    %v6417 = vunpack.c.h.b16 %v4953
    %v6418 = vunpack.c.l.b16 %v4954
    %v6419 = vunpack.c.h.b16 %v4954
    %v6420 = vunpack.c.l.b16 %v4955
    %v6421 = vunpack.c.h.b16 %v4955
    %v6422 = vunpack.c.l.b16 %v4956
    %v6423 = vunpack.c.h.b16 %v4956
    %v6424 = vunpack.c.l.b16 %v4957
    %v6425 = vunpack.c.h.b16 %v4957
    %v6426 = vunpack.c.l.b16 %v4958
    %v6427 = vunpack.c.h.b16 %v4958
    %v6428 = vunpack.c.l.b16 %v4959
    %v6429 = vunpack.c.h.b16 %v4959
    %v6430 = vunpack.c.l.b16 %v4960
    %v6431 = vunpack.c.h.b16 %v4960
    %v6432 = vunpack.c.l.b16 %v4961
    %v6433 = vunpack.c.h.b16 %v4961
    %v6434 = vunpack.c.l.b16 %v4962
    %v6435 = vunpack.c.h.b16 %v4962
    %v6436 = vunpack.c.l.b16 %v4963
    %v6437 = vunpack.c.h.b16 %v4963
    %v6438 = vunpack.c.l.b16 %v4964
    %v6439 = vunpack.c.h.b16 %v4964
    %v6440 = vunpack.c.l.b16 %v4965
    %v6441 = vunpack.c.h.b16 %v4965
    %v6442 = vunpack.c.l.b16 %v4966
    %v6443 = vunpack.c.h.b16 %v4966
    %v6444 = vunpack.c.l.b16 %v4967
    %v6445 = vunpack.c.h.b16 %v4967
    %v6446 = vunpack.c.l.b16 %v4968
    %v6447 = vunpack.c.h.b16 %v4968
    %v6448 = vunpack.c.l.b16 %v4969
    %v6449 = vunpack.c.h.b16 %v4969
    %v6450 = vunpack.c.l.b16 %v4970
    %v6451 = vunpack.c.h.b16 %v4970
    %v6452 = vunpack.c.l.b16 %v4971
    %v6453 = vunpack.c.h.b16 %v4971
    %v6454 = vunpack.c.l.b16 %v4972
    %v6455 = vunpack.c.h.b16 %v4972
    %v6456 = vunpack.c.l.b16 %v4973
    %v6457 = vunpack.c.h.b16 %v4973
    %v6458 = vunpack.c.l.b16 %v4974
    %v6459 = vunpack.c.h.b16 %v4974
    %v6460 = vunpack.c.l.b16 %v4975
    %v6461 = vunpack.c.h.b16 %v4975
    %v6462 = vunpack.c.l.b16 %v4976
    %v6463 = vunpack.c.h.b16 %v4976
    %v6464 = vunpack.c.l.b16 %v4977
    %v6465 = vunpack.c.h.b16 %v4977
    %v6466 = vunpack.c.l.b16 %v4978
    %v6467 = vunpack.c.h.b16 %v4978
    %v6468 = vunpack.c.l.b16 %v4979
    %v6469 = vunpack.c.h.b16 %v4979
    %v6470 = vunpack.c.l.b16 %v4980
    %v6471 = vunpack.c.h.b16 %v4980
    %v6472 = vunpack.c.l.b16 %v4981
    %v6473 = vunpack.c.h.b16 %v4981
    %v6474 = vunpack.c.l.b16 %v4982
    %v6475 = vunpack.c.h.b16 %v4982
    %v6476 = vunpack.c.l.b16 %v4983
    %v6477 = vunpack.c.h.b16 %v4983
    %v6478 = vunpack.c.l.b16 %v4984
    %v6479 = vunpack.c.h.b16 %v4984
    %v6480 = vunpack.c.l.b16 %v4985
    %v6481 = vunpack.c.h.b16 %v4985
    %v6482 = vunpack.c.l.b16 %v4986
    %v6483 = vunpack.c.h.b16 %v4986
    %v6484 = vunpack.c.l.b16 %v4987
    %v6485 = vunpack.c.h.b16 %v4987
    %v6486 = vunpack.c.l.b16 %v4988
    %v6487 = vunpack.c.h.b16 %v4988
    %v6488 = vunpack.c.l.b16 %v4989
    %v6489 = vunpack.c.h.b16 %v4989
    %v6490 = vunpack.c.l.b16 %v4990
    %v6491 = vunpack.c.h.b16 %v4990
    %v6492 = vunpack.c.l.b16 %v4991
    %v6493 = vunpack.c.h.b16 %v4991
    %v6494 = vunpack.c.l.b16 %v4992
    %v6495 = vunpack.c.h.b16 %v4992
    %v6496 = vunpack.c.l.b16 %v4993
    %v6497 = vunpack.c.h.b16 %v4993
    %v6498 = vunpack.c.l.b16 %v4994
    %v6499 = vunpack.c.h.b16 %v4994
    %v6500 = vunpack.c.l.b16 %v4995
    %v6501 = vunpack.c.h.b16 %v4995
    %v6502 = vunpack.c.l.b16 %v4996
    %v6503 = vunpack.c.h.b16 %v4996
    %v6504 = vunpack.c.l.b16 %v4997
    %v6505 = vunpack.c.h.b16 %v4997
    %v6506 = vunpack.c.l.b16 %v4998
    %v6507 = vunpack.c.h.b16 %v4998
    %v6508 = vunpack.c.l.b16 %v4999
    %v6509 = vunpack.c.h.b16 %v4999
    %v6510 = vunpack.c.l.b16 %v5000
    %v6511 = vunpack.c.h.b16 %v5000
    %v6512 = vunpack.c.l.b16 %v5001
    %v6513 = vunpack.c.h.b16 %v5001
    %v6514 = vunpack.c.l.b16 %v5002
    %v6515 = vunpack.c.h.b16 %v5002
    %v6516 = vunpack.c.l.b16 %v5003
    %v6517 = vunpack.c.h.b16 %v5003
    %v6518 = vunpack.c.l.b16 %v5004
    %v6519 = vunpack.c.h.b16 %v5004
    %v6520 = vunpack.c.l.b16 %v5005
    %v6521 = vunpack.c.h.b16 %v5005
    %v6522 = vunpack.c.l.b16 %v5006
    %v6523 = vunpack.c.h.b16 %v5006
    %v6524 = vunpack.c.l.b16 %v5007
    %v6525 = vunpack.c.h.b16 %v5007
    %v6526 = vunpack.c.l.b16 %v5008
    %v6527 = vunpack.c.h.b16 %v5008
    %v6528 = vunpack.c.l.b16 %v5009
    %v6529 = vunpack.c.h.b16 %v5009
    %v6530 = vunpack.c.l.b16 %v5010
    %v6531 = vunpack.c.h.b16 %v5010
    %v6532 = vunpack.c.l.b16 %v5011
    %v6533 = vunpack.c.h.b16 %v5011
    %v6534 = vunpack.c.l.b16 %v5012
    %v6535 = vunpack.c.h.b16 %v5012
    %v6536 = vunpack.c.l.b16 %v5013
    %v6537 = vunpack.c.h.b16 %v5013
    %v6538 = vunpack.c.l.b16 %v5014
    %v6539 = vunpack.c.h.b16 %v5014
    %v6540 = vunpack.c.l.b16 %v5015
    %v6541 = vunpack.c.h.b16 %v5015
    %v6542 = vunpack.c.l.b16 %v5016
    %v6543 = vunpack.c.h.b16 %v5016
    %v6544 = vunpack.c.l.b16 %v5017
    %v6545 = vunpack.c.h.b16 %v5017
    %v6546 = vunpack.c.l.b16 %v5018
    %v6547 = vunpack.c.h.b16 %v5018
    %v6548 = vunpack.c.l.b16 %v5019
    %v6549 = vunpack.c.h.b16 %v5019
    %v6550 = vunpack.c.l.b16 %v5020
    %v6551 = vunpack.c.h.b16 %v5020
    %v6552 = vunpack.c.l.b16 %v5021
    %v6553 = vunpack.c.h.b16 %v5021
    %v6554 = vunpack.c.l.b16 %v5022
    %v6555 = vunpack.c.h.b16 %v5022
    %v6556 = vunpack.c.l.b16 %v5023
    %v6557 = vunpack.c.h.b16 %v5023
    %v6558 = vunpack.c.l.b16 %v5024
    %v6559 = vunpack.c.h.b16 %v5024
    %v6560 = vunpack.c.l.b16 %v5025
    %v6561 = vunpack.c.h.b16 %v5025
    %v6562 = vunpack.c.l.b16 %v5026
    %v6563 = vunpack.c.h.b16 %v5026
    %v6564 = vunpack.c.l.b16 %v5027
    %v6565 = vunpack.c.h.b16 %v5027
    %v6566 = vunpack.c.l.b16 %v5028
    %v6567 = vunpack.c.h.b16 %v5028
    %v6568 = vunpack.c.l.b16 %v5029
    %v6569 = vunpack.c.h.b16 %v5029
    %v6570 = vunpack.c.l.b16 %v5030
    %v6571 = vunpack.c.h.b16 %v5030
    %v6572 = vunpack.c.l.b16 %v5031
    %v6573 = vunpack.c.h.b16 %v5031
    %v6574 = vunpack.c.l.b16 %v5032
    %v6575 = vunpack.c.h.b16 %v5032
    %v6576 = vunpack.c.l.b16 %v5033
    %v6577 = vunpack.c.h.b16 %v5033
    %v6578 = vunpack.c.l.b16 %v5034
    %v6579 = vunpack.c.h.b16 %v5034
    %v6580 = vunpack.c.l.b16 %v5035
    %v6581 = vunpack.c.h.b16 %v5035
    %v6582 = vunpack.c.l.b16 %v5036
    %v6583 = vunpack.c.h.b16 %v5036
    %v6584 = vunpack.c.l.b16 %v5037
    %v6585 = vunpack.c.h.b16 %v5037
    %v6586 = vunpack.c.l.b16 %v5038
    %v6587 = vunpack.c.h.b16 %v5038
    %v6588 = vunpack.c.l.b16 %v5039
    %v6589 = vunpack.c.h.b16 %v5039
    %v6590 = vunpack.c.l.b16 %v5040
    %v6591 = vunpack.c.h.b16 %v5040
    %v6592 = vunpack.c.l.b16 %v5041
    %v6593 = vunpack.c.h.b16 %v5041
    %v6594 = vunpack.c.l.b16 %v5042
    %v6595 = vunpack.c.h.b16 %v5042
    %v6596 = vunpack.c.l.b16 %v5043
    %v6597 = vunpack.c.h.b16 %v5043
    %v6598 = vunpack.c.l.b16 %v5044
    %v6599 = vunpack.c.h.b16 %v5044
    %v6600 = vunpack.c.l.b16 %v5045
    %v6601 = vunpack.c.h.b16 %v5045
    %v6602 = vunpack.c.l.b16 %v5046
    %v6603 = vunpack.c.h.b16 %v5046
    %v6604 = vunpack.c.l.b16 %v5047
    %v6605 = vunpack.c.h.b16 %v5047
    %v6606 = vunpack.c.l.b16 %v5048
    %v6607 = vunpack.c.h.b16 %v5048
    %v6608 = vunpack.c.l.b16 %v5049
    %v6609 = vunpack.c.h.b16 %v5049
    %v6610 = vunpack.c.l.b16 %v5050
    %v6611 = vunpack.c.h.b16 %v5050
    %v6612 = vunpack.c.l.b16 %v5051
    %v6613 = vunpack.c.h.b16 %v5051
    %v6614 = vunpack.c.l.b16 %v5052
    %v6615 = vunpack.c.h.b16 %v5052
    %v6616 = vunpack.c.l.b16 %v5053
    %v6617 = vunpack.c.h.b16 %v5053
    %v6618 = vunpack.c.l.b16 %v5054
    %v6619 = vunpack.c.h.b16 %v5054
    %v6620 = vunpack.c.l.b16 %v5055
    %v6621 = vunpack.c.h.b16 %v5055
    %v6622 = vunpack.c.l.b16 %v5056
    %v6623 = vunpack.c.h.b16 %v5056
    %v6624 = vunpack.c.l.b16 %v5057
    %v6625 = vunpack.c.h.b16 %v5057
    %v6626 = vunpack.c.l.b16 %v5058
    %v6627 = vunpack.c.h.b16 %v5058
    %v6628 = vunpack.c.l.b16 %v5059
    %v6629 = vunpack.c.h.b16 %v5059
    %v6630 = vunpack.c.l.b16 %v5060
    %v6631 = vunpack.c.h.b16 %v5060
    %v6632 = vunpack.c.l.b16 %v5061
    %v6633 = vunpack.c.h.b16 %v5061
    %v6634 = vunpack.c.l.b16 %v5062
    %v6635 = vunpack.c.h.b16 %v5062
    %v6636 = vunpack.c.l.b16 %v5063
    %v6637 = vunpack.c.h.b16 %v5063
    %v6638 = vunpack.c.l.b16 %v5064
    %v6639 = vunpack.c.h.b16 %v5064
    %v6640 = vunpack.c.l.b16 %v5065
    %v6641 = vunpack.c.h.b16 %v5065
    %v6642 = vunpack.c.l.b16 %v5066
    %v6643 = vunpack.c.h.b16 %v5066
    %v6644 = vunpack.c.l.b16 %v5067
    %v6645 = vunpack.c.h.b16 %v5067
    %v6646 = vpack.c.b16 %v5630, %v5622
    %v6647 = vpack.c.b16 %v5631, %v5623
    %v6648 = vpack.c.b16 %v5632, %v5624
    %v6649 = vpack.c.b16 %v5633, %v5625
    %v6650 = vpack.c.b16 %v5634, %v5626
    %v6651 = vpack.c.b16 %v5635, %v5627
    %v6652 = vpack.c.b16 %v5636, %v5628
    %v6653 = vpack.c.b16 %v5637, %v5629
    %v6654 = vpack.c.b16 %v5646, %v5638
    %v6655 = vpack.c.b16 %v5647, %v5639
    %v6656 = vpack.c.b16 %v5648, %v5640
    %v6657 = vpack.c.b16 %v5649, %v5641
    %v6658 = vpack.c.b16 %v5650, %v5642
    %v6659 = vpack.c.b16 %v5651, %v5643
    %v6660 = vpack.c.b16 %v5652, %v5644
    %v6661 = vpack.c.b16 %v5653, %v5645
    %v6662 = vpack.c.b16 %v5662, %v5654
    %v6663 = vpack.c.b16 %v5663, %v5655
    %v6664 = vpack.c.b16 %v5664, %v5656
    %v6665 = vpack.c.b16 %v5665, %v5657
    %v6666 = vpack.c.b16 %v5666, %v5658
    %v6667 = vpack.c.b16 %v5667, %v5659
    %v6668 = vpack.c.b16 %v5668, %v5660
    %v6669 = vpack.c.b16 %v5669, %v5661
    %v6670 = vpack.c.b16 %v5678, %v5670
    %v6671 = vpack.c.b16 %v5679, %v5671
    %v6672 = vpack.c.b16 %v5680, %v5672
    %v6673 = vpack.c.b16 %v5681, %v5673
    %v6674 = vpack.c.b16 %v5682, %v5674
    %v6675 = vpack.c.b16 %v5683, %v5675
    %v6676 = vpack.c.b16 %v5684, %v5676
    %v6677 = vpack.c.b16 %v5685, %v5677
    %v6678 = vpack.c.b16 %v5694, %v5686
    %v6679 = vpack.c.b16 %v5695, %v5687
    %v6680 = vpack.c.b16 %v5696, %v5688
    %v6681 = vpack.c.b16 %v5697, %v5689
    %v6682 = vpack.c.b16 %v5698, %v5690
    %v6683 = vpack.c.b16 %v5699, %v5691
    %v6684 = vpack.c.b16 %v5700, %v5692
    %v6685 = vpack.c.b16 %v5701, %v5693
    %v6686 = vpack.c.b16 %v5710, %v5702
    %v6687 = vpack.c.b16 %v5711, %v5703
    %v6688 = vpack.c.b16 %v5712, %v5704
    %v6689 = vpack.c.b16 %v5713, %v5705
    %v6690 = vpack.c.b16 %v5714, %v5706
    %v6691 = vpack.c.b16 %v5715, %v5707
    %v6692 = vpack.c.b16 %v5716, %v5708
    %v6693 = vpack.c.b16 %v5717, %v5709
    %v6694 = vpack.c.b16 %v5726, %v5718
    %v6695 = vpack.c.b16 %v5727, %v5719
    %v6696 = vpack.c.b16 %v5728, %v5720
    %v6697 = vpack.c.b16 %v5729, %v5721
    %v6698 = vpack.c.b16 %v5730, %v5722
    %v6699 = vpack.c.b16 %v5731, %v5723
    %v6700 = vpack.c.b16 %v5732, %v5724
    %v6701 = vpack.c.b16 %v5733, %v5725
    %v6702 = vpack.c.b16 %v5742, %v5734
    %v6703 = vpack.c.b16 %v5743, %v5735
    %v6704 = vpack.c.b16 %v5744, %v5736
    %v6705 = vpack.c.b16 %v5745, %v5737
    %v6706 = vpack.c.b16 %v5746, %v5738
    %v6707 = vpack.c.b16 %v5747, %v5739
    %v6708 = vpack.c.b16 %v5748, %v5740
    %v6709 = vpack.c.b16 %v5749, %v5741
    %v6710 = vpack.c.b16 %v5758, %v5750
    %v6711 = vpack.c.b16 %v5759, %v5751
    %v6712 = vpack.c.b16 %v5760, %v5752
    %v6713 = vpack.c.b16 %v5761, %v5753
    %v6714 = vpack.c.b16 %v5762, %v5754
    %v6715 = vpack.c.b16 %v5763, %v5755
    %v6716 = vpack.c.b16 %v5764, %v5756
    %v6717 = vpack.c.b16 %v5765, %v5757
    %v6718 = vpack.c.b16 %v5774, %v5766
    %v6719 = vpack.c.b16 %v5775, %v5767
    %v6720 = vpack.c.b16 %v5776, %v5768
    %v6721 = vpack.c.b16 %v5777, %v5769
    %v6722 = vpack.c.b16 %v5778, %v5770
    %v6723 = vpack.c.b16 %v5779, %v5771
    %v6724 = vpack.c.b16 %v5780, %v5772
    %v6725 = vpack.c.b16 %v5781, %v5773
    %v6726 = vpack.c.b16 %v5790, %v5782
    %v6727 = vpack.c.b16 %v5791, %v5783
    %v6728 = vpack.c.b16 %v5792, %v5784
    %v6729 = vpack.c.b16 %v5793, %v5785
    %v6730 = vpack.c.b16 %v5794, %v5786
    %v6731 = vpack.c.b16 %v5795, %v5787
    %v6732 = vpack.c.b16 %v5796, %v5788
    %v6733 = vpack.c.b16 %v5797, %v5789
    %v6734 = vpack.c.b16 %v5806, %v5798
    %v6735 = vpack.c.b16 %v5807, %v5799
    %v6736 = vpack.c.b16 %v5808, %v5800
    %v6737 = vpack.c.b16 %v5809, %v5801
    %v6738 = vpack.c.b16 %v5810, %v5802
    %v6739 = vpack.c.b16 %v5811, %v5803
    %v6740 = vpack.c.b16 %v5812, %v5804
    %v6741 = vpack.c.b16 %v5813, %v5805
    %v6742 = vpack.c.b16 %v5822, %v5814
    %v6743 = vpack.c.b16 %v5823, %v5815
    %v6744 = vpack.c.b16 %v5824, %v5816
    %v6745 = vpack.c.b16 %v5825, %v5817
    %v6746 = vpack.c.b16 %v5826, %v5818
    %v6747 = vpack.c.b16 %v5827, %v5819
    %v6748 = vpack.c.b16 %v5828, %v5820
    %v6749 = vpack.c.b16 %v5829, %v5821
    %v6750 = vpack.c.b16 %v5838, %v5830
    %v6751 = vpack.c.b16 %v5839, %v5831
    %v6752 = vpack.c.b16 %v5840, %v5832
    %v6753 = vpack.c.b16 %v5841, %v5833
    %v6754 = vpack.c.b16 %v5842, %v5834
    %v6755 = vpack.c.b16 %v5843, %v5835
    %v6756 = vpack.c.b16 %v5844, %v5836
    %v6757 = vpack.c.b16 %v5845, %v5837
    %v6758 = vpack.c.b16 %v5854, %v5846
    %v6759 = vpack.c.b16 %v5855, %v5847
    %v6760 = vpack.c.b16 %v5856, %v5848
    %v6761 = vpack.c.b16 %v5857, %v5849
    %v6762 = vpack.c.b16 %v5858, %v5850
    %v6763 = vpack.c.b16 %v5859, %v5851
    %v6764 = vpack.c.b16 %v5860, %v5852
    %v6765 = vpack.c.b16 %v5861, %v5853
    %v6766 = vpack.c.b16 %v5870, %v5862
    %v6767 = vpack.c.b16 %v5871, %v5863
    %v6768 = vpack.c.b16 %v5872, %v5864
    %v6769 = vpack.c.b16 %v5873, %v5865
    %v6770 = vpack.c.b16 %v5874, %v5866
    %v6771 = vpack.c.b16 %v5875, %v5867
    %v6772 = vpack.c.b16 %v5876, %v5868
    %v6773 = vpack.c.b16 %v5877, %v5869
    %v6774 = vpack.c.b16 %v5886, %v5878
    %v6775 = vpack.c.b16 %v5887, %v5879
    %v6776 = vpack.c.b16 %v5888, %v5880
    %v6777 = vpack.c.b16 %v5889, %v5881
    %v6778 = vpack.c.b16 %v5890, %v5882
    %v6779 = vpack.c.b16 %v5891, %v5883
    %v6780 = vpack.c.b16 %v5892, %v5884
    %v6781 = vpack.c.b16 %v5893, %v5885
    %v6782 = vpack.c.b16 %v5902, %v5894
    %v6783 = vpack.c.b16 %v5903, %v5895
    %v6784 = vpack.c.b16 %v5904, %v5896
    %v6785 = vpack.c.b16 %v5905, %v5897
    %v6786 = vpack.c.b16 %v5906, %v5898
    %v6787 = vpack.c.b16 %v5907, %v5899
    %v6788 = vpack.c.b16 %v5908, %v5900
    %v6789 = vpack.c.b16 %v5909, %v5901
    %v6790 = vpack.c.b16 %v5918, %v5910
    %v6791 = vpack.c.b16 %v5919, %v5911
    %v6792 = vpack.c.b16 %v5920, %v5912
    %v6793 = vpack.c.b16 %v5921, %v5913
    %v6794 = vpack.c.b16 %v5922, %v5914
    %v6795 = vpack.c.b16 %v5923, %v5915
    %v6796 = vpack.c.b16 %v5924, %v5916
    %v6797 = vpack.c.b16 %v5925, %v5917
    %v6798 = vpack.c.b16 %v5934, %v5926
    %v6799 = vpack.c.b16 %v5935, %v5927
    %v6800 = vpack.c.b16 %v5936, %v5928
    %v6801 = vpack.c.b16 %v5937, %v5929
    %v6802 = vpack.c.b16 %v5938, %v5930
    %v6803 = vpack.c.b16 %v5939, %v5931
    %v6804 = vpack.c.b16 %v5940, %v5932
    %v6805 = vpack.c.b16 %v5941, %v5933
    %v6806 = vpack.c.b16 %v5950, %v5942
    %v6807 = vpack.c.b16 %v5951, %v5943
    %v6808 = vpack.c.b16 %v5952, %v5944
    %v6809 = vpack.c.b16 %v5953, %v5945
    %v6810 = vpack.c.b16 %v5954, %v5946
    %v6811 = vpack.c.b16 %v5955, %v5947
    %v6812 = vpack.c.b16 %v5956, %v5948
    %v6813 = vpack.c.b16 %v5957, %v5949
    %v6814 = vpack.c.b16 %v5966, %v5958
    %v6815 = vpack.c.b16 %v5967, %v5959
    %v6816 = vpack.c.b16 %v5968, %v5960
    %v6817 = vpack.c.b16 %v5969, %v5961
    %v6818 = vpack.c.b16 %v5970, %v5962
    %v6819 = vpack.c.b16 %v5971, %v5963
    %v6820 = vpack.c.b16 %v5972, %v5964
    %v6821 = vpack.c.b16 %v5973, %v5965
    %v6822 = vpack.c.b16 %v5982, %v5974
    %v6823 = vpack.c.b16 %v5983, %v5975
    %v6824 = vpack.c.b16 %v5984, %v5976
    %v6825 = vpack.c.b16 %v5985, %v5977
    %v6826 = vpack.c.b16 %v5986, %v5978
    %v6827 = vpack.c.b16 %v5987, %v5979
    %v6828 = vpack.c.b16 %v5988, %v5980
    %v6829 = vpack.c.b16 %v5989, %v5981
    %v6830 = vpack.c.b16 %v5998, %v5990
    %v6831 = vpack.c.b16 %v5999, %v5991
    %v6832 = vpack.c.b16 %v6000, %v5992
    %v6833 = vpack.c.b16 %v6001, %v5993
    %v6834 = vpack.c.b16 %v6002, %v5994
    %v6835 = vpack.c.b16 %v6003, %v5995
    %v6836 = vpack.c.b16 %v6004, %v5996
    %v6837 = vpack.c.b16 %v6005, %v5997
    %v6838 = vpack.c.b16 %v6014, %v6006
    %v6839 = vpack.c.b16 %v6015, %v6007
    %v6840 = vpack.c.b16 %v6016, %v6008
    %v6841 = vpack.c.b16 %v6017, %v6009
    %v6842 = vpack.c.b16 %v6018, %v6010
    %v6843 = vpack.c.b16 %v6019, %v6011
    %v6844 = vpack.c.b16 %v6020, %v6012
    %v6845 = vpack.c.b16 %v6021, %v6013
    %v6846 = vpack.c.b16 %v6030, %v6022
    %v6847 = vpack.c.b16 %v6031, %v6023
    %v6848 = vpack.c.b16 %v6032, %v6024
    %v6849 = vpack.c.b16 %v6033, %v6025
    %v6850 = vpack.c.b16 %v6034, %v6026
    %v6851 = vpack.c.b16 %v6035, %v6027
    %v6852 = vpack.c.b16 %v6036, %v6028
    %v6853 = vpack.c.b16 %v6037, %v6029
    %v6854 = vpack.c.b16 %v6046, %v6038
    %v6855 = vpack.c.b16 %v6047, %v6039
    %v6856 = vpack.c.b16 %v6048, %v6040
    %v6857 = vpack.c.b16 %v6049, %v6041
    %v6858 = vpack.c.b16 %v6050, %v6042
    %v6859 = vpack.c.b16 %v6051, %v6043
    %v6860 = vpack.c.b16 %v6052, %v6044
    %v6861 = vpack.c.b16 %v6053, %v6045
    %v6862 = vpack.c.b16 %v6062, %v6054
    %v6863 = vpack.c.b16 %v6063, %v6055
    %v6864 = vpack.c.b16 %v6064, %v6056
    %v6865 = vpack.c.b16 %v6065, %v6057
    %v6866 = vpack.c.b16 %v6066, %v6058
    %v6867 = vpack.c.b16 %v6067, %v6059
    %v6868 = vpack.c.b16 %v6068, %v6060
    %v6869 = vpack.c.b16 %v6069, %v6061
    %v6870 = vpack.c.b16 %v6078, %v6070
    %v6871 = vpack.c.b16 %v6079, %v6071
    %v6872 = vpack.c.b16 %v6080, %v6072
    %v6873 = vpack.c.b16 %v6081, %v6073
    %v6874 = vpack.c.b16 %v6082, %v6074
    %v6875 = vpack.c.b16 %v6083, %v6075
    %v6876 = vpack.c.b16 %v6084, %v6076
    %v6877 = vpack.c.b16 %v6085, %v6077
    %v6878 = vpack.c.b16 %v6094, %v6086
    %v6879 = vpack.c.b16 %v6095, %v6087
    %v6880 = vpack.c.b16 %v6096, %v6088
    %v6881 = vpack.c.b16 %v6097, %v6089
    %v6882 = vpack.c.b16 %v6098, %v6090
    %v6883 = vpack.c.b16 %v6099, %v6091
    %v6884 = vpack.c.b16 %v6100, %v6092
    %v6885 = vpack.c.b16 %v6101, %v6093
    %v6886 = vpack.c.b16 %v6110, %v6102
    %v6887 = vpack.c.b16 %v6111, %v6103
    %v6888 = vpack.c.b16 %v6112, %v6104
    %v6889 = vpack.c.b16 %v6113, %v6105
    %v6890 = vpack.c.b16 %v6114, %v6106
    %v6891 = vpack.c.b16 %v6115, %v6107
    %v6892 = vpack.c.b16 %v6116, %v6108
    %v6893 = vpack.c.b16 %v6117, %v6109
    %v6894 = vpack.c.b16 %v6126, %v6118
    %v6895 = vpack.c.b16 %v6127, %v6119
    %v6896 = vpack.c.b16 %v6128, %v6120
    %v6897 = vpack.c.b16 %v6129, %v6121
    %v6898 = vpack.c.b16 %v6130, %v6122
    %v6899 = vpack.c.b16 %v6131, %v6123
    %v6900 = vpack.c.b16 %v6132, %v6124
    %v6901 = vpack.c.b16 %v6133, %v6125
    %v6902 = vpack.c.b16 %v6142, %v6134
    %v6903 = vpack.c.b16 %v6143, %v6135
    %v6904 = vpack.c.b16 %v6144, %v6136
    %v6905 = vpack.c.b16 %v6145, %v6137
    %v6906 = vpack.c.b16 %v6146, %v6138
    %v6907 = vpack.c.b16 %v6147, %v6139
    %v6908 = vpack.c.b16 %v6148, %v6140
    %v6909 = vpack.c.b16 %v6149, %v6141
    %v6910 = vpack.c.b16 %v6158, %v6150
    %v6911 = vpack.c.b16 %v6159, %v6151
    %v6912 = vpack.c.b16 %v6160, %v6152
    %v6913 = vpack.c.b16 %v6161, %v6153
    %v6914 = vpack.c.b16 %v6162, %v6154
    %v6915 = vpack.c.b16 %v6163, %v6155
    %v6916 = vpack.c.b16 %v6164, %v6156
    %v6917 = vpack.c.b16 %v6165, %v6157
    %v6918 = vpack.c.b16 %v6174, %v6166
    %v6919 = vpack.c.b16 %v6175, %v6167
    %v6920 = vpack.c.b16 %v6176, %v6168
    %v6921 = vpack.c.b16 %v6177, %v6169
    %v6922 = vpack.c.b16 %v6178, %v6170
    %v6923 = vpack.c.b16 %v6179, %v6171
    %v6924 = vpack.c.b16 %v6180, %v6172
    %v6925 = vpack.c.b16 %v6181, %v6173
    %v6926 = vpack.c.b16 %v6190, %v6182
    %v6927 = vpack.c.b16 %v6191, %v6183
    %v6928 = vpack.c.b16 %v6192, %v6184
    %v6929 = vpack.c.b16 %v6193, %v6185
    %v6930 = vpack.c.b16 %v6194, %v6186
    %v6931 = vpack.c.b16 %v6195, %v6187
    %v6932 = vpack.c.b16 %v6196, %v6188
    %v6933 = vpack.c.b16 %v6197, %v6189
    %v6934 = vpack.c.b16 %v6206, %v6198
    %v6935 = vpack.c.b16 %v6207, %v6199
    %v6936 = vpack.c.b16 %v6208, %v6200
    %v6937 = vpack.c.b16 %v6209, %v6201
    %v6938 = vpack.c.b16 %v6210, %v6202
    %v6939 = vpack.c.b16 %v6211, %v6203
    %v6940 = vpack.c.b16 %v6212, %v6204
    %v6941 = vpack.c.b16 %v6213, %v6205
    %v6942 = vpack.c.b16 %v6222, %v6214
    %v6943 = vpack.c.b16 %v6223, %v6215
    %v6944 = vpack.c.b16 %v6224, %v6216
    %v6945 = vpack.c.b16 %v6225, %v6217
    %v6946 = vpack.c.b16 %v6226, %v6218
    %v6947 = vpack.c.b16 %v6227, %v6219
    %v6948 = vpack.c.b16 %v6228, %v6220
    %v6949 = vpack.c.b16 %v6229, %v6221
    %v6950 = vpack.c.b16 %v6238, %v6230
    %v6951 = vpack.c.b16 %v6239, %v6231
    %v6952 = vpack.c.b16 %v6240, %v6232
    %v6953 = vpack.c.b16 %v6241, %v6233
    %v6954 = vpack.c.b16 %v6242, %v6234
    %v6955 = vpack.c.b16 %v6243, %v6235
    %v6956 = vpack.c.b16 %v6244, %v6236
    %v6957 = vpack.c.b16 %v6245, %v6237
    %v6958 = vpack.c.b16 %v6254, %v6246
    %v6959 = vpack.c.b16 %v6255, %v6247
    %v6960 = vpack.c.b16 %v6256, %v6248
    %v6961 = vpack.c.b16 %v6257, %v6249
    %v6962 = vpack.c.b16 %v6258, %v6250
    %v6963 = vpack.c.b16 %v6259, %v6251
    %v6964 = vpack.c.b16 %v6260, %v6252
    %v6965 = vpack.c.b16 %v6261, %v6253
    %v6966 = vpack.c.b16 %v6270, %v6262
    %v6967 = vpack.c.b16 %v6271, %v6263
    %v6968 = vpack.c.b16 %v6272, %v6264
    %v6969 = vpack.c.b16 %v6273, %v6265
    %v6970 = vpack.c.b16 %v6274, %v6266
    %v6971 = vpack.c.b16 %v6275, %v6267
    %v6972 = vpack.c.b16 %v6276, %v6268
    %v6973 = vpack.c.b16 %v6277, %v6269
    %v6974 = vpack.c.b16 %v6286, %v6278
    %v6975 = vpack.c.b16 %v6287, %v6279
    %v6976 = vpack.c.b16 %v6288, %v6280
    %v6977 = vpack.c.b16 %v6289, %v6281
    %v6978 = vpack.c.b16 %v6290, %v6282
    %v6979 = vpack.c.b16 %v6291, %v6283
    %v6980 = vpack.c.b16 %v6292, %v6284
    %v6981 = vpack.c.b16 %v6293, %v6285
    %v6982 = vpack.c.b16 %v6302, %v6294
    %v6983 = vpack.c.b16 %v6303, %v6295
    %v6984 = vpack.c.b16 %v6304, %v6296
    %v6985 = vpack.c.b16 %v6305, %v6297
    %v6986 = vpack.c.b16 %v6306, %v6298
    %v6987 = vpack.c.b16 %v6307, %v6299
    %v6988 = vpack.c.b16 %v6308, %v6300
    %v6989 = vpack.c.b16 %v6309, %v6301
    %v6990 = vpack.c.b16 %v6318, %v6310
    %v6991 = vpack.c.b16 %v6319, %v6311
    %v6992 = vpack.c.b16 %v6320, %v6312
    %v6993 = vpack.c.b16 %v6321, %v6313
    %v6994 = vpack.c.b16 %v6322, %v6314
    %v6995 = vpack.c.b16 %v6323, %v6315
    %v6996 = vpack.c.b16 %v6324, %v6316
    %v6997 = vpack.c.b16 %v6325, %v6317
    %v6998 = vpack.c.b16 %v6334, %v6326
    %v6999 = vpack.c.b16 %v6335, %v6327
    %v7000 = vpack.c.b16 %v6336, %v6328
    %v7001 = vpack.c.b16 %v6337, %v6329
    %v7002 = vpack.c.b16 %v6338, %v6330
    %v7003 = vpack.c.b16 %v6339, %v6331
    %v7004 = vpack.c.b16 %v6340, %v6332
    %v7005 = vpack.c.b16 %v6341, %v6333
    %v7006 = vpack.c.b16 %v6350, %v6342
    %v7007 = vpack.c.b16 %v6351, %v6343
    %v7008 = vpack.c.b16 %v6352, %v6344
    %v7009 = vpack.c.b16 %v6353, %v6345
    %v7010 = vpack.c.b16 %v6354, %v6346
    %v7011 = vpack.c.b16 %v6355, %v6347
    %v7012 = vpack.c.b16 %v6356, %v6348
    %v7013 = vpack.c.b16 %v6357, %v6349
    %v7014 = vpack.c.b16 %v6366, %v6358
    %v7015 = vpack.c.b16 %v6367, %v6359
    %v7016 = vpack.c.b16 %v6368, %v6360
    %v7017 = vpack.c.b16 %v6369, %v6361
    %v7018 = vpack.c.b16 %v6370, %v6362
    %v7019 = vpack.c.b16 %v6371, %v6363
    %v7020 = vpack.c.b16 %v6372, %v6364
    %v7021 = vpack.c.b16 %v6373, %v6365
    %v7022 = vpack.c.b16 %v6382, %v6374
    %v7023 = vpack.c.b16 %v6383, %v6375
    %v7024 = vpack.c.b16 %v6384, %v6376
    %v7025 = vpack.c.b16 %v6385, %v6377
    %v7026 = vpack.c.b16 %v6386, %v6378
    %v7027 = vpack.c.b16 %v6387, %v6379
    %v7028 = vpack.c.b16 %v6388, %v6380
    %v7029 = vpack.c.b16 %v6389, %v6381
    %v7030 = vpack.c.b16 %v6398, %v6390
    %v7031 = vpack.c.b16 %v6399, %v6391
    %v7032 = vpack.c.b16 %v6400, %v6392
    %v7033 = vpack.c.b16 %v6401, %v6393
    %v7034 = vpack.c.b16 %v6402, %v6394
    %v7035 = vpack.c.b16 %v6403, %v6395
    %v7036 = vpack.c.b16 %v6404, %v6396
    %v7037 = vpack.c.b16 %v6405, %v6397
    %v7038 = vpack.c.b16 %v6414, %v6406
    %v7039 = vpack.c.b16 %v6415, %v6407
    %v7040 = vpack.c.b16 %v6416, %v6408
    %v7041 = vpack.c.b16 %v6417, %v6409
    %v7042 = vpack.c.b16 %v6418, %v6410
    %v7043 = vpack.c.b16 %v6419, %v6411
    %v7044 = vpack.c.b16 %v6420, %v6412
    %v7045 = vpack.c.b16 %v6421, %v6413
    %v7046 = vpack.c.b16 %v6430, %v6422
    %v7047 = vpack.c.b16 %v6431, %v6423
    %v7048 = vpack.c.b16 %v6432, %v6424
    %v7049 = vpack.c.b16 %v6433, %v6425
    %v7050 = vpack.c.b16 %v6434, %v6426
    %v7051 = vpack.c.b16 %v6435, %v6427
    %v7052 = vpack.c.b16 %v6436, %v6428
    %v7053 = vpack.c.b16 %v6437, %v6429
    %v7054 = vpack.c.b16 %v6446, %v6438
    %v7055 = vpack.c.b16 %v6447, %v6439
    %v7056 = vpack.c.b16 %v6448, %v6440
    %v7057 = vpack.c.b16 %v6449, %v6441
    %v7058 = vpack.c.b16 %v6450, %v6442
    %v7059 = vpack.c.b16 %v6451, %v6443
    %v7060 = vpack.c.b16 %v6452, %v6444
    %v7061 = vpack.c.b16 %v6453, %v6445
    %v7062 = vpack.c.b16 %v6462, %v6454
    %v7063 = vpack.c.b16 %v6463, %v6455
    %v7064 = vpack.c.b16 %v6464, %v6456
    %v7065 = vpack.c.b16 %v6465, %v6457
    %v7066 = vpack.c.b16 %v6466, %v6458
    %v7067 = vpack.c.b16 %v6467, %v6459
    %v7068 = vpack.c.b16 %v6468, %v6460
    %v7069 = vpack.c.b16 %v6469, %v6461
    %v7070 = vpack.c.b16 %v6478, %v6470
    %v7071 = vpack.c.b16 %v6479, %v6471
    %v7072 = vpack.c.b16 %v6480, %v6472
    %v7073 = vpack.c.b16 %v6481, %v6473
    %v7074 = vpack.c.b16 %v6482, %v6474
    %v7075 = vpack.c.b16 %v6483, %v6475
    %v7076 = vpack.c.b16 %v6484, %v6476
    %v7077 = vpack.c.b16 %v6485, %v6477
    %v7078 = vpack.c.b16 %v6494, %v6486
    %v7079 = vpack.c.b16 %v6495, %v6487
    %v7080 = vpack.c.b16 %v6496, %v6488
    %v7081 = vpack.c.b16 %v6497, %v6489
    %v7082 = vpack.c.b16 %v6498, %v6490
    %v7083 = vpack.c.b16 %v6499, %v6491
    %v7084 = vpack.c.b16 %v6500, %v6492
    %v7085 = vpack.c.b16 %v6501, %v6493
    %v7086 = vpack.c.b16 %v6510, %v6502
    %v7087 = vpack.c.b16 %v6511, %v6503
    %v7088 = vpack.c.b16 %v6512, %v6504
    %v7089 = vpack.c.b16 %v6513, %v6505
    %v7090 = vpack.c.b16 %v6514, %v6506
    %v7091 = vpack.c.b16 %v6515, %v6507
    %v7092 = vpack.c.b16 %v6516, %v6508
    %v7093 = vpack.c.b16 %v6517, %v6509
    %v7094 = vpack.c.b16 %v6526, %v6518
    %v7095 = vpack.c.b16 %v6527, %v6519
    %v7096 = vpack.c.b16 %v6528, %v6520
    %v7097 = vpack.c.b16 %v6529, %v6521
    %v7098 = vpack.c.b16 %v6530, %v6522
    %v7099 = vpack.c.b16 %v6531, %v6523
    %v7100 = vpack.c.b16 %v6532, %v6524
    %v7101 = vpack.c.b16 %v6533, %v6525
    %v7102 = vpack.c.b16 %v6542, %v6534
    %v7103 = vpack.c.b16 %v6543, %v6535
    %v7104 = vpack.c.b16 %v6544, %v6536
    %v7105 = vpack.c.b16 %v6545, %v6537
    %v7106 = vpack.c.b16 %v6546, %v6538
    %v7107 = vpack.c.b16 %v6547, %v6539
    %v7108 = vpack.c.b16 %v6548, %v6540
    %v7109 = vpack.c.b16 %v6549, %v6541
    %v7110 = vpack.c.b16 %v6558, %v6550
    %v7111 = vpack.c.b16 %v6559, %v6551
    %v7112 = vpack.c.b16 %v6560, %v6552
    %v7113 = vpack.c.b16 %v6561, %v6553
    %v7114 = vpack.c.b16 %v6562, %v6554
    %v7115 = vpack.c.b16 %v6563, %v6555
    %v7116 = vpack.c.b16 %v6564, %v6556
    %v7117 = vpack.c.b16 %v6565, %v6557
    %v7118 = vpack.c.b16 %v6574, %v6566
    %v7119 = vpack.c.b16 %v6575, %v6567
    %v7120 = vpack.c.b16 %v6576, %v6568
    %v7121 = vpack.c.b16 %v6577, %v6569
    %v7122 = vpack.c.b16 %v6578, %v6570
    %v7123 = vpack.c.b16 %v6579, %v6571
    %v7124 = vpack.c.b16 %v6580, %v6572
    %v7125 = vpack.c.b16 %v6581, %v6573
    %v7126 = vpack.c.b16 %v6590, %v6582
    %v7127 = vpack.c.b16 %v6591, %v6583
    %v7128 = vpack.c.b16 %v6592, %v6584
    %v7129 = vpack.c.b16 %v6593, %v6585
    %v7130 = vpack.c.b16 %v6594, %v6586
    %v7131 = vpack.c.b16 %v6595, %v6587
    %v7132 = vpack.c.b16 %v6596, %v6588
    %v7133 = vpack.c.b16 %v6597, %v6589
    %v7134 = vpack.c.b16 %v6606, %v6598
    %v7135 = vpack.c.b16 %v6607, %v6599
    %v7136 = vpack.c.b16 %v6608, %v6600
    %v7137 = vpack.c.b16 %v6609, %v6601
    %v7138 = vpack.c.b16 %v6610, %v6602
    %v7139 = vpack.c.b16 %v6611, %v6603
    %v7140 = vpack.c.b16 %v6612, %v6604
    %v7141 = vpack.c.b16 %v6613, %v6605
    %v7142 = vpack.c.b16 %v6622, %v6614
    %v7143 = vpack.c.b16 %v6623, %v6615
    %v7144 = vpack.c.b16 %v6624, %v6616
    %v7145 = vpack.c.b16 %v6625, %v6617
    %v7146 = vpack.c.b16 %v6626, %v6618
    %v7147 = vpack.c.b16 %v6627, %v6619
    %v7148 = vpack.c.b16 %v6628, %v6620
    %v7149 = vpack.c.b16 %v6629, %v6621
    %v7150 = vpack.c.b16 %v6638, %v6630
    %v7151 = vpack.c.b16 %v6639, %v6631
    %v7152 = vpack.c.b16 %v6640, %v6632
    %v7153 = vpack.c.b16 %v6641, %v6633
    %v7154 = vpack.c.b16 %v6642, %v6634
    %v7155 = vpack.c.b16 %v6643, %v6635
    %v7156 = vpack.c.b16 %v6644, %v6636
    %v7157 = vpack.c.b16 %v6645, %v6637
    %7670 = vmatprep.subr.bf16.mxu0 %v6703
    %7671 = vmatpush1.bf16.msra.mxu0 %v6702
    %7672 = vmatprep.subr.bf16.mxu0 %v6695
    %7673 = vmatpush1.bf16.msra.mxu0 %v6694
    %7674 = vmatprep.subr.bf16.mxu0 %v6687
    %7675 = vmatpush1.bf16.msra.mxu0 %v6686
    %7676 = vmatprep.subr.bf16.mxu0 %v6679
    %7677 = vmatpush1.bf16.msra.mxu0 %v6678
    %7678 = vmatprep.subr.bf16.mxu0 %v6671
    %7679 = vmatpush1.bf16.msra.mxu0 %v6670
    %7680 = vmatprep.subr.bf16.mxu0 %v6663
    %7681 = vmatpush1.bf16.msra.mxu0 %v6662
    %7682 = vmatprep.subr.bf16.mxu0 %v6655
    %7683 = vmatpush1.bf16.msra.mxu0 %v6654
    %7684 = vmatprep.subr.bf16.mxu0 %v6647
    %7685 = vmatpush1.bf16.msra.mxu0 %v6646
    %7686 = vmatprep.subr.bf16.mxu0 %v6767
    %7687 = vmatpush2.bf16.msra.mxu0 %v6766
    %7688 = vmatprep.subr.bf16.mxu0 %v6759
    %7689 = vmatpush2.bf16.msra.mxu0 %v6758
    %7690 = vmatprep.subr.bf16.mxu0 %v6751
    %7691 = vmatpush2.bf16.msra.mxu0 %v6750
    %7692 = vmatprep.subr.bf16.mxu0 %v6743
    %7693 = vmatpush2.bf16.msra.mxu0 %v6742
    %7694 = vmatprep.subr.bf16.mxu0 %v6735
    %7695 = vmatpush2.bf16.msra.mxu0 %v6734
    %7696 = vmatprep.subr.bf16.mxu0 %v6727
    %7697 = vmatpush2.bf16.msra.mxu0 %v6726
    %7698 = vmatprep.subr.bf16.mxu0 %v6719
    %7699 = vmatpush2.bf16.msra.mxu0 %v6718
    %7700 = vmatprep.subr.bf16.mxu0 %v6711
    %7701 = vmatpush2.bf16.msra.mxu0 %v6710
    %7702 = vmatprep.mubr.bf16.mxu0 %v4549
    %7703 = vmatmul.mubr.bf16.gmra.mxu0 %v4548
    %v7704 = vpop.f32.mrf.mxu0
    %v7705 = vadd.f32 %v5073, %v7704
    %v7706 = vpop.f32.mrf.mxu0
    %v7707 = vadd.f32 %v5077, %v7706
    %v7708 = vpop.f32.mrf.mxu0
    %v7709 = vpop.f32.mrf.mxu0
    %7710 = vdwg.mxu0
    %7711 = vmatprep.subr.bf16.mxu0 %v6831
    %7712 = vmatpush1.bf16.msra.mxu0 %v6830
    %7713 = vmatprep.subr.bf16.mxu0 %v6823
    %7714 = vmatpush1.bf16.msra.mxu0 %v6822
    %7715 = vmatprep.subr.bf16.mxu0 %v6815
    %7716 = vmatpush1.bf16.msra.mxu0 %v6814
    %7717 = vmatprep.subr.bf16.mxu0 %v6807
    %7718 = vmatpush1.bf16.msra.mxu0 %v6806
    %7719 = vmatprep.subr.bf16.mxu0 %v6799
    %7720 = vmatpush1.bf16.msra.mxu0 %v6798
    %7721 = vmatprep.subr.bf16.mxu0 %v6791
    %7722 = vmatpush1.bf16.msra.mxu0 %v6790
    %7723 = vmatprep.subr.bf16.mxu0 %v6783
    %7724 = vmatpush1.bf16.msra.mxu0 %v6782
    %7725 = vmatprep.subr.bf16.mxu0 %v6775
    %7726 = vmatpush1.bf16.msra.mxu0 %v6774
    %7727 = vmatprep.subr.bf16.mxu0 %v6895
    %7728 = vmatpush2.bf16.msra.mxu0 %v6894
    %7729 = vmatprep.subr.bf16.mxu0 %v6887
    %7730 = vmatpush2.bf16.msra.mxu0 %v6886
    %7731 = vmatprep.subr.bf16.mxu0 %v6879
    %7732 = vmatpush2.bf16.msra.mxu0 %v6878
    %7733 = vmatprep.subr.bf16.mxu0 %v6871
    %7734 = vmatpush2.bf16.msra.mxu0 %v6870
    %7735 = vmatprep.subr.bf16.mxu0 %v6863
    %7736 = vmatpush2.bf16.msra.mxu0 %v6862
    %7737 = vmatprep.subr.bf16.mxu0 %v6855
    %7738 = vmatpush2.bf16.msra.mxu0 %v6854
    %7739 = vmatprep.subr.bf16.mxu0 %v6847
    %7740 = vmatpush2.bf16.msra.mxu0 %v6846
    %7741 = vmatprep.subr.bf16.mxu0 %v6839
    %7742 = vmatpush2.bf16.msra.mxu0 %v6838
    %7743 = vmatprep.mubr.bf16.mxu0 %v4551
    %7744 = vmatmul.mubr.bf16.gmra.mxu0 %v4550
    %v7745 = vpop.f32.mrf.mxu0
    %v7746 = vadd.f32 %v7705, %v7745
    %v7747 = vpop.f32.mrf.mxu0
    %v7748 = vadd.f32 %v7707, %v7747
    %v7749 = vpop.f32.mrf.mxu0
    %v7750 = vpop.f32.mrf.mxu0
    %7751 = vdwg.mxu0
    %7752 = vmatprep.subr.bf16.mxu0 %v6959
    %7753 = vmatpush1.bf16.msra.mxu0 %v6958
    %7754 = vmatprep.subr.bf16.mxu0 %v6951
    %7755 = vmatpush1.bf16.msra.mxu0 %v6950
    %7756 = vmatprep.subr.bf16.mxu0 %v6943
    %7757 = vmatpush1.bf16.msra.mxu0 %v6942
    %7758 = vmatprep.subr.bf16.mxu0 %v6935
    %7759 = vmatpush1.bf16.msra.mxu0 %v6934
    %7760 = vmatprep.subr.bf16.mxu0 %v6927
    %7761 = vmatpush1.bf16.msra.mxu0 %v6926
    %7762 = vmatprep.subr.bf16.mxu0 %v6919
    %7763 = vmatpush1.bf16.msra.mxu0 %v6918
    %7764 = vmatprep.subr.bf16.mxu0 %v6911
    %7765 = vmatpush1.bf16.msra.mxu0 %v6910
    %7766 = vmatprep.subr.bf16.mxu0 %v6903
    %7767 = vmatpush1.bf16.msra.mxu0 %v6902
    %7768 = vmatprep.subr.bf16.mxu0 %v7023
    %7769 = vmatpush2.bf16.msra.mxu0 %v7022
    %7770 = vmatprep.subr.bf16.mxu0 %v7015
    %7771 = vmatpush2.bf16.msra.mxu0 %v7014
    %7772 = vmatprep.subr.bf16.mxu0 %v7007
    %7773 = vmatpush2.bf16.msra.mxu0 %v7006
    %7774 = vmatprep.subr.bf16.mxu0 %v6999
    %7775 = vmatpush2.bf16.msra.mxu0 %v6998
    %7776 = vmatprep.subr.bf16.mxu0 %v6991
    %7777 = vmatpush2.bf16.msra.mxu0 %v6990
    %7778 = vmatprep.subr.bf16.mxu0 %v6983
    %7779 = vmatpush2.bf16.msra.mxu0 %v6982
    %7780 = vmatprep.subr.bf16.mxu0 %v6975
    %7781 = vmatpush2.bf16.msra.mxu0 %v6974
    %7782 = vmatprep.subr.bf16.mxu0 %v6967
    %7783 = vmatpush2.bf16.msra.mxu0 %v6966
    %7784 = vmatprep.mubr.bf16.mxu0 %v4553
    %7785 = vmatmul.mubr.bf16.gmra.mxu0 %v4552
    %v7786 = vpop.f32.mrf.mxu0
    %v7787 = vadd.f32 %v7746, %v7786
    %v7788 = vpop.f32.mrf.mxu0
    %v7789 = vadd.f32 %v7748, %v7788
    %v7790 = vpop.f32.mrf.mxu0
    %v7791 = vpop.f32.mrf.mxu0
    %7792 = vdwg.mxu0
    %7793 = vmatprep.subr.bf16.mxu0 %v7087
    %7794 = vmatpush1.bf16.msra.mxu0 %v7086
    %7795 = vmatprep.subr.bf16.mxu0 %v7079
    %7796 = vmatpush1.bf16.msra.mxu0 %v7078
    %7797 = vmatprep.subr.bf16.mxu0 %v7071
    %7798 = vmatpush1.bf16.msra.mxu0 %v7070
    %7799 = vmatprep.subr.bf16.mxu0 %v7063
    %7800 = vmatpush1.bf16.msra.mxu0 %v7062
    %7801 = vmatprep.subr.bf16.mxu0 %v7055
    %7802 = vmatpush1.bf16.msra.mxu0 %v7054
    %7803 = vmatprep.subr.bf16.mxu0 %v7047
    %7804 = vmatpush1.bf16.msra.mxu0 %v7046
    %7805 = vmatprep.subr.bf16.mxu0 %v7039
    %7806 = vmatpush1.bf16.msra.mxu0 %v7038
    %7807 = vmatprep.subr.bf16.mxu0 %v7031
    %7808 = vmatpush1.bf16.msra.mxu0 %v7030
    %7809 = vmatprep.subr.bf16.mxu0 %v7151
    %7810 = vmatpush2.bf16.msra.mxu0 %v7150
    %7811 = vmatprep.subr.bf16.mxu0 %v7143
    %7812 = vmatpush2.bf16.msra.mxu0 %v7142
    %7813 = vmatprep.subr.bf16.mxu0 %v7135
    %7814 = vmatpush2.bf16.msra.mxu0 %v7134
    %7815 = vmatprep.subr.bf16.mxu0 %v7127
    %7816 = vmatpush2.bf16.msra.mxu0 %v7126
    %7817 = vmatprep.subr.bf16.mxu0 %v7119
    %7818 = vmatpush2.bf16.msra.mxu0 %v7118
    %7819 = vmatprep.subr.bf16.mxu0 %v7111
    %7820 = vmatpush2.bf16.msra.mxu0 %v7110
    %7821 = vmatprep.subr.bf16.mxu0 %v7103
    %7822 = vmatpush2.bf16.msra.mxu0 %v7102
    %7823 = vmatprep.subr.bf16.mxu0 %v7095
    %7824 = vmatpush2.bf16.msra.mxu0 %v7094
    %7825 = vmatprep.mubr.bf16.mxu0 %v4555
    %7826 = vmatmul.mubr.bf16.gmra.mxu0 %v4554
    %v7827 = vpop.f32.mrf.mxu0
    %v7828 = vadd.f32 %v7787, %v7827
    %v7829 = vpop.f32.mrf.mxu0
    %v7830 = vadd.f32 %v7789, %v7829
    %v7831 = vpop.f32.mrf.mxu0
    %v7832 = vpop.f32.mrf.mxu0
    %7833 = vdwg.mxu0
    %7834 = vmatprep.subr.bf16.mxu0 %v6705
    %7835 = vmatpush1.bf16.msra.mxu0 %v6704
    %7836 = vmatprep.subr.bf16.mxu0 %v6697
    %7837 = vmatpush1.bf16.msra.mxu0 %v6696
    %7838 = vmatprep.subr.bf16.mxu0 %v6689
    %7839 = vmatpush1.bf16.msra.mxu0 %v6688
    %7840 = vmatprep.subr.bf16.mxu0 %v6681
    %7841 = vmatpush1.bf16.msra.mxu0 %v6680
    %7842 = vmatprep.subr.bf16.mxu0 %v6673
    %7843 = vmatpush1.bf16.msra.mxu0 %v6672
    %7844 = vmatprep.subr.bf16.mxu0 %v6665
    %7845 = vmatpush1.bf16.msra.mxu0 %v6664
    %7846 = vmatprep.subr.bf16.mxu0 %v6657
    %7847 = vmatpush1.bf16.msra.mxu0 %v6656
    %7848 = vmatprep.subr.bf16.mxu0 %v6649
    %7849 = vmatpush1.bf16.msra.mxu0 %v6648
    %7850 = vmatprep.subr.bf16.mxu0 %v6769
    %7851 = vmatpush2.bf16.msra.mxu0 %v6768
    %7852 = vmatprep.subr.bf16.mxu0 %v6761
    %7853 = vmatpush2.bf16.msra.mxu0 %v6760
    %7854 = vmatprep.subr.bf16.mxu0 %v6753
    %7855 = vmatpush2.bf16.msra.mxu0 %v6752
    %7856 = vmatprep.subr.bf16.mxu0 %v6745
    %7857 = vmatpush2.bf16.msra.mxu0 %v6744
    %7858 = vmatprep.subr.bf16.mxu0 %v6737
    %7859 = vmatpush2.bf16.msra.mxu0 %v6736
    %7860 = vmatprep.subr.bf16.mxu0 %v6729
    %7861 = vmatpush2.bf16.msra.mxu0 %v6728
    %7862 = vmatprep.subr.bf16.mxu0 %v6721
    %7863 = vmatpush2.bf16.msra.mxu0 %v6720
    %7864 = vmatprep.subr.bf16.mxu0 %v6713
    %7865 = vmatpush2.bf16.msra.mxu0 %v6712
    %7866 = vmatprep.mubr.bf16.mxu0 %v4549
    %7867 = vmatmul.mubr.bf16.gmra.mxu0 %v4548
    %v7868 = vpop.f32.mrf.mxu0
    %v7869 = vadd.f32 %v5081, %v7868
    %v7870 = vpop.f32.mrf.mxu0
    %v7871 = vadd.f32 %v5085, %v7870
    %v7872 = vpop.f32.mrf.mxu0
    %v7873 = vpop.f32.mrf.mxu0
    %7874 = vdwg.mxu0
    %7875 = vmatprep.subr.bf16.mxu0 %v6833
    %7876 = vmatpush1.bf16.msra.mxu0 %v6832
    %7877 = vmatprep.subr.bf16.mxu0 %v6825
    %7878 = vmatpush1.bf16.msra.mxu0 %v6824
    %7879 = vmatprep.subr.bf16.mxu0 %v6817
    %7880 = vmatpush1.bf16.msra.mxu0 %v6816
    %7881 = vmatprep.subr.bf16.mxu0 %v6809
    %7882 = vmatpush1.bf16.msra.mxu0 %v6808
    %7883 = vmatprep.subr.bf16.mxu0 %v6801
    %7884 = vmatpush1.bf16.msra.mxu0 %v6800
    %7885 = vmatprep.subr.bf16.mxu0 %v6793
    %7886 = vmatpush1.bf16.msra.mxu0 %v6792
    %7887 = vmatprep.subr.bf16.mxu0 %v6785
    %7888 = vmatpush1.bf16.msra.mxu0 %v6784
    %7889 = vmatprep.subr.bf16.mxu0 %v6777
    %7890 = vmatpush1.bf16.msra.mxu0 %v6776
    %7891 = vmatprep.subr.bf16.mxu0 %v6897
    %7892 = vmatpush2.bf16.msra.mxu0 %v6896
    %7893 = vmatprep.subr.bf16.mxu0 %v6889
    %7894 = vmatpush2.bf16.msra.mxu0 %v6888
    %7895 = vmatprep.subr.bf16.mxu0 %v6881
    %7896 = vmatpush2.bf16.msra.mxu0 %v6880
    %7897 = vmatprep.subr.bf16.mxu0 %v6873
    %7898 = vmatpush2.bf16.msra.mxu0 %v6872
    %7899 = vmatprep.subr.bf16.mxu0 %v6865
    %7900 = vmatpush2.bf16.msra.mxu0 %v6864
    %7901 = vmatprep.subr.bf16.mxu0 %v6857
    %7902 = vmatpush2.bf16.msra.mxu0 %v6856
    %7903 = vmatprep.subr.bf16.mxu0 %v6849
    %7904 = vmatpush2.bf16.msra.mxu0 %v6848
    %7905 = vmatprep.subr.bf16.mxu0 %v6841
    %7906 = vmatpush2.bf16.msra.mxu0 %v6840
    %7907 = vmatprep.mubr.bf16.mxu0 %v4551
    %7908 = vmatmul.mubr.bf16.gmra.mxu0 %v4550
    %v7909 = vpop.f32.mrf.mxu0
    %v7910 = vadd.f32 %v7869, %v7909
    %v7911 = vpop.f32.mrf.mxu0
    %v7912 = vadd.f32 %v7871, %v7911
    %v7913 = vpop.f32.mrf.mxu0
    %v7914 = vpop.f32.mrf.mxu0
    %7915 = vdwg.mxu0
    %7916 = vmatprep.subr.bf16.mxu0 %v6961
    %7917 = vmatpush1.bf16.msra.mxu0 %v6960
    %7918 = vmatprep.subr.bf16.mxu0 %v6953
    %7919 = vmatpush1.bf16.msra.mxu0 %v6952
    %7920 = vmatprep.subr.bf16.mxu0 %v6945
    %7921 = vmatpush1.bf16.msra.mxu0 %v6944
    %7922 = vmatprep.subr.bf16.mxu0 %v6937
    %7923 = vmatpush1.bf16.msra.mxu0 %v6936
    %7924 = vmatprep.subr.bf16.mxu0 %v6929
    %7925 = vmatpush1.bf16.msra.mxu0 %v6928
    %7926 = vmatprep.subr.bf16.mxu0 %v6921
    %7927 = vmatpush1.bf16.msra.mxu0 %v6920
    %7928 = vmatprep.subr.bf16.mxu0 %v6913
    %7929 = vmatpush1.bf16.msra.mxu0 %v6912
    %7930 = vmatprep.subr.bf16.mxu0 %v6905
    %7931 = vmatpush1.bf16.msra.mxu0 %v6904
    %7932 = vmatprep.subr.bf16.mxu0 %v7025
    %7933 = vmatpush2.bf16.msra.mxu0 %v7024
    %7934 = vmatprep.subr.bf16.mxu0 %v7017
    %7935 = vmatpush2.bf16.msra.mxu0 %v7016
    %7936 = vmatprep.subr.bf16.mxu0 %v7009
    %7937 = vmatpush2.bf16.msra.mxu0 %v7008
    %7938 = vmatprep.subr.bf16.mxu0 %v7001
    %7939 = vmatpush2.bf16.msra.mxu0 %v7000
    %7940 = vmatprep.subr.bf16.mxu0 %v6993
    %7941 = vmatpush2.bf16.msra.mxu0 %v6992
    %7942 = vmatprep.subr.bf16.mxu0 %v6985
    %7943 = vmatpush2.bf16.msra.mxu0 %v6984
    %7944 = vmatprep.subr.bf16.mxu0 %v6977
    %7945 = vmatpush2.bf16.msra.mxu0 %v6976
    %7946 = vmatprep.subr.bf16.mxu0 %v6969
    %7947 = vmatpush2.bf16.msra.mxu0 %v6968
    %7948 = vmatprep.mubr.bf16.mxu0 %v4553
    %7949 = vmatmul.mubr.bf16.gmra.mxu0 %v4552
    %v7950 = vpop.f32.mrf.mxu0
    %v7951 = vadd.f32 %v7910, %v7950
    %v7952 = vpop.f32.mrf.mxu0
    %v7953 = vadd.f32 %v7912, %v7952
    %v7954 = vpop.f32.mrf.mxu0
    %v7955 = vpop.f32.mrf.mxu0
    %7956 = vdwg.mxu0
    %7957 = vmatprep.subr.bf16.mxu0 %v7089
    %7958 = vmatpush1.bf16.msra.mxu0 %v7088
    %7959 = vmatprep.subr.bf16.mxu0 %v7081
    %7960 = vmatpush1.bf16.msra.mxu0 %v7080
    %7961 = vmatprep.subr.bf16.mxu0 %v7073
    %7962 = vmatpush1.bf16.msra.mxu0 %v7072
    %7963 = vmatprep.subr.bf16.mxu0 %v7065
    %7964 = vmatpush1.bf16.msra.mxu0 %v7064
    %7965 = vmatprep.subr.bf16.mxu0 %v7057
    %7966 = vmatpush1.bf16.msra.mxu0 %v7056
    %7967 = vmatprep.subr.bf16.mxu0 %v7049
    %7968 = vmatpush1.bf16.msra.mxu0 %v7048
    %7969 = vmatprep.subr.bf16.mxu0 %v7041
    %7970 = vmatpush1.bf16.msra.mxu0 %v7040
    %7971 = vmatprep.subr.bf16.mxu0 %v7033
    %7972 = vmatpush1.bf16.msra.mxu0 %v7032
    %7973 = vmatprep.subr.bf16.mxu0 %v7153
    %7974 = vmatpush2.bf16.msra.mxu0 %v7152
    %7975 = vmatprep.subr.bf16.mxu0 %v7145
    %7976 = vmatpush2.bf16.msra.mxu0 %v7144
    %7977 = vmatprep.subr.bf16.mxu0 %v7137
    %7978 = vmatpush2.bf16.msra.mxu0 %v7136
    %7979 = vmatprep.subr.bf16.mxu0 %v7129
    %7980 = vmatpush2.bf16.msra.mxu0 %v7128
    %7981 = vmatprep.subr.bf16.mxu0 %v7121
    %7982 = vmatpush2.bf16.msra.mxu0 %v7120
    %7983 = vmatprep.subr.bf16.mxu0 %v7113
    %7984 = vmatpush2.bf16.msra.mxu0 %v7112
    %7985 = vmatprep.subr.bf16.mxu0 %v7105
    %7986 = vmatpush2.bf16.msra.mxu0 %v7104
    %7987 = vmatprep.subr.bf16.mxu0 %v7097
    %7988 = vmatpush2.bf16.msra.mxu0 %v7096
    %7989 = vmatprep.mubr.bf16.mxu0 %v4555
    %7990 = vmatmul.mubr.bf16.gmra.mxu0 %v4554
    %v7991 = vpop.f32.mrf.mxu0
    %v7992 = vadd.f32 %v7951, %v7991
    %v7993 = vpop.f32.mrf.mxu0
    %v7994 = vadd.f32 %v7953, %v7993
    %v7995 = vpop.f32.mrf.mxu0
    %v7996 = vpop.f32.mrf.mxu0
    %7997 = vdwg.mxu0
    %7998 = vmatprep.subr.bf16.mxu0 %v6707
    %7999 = vmatpush1.bf16.msra.mxu0 %v6706
    %8000 = vmatprep.subr.bf16.mxu0 %v6699
    %8001 = vmatpush1.bf16.msra.mxu0 %v6698
    %8002 = vmatprep.subr.bf16.mxu0 %v6691
    %8003 = vmatpush1.bf16.msra.mxu0 %v6690
    %8004 = vmatprep.subr.bf16.mxu0 %v6683
    %8005 = vmatpush1.bf16.msra.mxu0 %v6682
    %8006 = vmatprep.subr.bf16.mxu0 %v6675
    %8007 = vmatpush1.bf16.msra.mxu0 %v6674
    %8008 = vmatprep.subr.bf16.mxu0 %v6667
    %8009 = vmatpush1.bf16.msra.mxu0 %v6666
    %8010 = vmatprep.subr.bf16.mxu0 %v6659
    %8011 = vmatpush1.bf16.msra.mxu0 %v6658
    %8012 = vmatprep.subr.bf16.mxu0 %v6651
    %8013 = vmatpush1.bf16.msra.mxu0 %v6650
    %8014 = vmatprep.subr.bf16.mxu0 %v6771
    %8015 = vmatpush2.bf16.msra.mxu0 %v6770
    %8016 = vmatprep.subr.bf16.mxu0 %v6763
    %8017 = vmatpush2.bf16.msra.mxu0 %v6762
    %8018 = vmatprep.subr.bf16.mxu0 %v6755
    %8019 = vmatpush2.bf16.msra.mxu0 %v6754
    %8020 = vmatprep.subr.bf16.mxu0 %v6747
    %8021 = vmatpush2.bf16.msra.mxu0 %v6746
    %8022 = vmatprep.subr.bf16.mxu0 %v6739
    %8023 = vmatpush2.bf16.msra.mxu0 %v6738
    %8024 = vmatprep.subr.bf16.mxu0 %v6731
    %8025 = vmatpush2.bf16.msra.mxu0 %v6730
    %8026 = vmatprep.subr.bf16.mxu0 %v6723
    %8027 = vmatpush2.bf16.msra.mxu0 %v6722
    %8028 = vmatprep.subr.bf16.mxu0 %v6715
    %8029 = vmatpush2.bf16.msra.mxu0 %v6714
    %8030 = vmatprep.mubr.bf16.mxu0 %v4549
    %8031 = vmatmul.mubr.bf16.gmra.mxu0 %v4548
    %v8032 = vpop.f32.mrf.mxu0
    %v8033 = vadd.f32 %v5089, %v8032
    %v8034 = vpop.f32.mrf.mxu0
    %v8035 = vadd.f32 %v5093, %v8034
    %v8036 = vpop.f32.mrf.mxu0
    %v8037 = vpop.f32.mrf.mxu0
    %8038 = vdwg.mxu0
    %8039 = vmatprep.subr.bf16.mxu0 %v6835
    %8040 = vmatpush1.bf16.msra.mxu0 %v6834
    %8041 = vmatprep.subr.bf16.mxu0 %v6827
    %8042 = vmatpush1.bf16.msra.mxu0 %v6826
    %8043 = vmatprep.subr.bf16.mxu0 %v6819
    %8044 = vmatpush1.bf16.msra.mxu0 %v6818
    %8045 = vmatprep.subr.bf16.mxu0 %v6811
    %8046 = vmatpush1.bf16.msra.mxu0 %v6810
    %8047 = vmatprep.subr.bf16.mxu0 %v6803
    %8048 = vmatpush1.bf16.msra.mxu0 %v6802
    %8049 = vmatprep.subr.bf16.mxu0 %v6795
    %8050 = vmatpush1.bf16.msra.mxu0 %v6794
    %8051 = vmatprep.subr.bf16.mxu0 %v6787
    %8052 = vmatpush1.bf16.msra.mxu0 %v6786
    %8053 = vmatprep.subr.bf16.mxu0 %v6779
    %8054 = vmatpush1.bf16.msra.mxu0 %v6778
    %8055 = vmatprep.subr.bf16.mxu0 %v6899
    %8056 = vmatpush2.bf16.msra.mxu0 %v6898
    %8057 = vmatprep.subr.bf16.mxu0 %v6891
    %8058 = vmatpush2.bf16.msra.mxu0 %v6890
    %8059 = vmatprep.subr.bf16.mxu0 %v6883
    %8060 = vmatpush2.bf16.msra.mxu0 %v6882
    %8061 = vmatprep.subr.bf16.mxu0 %v6875
    %8062 = vmatpush2.bf16.msra.mxu0 %v6874
    %8063 = vmatprep.subr.bf16.mxu0 %v6867
    %8064 = vmatpush2.bf16.msra.mxu0 %v6866
    %8065 = vmatprep.subr.bf16.mxu0 %v6859
    %8066 = vmatpush2.bf16.msra.mxu0 %v6858
    %8067 = vmatprep.subr.bf16.mxu0 %v6851
    %8068 = vmatpush2.bf16.msra.mxu0 %v6850
    %8069 = vmatprep.subr.bf16.mxu0 %v6843
    %8070 = vmatpush2.bf16.msra.mxu0 %v6842
    %8071 = vmatprep.mubr.bf16.mxu0 %v4551
    %8072 = vmatmul.mubr.bf16.gmra.mxu0 %v4550
    %v8073 = vpop.f32.mrf.mxu0
    %v8074 = vadd.f32 %v8033, %v8073
    %v8075 = vpop.f32.mrf.mxu0
    %v8076 = vadd.f32 %v8035, %v8075
    %v8077 = vpop.f32.mrf.mxu0
    %v8078 = vpop.f32.mrf.mxu0
    %8079 = vdwg.mxu0
    %8080 = vmatprep.subr.bf16.mxu0 %v6963
    %8081 = vmatpush1.bf16.msra.mxu0 %v6962
    %8082 = vmatprep.subr.bf16.mxu0 %v6955
    %8083 = vmatpush1.bf16.msra.mxu0 %v6954
    %8084 = vmatprep.subr.bf16.mxu0 %v6947
    %8085 = vmatpush1.bf16.msra.mxu0 %v6946
    %8086 = vmatprep.subr.bf16.mxu0 %v6939
    %8087 = vmatpush1.bf16.msra.mxu0 %v6938
    %8088 = vmatprep.subr.bf16.mxu0 %v6931
    %8089 = vmatpush1.bf16.msra.mxu0 %v6930
    %8090 = vmatprep.subr.bf16.mxu0 %v6923
    %8091 = vmatpush1.bf16.msra.mxu0 %v6922
    %8092 = vmatprep.subr.bf16.mxu0 %v6915
    %8093 = vmatpush1.bf16.msra.mxu0 %v6914
    %8094 = vmatprep.subr.bf16.mxu0 %v6907
    %8095 = vmatpush1.bf16.msra.mxu0 %v6906
    %8096 = vmatprep.subr.bf16.mxu0 %v7027
    %8097 = vmatpush2.bf16.msra.mxu0 %v7026
    %8098 = vmatprep.subr.bf16.mxu0 %v7019
    %8099 = vmatpush2.bf16.msra.mxu0 %v7018
    %8100 = vmatprep.subr.bf16.mxu0 %v7011
    %8101 = vmatpush2.bf16.msra.mxu0 %v7010
    %8102 = vmatprep.subr.bf16.mxu0 %v7003
    %8103 = vmatpush2.bf16.msra.mxu0 %v7002
    %8104 = vmatprep.subr.bf16.mxu0 %v6995
    %8105 = vmatpush2.bf16.msra.mxu0 %v6994
    %8106 = vmatprep.subr.bf16.mxu0 %v6987
    %8107 = vmatpush2.bf16.msra.mxu0 %v6986
    %8108 = vmatprep.subr.bf16.mxu0 %v6979
    %8109 = vmatpush2.bf16.msra.mxu0 %v6978
    %8110 = vmatprep.subr.bf16.mxu0 %v6971
    %8111 = vmatpush2.bf16.msra.mxu0 %v6970
    %8112 = vmatprep.mubr.bf16.mxu0 %v4553
    %8113 = vmatmul.mubr.bf16.gmra.mxu0 %v4552
    %v8114 = vpop.f32.mrf.mxu0
    %v8115 = vadd.f32 %v8074, %v8114
    %v8116 = vpop.f32.mrf.mxu0
    %v8117 = vadd.f32 %v8076, %v8116
    %v8118 = vpop.f32.mrf.mxu0
    %v8119 = vpop.f32.mrf.mxu0
    %8120 = vdwg.mxu0
    %8121 = vmatprep.subr.bf16.mxu0 %v7091
    %8122 = vmatpush1.bf16.msra.mxu0 %v7090
    %8123 = vmatprep.subr.bf16.mxu0 %v7083
    %8124 = vmatpush1.bf16.msra.mxu0 %v7082
    %8125 = vmatprep.subr.bf16.mxu0 %v7075
    %8126 = vmatpush1.bf16.msra.mxu0 %v7074
    %8127 = vmatprep.subr.bf16.mxu0 %v7067
    %8128 = vmatpush1.bf16.msra.mxu0 %v7066
    %8129 = vmatprep.subr.bf16.mxu0 %v7059
    %8130 = vmatpush1.bf16.msra.mxu0 %v7058
    %8131 = vmatprep.subr.bf16.mxu0 %v7051
    %8132 = vmatpush1.bf16.msra.mxu0 %v7050
    %8133 = vmatprep.subr.bf16.mxu0 %v7043
    %8134 = vmatpush1.bf16.msra.mxu0 %v7042
    %8135 = vmatprep.subr.bf16.mxu0 %v7035
    %8136 = vmatpush1.bf16.msra.mxu0 %v7034
    %8137 = vmatprep.subr.bf16.mxu0 %v7155
    %8138 = vmatpush2.bf16.msra.mxu0 %v7154
    %8139 = vmatprep.subr.bf16.mxu0 %v7147
    %8140 = vmatpush2.bf16.msra.mxu0 %v7146
    %8141 = vmatprep.subr.bf16.mxu0 %v7139
    %8142 = vmatpush2.bf16.msra.mxu0 %v7138
    %8143 = vmatprep.subr.bf16.mxu0 %v7131
    %8144 = vmatpush2.bf16.msra.mxu0 %v7130
    %8145 = vmatprep.subr.bf16.mxu0 %v7123
    %8146 = vmatpush2.bf16.msra.mxu0 %v7122
    %8147 = vmatprep.subr.bf16.mxu0 %v7115
    %8148 = vmatpush2.bf16.msra.mxu0 %v7114
    %8149 = vmatprep.subr.bf16.mxu0 %v7107
    %8150 = vmatpush2.bf16.msra.mxu0 %v7106
    %8151 = vmatprep.subr.bf16.mxu0 %v7099
    %8152 = vmatpush2.bf16.msra.mxu0 %v7098
    %8153 = vmatprep.mubr.bf16.mxu0 %v4555
    %8154 = vmatmul.mubr.bf16.gmra.mxu0 %v4554
    %v8155 = vpop.f32.mrf.mxu0
    %v8156 = vadd.f32 %v8115, %v8155
    %v8157 = vpop.f32.mrf.mxu0
    %v8158 = vadd.f32 %v8117, %v8157
    %v8159 = vpop.f32.mrf.mxu0
    %v8160 = vpop.f32.mrf.mxu0
    %8161 = vdwg.mxu0
    %8162 = vmatprep.subr.bf16.mxu0 %v6709
    %8163 = vmatpush1.bf16.msra.mxu0 %v6708
    %8164 = vmatprep.subr.bf16.mxu0 %v6701
    %8165 = vmatpush1.bf16.msra.mxu0 %v6700
    %8166 = vmatprep.subr.bf16.mxu0 %v6693
    %8167 = vmatpush1.bf16.msra.mxu0 %v6692
    %8168 = vmatprep.subr.bf16.mxu0 %v6685
    %8169 = vmatpush1.bf16.msra.mxu0 %v6684
    %8170 = vmatprep.subr.bf16.mxu0 %v6677
    %8171 = vmatpush1.bf16.msra.mxu0 %v6676
    %8172 = vmatprep.subr.bf16.mxu0 %v6669
    %8173 = vmatpush1.bf16.msra.mxu0 %v6668
    %8174 = vmatprep.subr.bf16.mxu0 %v6661
    %8175 = vmatpush1.bf16.msra.mxu0 %v6660
    %8176 = vmatprep.subr.bf16.mxu0 %v6653
    %8177 = vmatpush1.bf16.msra.mxu0 %v6652
    %8178 = vmatprep.subr.bf16.mxu0 %v6773
    %8179 = vmatpush2.bf16.msra.mxu0 %v6772
    %8180 = vmatprep.subr.bf16.mxu0 %v6765
    %8181 = vmatpush2.bf16.msra.mxu0 %v6764
    %8182 = vmatprep.subr.bf16.mxu0 %v6757
    %8183 = vmatpush2.bf16.msra.mxu0 %v6756
    %8184 = vmatprep.subr.bf16.mxu0 %v6749
    %8185 = vmatpush2.bf16.msra.mxu0 %v6748
    %8186 = vmatprep.subr.bf16.mxu0 %v6741
    %8187 = vmatpush2.bf16.msra.mxu0 %v6740
    %8188 = vmatprep.subr.bf16.mxu0 %v6733
    %8189 = vmatpush2.bf16.msra.mxu0 %v6732
    %8190 = vmatprep.subr.bf16.mxu0 %v6725
    %8191 = vmatpush2.bf16.msra.mxu0 %v6724
    %8192 = vmatprep.subr.bf16.mxu0 %v6717
    %8193 = vmatpush2.bf16.msra.mxu0 %v6716
    %8194 = vmatprep.mubr.bf16.mxu0 %v4549
    %8195 = vmatmul.mubr.bf16.gmra.mxu0 %v4548
    %v8196 = vpop.f32.mrf.mxu0
    %v8197 = vadd.f32 %v5097, %v8196
    %v8198 = vpop.f32.mrf.mxu0
    %v8199 = vadd.f32 %v5101, %v8198
    %v8200 = vpop.f32.mrf.mxu0
    %v8201 = vpop.f32.mrf.mxu0
    %8202 = vdwg.mxu0
    %8203 = vmatprep.subr.bf16.mxu0 %v6837
    %8204 = vmatpush1.bf16.msra.mxu0 %v6836
    %8205 = vmatprep.subr.bf16.mxu0 %v6829
    %8206 = vmatpush1.bf16.msra.mxu0 %v6828
    %8207 = vmatprep.subr.bf16.mxu0 %v6821
    %8208 = vmatpush1.bf16.msra.mxu0 %v6820
    %8209 = vmatprep.subr.bf16.mxu0 %v6813
    %8210 = vmatpush1.bf16.msra.mxu0 %v6812
    %8211 = vmatprep.subr.bf16.mxu0 %v6805
    %8212 = vmatpush1.bf16.msra.mxu0 %v6804
    %8213 = vmatprep.subr.bf16.mxu0 %v6797
    %8214 = vmatpush1.bf16.msra.mxu0 %v6796
    %8215 = vmatprep.subr.bf16.mxu0 %v6789
    %8216 = vmatpush1.bf16.msra.mxu0 %v6788
    %8217 = vmatprep.subr.bf16.mxu0 %v6781
    %8218 = vmatpush1.bf16.msra.mxu0 %v6780
    %8219 = vmatprep.subr.bf16.mxu0 %v6901
    %8220 = vmatpush2.bf16.msra.mxu0 %v6900
    %8221 = vmatprep.subr.bf16.mxu0 %v6893
    %8222 = vmatpush2.bf16.msra.mxu0 %v6892
    %8223 = vmatprep.subr.bf16.mxu0 %v6885
    %8224 = vmatpush2.bf16.msra.mxu0 %v6884
    %8225 = vmatprep.subr.bf16.mxu0 %v6877
    %8226 = vmatpush2.bf16.msra.mxu0 %v6876
    %8227 = vmatprep.subr.bf16.mxu0 %v6869
    %8228 = vmatpush2.bf16.msra.mxu0 %v6868
    %8229 = vmatprep.subr.bf16.mxu0 %v6861
    %8230 = vmatpush2.bf16.msra.mxu0 %v6860
    %8231 = vmatprep.subr.bf16.mxu0 %v6853
    %8232 = vmatpush2.bf16.msra.mxu0 %v6852
    %8233 = vmatprep.subr.bf16.mxu0 %v6845
    %8234 = vmatpush2.bf16.msra.mxu0 %v6844
    %8235 = vmatprep.mubr.bf16.mxu0 %v4551
    %8236 = vmatmul.mubr.bf16.gmra.mxu0 %v4550
    %v8237 = vpop.f32.mrf.mxu0
    %v8238 = vadd.f32 %v8197, %v8237
    %v8239 = vpop.f32.mrf.mxu0
    %v8240 = vadd.f32 %v8199, %v8239
    %v8241 = vpop.f32.mrf.mxu0
    %v8242 = vpop.f32.mrf.mxu0
    %8243 = vdwg.mxu0
    %8244 = vmatprep.subr.bf16.mxu0 %v6965
    %8245 = vmatpush1.bf16.msra.mxu0 %v6964
    %8246 = vmatprep.subr.bf16.mxu0 %v6957
    %8247 = vmatpush1.bf16.msra.mxu0 %v6956
    %8248 = vmatprep.subr.bf16.mxu0 %v6949
    %8249 = vmatpush1.bf16.msra.mxu0 %v6948
    %8250 = vmatprep.subr.bf16.mxu0 %v6941
    %8251 = vmatpush1.bf16.msra.mxu0 %v6940
    %8252 = vmatprep.subr.bf16.mxu0 %v6933
    %8253 = vmatpush1.bf16.msra.mxu0 %v6932
    %8254 = vmatprep.subr.bf16.mxu0 %v6925
    %8255 = vmatpush1.bf16.msra.mxu0 %v6924
    %8256 = vmatprep.subr.bf16.mxu0 %v6917
    %8257 = vmatpush1.bf16.msra.mxu0 %v6916
    %8258 = vmatprep.subr.bf16.mxu0 %v6909
    %8259 = vmatpush1.bf16.msra.mxu0 %v6908
    %8260 = vmatprep.subr.bf16.mxu0 %v7029
    %8261 = vmatpush2.bf16.msra.mxu0 %v7028
    %8262 = vmatprep.subr.bf16.mxu0 %v7021
    %8263 = vmatpush2.bf16.msra.mxu0 %v7020
    %8264 = vmatprep.subr.bf16.mxu0 %v7013
    %8265 = vmatpush2.bf16.msra.mxu0 %v7012
    %8266 = vmatprep.subr.bf16.mxu0 %v7005
    %8267 = vmatpush2.bf16.msra.mxu0 %v7004
    %8268 = vmatprep.subr.bf16.mxu0 %v6997
    %8269 = vmatpush2.bf16.msra.mxu0 %v6996
    %8270 = vmatprep.subr.bf16.mxu0 %v6989
    %8271 = vmatpush2.bf16.msra.mxu0 %v6988
    %8272 = vmatprep.subr.bf16.mxu0 %v6981
    %8273 = vmatpush2.bf16.msra.mxu0 %v6980
    %8274 = vmatprep.subr.bf16.mxu0 %v6973
    %8275 = vmatpush2.bf16.msra.mxu0 %v6972
    %8276 = vmatprep.mubr.bf16.mxu0 %v4553
    %8277 = vmatmul.mubr.bf16.gmra.mxu0 %v4552
    %v8278 = vpop.f32.mrf.mxu0
    %v8279 = vadd.f32 %v8238, %v8278
    %v8280 = vpop.f32.mrf.mxu0
    %v8281 = vadd.f32 %v8240, %v8280
    %v8282 = vpop.f32.mrf.mxu0
    %v8283 = vpop.f32.mrf.mxu0
    %8284 = vdwg.mxu0
    %8285 = vmatprep.subr.bf16.mxu0 %v7093
    %8286 = vmatpush1.bf16.msra.mxu0 %v7092
    %8287 = vmatprep.subr.bf16.mxu0 %v7085
    %8288 = vmatpush1.bf16.msra.mxu0 %v7084
    %8289 = vmatprep.subr.bf16.mxu0 %v7077
    %8290 = vmatpush1.bf16.msra.mxu0 %v7076
    %8291 = vmatprep.subr.bf16.mxu0 %v7069
    %8292 = vmatpush1.bf16.msra.mxu0 %v7068
    %8293 = vmatprep.subr.bf16.mxu0 %v7061
    %8294 = vmatpush1.bf16.msra.mxu0 %v7060
    %8295 = vmatprep.subr.bf16.mxu0 %v7053
    %8296 = vmatpush1.bf16.msra.mxu0 %v7052
    %8297 = vmatprep.subr.bf16.mxu0 %v7045
    %8298 = vmatpush1.bf16.msra.mxu0 %v7044
    %8299 = vmatprep.subr.bf16.mxu0 %v7037
    %8300 = vmatpush1.bf16.msra.mxu0 %v7036
    %8301 = vmatprep.subr.bf16.mxu0 %v7157
    %8302 = vmatpush2.bf16.msra.mxu0 %v7156
    %8303 = vmatprep.subr.bf16.mxu0 %v7149
    %8304 = vmatpush2.bf16.msra.mxu0 %v7148
    %8305 = vmatprep.subr.bf16.mxu0 %v7141
    %8306 = vmatpush2.bf16.msra.mxu0 %v7140
    %8307 = vmatprep.subr.bf16.mxu0 %v7133
    %8308 = vmatpush2.bf16.msra.mxu0 %v7132
    %8309 = vmatprep.subr.bf16.mxu0 %v7125
    %8310 = vmatpush2.bf16.msra.mxu0 %v7124
    %8311 = vmatprep.subr.bf16.mxu0 %v7117
    %8312 = vmatpush2.bf16.msra.mxu0 %v7116
    %8313 = vmatprep.subr.bf16.mxu0 %v7109
    %8314 = vmatpush2.bf16.msra.mxu0 %v7108
    %8315 = vmatprep.subr.bf16.mxu0 %v7101
    %8316 = vmatpush2.bf16.msra.mxu0 %v7100
    %8317 = vmatprep.mubr.bf16.mxu0 %v4555
    %8318 = vmatmul.mubr.bf16.gmra.mxu0 %v4554
    %v8319 = vpop.f32.mrf.mxu0
    %v8320 = vadd.f32 %v8279, %v8319
    %v8321 = vpop.f32.mrf.mxu0
    %v8322 = vadd.f32 %v8281, %v8321
    %v8323 = vpop.f32.mrf.mxu0
    %v8324 = vpop.f32.mrf.mxu0
    %8325 = vdwg.mxu0
    %v8326 = vmul.f32 %v7828, 0.01
    %v8327 = vmul.f32 %v7830, 0.01
    %v8328 = vmul.f32 %v7992, 0.01
    %v8329 = vmul.f32 %v7994, 0.01
    %v8330 = vmul.f32 %v8156, 0.01
    %v8331 = vmul.f32 %v8158, 0.01
    %v8332 = vmul.f32 %v8320, 0.01
    %v8333 = vmul.f32 %v8322, 0.01
    %v8334 = vmax.f32 %v7828, %v8326
    %v8335 = vmax.f32 %v7830, %v8327
    %v8336 = vmax.f32 %v7992, %v8328
    %v8337 = vmax.f32 %v7994, %v8329
    %v8338 = vmax.f32 %v8156, %v8330
    %v8339 = vmax.f32 %v8158, %v8331
    %v8340 = vmax.f32 %v8320, %v8332
    %v8341 = vmax.f32 %v8322, %v8333
    %v8342 = vpack.c.bf16 %v8334, %v8334
    %v8343 = vpack.c.bf16 %v8335, %v8335
    %v8344 = vpack.c.bf16 %v8336, %v8336
    %v8345 = vpack.c.bf16 %v8337, %v8337
    %v8346 = vpack.c.bf16 %v8338, %v8338
    %v8347 = vpack.c.bf16 %v8339, %v8339
    %v8348 = vpack.c.bf16 %v8340, %v8340
    %v8349 = vpack.c.bf16 %v8341, %v8341
    %v8350 = vld [vmem:[#allocation14] sm:$0xf]
    %v8351 = vld [vmem:[#allocation14 + $0x4] sm:$0xf]
    %v8352 = vld [vmem:[#allocation14 + $0x8] sm:$0xf]
    %v8353 = vld [vmem:[#allocation14 + $0xc] sm:$0xf]
    %v8354 = vld [vmem:[#allocation14 + $0x10] sm:$0xf]
    %v8355 = vld [vmem:[#allocation14 + $0x14] sm:$0xf]
    %v8356 = vld [vmem:[#allocation14 + $0x18] sm:$0xf]
    %v8357 = vld [vmem:[#allocation14 + $0x1c] sm:$0xf]
    %v8358 = vld [vmem:[#allocation14 + $0x20] sm:$0xf]
    %v8359 = vld [vmem:[#allocation14 + $0x24] sm:$0xf]
    %v8360 = vld [vmem:[#allocation14 + $0x28] sm:$0xf]
    %v8361 = vld [vmem:[#allocation14 + $0x2c] sm:$0xf]
    %v8362 = vld [vmem:[#allocation14 + $0x30] sm:$0xf]
    %v8363 = vld [vmem:[#allocation14 + $0x34] sm:$0xf]
    %v8364 = vld [vmem:[#allocation14 + $0x38] sm:$0xf]
    %v8365 = vld [vmem:[#allocation14 + $0x3c] sm:$0xf]
    %v8366 = vld [vmem:[#allocation14 + $0x40] sm:$0xf]
    %v8367 = vld [vmem:[#allocation14 + $0x44] sm:$0xf]
    %v8368 = vld [vmem:[#allocation14 + $0x48] sm:$0xf]
    %v8369 = vld [vmem:[#allocation14 + $0x4c] sm:$0xf]
    %v8370 = vld [vmem:[#allocation14 + $0x50] sm:$0xf]
    %v8371 = vld [vmem:[#allocation14 + $0x54] sm:$0xf]
    %v8372 = vld [vmem:[#allocation14 + $0x58] sm:$0xf]
    %v8373 = vld [vmem:[#allocation14 + $0x5c] sm:$0xf]
    %v8374 = vld [vmem:[#allocation14 + $0x60] sm:$0xf]
    %v8375 = vld [vmem:[#allocation14 + $0x64] sm:$0xf]
    %v8376 = vld [vmem:[#allocation14 + $0x68] sm:$0xf]
    %v8377 = vld [vmem:[#allocation14 + $0x6c] sm:$0xf]
    %v8378 = vld [vmem:[#allocation14 + $0x70] sm:$0xf]
    %v8379 = vld [vmem:[#allocation14 + $0x74] sm:$0xf]
    %v8380 = vld [vmem:[#allocation14 + $0x78] sm:$0xf]
    %v8381 = vld [vmem:[#allocation14 + $0x7c] sm:$0xf]
    %v8382 = vld [vmem:[#allocation14 + $0x80] sm:$0xf]
    %v8383 = vld [vmem:[#allocation14 + $0x84] sm:$0xf]
    %v8384 = vld [vmem:[#allocation14 + $0x88] sm:$0xf]
    %v8385 = vld [vmem:[#allocation14 + $0x8c] sm:$0xf]
    %v8386 = vld [vmem:[#allocation14 + $0x90] sm:$0xf]
    %v8387 = vld [vmem:[#allocation14 + $0x94] sm:$0xf]
    %v8388 = vld [vmem:[#allocation14 + $0x98] sm:$0xf]
    %v8389 = vld [vmem:[#allocation14 + $0x9c] sm:$0xf]
    %v8390 = vld [vmem:[#allocation14 + $0xa0] sm:$0xf]
    %v8391 = vld [vmem:[#allocation14 + $0xa4] sm:$0xf]
    %v8392 = vld [vmem:[#allocation14 + $0xa8] sm:$0xf]
    %v8393 = vld [vmem:[#allocation14 + $0xac] sm:$0xf]
    %v8394 = vld [vmem:[#allocation14 + $0xb0] sm:$0xf]
    %v8395 = vld [vmem:[#allocation14 + $0xb4] sm:$0xf]
    %v8396 = vld [vmem:[#allocation14 + $0xb8] sm:$0xf]
    %v8397 = vld [vmem:[#allocation14 + $0xbc] sm:$0xf]
    %v8398 = vld [vmem:[#allocation14 + $0xc0] sm:$0xf]
    %v8399 = vld [vmem:[#allocation14 + $0xc4] sm:$0xf]
    %v8400 = vld [vmem:[#allocation14 + $0xc8] sm:$0xf]
    %v8401 = vld [vmem:[#allocation14 + $0xcc] sm:$0xf]
    %v8402 = vld [vmem:[#allocation14 + $0xd0] sm:$0xf]
    %v8403 = vld [vmem:[#allocation14 + $0xd4] sm:$0xf]
    %v8404 = vld [vmem:[#allocation14 + $0xd8] sm:$0xf]
    %v8405 = vld [vmem:[#allocation14 + $0xdc] sm:$0xf]
    %v8406 = vld [vmem:[#allocation14 + $0xe0] sm:$0xf]
    %v8407 = vld [vmem:[#allocation14 + $0xe4] sm:$0xf]
    %v8408 = vld [vmem:[#allocation14 + $0xe8] sm:$0xf]
    %v8409 = vld [vmem:[#allocation14 + $0xec] sm:$0xf]
    %v8410 = vld [vmem:[#allocation14 + $0xf0] sm:$0xf]
    %v8411 = vld [vmem:[#allocation14 + $0xf4] sm:$0xf]
    %v8412 = vld [vmem:[#allocation14 + $0xf8] sm:$0xf]
    %v8413 = vld [vmem:[#allocation14 + $0xfc] sm:$0xf]
    %v8414 = vld [vmem:[#allocation14 + $0x100] sm:$0xf]
    %v8415 = vld [vmem:[#allocation14 + $0x104] sm:$0xf]
    %v8416 = vld [vmem:[#allocation14 + $0x108] sm:$0xf]
    %v8417 = vld [vmem:[#allocation14 + $0x10c] sm:$0xf]
    %v8418 = vld [vmem:[#allocation14 + $0x110] sm:$0xf]
    %v8419 = vld [vmem:[#allocation14 + $0x114] sm:$0xf]
    %v8420 = vld [vmem:[#allocation14 + $0x118] sm:$0xf]
    %v8421 = vld [vmem:[#allocation14 + $0x11c] sm:$0xf]
    %v8422 = vld [vmem:[#allocation14 + $0x120] sm:$0xf]
    %v8423 = vld [vmem:[#allocation14 + $0x124] sm:$0xf]
    %v8424 = vld [vmem:[#allocation14 + $0x128] sm:$0xf]
    %v8425 = vld [vmem:[#allocation14 + $0x12c] sm:$0xf]
    %v8426 = vld [vmem:[#allocation14 + $0x130] sm:$0xf]
    %v8427 = vld [vmem:[#allocation14 + $0x134] sm:$0xf]
    %v8428 = vld [vmem:[#allocation14 + $0x138] sm:$0xf]
    %v8429 = vld [vmem:[#allocation14 + $0x13c] sm:$0xf]
    %v8430 = vld [vmem:[#allocation14 + $0x140] sm:$0xf]
    %v8431 = vld [vmem:[#allocation14 + $0x144] sm:$0xf]
    %v8432 = vld [vmem:[#allocation14 + $0x148] sm:$0xf]
    %v8433 = vld [vmem:[#allocation14 + $0x14c] sm:$0xf]
    %v8434 = vld [vmem:[#allocation14 + $0x150] sm:$0xf]
    %v8435 = vld [vmem:[#allocation14 + $0x154] sm:$0xf]
    %v8436 = vld [vmem:[#allocation14 + $0x158] sm:$0xf]
    %v8437 = vld [vmem:[#allocation14 + $0x15c] sm:$0xf]
    %v8438 = vld [vmem:[#allocation14 + $0x160] sm:$0xf]
    %v8439 = vld [vmem:[#allocation14 + $0x164] sm:$0xf]
    %v8440 = vld [vmem:[#allocation14 + $0x168] sm:$0xf]
    %v8441 = vld [vmem:[#allocation14 + $0x16c] sm:$0xf]
    %v8442 = vld [vmem:[#allocation14 + $0x170] sm:$0xf]
    %v8443 = vld [vmem:[#allocation14 + $0x174] sm:$0xf]
    %v8444 = vld [vmem:[#allocation14 + $0x178] sm:$0xf]
    %v8445 = vld [vmem:[#allocation14 + $0x17c] sm:$0xf]
    %v8446 = vld [vmem:[#allocation14 + $0x180] sm:$0xf]
    %v8447 = vld [vmem:[#allocation14 + $0x184] sm:$0xf]
    %v8448 = vld [vmem:[#allocation14 + $0x188] sm:$0xf]
    %v8449 = vld [vmem:[#allocation14 + $0x18c] sm:$0xf]
    %v8450 = vld [vmem:[#allocation14 + $0x190] sm:$0xf]
    %v8451 = vld [vmem:[#allocation14 + $0x194] sm:$0xf]
    %v8452 = vld [vmem:[#allocation14 + $0x198] sm:$0xf]
    %v8453 = vld [vmem:[#allocation14 + $0x19c] sm:$0xf]
    %v8454 = vld [vmem:[#allocation14 + $0x1a0] sm:$0xf]
    %v8455 = vld [vmem:[#allocation14 + $0x1a4] sm:$0xf]
    %v8456 = vld [vmem:[#allocation14 + $0x1a8] sm:$0xf]
    %v8457 = vld [vmem:[#allocation14 + $0x1ac] sm:$0xf]
    %v8458 = vld [vmem:[#allocation14 + $0x1b0] sm:$0xf]
    %v8459 = vld [vmem:[#allocation14 + $0x1b4] sm:$0xf]
    %v8460 = vld [vmem:[#allocation14 + $0x1b8] sm:$0xf]
    %v8461 = vld [vmem:[#allocation14 + $0x1bc] sm:$0xf]
    %v8462 = vld [vmem:[#allocation14 + $0x1c0] sm:$0xf]
    %v8463 = vld [vmem:[#allocation14 + $0x1c4] sm:$0xf]
    %v8464 = vld [vmem:[#allocation14 + $0x1c8] sm:$0xf]
    %v8465 = vld [vmem:[#allocation14 + $0x1cc] sm:$0xf]
    %v8466 = vld [vmem:[#allocation14 + $0x1d0] sm:$0xf]
    %v8467 = vld [vmem:[#allocation14 + $0x1d4] sm:$0xf]
    %v8468 = vld [vmem:[#allocation14 + $0x1d8] sm:$0xf]
    %v8469 = vld [vmem:[#allocation14 + $0x1dc] sm:$0xf]
    %v8470 = vld [vmem:[#allocation14 + $0x1e0] sm:$0xf]
    %v8471 = vld [vmem:[#allocation14 + $0x1e4] sm:$0xf]
    %v8472 = vld [vmem:[#allocation14 + $0x1e8] sm:$0xf]
    %v8473 = vld [vmem:[#allocation14 + $0x1ec] sm:$0xf]
    %v8474 = vld [vmem:[#allocation14 + $0x1f0] sm:$0xf]
    %v8475 = vld [vmem:[#allocation14 + $0x1f4] sm:$0xf]
    %v8476 = vld [vmem:[#allocation14 + $0x1f8] sm:$0xf]
    %v8477 = vld [vmem:[#allocation14 + $0x1fc] sm:$0xf]
    %v8478 = vld [vmem:[#allocation16] sm:$0x1]
    %v8480 = vlaneseq
    %v8481 = vshrl.u32 %v8480, 7
    %v8482 = vsub.s32 0, %v8481
    %v8483 = vrot.slane %v8478, %v8482
    %v8613 = vunpack.c.l.b16 %v8350
    %v8614 = vunpack.c.l.b16 %v8351
    %v8615 = vunpack.c.l.b16 %v8352
    %v8616 = vunpack.c.l.b16 %v8353
    %v8617 = vunpack.c.l.b16 %v8354
    %v8618 = vunpack.c.l.b16 %v8355
    %v8619 = vunpack.c.l.b16 %v8356
    %v8620 = vunpack.c.l.b16 %v8357
    %v8621 = vunpack.c.l.b16 %v8358
    %v8622 = vunpack.c.l.b16 %v8359
    %v8623 = vunpack.c.l.b16 %v8360
    %v8624 = vunpack.c.l.b16 %v8361
    %v8625 = vunpack.c.l.b16 %v8362
    %v8626 = vunpack.c.l.b16 %v8363
    %v8627 = vunpack.c.l.b16 %v8364
    %v8628 = vunpack.c.l.b16 %v8365
    %v8629 = vunpack.c.l.b16 %v8366
    %v8630 = vunpack.c.l.b16 %v8367
    %v8631 = vunpack.c.l.b16 %v8368
    %v8632 = vunpack.c.l.b16 %v8369
    %v8633 = vunpack.c.l.b16 %v8370
    %v8634 = vunpack.c.l.b16 %v8371
    %v8635 = vunpack.c.l.b16 %v8372
    %v8636 = vunpack.c.l.b16 %v8373
    %v8637 = vunpack.c.l.b16 %v8374
    %v8638 = vunpack.c.l.b16 %v8375
    %v8639 = vunpack.c.l.b16 %v8376
    %v8640 = vunpack.c.l.b16 %v8377
    %v8641 = vunpack.c.l.b16 %v8378
    %v8642 = vunpack.c.l.b16 %v8379
    %v8643 = vunpack.c.l.b16 %v8380
    %v8644 = vunpack.c.l.b16 %v8381
    %v8645 = vunpack.c.l.b16 %v8382
    %v8646 = vunpack.c.l.b16 %v8383
    %v8647 = vunpack.c.l.b16 %v8384
    %v8648 = vunpack.c.l.b16 %v8385
    %v8649 = vunpack.c.l.b16 %v8386
    %v8650 = vunpack.c.l.b16 %v8387
    %v8651 = vunpack.c.l.b16 %v8388
    %v8652 = vunpack.c.l.b16 %v8389
    %v8653 = vunpack.c.l.b16 %v8390
    %v8654 = vunpack.c.l.b16 %v8391
    %v8655 = vunpack.c.l.b16 %v8392
    %v8656 = vunpack.c.l.b16 %v8393
    %v8657 = vunpack.c.l.b16 %v8394
    %v8658 = vunpack.c.l.b16 %v8395
    %v8659 = vunpack.c.l.b16 %v8396
    %v8660 = vunpack.c.l.b16 %v8397
    %v8661 = vunpack.c.l.b16 %v8398
    %v8662 = vunpack.c.l.b16 %v8399
    %v8663 = vunpack.c.l.b16 %v8400
    %v8664 = vunpack.c.l.b16 %v8401
    %v8665 = vunpack.c.l.b16 %v8402
    %v8666 = vunpack.c.l.b16 %v8403
    %v8667 = vunpack.c.l.b16 %v8404
    %v8668 = vunpack.c.l.b16 %v8405
    %v8669 = vunpack.c.l.b16 %v8406
    %v8670 = vunpack.c.l.b16 %v8407
    %v8671 = vunpack.c.l.b16 %v8408
    %v8672 = vunpack.c.l.b16 %v8409
    %v8673 = vunpack.c.l.b16 %v8410
    %v8674 = vunpack.c.l.b16 %v8411
    %v8675 = vunpack.c.l.b16 %v8412
    %v8676 = vunpack.c.l.b16 %v8413
    %v8677 = vunpack.c.l.b16 %v8414
    %v8678 = vunpack.c.l.b16 %v8415
    %v8679 = vunpack.c.l.b16 %v8416
    %v8680 = vunpack.c.l.b16 %v8417
    %v8681 = vunpack.c.l.b16 %v8418
    %v8682 = vunpack.c.l.b16 %v8419
    %v8683 = vunpack.c.l.b16 %v8420
    %v8684 = vunpack.c.l.b16 %v8421
    %v8685 = vunpack.c.l.b16 %v8422
    %v8686 = vunpack.c.l.b16 %v8423
    %v8687 = vunpack.c.l.b16 %v8424
    %v8688 = vunpack.c.l.b16 %v8425
    %v8689 = vunpack.c.l.b16 %v8426
    %v8690 = vunpack.c.l.b16 %v8427
    %v8691 = vunpack.c.l.b16 %v8428
    %v8692 = vunpack.c.l.b16 %v8429
    %v8693 = vunpack.c.l.b16 %v8430
    %v8694 = vunpack.c.l.b16 %v8431
    %v8695 = vunpack.c.l.b16 %v8432
    %v8696 = vunpack.c.l.b16 %v8433
    %v8697 = vunpack.c.l.b16 %v8434
    %v8698 = vunpack.c.l.b16 %v8435
    %v8699 = vunpack.c.l.b16 %v8436
    %v8700 = vunpack.c.l.b16 %v8437
    %v8701 = vunpack.c.l.b16 %v8438
    %v8702 = vunpack.c.l.b16 %v8439
    %v8703 = vunpack.c.l.b16 %v8440
    %v8704 = vunpack.c.l.b16 %v8441
    %v8705 = vunpack.c.l.b16 %v8442
    %v8706 = vunpack.c.l.b16 %v8443
    %v8707 = vunpack.c.l.b16 %v8444
    %v8708 = vunpack.c.l.b16 %v8445
    %v8709 = vunpack.c.l.b16 %v8446
    %v8710 = vunpack.c.l.b16 %v8447
    %v8711 = vunpack.c.l.b16 %v8448
    %v8712 = vunpack.c.l.b16 %v8449
    %v8713 = vunpack.c.l.b16 %v8450
    %v8714 = vunpack.c.l.b16 %v8451
    %v8715 = vunpack.c.l.b16 %v8452
    %v8716 = vunpack.c.l.b16 %v8453
    %v8717 = vunpack.c.l.b16 %v8454
    %v8718 = vunpack.c.l.b16 %v8455
    %v8719 = vunpack.c.l.b16 %v8456
    %v8720 = vunpack.c.l.b16 %v8457
    %v8721 = vunpack.c.l.b16 %v8458
    %v8722 = vunpack.c.l.b16 %v8459
    %v8723 = vunpack.c.l.b16 %v8460
    %v8724 = vunpack.c.l.b16 %v8461
    %v8725 = vunpack.c.l.b16 %v8462
    %v8726 = vunpack.c.l.b16 %v8463
    %v8727 = vunpack.c.l.b16 %v8464
    %v8728 = vunpack.c.l.b16 %v8465
    %v8729 = vunpack.c.l.b16 %v8466
    %v8730 = vunpack.c.l.b16 %v8467
    %v8731 = vunpack.c.l.b16 %v8468
    %v8732 = vunpack.c.l.b16 %v8469
    %v8733 = vunpack.c.l.b16 %v8470
    %v8734 = vunpack.c.l.b16 %v8471
    %v8735 = vunpack.c.l.b16 %v8472
    %v8736 = vunpack.c.l.b16 %v8473
    %v8737 = vunpack.c.l.b16 %v8474
    %v8738 = vunpack.c.l.b16 %v8475
    %v8739 = vunpack.c.l.b16 %v8476
    %v8740 = vunpack.c.l.b16 %v8477
    %v8741 = vpack.c.b16 %v8614, %v8613
    %v8742 = vpack.c.b16 %v8616, %v8615
    %v8743 = vpack.c.b16 %v8618, %v8617
    %v8744 = vpack.c.b16 %v8620, %v8619
    %v8745 = vpack.c.b16 %v8622, %v8621
    %v8746 = vpack.c.b16 %v8624, %v8623
    %v8747 = vpack.c.b16 %v8626, %v8625
    %v8748 = vpack.c.b16 %v8628, %v8627
    %v8749 = vpack.c.b16 %v8630, %v8629
    %v8750 = vpack.c.b16 %v8632, %v8631
    %v8751 = vpack.c.b16 %v8634, %v8633
    %v8752 = vpack.c.b16 %v8636, %v8635
    %v8753 = vpack.c.b16 %v8638, %v8637
    %v8754 = vpack.c.b16 %v8640, %v8639
    %v8755 = vpack.c.b16 %v8642, %v8641
    %v8756 = vpack.c.b16 %v8644, %v8643
    %v8757 = vpack.c.b16 %v8646, %v8645
    %v8758 = vpack.c.b16 %v8648, %v8647
    %v8759 = vpack.c.b16 %v8650, %v8649
    %v8760 = vpack.c.b16 %v8652, %v8651
    %v8761 = vpack.c.b16 %v8654, %v8653
    %v8762 = vpack.c.b16 %v8656, %v8655
    %v8763 = vpack.c.b16 %v8658, %v8657
    %v8764 = vpack.c.b16 %v8660, %v8659
    %v8765 = vpack.c.b16 %v8662, %v8661
    %v8766 = vpack.c.b16 %v8664, %v8663
    %v8767 = vpack.c.b16 %v8666, %v8665
    %v8768 = vpack.c.b16 %v8668, %v8667
    %v8769 = vpack.c.b16 %v8670, %v8669
    %v8770 = vpack.c.b16 %v8672, %v8671
    %v8771 = vpack.c.b16 %v8674, %v8673
    %v8772 = vpack.c.b16 %v8676, %v8675
    %v8773 = vpack.c.b16 %v8678, %v8677
    %v8774 = vpack.c.b16 %v8680, %v8679
    %v8775 = vpack.c.b16 %v8682, %v8681
    %v8776 = vpack.c.b16 %v8684, %v8683
    %v8777 = vpack.c.b16 %v8686, %v8685
    %v8778 = vpack.c.b16 %v8688, %v8687
    %v8779 = vpack.c.b16 %v8690, %v8689
    %v8780 = vpack.c.b16 %v8692, %v8691
    %v8781 = vpack.c.b16 %v8694, %v8693
    %v8782 = vpack.c.b16 %v8696, %v8695
    %v8783 = vpack.c.b16 %v8698, %v8697
    %v8784 = vpack.c.b16 %v8700, %v8699
    %v8785 = vpack.c.b16 %v8702, %v8701
    %v8786 = vpack.c.b16 %v8704, %v8703
    %v8787 = vpack.c.b16 %v8706, %v8705
    %v8788 = vpack.c.b16 %v8708, %v8707
    %v8789 = vpack.c.b16 %v8710, %v8709
    %v8790 = vpack.c.b16 %v8712, %v8711
    %v8791 = vpack.c.b16 %v8714, %v8713
    %v8792 = vpack.c.b16 %v8716, %v8715
    %v8793 = vpack.c.b16 %v8718, %v8717
    %v8794 = vpack.c.b16 %v8720, %v8719
    %v8795 = vpack.c.b16 %v8722, %v8721
    %v8796 = vpack.c.b16 %v8724, %v8723
    %v8797 = vpack.c.b16 %v8726, %v8725
    %v8798 = vpack.c.b16 %v8728, %v8727
    %v8799 = vpack.c.b16 %v8730, %v8729
    %v8800 = vpack.c.b16 %v8732, %v8731
    %v8801 = vpack.c.b16 %v8734, %v8733
    %v8802 = vpack.c.b16 %v8736, %v8735
    %v8803 = vpack.c.b16 %v8738, %v8737
    %v8804 = vpack.c.b16 %v8740, %v8739
    %8869 = vmatprep.subr.bf16.mxu0 0
    %8870 = vmatpush1.bf16.msra.mxu0 %v8748
    %8871 = vmatprep.subr.bf16.mxu0 0
    %8872 = vmatpush1.bf16.msra.mxu0 %v8747
    %8873 = vmatprep.subr.bf16.mxu0 0
    %8874 = vmatpush1.bf16.msra.mxu0 %v8746
    %8875 = vmatprep.subr.bf16.mxu0 0
    %8876 = vmatpush1.bf16.msra.mxu0 %v8745
    %8877 = vmatprep.subr.bf16.mxu0 0
    %8878 = vmatpush1.bf16.msra.mxu0 %v8744
    %8879 = vmatprep.subr.bf16.mxu0 0
    %8880 = vmatpush1.bf16.msra.mxu0 %v8743
    %8881 = vmatprep.subr.bf16.mxu0 0
    %8882 = vmatpush1.bf16.msra.mxu0 %v8742
    %8883 = vmatprep.subr.bf16.mxu0 0
    %8884 = vmatpush1.bf16.msra.mxu0 %v8741
    %8885 = vmatprep.subr.bf16.mxu0 0
    %8886 = vmatpush2.bf16.msra.mxu0 %v8756
    %8887 = vmatprep.subr.bf16.mxu0 0
    %8888 = vmatpush2.bf16.msra.mxu0 %v8755
    %8889 = vmatprep.subr.bf16.mxu0 0
    %8890 = vmatpush2.bf16.msra.mxu0 %v8754
    %8891 = vmatprep.subr.bf16.mxu0 0
    %8892 = vmatpush2.bf16.msra.mxu0 %v8753
    %8893 = vmatprep.subr.bf16.mxu0 0
    %8894 = vmatpush2.bf16.msra.mxu0 %v8752
    %8895 = vmatprep.subr.bf16.mxu0 0
    %8896 = vmatpush2.bf16.msra.mxu0 %v8751
    %8897 = vmatprep.subr.bf16.mxu0 0
    %8898 = vmatpush2.bf16.msra.mxu0 %v8750
    %8899 = vmatprep.subr.bf16.mxu0 0
    %8900 = vmatpush2.bf16.msra.mxu0 %v8749
    %8901 = vmatprep.mubr.bf16.mxu0 %v8343
    %8902 = vmatmul.mubr.bf16.gmra.mxu0 %v8342
    %v8903 = vpop.f32.mrf.mxu0
    %v8904 = vadd.f32 %v8483, %v8903
    %v8905 = vpop.f32.mrf.mxu0
    %v8906 = vpop.f32.mrf.mxu0
    %v8907 = vpop.f32.mrf.mxu0
    %8908 = vdwg.mxu0
    %8909 = vmatprep.subr.bf16.mxu0 0
    %8910 = vmatpush1.bf16.msra.mxu0 %v8764
    %8911 = vmatprep.subr.bf16.mxu0 0
    %8912 = vmatpush1.bf16.msra.mxu0 %v8763
    %8913 = vmatprep.subr.bf16.mxu0 0
    %8914 = vmatpush1.bf16.msra.mxu0 %v8762
    %8915 = vmatprep.subr.bf16.mxu0 0
    %8916 = vmatpush1.bf16.msra.mxu0 %v8761
    %8917 = vmatprep.subr.bf16.mxu0 0
    %8918 = vmatpush1.bf16.msra.mxu0 %v8760
    %8919 = vmatprep.subr.bf16.mxu0 0
    %8920 = vmatpush1.bf16.msra.mxu0 %v8759
    %8921 = vmatprep.subr.bf16.mxu0 0
    %8922 = vmatpush1.bf16.msra.mxu0 %v8758
    %8923 = vmatprep.subr.bf16.mxu0 0
    %8924 = vmatpush1.bf16.msra.mxu0 %v8757
    %8925 = vmatprep.subr.bf16.mxu0 0
    %8926 = vmatpush2.bf16.msra.mxu0 %v8772
    %8927 = vmatprep.subr.bf16.mxu0 0
    %8928 = vmatpush2.bf16.msra.mxu0 %v8771
    %8929 = vmatprep.subr.bf16.mxu0 0
    %8930 = vmatpush2.bf16.msra.mxu0 %v8770
    %8931 = vmatprep.subr.bf16.mxu0 0
    %8932 = vmatpush2.bf16.msra.mxu0 %v8769
    %8933 = vmatprep.subr.bf16.mxu0 0
    %8934 = vmatpush2.bf16.msra.mxu0 %v8768
    %8935 = vmatprep.subr.bf16.mxu0 0
    %8936 = vmatpush2.bf16.msra.mxu0 %v8767
    %8937 = vmatprep.subr.bf16.mxu0 0
    %8938 = vmatpush2.bf16.msra.mxu0 %v8766
    %8939 = vmatprep.subr.bf16.mxu0 0
    %8940 = vmatpush2.bf16.msra.mxu0 %v8765
    %8941 = vmatprep.mubr.bf16.mxu0 %v8345
    %8942 = vmatmul.mubr.bf16.gmra.mxu0 %v8344
    %v8943 = vpop.f32.mrf.mxu0
    %v8944 = vadd.f32 %v8904, %v8943
    %v8945 = vpop.f32.mrf.mxu0
    %v8946 = vpop.f32.mrf.mxu0
    %v8947 = vpop.f32.mrf.mxu0
    %8948 = vdwg.mxu0
    %8949 = vmatprep.subr.bf16.mxu0 0
    %8950 = vmatpush1.bf16.msra.mxu0 %v8780
    %8951 = vmatprep.subr.bf16.mxu0 0
    %8952 = vmatpush1.bf16.msra.mxu0 %v8779
    %8953 = vmatprep.subr.bf16.mxu0 0
    %8954 = vmatpush1.bf16.msra.mxu0 %v8778
    %8955 = vmatprep.subr.bf16.mxu0 0
    %8956 = vmatpush1.bf16.msra.mxu0 %v8777
    %8957 = vmatprep.subr.bf16.mxu0 0
    %8958 = vmatpush1.bf16.msra.mxu0 %v8776
    %8959 = vmatprep.subr.bf16.mxu0 0
    %8960 = vmatpush1.bf16.msra.mxu0 %v8775
    %8961 = vmatprep.subr.bf16.mxu0 0
    %8962 = vmatpush1.bf16.msra.mxu0 %v8774
    %8963 = vmatprep.subr.bf16.mxu0 0
    %8964 = vmatpush1.bf16.msra.mxu0 %v8773
    %8965 = vmatprep.subr.bf16.mxu0 0
    %8966 = vmatpush2.bf16.msra.mxu0 %v8788
    %8967 = vmatprep.subr.bf16.mxu0 0
    %8968 = vmatpush2.bf16.msra.mxu0 %v8787
    %8969 = vmatprep.subr.bf16.mxu0 0
    %8970 = vmatpush2.bf16.msra.mxu0 %v8786
    %8971 = vmatprep.subr.bf16.mxu0 0
    %8972 = vmatpush2.bf16.msra.mxu0 %v8785
    %8973 = vmatprep.subr.bf16.mxu0 0
    %8974 = vmatpush2.bf16.msra.mxu0 %v8784
    %8975 = vmatprep.subr.bf16.mxu0 0
    %8976 = vmatpush2.bf16.msra.mxu0 %v8783
    %8977 = vmatprep.subr.bf16.mxu0 0
    %8978 = vmatpush2.bf16.msra.mxu0 %v8782
    %8979 = vmatprep.subr.bf16.mxu0 0
    %8980 = vmatpush2.bf16.msra.mxu0 %v8781
    %8981 = vmatprep.mubr.bf16.mxu0 %v8347
    %8982 = vmatmul.mubr.bf16.gmra.mxu0 %v8346
    %v8983 = vpop.f32.mrf.mxu0
    %v8984 = vadd.f32 %v8944, %v8983
    %v8985 = vpop.f32.mrf.mxu0
    %v8986 = vpop.f32.mrf.mxu0
    %v8987 = vpop.f32.mrf.mxu0
    %8988 = vdwg.mxu0
    %8989 = vmatprep.subr.bf16.mxu0 0
    %8990 = vmatpush1.bf16.msra.mxu0 %v8796
    %8991 = vmatprep.subr.bf16.mxu0 0
    %8992 = vmatpush1.bf16.msra.mxu0 %v8795
    %8993 = vmatprep.subr.bf16.mxu0 0
    %8994 = vmatpush1.bf16.msra.mxu0 %v8794
    %8995 = vmatprep.subr.bf16.mxu0 0
    %8996 = vmatpush1.bf16.msra.mxu0 %v8793
    %8997 = vmatprep.subr.bf16.mxu0 0
    %8998 = vmatpush1.bf16.msra.mxu0 %v8792
    %8999 = vmatprep.subr.bf16.mxu0 0
    %9000 = vmatpush1.bf16.msra.mxu0 %v8791
    %9001 = vmatprep.subr.bf16.mxu0 0
    %9002 = vmatpush1.bf16.msra.mxu0 %v8790
    %9003 = vmatprep.subr.bf16.mxu0 0
    %9004 = vmatpush1.bf16.msra.mxu0 %v8789
    %9005 = vmatprep.subr.bf16.mxu0 0
    %9006 = vmatpush2.bf16.msra.mxu0 %v8804
    %9007 = vmatprep.subr.bf16.mxu0 0
    %9008 = vmatpush2.bf16.msra.mxu0 %v8803
    %9009 = vmatprep.subr.bf16.mxu0 0
    %9010 = vmatpush2.bf16.msra.mxu0 %v8802
    %9011 = vmatprep.subr.bf16.mxu0 0
    %9012 = vmatpush2.bf16.msra.mxu0 %v8801
    %9013 = vmatprep.subr.bf16.mxu0 0
    %9014 = vmatpush2.bf16.msra.mxu0 %v8800
    %9015 = vmatprep.subr.bf16.mxu0 0
    %9016 = vmatpush2.bf16.msra.mxu0 %v8799
    %9017 = vmatprep.subr.bf16.mxu0 0
    %9018 = vmatpush2.bf16.msra.mxu0 %v8798
    %9019 = vmatprep.subr.bf16.mxu0 0
    %9020 = vmatpush2.bf16.msra.mxu0 %v8797
    %9021 = vmatprep.mubr.bf16.mxu0 %v8349
    %9022 = vmatmul.mubr.bf16.gmra.mxu0 %v8348
    %v9023 = vpop.f32.mrf.mxu0
    %v9024 = vadd.f32 %v8984, %v9023
    %v9025 = vpop.f32.mrf.mxu0
    %v9026 = vpop.f32.mrf.mxu0
    %v9027 = vpop.f32.mrf.mxu0
    %9028 = vdwg.mxu0
    %9029 = vst [vmem:[#allocation17] sm:$0xff] %v9024
    // Predicated region
    $region74: #{_forward_padded.1} parent=1 // pred_check
      _
    $region75: #{_forward_padded.1} parent=1 // pred_check_branch
      %9031 = sbr.rel (0) target = $region77
    $region76: #{_forward_padded.1} parent=1 // pred_region
      %s9033 = ssub.s32 128, 128
      %9034 = vsyncadd [#allocation4], %s9033
      %s9036 = sshll.u32 [#allocation17], 4
      %s9037 = int_to_ptr.vmem [resolvable:$true] %s9036
      %9039 = dma.vmem_to_hbm [thread:$0]  %s9037, 128, %s9, [#allocation4]
    $region77: #{_forward_padded.1} parent=1 // pred_fallthru
      _
    // Predicated region
    $region78: #{_forward_padded.1} parent=1 // pred_check
      _
    $region79: #{_forward_padded.1} parent=1 // pred_check_branch
      %9041 = sbr.rel (0) target = $region81
    $region80: #{_forward_padded.1} parent=1 // pred_region
      %9042 = dma.done [#allocation4], 128
    $region81: #{_forward_padded.1} parent=1 // pred_fallthru
      _
    %9043 = vsyncpa [#allocation3], 1
    %9044 = vsyncpa [#allocation6], 1
    %9045 = vsyncpa [#allocation9], 1
    %9046 = vsyncpa [#allocation12], 1
    %9047 = vsyncpa [#allocation15], 1
    %9048 = vsyncpa [#allocation4], 1

</llo_original>
